<compile_context>
chip_gen: v6e
topology: v6e:2x2x1
jax: 0.10.0
libtpu: 0.0.40
codegen_flags: <defaults>
</compile_context>

<pallas_src>
import functools

import jax
import jax.numpy as jnp
from jax.experimental import pallas as pl
from jax.experimental.pallas import tpu as pltpu


# ----------------------------- matmul kernels --------------------------------
def _matmul_bias_direct_kernel(a_ref, b_ref, bias_ref, o_ref, *, relu):
    # Single K step: no accumulator scratch needed.
    r = jnp.dot(a_ref[...], b_ref[...],
                preferred_element_type=jnp.float32) + bias_ref[...]
    if relu:
        r = jnp.maximum(r, 0.0)
    o_ref[...] = r.astype(o_ref.dtype)


def _matmul_bias_acc_kernel(a_ref, b_ref, bias_ref, o_ref, acc_ref, *, relu):
    @pl.when(pl.program_id(2) == 0)
    def _():
        acc_ref[...] = jnp.zeros_like(acc_ref)

    acc_ref[...] += jnp.dot(a_ref[...], b_ref[...],
                            preferred_element_type=jnp.float32)

    @pl.when(pl.program_id(2) == pl.num_programs(2) - 1)
    def _():
        r = acc_ref[...] + bias_ref[...]
        if relu:
            r = jnp.maximum(r, 0.0)
        o_ref[...] = r.astype(o_ref.dtype)


def matmul_bias(a, b, bias, *, relu, tm, tn, tk, out_dtype=jnp.float32):
    """C = act(A @ B + bias); A:(M,K) B:(K,N) bias:(N,). bf16 stream, f32 acc."""
    M, K = a.shape
    K2, N = b.shape
    assert K == K2 and M % tm == 0 and N % tn == 0 and K % tk == 0

    a = a.astype(jnp.bfloat16)
    b = b.astype(jnp.bfloat16)
    bias2d = bias.reshape(1, N).astype(jnp.float32)
    kg = K // tk

    if kg == 1:
        # Direct path: no accumulator, 2-D grid.
        kernel = functools.partial(_matmul_bias_direct_kernel, relu=relu)
        return pl.pallas_call(
            kernel,
            out_shape=jax.ShapeDtypeStruct((M, N), out_dtype),
            grid_spec=pltpu.PrefetchScalarGridSpec(
                num_scalar_prefetch=0,
                grid=(M // tm, N // tn),
                in_specs=[
                    pl.BlockSpec((tm, K), lambda i, j: (i, 0)),
                    pl.BlockSpec((K, tn), lambda i, j: (0, j)),
                    pl.BlockSpec((1, tn), lambda i, j: (0, j)),
                ],
                out_specs=pl.BlockSpec((tm, tn), lambda i, j: (i, j)),
            ),
            compiler_params=pltpu.CompilerParams(
                dimension_semantics=("parallel", "parallel")),
        )(a, b, bias2d)

    kernel = functools.partial(_matmul_bias_acc_kernel, relu=relu)
    return pl.pallas_call(
        kernel,
        out_shape=jax.ShapeDtypeStruct((M, N), out_dtype),
        grid_spec=pltpu.PrefetchScalarGridSpec(
            num_scalar_prefetch=0,
            grid=(M // tm, N // tn, kg),
            in_specs=[
                pl.BlockSpec((tm, tk), lambda i, j, k: (i, k)),
                pl.BlockSpec((tk, tn), lambda i, j, k: (k, j)),
                pl.BlockSpec((1, tn), lambda i, j, k: (0, j)),
            ],
            out_specs=pl.BlockSpec((tm, tn), lambda i, j, k: (i, j)),
            scratch_shapes=[pltpu.VMEM((tm, tn), jnp.float32)],
        ),
        compiler_params=pltpu.CompilerParams(
            dimension_semantics=("parallel", "parallel", "arbitrary")),
    )(a, b, bias2d)


# ----------------------------- fused maxpool 2x2 ------------------------------
def _maxpool2x2_kernel(x_ref, o_ref):
    # x_ref block: (1, H/2, 2, W/2, 2*C); o_ref block: (1, H/2, W/2, C).
    C = o_ref.shape[-1]
    x = x_ref[0]                                        # (H/2, 2, W/2, 2C)
    h = jnp.maximum(x[:, 0, :, :], x[:, 1, :, :])       # max over H pair
    o_ref[0] = jnp.maximum(h[:, :, :C], h[:, :, C:])    # max over W pair (lane halves)


def maxpool2x2(x_nhwc):
    """x: (N,H,W,C) -> (N,H//2,W//2,C); fused 2x2/stride-2 max pool."""
    N, H, W, C = x_nhwc.shape
    assert H % 2 == 0 and W % 2 == 0
    # Pure reshape: last dim packs (w parity, channel) -> 2C lanes.
    xr = x_nhwc.reshape(N, H // 2, 2, W // 2, 2 * C)
    return pl.pallas_call(
        _maxpool2x2_kernel,
        out_shape=jax.ShapeDtypeStruct((N, H // 2, W // 2, C), x_nhwc.dtype),
        grid_spec=pltpu.PrefetchScalarGridSpec(
            num_scalar_prefetch=0,
            grid=(N,),
            in_specs=[pl.BlockSpec((1, H // 2, 2, W // 2, 2 * C),
                                   lambda n: (n, 0, 0, 0, 0))],
            out_specs=pl.BlockSpec((1, H // 2, W // 2, C),
                                   lambda n: (n, 0, 0, 0)),
        ),
        compiler_params=pltpu.CompilerParams(
            dimension_semantics=("parallel",)),
    )(xr)


# ----------------------------- conv via im2col -------------------------------
def _im2col_3x3(x):
    # x: (N, H, W, C) -> (N*H*W, 9*C), 'same' padding=1, feature order (kh,kw,c)
    N, H, W, C = x.shape
    xp = jnp.pad(x, ((0, 0), (1, 1), (1, 1), (0, 0)))
    cols = [xp[:, dy:dy + H, dx:dx + W, :]
            for dy in range(3) for dx in range(3)]
    patches = jnp.concatenate(cols, axis=-1)
    return patches.reshape(N * H * W, 9 * C)


def conv3x3_relu(x_nhwc, w_oihw, b, *, tm):
    N, H, W, C = x_nhwc.shape
    cout = w_oihw.shape[0]
    a = _im2col_3x3(x_nhwc)                                        # (N*H*W, 9C)
    wmat = jnp.transpose(w_oihw, (2, 3, 1, 0)).reshape(9 * C, cout)
    # K//tk == 1 -> direct-write kernel (no accumulator scratch).
    y = matmul_bias(a, wmat, b, relu=True, tm=tm, tn=cout, tk=9 * C)
    return y.reshape(N, H, W, cout)


# ----------------------------- full model ------------------------------------
def init_params(key):
    ks = jax.random.split(key, 8)

    def norm(k, shape, scale):
        return scale * jax.random.normal(k, shape, dtype=jnp.float32)

    # w3 rows are ordered for NHWC (H',W',C) flattening (equivalent to
    # permuting a torch-initialized weight once at load time), stored bf16
    # so FC1 streams half the HBM bytes.
    w3 = norm(ks[4], (14 * 14 * 128, 1024), 0.01).astype(jnp.bfloat16)

    # FC2 weight/bias padded 10 -> 128 output lanes (zeros); logits sliced
    # back to 10 in the wrapper.
    w4 = norm(ks[6], (1024, 10), 0.05)
    b4 = norm(ks[7], (10,), 0.05)
    w4p = jnp.zeros((1024, 128), jnp.float32).at[:, :10].set(w4)
    b4p = jnp.zeros((128,), jnp.float32).at[:10].set(b4)

    return {
        "w1": norm(ks[0], (64, 1, 3, 3), 0.10),    # torch Conv2d (out,in,kh,kw)
        "b1": norm(ks[1], (64,), 0.10),
        "w2": norm(ks[2], (128, 64, 3, 3), 0.05),
        "b2": norm(ks[3], (128,), 0.05),
        "w3": w3,                                  # (25088, 1024) bf16, (H,W,C) rows
        "b3": norm(ks[5], (1024,), 0.01),
        "w4p": w4p.astype(jnp.bfloat16),           # (1024, 128) bf16, padded
        "b4p": b4p,                                # (128,) f32, padded
    }


def model_forward(params, x_nchw):
    N = x_nchw.shape[0]
    x = jnp.transpose(x_nchw, (0, 2, 3, 1))                    # NCHW -> NHWC

    h1 = conv3x3_relu(x, params["w1"], params["b1"], tm=784)   # (N,28,28,64)
    h2 = conv3x3_relu(h1, params["w2"], params["b2"], tm=784)  # (N,28,28,128)

    pooled = maxpool2x2(h2)                                    # (N,14,14,128)
    feats = pooled.reshape(N, 14 * 14 * 128)                   # (H',W',C) order

    # TODO(synk): Dropout(p=0.5) is stochastic in torch train mode; implemented
    # as inference-mode identity here.
    # FC1: grid (1, 2, 7) — 2-extent parallel N axis (v7x megacore), big K tiles.
    d1 = matmul_bias(feats, params["w3"], params["b3"], relu=True,
                     tm=N, tn=512, tk=3584)                    # (N, 1024)
    # FC2: single grid step, direct-write kernel, padded to 128 lanes.
    logits_pad = matmul_bias(d1, params["w4p"], params["b4p"], relu=False,
                             tm=N, tn=128, tk=1024)            # (N, 128)
    return logits_pad[:, :10]


if __name__ == "__main__":
    key = jax.random.PRNGKey(0)
    pkey, xkey = jax.random.split(key)
    params = init_params(pkey)
    # Input consistent with the module: 28x28 single-channel images (NCHW).
    x = jax.random.normal(xkey, (2, 1, 28, 28), dtype=jnp.float32)

    out = jax.jit(model_forward)(params, x)
    out = jax.block_until_ready(out)
    assert out.shape == (2, 10) and out.dtype == jnp.float32
    print("KERNEL_OK")
</pallas_src>

<mosaic_0001>
module attributes {stable_mosaic.version = 11 : i64} {
  func.func @_matmul_bias_direct_kernel(%arg0: i32, %arg1: i32, %arg2: memref<784x9xbf16, #tpu.memory_space<vmem>>, %arg3: memref<9x64xbf16, #tpu.memory_space<vmem>>, %arg4: memref<1x64xf32, #tpu.memory_space<vmem>>, %arg5: memref<784x64xf32, #tpu.memory_space<vmem>>) attributes {dimension_semantics = [#tpu.dimension_semantics<parallel>, #tpu.dimension_semantics<parallel>], iteration_bounds = array<i64: 2, 1>, scalar_prefetch = 0 : i64, scratch_operands = 0 : i64, tpu.core_type = #tpu.core_type<tc>, window_params = [{transform_indices = @transform_0, window_bounds = array<i64: 784, 9>}, {transform_indices = @transform_1, window_bounds = array<i64: 9, 64>}, {transform_indices = @transform_2, window_bounds = array<i64: 1, 64>}, {transform_indices = @transform_3, window_bounds = array<i64: 784, 64>}]} {
    %c0 = arith.constant 0 : index
    %c0_0 = arith.constant 0 : index
    %0 = vector.load %arg2[%c0, %c0_0] : memref<784x9xbf16, #tpu.memory_space<vmem>>, vector<784x9xbf16>
    %c0_1 = arith.constant 0 : index
    %c0_2 = arith.constant 0 : index
    %1 = vector.load %arg3[%c0_1, %c0_2] : memref<9x64xbf16, #tpu.memory_space<vmem>>, vector<9x64xbf16>
    %cst = arith.constant dense<0.000000e+00> : vector<784x64xf32>
    %2 = tpu.matmul %0, %1, %cst {dimension_numbers = #tpu.dot_dimension_numbers<[1], [0], [0], [1], [0, 0, 1, 1], [], []>} : vector<784x9xbf16>, vector<9x64xbf16>, vector<784x64xf32> -> vector<784x64xf32>
    %c0_3 = arith.constant 0 : index
    %c0_4 = arith.constant 0 : index
    %3 = vector.load %arg4[%c0_3, %c0_4] : memref<1x64xf32, #tpu.memory_space<vmem>>, vector<1x64xf32>
    %4 = vector.broadcast %3 : vector<1x64xf32> to vector<784x64xf32>
    %5 = arith.addf %2, %4 : vector<784x64xf32>
    %cst_5 = arith.constant 0.000000e+00 : f32
    %6 = vector.broadcast %cst_5 : f32 to vector<784x64xf32>
    %7 = arith.maximumf %5, %6 : vector<784x64xf32>
    %c0_6 = arith.constant 0 : index
    %c0_7 = arith.constant 0 : index
    %8 = vector.load %arg5[%c0_6, %c0_7] : memref<784x64xf32, #tpu.memory_space<vmem>>, vector<784x64xf32>
    tpu.vector_store %arg5[%c0_6, %c0_7], %7 {strides = array<i32>} : memref<784x64xf32, #tpu.memory_space<vmem>>, vector<784x64xf32>,
    return
  }
  func.func @transform_0(%arg0: i32, %arg1: i32) -> (i32, i32) {
    %c0_i32 = arith.constant 0 : i32
    %c0_i32_0 = arith.constant 0 : i32
    return %arg0, %c0_i32 : i32, i32
  }
  func.func @transform_1(%arg0: i32, %arg1: i32) -> (i32, i32) {
    %c0_i32 = arith.constant 0 : i32
    %c0_i32_0 = arith.constant 0 : i32
    return %c0_i32, %arg1 : i32, i32
  }
  func.func @transform_2(%arg0: i32, %arg1: i32) -> (i32, i32) {
    %c0_i32 = arith.constant 0 : i32
    %c0_i32_0 = arith.constant 0 : i32
    return %c0_i32, %arg1 : i32, i32
  }
  func.func @transform_3(%arg0: i32, %arg1: i32) -> (i32, i32) {
    %c0_i32 = arith.constant 0 : i32
    return %arg0, %arg1 : i32, i32
  }
}

module attributes {stable_mosaic.version = 11 : i64} {
  func.func @_matmul_bias_direct_kernel(%arg0: i32, %arg1: i32, %arg2: memref<784x576xbf16, #tpu.memory_space<vmem>>, %arg3: memref<576x128xbf16, #tpu.memory_space<vmem>>, %arg4: memref<1x128xf32, #tpu.memory_space<vmem>>, %arg5: memref<784x128xf32, #tpu.memory_space<vmem>>) attributes {dimension_semantics = [#tpu.dimension_semantics<parallel>, #tpu.dimension_semantics<parallel>], iteration_bounds = array<i64: 2, 1>, scalar_prefetch = 0 : i64, scratch_operands = 0 : i64, tpu.core_type = #tpu.core_type<tc>, window_params = [{transform_indices = @transform_0, window_bounds = array<i64: 784, 576>}, {transform_indices = @transform_1, window_bounds = array<i64: 576, 128>}, {transform_indices = @transform_2, window_bounds = array<i64: 1, 128>}, {transform_indices = @transform_3, window_bounds = array<i64: 784, 128>}]} {
    %c0 = arith.constant 0 : index
    %c0_0 = arith.constant 0 : index
    %0 = vector.load %arg2[%c0, %c0_0] : memref<784x576xbf16, #tpu.memory_space<vmem>>, vector<784x576xbf16>
    %c0_1 = arith.constant 0 : index
    %c0_2 = arith.constant 0 : index
    %1 = vector.load %arg3[%c0_1, %c0_2] : memref<576x128xbf16, #tpu.memory_space<vmem>>, vector<576x128xbf16>
    %cst = arith.constant dense<0.000000e+00> : vector<784x128xf32>
    %2 = tpu.matmul %0, %1, %cst {dimension_numbers = #tpu.dot_dimension_numbers<[1], [0], [0], [1], [0, 0, 1, 1], [], []>} : vector<784x576xbf16>, vector<576x128xbf16>, vector<784x128xf32> -> vector<784x128xf32>
    %c0_3 = arith.constant 0 : index
    %c0_4 = arith.constant 0 : index
    %3 = vector.load %arg4[%c0_3, %c0_4] : memref<1x128xf32, #tpu.memory_space<vmem>>, vector<1x128xf32>
    %4 = vector.broadcast %3 : vector<1x128xf32> to vector<784x128xf32>
    %5 = arith.addf %2, %4 : vector<784x128xf32>
    %cst_5 = arith.constant 0.000000e+00 : f32
    %6 = vector.broadcast %cst_5 : f32 to vector<784x128xf32>
    %7 = arith.maximumf %5, %6 : vector<784x128xf32>
    %c0_6 = arith.constant 0 : index
    %c0_7 = arith.constant 0 : index
    %8 = vector.load %arg5[%c0_6, %c0_7] : memref<784x128xf32, #tpu.memory_space<vmem>>, vector<784x128xf32>
    tpu.vector_store %arg5[%c0_6, %c0_7], %7 {strides = array<i32>} : memref<784x128xf32, #tpu.memory_space<vmem>>, vector<784x128xf32>,
    return
  }
  func.func @transform_0(%arg0: i32, %arg1: i32) -> (i32, i32) {
    %c0_i32 = arith.constant 0 : i32
    %c0_i32_0 = arith.constant 0 : i32
    return %arg0, %c0_i32 : i32, i32
  }
  func.func @transform_1(%arg0: i32, %arg1: i32) -> (i32, i32) {
    %c0_i32 = arith.constant 0 : i32
    %c0_i32_0 = arith.constant 0 : i32
    return %c0_i32, %arg1 : i32, i32
  }
  func.func @transform_2(%arg0: i32, %arg1: i32) -> (i32, i32) {
    %c0_i32 = arith.constant 0 : i32
    %c0_i32_0 = arith.constant 0 : i32
    return %c0_i32, %arg1 : i32, i32
  }
  func.func @transform_3(%arg0: i32, %arg1: i32) -> (i32, i32) {
    %c0_i32 = arith.constant 0 : i32
    return %arg0, %arg1 : i32, i32
  }
}

module attributes {stable_mosaic.version = 11 : i64} {
  func.func @_maxpool2x2_kernel(%arg0: i32, %arg1: memref<1x14x2x14x256xf32, #tpu.memory_space<vmem>>, %arg2: memref<1x14x14x128xf32, #tpu.memory_space<vmem>>) attributes {dimension_semantics = [#tpu.dimension_semantics<parallel>], iteration_bounds = array<i64: 2>, scalar_prefetch = 0 : i64, scratch_operands = 0 : i64, tpu.core_type = #tpu.core_type<tc>, window_params = [{transform_indices = @transform_0, window_bounds = array<i64: 1, 14, 2, 14, 256>}, {transform_indices = @transform_1, window_bounds = array<i64: 1, 14, 14, 128>}]} {
    %c0 = arith.constant 0 : index
    %c0_0 = arith.constant 0 : index
    %c0_1 = arith.constant 0 : index
    %c0_2 = arith.constant 0 : index
    %c0_3 = arith.constant 0 : index
    %0 = vector.load %arg1[%c0, %c0_0, %c0_1, %c0_2, %c0_3] : memref<1x14x2x14x256xf32, #tpu.memory_space<vmem>>, vector<1x14x2x14x256xf32>
    %1 = vector.shape_cast %0 : vector<1x14x2x14x256xf32> to vector<14x2x14x256xf32>
    %2 = vector.extract_strided_slice %1 {offsets = [0, 0, 0, 0], sizes = [14, 1, 14, 256], strides = [1, 1, 1, 1]} : vector<14x2x14x256xf32> to vector<14x1x14x256xf32>
    %3 = vector.shape_cast %2 : vector<14x1x14x256xf32> to vector<14x14x256xf32>
    %4 = vector.extract_strided_slice %1 {offsets = [0, 1, 0, 0], sizes = [14, 1, 14, 256], strides = [1, 1, 1, 1]} : vector<14x2x14x256xf32> to vector<14x1x14x256xf32>
    %5 = vector.shape_cast %4 : vector<14x1x14x256xf32> to vector<14x14x256xf32>
    %6 = arith.maximumf %3, %5 : vector<14x14x256xf32>
    %7 = vector.extract_strided_slice %6 {offsets = [0, 0, 0], sizes = [14, 14, 128], strides = [1, 1, 1]} : vector<14x14x256xf32> to vector<14x14x128xf32>
    %8 = vector.extract_strided_slice %6 {offsets = [0, 0, 128], sizes = [14, 14, 128], strides = [1, 1, 1]} : vector<14x14x256xf32> to vector<14x14x128xf32>
    %9 = arith.maximumf %7, %8 : vector<14x14x128xf32>
    %c0_4 = arith.constant 0 : index
    %c0_5 = arith.constant 0 : index
    %c0_6 = arith.constant 0 : index
    %c0_7 = arith.constant 0 : index
    %10 = vector.load %arg2[%c0_4, %c0_5, %c0_6, %c0_7] : memref<1x14x14x128xf32, #tpu.memory_space<vmem>>, vector<1x14x14x128xf32>
    %11 = vector.shape_cast %10 : vector<1x14x14x128xf32> to vector<14x14x128xf32>
    %12 = vector.shape_cast %9 : vector<14x14x128xf32> to vector<1x14x14x128xf32>
    tpu.vector_store %arg2[%c0_4, %c0_5, %c0_6, %c0_7], %12 {strides = array<i32>} : memref<1x14x14x128xf32, #tpu.memory_space<vmem>>, vector<1x14x14x128xf32>,
    return
  }
  func.func @transform_0(%arg0: i32) -> (i32, i32, i32, i32, i32) {
    %c0_i32 = arith.constant 0 : i32
    %c0_i32_0 = arith.constant 0 : i32
    %c0_i32_1 = arith.constant 0 : i32
    %c0_i32_2 = arith.constant 0 : i32
    %c0_i32_3 = arith.constant 0 : i32
    return %arg0, %c0_i32, %c0_i32_0, %c0_i32_1, %c0_i32_2 : i32, i32, i32, i32, i32
  }
  func.func @transform_1(%arg0: i32) -> (i32, i32, i32, i32) {
    %c0_i32 = arith.constant 0 : i32
    %c0_i32_0 = arith.constant 0 : i32
    %c0_i32_1 = arith.constant 0 : i32
    %c0_i32_2 = arith.constant 0 : i32
    return %arg0, %c0_i32, %c0_i32_0, %c0_i32_1 : i32, i32, i32, i32
  }
}

module attributes {stable_mosaic.version = 11 : i64} {
  func.func @_matmul_bias_acc_kernel(%arg0: i32, %arg1: i32, %arg2: i32, %arg3: memref<2x3584xbf16, #tpu.memory_space<vmem>>, %arg4: memref<3584x512xbf16, #tpu.memory_space<vmem>>, %arg5: memref<1x512xf32, #tpu.memory_space<vmem>>, %arg6: memref<2x512xf32, #tpu.memory_space<vmem>>, %arg7: memref<2x512xf32, #tpu.memory_space<vmem>>) attributes {dimension_semantics = [#tpu.dimension_semantics<parallel>, #tpu.dimension_semantics<parallel>, #tpu.dimension_semantics<arbitrary>], iteration_bounds = array<i64: 1, 2, 7>, scalar_prefetch = 0 : i64, scratch_operands = 1 : i64, tpu.core_type = #tpu.core_type<tc>, window_params = [{transform_indices = @transform_0, window_bounds = array<i64: 2, 3584>}, {transform_indices = @transform_1, window_bounds = array<i64: 3584, 512>}, {transform_indices = @transform_2, window_bounds = array<i64: 1, 512>}, {transform_indices = @transform_3, window_bounds = array<i64: 2, 512>}]} {
    %c0_i32 = arith.constant 0 : i32
    %0 = arith.cmpi eq, %arg2, %c0_i32 : i32
    %1 = arith.extui %0 : i1 to i32
    %c0_i32_0 = arith.constant 0 : i32
    %2 = arith.cmpi ne, %1, %c0_i32_0 : i32
    scf.if %2 {
      %cst_9 = arith.constant 0.000000e+00 : f32
      %12 = vector.broadcast %cst_9 : f32 to vector<2x512xf32>
      %c0_10 = arith.constant 0 : index
      %c0_11 = arith.constant 0 : index
      %13 = vector.load %arg7[%c0_10, %c0_11] : memref<2x512xf32, #tpu.memory_space<vmem>>, vector<2x512xf32>
      tpu.vector_store %arg7[%c0_10, %c0_11], %12 {strides = array<i32>} : memref<2x512xf32, #tpu.memory_space<vmem>>, vector<2x512xf32>,
    } else {
    }
    %c0 = arith.constant 0 : index
    %c0_1 = arith.constant 0 : index
    %3 = vector.load %arg7[%c0, %c0_1] : memref<2x512xf32, #tpu.memory_space<vmem>>, vector<2x512xf32>
    %c0_2 = arith.constant 0 : index
    %c0_3 = arith.constant 0 : index
    %4 = vector.load %arg3[%c0_2, %c0_3] : memref<2x3584xbf16, #tpu.memory_space<vmem>>, vector<2x3584xbf16>
    %c0_4 = arith.constant 0 : index
    %c0_5 = arith.constant 0 : index
    %5 = vector.load %arg4[%c0_4, %c0_5] : memref<3584x512xbf16, #tpu.memory_space<vmem>>, vector<3584x512xbf16>
    %cst = arith.constant dense<0.000000e+00> : vector<2x512xf32>
    %6 = tpu.matmul %4, %5, %cst {dimension_numbers = #tpu.dot_dimension_numbers<[1], [0], [0], [1], [0, 0, 1, 1], [], []>} : vector<2x3584xbf16>, vector<3584x512xbf16>, vector<2x512xf32> -> vector<2x512xf32>
    %7 = arith.addf %3, %6 : vector<2x512xf32>
    %c0_6 = arith.constant 0 : index
    %c0_7 = arith.constant 0 : index
    %8 = vector.load %arg7[%c0_6, %c0_7] : memref<2x512xf32, #tpu.memory_space<vmem>>, vector<2x512xf32>
    tpu.vector_store %arg7[%c0_6, %c0_7], %7 {strides = array<i32>} : memref<2x512xf32, #tpu.memory_space<vmem>>, vector<2x512xf32>,
    %c6_i32 = arith.constant 6 : i32
    %9 = arith.cmpi eq, %arg2, %c6_i32 : i32
    %10 = arith.extui %9 : i1 to i32
    %c0_i32_8 = arith.constant 0 : i32
    %11 = arith.cmpi ne, %10, %c0_i32_8 : i32
    scf.if %11 {
      %c0_9 = arith.constant 0 : index
      %c0_10 = arith.constant 0 : index
      %12 = vector.load %arg7[%c0_9, %c0_10] : memref<2x512xf32, #tpu.memory_space<vmem>>, vector<2x512xf32>
      %c0_11 = arith.constant 0 : index
      %c0_12 = arith.constant 0 : index
      %13 = vector.load %arg5[%c0_11, %c0_12] : memref<1x512xf32, #tpu.memory_space<vmem>>, vector<1x512xf32>
      %14 = vector.broadcast %13 : vector<1x512xf32> to vector<2x512xf32>
      %15 = arith.addf %12, %14 : vector<2x512xf32>
      %cst_13 = arith.constant 0.000000e+00 : f32
      %16 = vector.broadcast %cst_13 : f32 to vector<2x512xf32>
      %17 = arith.maximumf %15, %16 : vector<2x512xf32>
      %c0_14 = arith.constant 0 : index
      %c0_15 = arith.constant 0 : index
      %18 = vector.load %arg6[%c0_14, %c0_15] : memref<2x512xf32, #tpu.memory_space<vmem>>, vector<2x512xf32>
      tpu.vector_store %arg6[%c0_14, %c0_15], %17 {strides = array<i32>} : memref<2x512xf32, #tpu.memory_space<vmem>>, vector<2x512xf32>,
    } else {
    }
    return
  }
  func.func @transform_0(%arg0: i32, %arg1: i32, %arg2: i32) -> (i32, i32) {
    %c0_i32 = arith.constant 0 : i32
    return %arg0, %arg2 : i32, i32
  }
  func.func @transform_1(%arg0: i32, %arg1: i32, %arg2: i32) -> (i32, i32) {
    %c0_i32 = arith.constant 0 : i32
    return %arg2, %arg1 : i32, i32
  }
  func.func @transform_2(%arg0: i32, %arg1: i32, %arg2: i32) -> (i32, i32) {
    %c0_i32 = arith.constant 0 : i32
    %c0_i32_0 = arith.constant 0 : i32
    return %c0_i32, %arg1 : i32, i32
  }
  func.func @transform_3(%arg0: i32, %arg1: i32, %arg2: i32) -> (i32, i32) {
    %c0_i32 = arith.constant 0 : i32
    return %arg0, %arg1 : i32, i32
  }
}

module attributes {stable_mosaic.version = 11 : i64} {
  func.func @_matmul_bias_direct_kernel(%arg0: i32, %arg1: i32, %arg2: memref<2x1024xbf16, #tpu.memory_space<vmem>>, %arg3: memref<1024x128xbf16, #tpu.memory_space<vmem>>, %arg4: memref<1x128xf32, #tpu.memory_space<vmem>>, %arg5: memref<2x128xf32, #tpu.memory_space<vmem>>) attributes {dimension_semantics = [#tpu.dimension_semantics<parallel>, #tpu.dimension_semantics<parallel>], iteration_bounds = array<i64: 1, 1>, scalar_prefetch = 0 : i64, scratch_operands = 0 : i64, tpu.core_type = #tpu.core_type<tc>, window_params = [{transform_indices = @transform_0, window_bounds = array<i64: 2, 1024>}, {transform_indices = @transform_1, window_bounds = array<i64: 1024, 128>}, {transform_indices = @transform_2, window_bounds = array<i64: 1, 128>}, {transform_indices = @transform_3, window_bounds = array<i64: 2, 128>}]} {
    %c0 = arith.constant 0 : index
    %c0_0 = arith.constant 0 : index
    %0 = vector.load %arg2[%c0, %c0_0] : memref<2x1024xbf16, #tpu.memory_space<vmem>>, vector<2x1024xbf16>
    %c0_1 = arith.constant 0 : index
    %c0_2 = arith.constant 0 : index
    %1 = vector.load %arg3[%c0_1, %c0_2] : memref<1024x128xbf16, #tpu.memory_space<vmem>>, vector<1024x128xbf16>
    %cst = arith.constant dense<0.000000e+00> : vector<2x128xf32>
    %2 = tpu.matmul %0, %1, %cst {dimension_numbers = #tpu.dot_dimension_numbers<[1], [0], [0], [1], [0, 0, 1, 1], [], []>} : vector<2x1024xbf16>, vector<1024x128xbf16>, vector<2x128xf32> -> vector<2x128xf32>
    %c0_3 = arith.constant 0 : index
    %c0_4 = arith.constant 0 : index
    %3 = vector.load %arg4[%c0_3, %c0_4] : memref<1x128xf32, #tpu.memory_space<vmem>>, vector<1x128xf32>
    %4 = vector.broadcast %3 : vector<1x128xf32> to vector<2x128xf32>
    %5 = arith.addf %2, %4 : vector<2x128xf32>
    %c0_5 = arith.constant 0 : index
    %c0_6 = arith.constant 0 : index
    %6 = vector.load %arg5[%c0_5, %c0_6] : memref<2x128xf32, #tpu.memory_space<vmem>>, vector<2x128xf32>
    tpu.vector_store %arg5[%c0_5, %c0_6], %5 {strides = array<i32>} : memref<2x128xf32, #tpu.memory_space<vmem>>, vector<2x128xf32>,
    return
  }
  func.func @transform_0(%arg0: i32, %arg1: i32) -> (i32, i32) {
    %c0_i32 = arith.constant 0 : i32
    %c0_i32_0 = arith.constant 0 : i32
    return %arg0, %c0_i32 : i32, i32
  }
  func.func @transform_1(%arg0: i32, %arg1: i32) -> (i32, i32) {
    %c0_i32 = arith.constant 0 : i32
    %c0_i32_0 = arith.constant 0 : i32
    return %c0_i32, %arg1 : i32, i32
  }
  func.func @transform_2(%arg0: i32, %arg1: i32) -> (i32, i32) {
    %c0_i32 = arith.constant 0 : i32
    %c0_i32_0 = arith.constant 0 : i32
    return %c0_i32, %arg1 : i32, i32
  }
  func.func @transform_3(%arg0: i32, %arg1: i32) -> (i32, i32) {
    %c0_i32 = arith.constant 0 : i32
    return %arg0, %arg1 : i32, i32
  }
}

</mosaic_0001>

<llo_original>
// kernel: model_forward.5
$region0: #{model_forward.5}
  #allocation0 [shape = 'u32[]', space=smem, size = 0x4, offset = 0x4, fixed_abs, tag = 'smem constant byte address 0x4 - core index']
  #allocation1 [shape = 'u32[144,128]{1,0:T(1,128)}', space=vmem, size = 0x12000, scoped, tag = 'internal scratch']
  %s0 = inlined_call_operand.vmem [shape: bf16[1568,9], index: 0, kind: input, shape index: {}]
  %s1 = inlined_call_operand.vmem [shape: bf16[9,64], index: 1, kind: input, shape index: {}]
  %s2 = inlined_call_operand.hbm [shape: f32[1,64], index: 2, kind: input, shape index: {}]
  %s3 = inlined_call_operand.vmem [shape: f32[1568,64], index: 3, kind: output, shape index: {}]
  %s4 = sld [smem:[#allocation0]]
  $region49: #{model_forward.5} parent=0
    _
  %s6 = ssub.s32 1, %s4
  %s7 = scalar_select 0, %s6, %s4
  $region1: #{model_forward.5} parent=0
    #allocation2 [shape = 'u8[512]{0}', space=vmem, size = 0x400, scoped, tag = 'input window, operand 2, single buffered']
    #allocation3 [shape = 's32[2]{0}', space=sflag, size = 0x8, scoped, tag = 'scoped memory for model_forward.5']
    %8 = vsyncpa [#allocation3], 0
    loop: start=0, step=1, limit=4
    $region2: #{model_forward.5} parent=1 // loop_pre_header
      _
    $region3: #{model_forward.5} parent=1 // loop_header
      %s10 = sphi 0, %s14
      %p11 = scmp.ge.s32.totalorder %s10, 4
      %s17 = sphi 0, %s29
      %s18 = sphi 0, %s25
      %s19 = sphi 0, %s17
      %s20 = sphi 0, %s18
      %s21 = sphi 0, %s19
      %s22 = sphi 0, %s20
      %s32 = sphi 0, %s34
      %s35 = sphi 0, %s32
      %s36 = sphi 0, %s35
      %s52 = sphi 0, %s36
      %s58 = sphi 0, %s60
      %s61 = sphi 0, %s58
      %s62 = sphi 0, %s61
      %s78 = sphi 0, %s62
      %s84 = sphi 0, %s86
      %s87 = sphi 0, %s84
      %s88 = sphi 0, %s87
      %s104 = sphi 0, %s88
      %s112 = sphi 0, %s114
      %s115 = sphi 0, %s112
      %s116 = sphi 0, %s115
      %s132 = sphi 0, %s116
    $region4: #{model_forward.5} parent=1 // loop_header_branch
      %13 = sbr.rel (%p11) target = $region8
    $region5: #{model_forward.5} parent=1 // loop_body
      %s15 = ssub.s32 %s10, 1
      %s16 = ssub.s32 %s10, 2
      %s23 = sadd.s32 1, %s18
      %p24 = scmp.ge.s32.totalorder %s23, 1
      %s25 = scalar_select %p24, 0, %s23
      %s26 = sadd.s32 1, %s17
      %s27 = scalar_select %p24, %s26, %s17
      %p28 = scmp.ge.s32.totalorder %s27, 2
      %s29 = scalar_select %p28, 0, %s27
      %s30 = ssub.s32 %s17, %s29
      %p31 = scmp.eq.s32.totalorder %s30, 0
      %s33 = sadd.s32 %s32, 1
      %s34 = scalar_select %p31, %s32, %s33
      %p37 = pneg %p31
      %p38 = scmp.eq.s32.totalorder %s10, 1
      %p39 = por %p37, %p38
      %p40 = scmp.ne.s32.totalorder %s32, %s35
      %p41 = scmp.eq.s32.totalorder %s10, 0
      %p42 = por %p40, %p41
      %p43 = scmp.ne.s32.totalorder %s32, %s35
      %p44 = scmp.eq.s32.totalorder %s15, 1
      %p45 = por %p43, %p44
      %p46 = scmp.ne.s32.totalorder %s35, %s36
      %p47 = scmp.eq.s32.totalorder %s15, 0
      %p48 = por %p46, %p47
      %p49 = scmp.ne.s32.totalorder %s35, %s36
      %p50 = scmp.eq.s32.totalorder %s16, 1
      %p51 = por %p49, %p50
      %p53 = scmp.ne.s32.totalorder %s36, %s52
      %p54 = scmp.eq.s32.totalorder %s16, 0
      %p55 = por %p53, %p54
      %s56 = ssub.s32 %s18, %s25
      %p57 = scmp.eq.s32.totalorder %s56, 0
      %s59 = sadd.s32 %s58, 1
      %s60 = scalar_select %p57, %s58, %s59
      %p63 = pneg %p57
      %p64 = scmp.eq.s32.totalorder %s10, 1
      %p65 = por %p63, %p64
      %p66 = scmp.ne.s32.totalorder %s58, %s61
      %p67 = scmp.eq.s32.totalorder %s10, 0
      %p68 = por %p66, %p67
      %p69 = scmp.ne.s32.totalorder %s58, %s61
      %p70 = scmp.eq.s32.totalorder %s15, 1
      %p71 = por %p69, %p70
      %p72 = scmp.ne.s32.totalorder %s61, %s62
      %p73 = scmp.eq.s32.totalorder %s15, 0
      %p74 = por %p72, %p73
      %p75 = scmp.ne.s32.totalorder %s61, %s62
      %p76 = scmp.eq.s32.totalorder %s16, 1
      %p77 = por %p75, %p76
      %p79 = scmp.ne.s32.totalorder %s62, %s78
      %p80 = scmp.eq.s32.totalorder %s16, 0
      %p81 = por %p79, %p80
      %s82 = ssub.s32 %s18, %s25
      %p83 = scmp.eq.s32.totalorder %s82, 0
      %s85 = sadd.s32 %s84, 1
      %s86 = scalar_select %p83, %s84, %s85
      %p89 = pneg %p83
      %p90 = scmp.eq.s32.totalorder %s10, 1
      %p91 = por %p89, %p90
      %p92 = scmp.ne.s32.totalorder %s84, %s87
      %p93 = scmp.eq.s32.totalorder %s10, 0
      %p94 = por %p92, %p93
      %p95 = scmp.ne.s32.totalorder %s84, %s87
      %p96 = scmp.eq.s32.totalorder %s15, 1
      %p97 = por %p95, %p96
      %p98 = scmp.ne.s32.totalorder %s87, %s88
      %p99 = scmp.eq.s32.totalorder %s15, 0
      %p100 = por %p98, %p99
      %p101 = scmp.ne.s32.totalorder %s87, %s88
      %p102 = scmp.eq.s32.totalorder %s16, 1
      %p103 = por %p101, %p102
      %p105 = scmp.ne.s32.totalorder %s88, %s104
      %p106 = scmp.eq.s32.totalorder %s16, 0
      %p107 = por %p105, %p106
      %s108 = ssub.s32 %s17, %s29
      %s109 = ssub.s32 %s18, %s25
      %s110 = sor.u32 %s108, %s109
      %p111 = scmp.eq.s32.totalorder %s110, 0
      %s113 = sadd.s32 %s112, 1
      %s114 = scalar_select %p111, %s112, %s113
      %p117 = pneg %p111
      %p118 = scmp.eq.s32.totalorder %s10, 1
      %p119 = por %p117, %p118
      %p120 = scmp.ne.s32.totalorder %s112, %s115
      %p121 = scmp.eq.s32.totalorder %s10, 0
      %p122 = por %p120, %p121
      %p123 = scmp.ne.s32.totalorder %s112, %s115
      %p124 = scmp.eq.s32.totalorder %s15, 1
      %p125 = por %p123, %p124
      %p126 = scmp.ne.s32.totalorder %s115, %s116
      %p127 = scmp.eq.s32.totalorder %s15, 0
      %p128 = por %p126, %p127
      %p129 = scmp.ne.s32.totalorder %s115, %s116
      %p130 = scmp.eq.s32.totalorder %s16, 1
      %p131 = por %p129, %p130
      %p133 = scmp.ne.s32.totalorder %s116, %s132
      %p134 = scmp.eq.s32.totalorder %s16, 0
      %p135 = por %p133, %p134
      %p136 = scmp.le.s32.totalorder 1, %s10
      %p137 = scmp.lt.s32.totalorder %s10, 3
      %p138 = pnand %p136, %p137
      %p139 = pneg %p138
      // Predicated region
      $region9: #{model_forward.5} parent=5 // pred_check
        _
      $region10: #{model_forward.5} parent=5 // pred_check_branch
        %141 = sbr.rel (%p138) target = $region12
      $region11: #{model_forward.5} parent=5 // pred_region
        %s142 = ssub.s32 %s10, 1
        // Predicated region
        $region13: #{model_forward.5} parent=11 // pred_check
          %p143 = pneg %p74
        $region14: #{model_forward.5} parent=11 // pred_check_branch
          %145 = sbr.rel (%p143) target = $region16
        $region15: #{model_forward.5} parent=11 // pred_region
          %p146 = scmp.lt.s32.totalorder %s20, 0
          %s147 = scalar_select %p146, %s20, 0
          %s148 = smul.addr %s147, 4
          %s149 = scalar_lea.vmem %s1, %s148
        $region16: #{model_forward.5} parent=11 // pred_fallthru
          _
        // Predicated region
        $region17: #{model_forward.5} parent=11 // pred_check
          %p150 = pneg %p100
        $region18: #{model_forward.5} parent=11 // pred_check_branch
          %152 = sbr.rel (%p150) target = $region20
        $region19: #{model_forward.5} parent=11 // pred_region
          %s154 = ssub.s32 16, 16
          %155 = vsyncadd [#allocation3], %s154
          %s156 = smul.addr %s20, 16
          %s157 = scalar_lea.hbm %s2, %s156
          %s159 = sshll.u32 [#allocation2], 4
          %s160 = int_to_ptr.vmem [resolvable:$true] %s159
          %162 = dma.hbm_to_vmem [thread:$0]  %s157, 16, %s160, [#allocation3]
        $region20: #{model_forward.5} parent=11 // pred_fallthru
          _
      $region12: #{model_forward.5} parent=5 // pred_fallthru
        _
      %p163 = scmp.lt.s32.totalorder %s10, 2
      // Predicated region
      $region21: #{model_forward.5} parent=5 // pred_check
        %p164 = pneg %p163
      $region22: #{model_forward.5} parent=5 // pred_check_branch
        %166 = sbr.rel (%p164) target = $region24
      $region23: #{model_forward.5} parent=5 // pred_region
        // Predicated region
        $region25: #{model_forward.5} parent=23 // pred_check
          %p167 = pneg %p42
        $region26: #{model_forward.5} parent=23 // pred_check_branch
          %169 = sbr.rel (%p167) target = $region28
        $region27: #{model_forward.5} parent=23 // pred_region
          %s170 = smul.u32 98, %s17
          %p171 = scmp.lt.s32.totalorder %s170, 195
          %s172 = scalar_select %p171, %s170, 195
          %s173 = smul.addr %s172, 4
          %s174 = scalar_lea.vmem %s0, %s173
          %s175 = smul.u32 98, %s17
        $region28: #{model_forward.5} parent=23 // pred_fallthru
          _
      $region24: #{model_forward.5} parent=5 // pred_fallthru
        _
      %p176 = scmp.le.s32.totalorder 1, %s10
      %p177 = scmp.lt.s32.totalorder %s10, 3
      %p178 = pnand %p176, %p177
      %p179 = pneg %p178
      // Predicated region
      $region29: #{model_forward.5} parent=5 // pred_check
        _
      $region30: #{model_forward.5} parent=5 // pred_check_branch
        %181 = sbr.rel (%p178) target = $region32
      $region31: #{model_forward.5} parent=5 // pred_region
        %s182 = ssub.s32 %s10, 1
        // Predicated region
        $region33: #{model_forward.5} parent=31 // pred_check
          %p183 = pneg %p100
        $region34: #{model_forward.5} parent=31 // pred_check_branch
          %185 = sbr.rel (%p183) target = $region36
        $region35: #{model_forward.5} parent=31 // pred_region
          %186 = dma.done [#allocation3], 16
        $region36: #{model_forward.5} parent=31 // pred_fallthru
          _
        %s187 = smul.u32 98, %s19
        %p188 = scmp.lt.s32.totalorder %s187, 195
        %s189 = scalar_select %p188, %s187, 195
        %s190 = smul.addr %s189, 4
        %s191 = scalar_lea.vmem %s0, %s190
        %p192 = pneg %p48
        %p193 = pneg %p45
        %p194 = scmp.lt.s32.totalorder %s20, 0
        %s195 = scalar_select %p194, %s20, 0
        %s196 = smul.addr %s195, 4
        %s197 = scalar_lea.vmem %s1, %s196
        %p198 = pneg %p74
        %p199 = pneg %p71
        %p200 = pneg %p100
        %p201 = pneg %p97
        %p202 = pneg %p128
        %p203 = pneg %p125
        %s204 = smul.u32 98, %s19
        %p205 = scmp.lt.s32.totalorder %s204, 195
        %s206 = scalar_select %p205, %s204, 195
        %p207 = scmp.lt.s32.totalorder %s20, 0
        %s208 = scalar_select %p207, %s20, 0
        %s209 = sadd.s32 %s208, %s206
        %s210 = smul.addr %s209, 8
        %s211 = scalar_lea.vmem %s3, %s210
        %s212 = smul.u32 98, %s19
        %p213 = scmp.lt.s32.totalorder %s212, 195
        %s214 = scalar_select %p213, %s212, 195
        %s215 = smul.addr %s214, 4
        %s216 = scalar_lea.vmem %s0, %s215
        %s217 = smul.u32 98, %s19
        %p218 = scmp.lt.s32.totalorder %s20, 0
        %s219 = scalar_select %p218, %s20, 0
        %s220 = smul.addr %s219, 4
        %s221 = scalar_lea.vmem %s1, %s220
        %s222 = smul.u32 98, %s19
        %p223 = scmp.lt.s32.totalorder %s222, 195
        %s224 = scalar_select %p223, %s222, 195
        %p225 = scmp.lt.s32.totalorder %s20, 0
        %s226 = scalar_select %p225, %s20, 0
        %s227 = sadd.s32 %s226, %s224
        %s228 = smul.addr %s227, 8
        %s229 = scalar_lea.vmem %s3, %s228
        %s230 = smul.u32 98, %s19
        %v232 = vld [vmem:[%s216] sm:$0xf]
        %v233 = vld [vmem:[%s216 + $0x4] sm:$0xf]
        %v234 = vld [vmem:[%s216 + $0x8] sm:$0xf]
        %v235 = vld [vmem:[%s216 + $0xc] sm:$0xf]
        %v236 = vld [vmem:[%s216 + $0x10] sm:$0xf]
        %v237 = vld [vmem:[%s216 + $0x14] sm:$0xf]
        %v238 = vld [vmem:[%s216 + $0x18] sm:$0xf]
        %v239 = vld [vmem:[%s216 + $0x1c] sm:$0xf]
        %v240 = vld [vmem:[%s216 + $0x20] sm:$0xf]
        %v241 = vld [vmem:[%s216 + $0x24] sm:$0xf]
        %v242 = vld [vmem:[%s216 + $0x28] sm:$0xf]
        %v243 = vld [vmem:[%s216 + $0x2c] sm:$0xf]
        %v244 = vld [vmem:[%s216 + $0x30] sm:$0xf]
        %v245 = vld [vmem:[%s216 + $0x34] sm:$0xf]
        %v246 = vld [vmem:[%s216 + $0x38] sm:$0xf]
        %v247 = vld [vmem:[%s216 + $0x3c] sm:$0xf]
        %v248 = vld [vmem:[%s216 + $0x40] sm:$0xf]
        %v249 = vld [vmem:[%s216 + $0x44] sm:$0xf]
        %v250 = vld [vmem:[%s216 + $0x48] sm:$0xf]
        %v251 = vld [vmem:[%s216 + $0x4c] sm:$0xf]
        %v252 = vld [vmem:[%s216 + $0x50] sm:$0xf]
        %v253 = vld [vmem:[%s216 + $0x54] sm:$0xf]
        %v254 = vld [vmem:[%s216 + $0x58] sm:$0xf]
        %v255 = vld [vmem:[%s216 + $0x5c] sm:$0xf]
        %v256 = vld [vmem:[%s216 + $0x60] sm:$0xf]
        %v257 = vld [vmem:[%s216 + $0x64] sm:$0xf]
        %v258 = vld [vmem:[%s216 + $0x68] sm:$0xf]
        %v259 = vld [vmem:[%s216 + $0x6c] sm:$0xf]
        %v260 = vld [vmem:[%s216 + $0x70] sm:$0xf]
        %v261 = vld [vmem:[%s216 + $0x74] sm:$0xf]
        %v262 = vld [vmem:[%s216 + $0x78] sm:$0xf]
        %v263 = vld [vmem:[%s216 + $0x7c] sm:$0xf]
        %v264 = vld [vmem:[%s216 + $0x80] sm:$0xf]
        %v265 = vld [vmem:[%s216 + $0x84] sm:$0xf]
        %v266 = vld [vmem:[%s216 + $0x88] sm:$0xf]
        %v267 = vld [vmem:[%s216 + $0x8c] sm:$0xf]
        %v268 = vld [vmem:[%s216 + $0x90] sm:$0xf]
        %v269 = vld [vmem:[%s216 + $0x94] sm:$0xf]
        %v270 = vld [vmem:[%s216 + $0x98] sm:$0xf]
        %v271 = vld [vmem:[%s216 + $0x9c] sm:$0xf]
        %v272 = vld [vmem:[%s216 + $0xa0] sm:$0xf]
        %v273 = vld [vmem:[%s216 + $0xa4] sm:$0xf]
        %v274 = vld [vmem:[%s216 + $0xa8] sm:$0xf]
        %v275 = vld [vmem:[%s216 + $0xac] sm:$0xf]
        %v276 = vld [vmem:[%s216 + $0xb0] sm:$0xf]
        %v277 = vld [vmem:[%s216 + $0xb4] sm:$0xf]
        %v278 = vld [vmem:[%s216 + $0xb8] sm:$0xf]
        %v279 = vld [vmem:[%s216 + $0xbc] sm:$0xf]
        %v280 = vld [vmem:[%s216 + $0xc0] sm:$0xf]
        %v281 = vld [vmem:[%s216 + $0xc4] sm:$0xf]
        %v282 = vld [vmem:[%s216 + $0xc8] sm:$0xf]
        %v283 = vld [vmem:[%s216 + $0xcc] sm:$0xf]
        %v284 = vld [vmem:[%s216 + $0xd0] sm:$0xf]
        %v285 = vld [vmem:[%s216 + $0xd4] sm:$0xf]
        %v286 = vld [vmem:[%s216 + $0xd8] sm:$0xf]
        %v287 = vld [vmem:[%s216 + $0xdc] sm:$0xf]
        %v288 = vld [vmem:[%s216 + $0xe0] sm:$0xf]
        %v289 = vld [vmem:[%s216 + $0xe4] sm:$0xf]
        %v290 = vld [vmem:[%s216 + $0xe8] sm:$0xf]
        %v291 = vld [vmem:[%s216 + $0xec] sm:$0xf]
        %v292 = vld [vmem:[%s216 + $0xf0] sm:$0xf]
        %v293 = vld [vmem:[%s216 + $0xf4] sm:$0xf]
        %v294 = vld [vmem:[%s216 + $0xf8] sm:$0xf]
        %v295 = vld [vmem:[%s216 + $0xfc] sm:$0xf]
        %v296 = vld [vmem:[%s216 + $0x100] sm:$0xf]
        %v297 = vld [vmem:[%s216 + $0x104] sm:$0xf]
        %v298 = vld [vmem:[%s216 + $0x108] sm:$0xf]
        %v299 = vld [vmem:[%s216 + $0x10c] sm:$0xf]
        %v300 = vld [vmem:[%s216 + $0x110] sm:$0xf]
        %v301 = vld [vmem:[%s216 + $0x114] sm:$0xf]
        %v302 = vld [vmem:[%s216 + $0x118] sm:$0xf]
        %v303 = vld [vmem:[%s216 + $0x11c] sm:$0xf]
        %v304 = vld [vmem:[%s216 + $0x120] sm:$0xf]
        %v305 = vld [vmem:[%s216 + $0x124] sm:$0xf]
        %v306 = vld [vmem:[%s216 + $0x128] sm:$0xf]
        %v307 = vld [vmem:[%s216 + $0x12c] sm:$0xf]
        %v308 = vld [vmem:[%s216 + $0x130] sm:$0xf]
        %v309 = vld [vmem:[%s216 + $0x134] sm:$0xf]
        %v310 = vld [vmem:[%s216 + $0x138] sm:$0xf]
        %v311 = vld [vmem:[%s216 + $0x13c] sm:$0xf]
        %v312 = vld [vmem:[%s216 + $0x140] sm:$0xf]
        %v313 = vld [vmem:[%s216 + $0x144] sm:$0xf]
        %v314 = vld [vmem:[%s216 + $0x148] sm:$0xf]
        %v315 = vld [vmem:[%s216 + $0x14c] sm:$0xf]
        %v316 = vld [vmem:[%s216 + $0x150] sm:$0xf]
        %v317 = vld [vmem:[%s216 + $0x154] sm:$0xf]
        %v318 = vld [vmem:[%s216 + $0x158] sm:$0xf]
        %v319 = vld [vmem:[%s216 + $0x15c] sm:$0xf]
        %v320 = vld [vmem:[%s216 + $0x160] sm:$0xf]
        %v321 = vld [vmem:[%s216 + $0x164] sm:$0xf]
        %v322 = vld [vmem:[%s216 + $0x168] sm:$0xf]
        %v323 = vld [vmem:[%s216 + $0x16c] sm:$0xf]
        %v324 = vld [vmem:[%s216 + $0x170] sm:$0xf]
        %v325 = vld [vmem:[%s216 + $0x174] sm:$0xf]
        %v326 = vld [vmem:[%s216 + $0x178] sm:$0xf]
        %v327 = vld [vmem:[%s216 + $0x17c] sm:$0xf]
        %v328 = vld [vmem:[%s216 + $0x180] sm:$0xf]
        %v329 = vld [vmem:[%s216 + $0x184] sm:$0xf]
        %v330 = vld [vmem:[%s221] sm:$0xf]
        %v331 = vld [vmem:[%s221 + $0x4] sm:$0x1]
        %v332 = vld [vmem:[#allocation2] sm:$0x1]
        %v334 = vlaneseq
        %v335 = vshrl.u32 %v334, 7
        %v336 = vsub.s32 0, %v335
        %v337 = vrot.slane %v332, %v336
        %v437 = vunpack.c.l.b16 %v232
        %v438 = vunpack.c.l.b16 %v233
        %v439 = vunpack.c.l.b16 %v234
        %v440 = vunpack.c.l.b16 %v235
        %v441 = vunpack.c.l.b16 %v236
        %v442 = vunpack.c.l.b16 %v237
        %v443 = vunpack.c.l.b16 %v238
        %v444 = vunpack.c.l.b16 %v239
        %v445 = vunpack.c.l.b16 %v240
        %v446 = vunpack.c.l.b16 %v241
        %v447 = vunpack.c.l.b16 %v242
        %v448 = vunpack.c.l.b16 %v243
        %v449 = vunpack.c.l.b16 %v244
        %v450 = vunpack.c.l.b16 %v245
        %v451 = vunpack.c.l.b16 %v246
        %v452 = vunpack.c.l.b16 %v247
        %v453 = vunpack.c.l.b16 %v248
        %v454 = vunpack.c.l.b16 %v249
        %v455 = vunpack.c.l.b16 %v250
        %v456 = vunpack.c.l.b16 %v251
        %v457 = vunpack.c.l.b16 %v252
        %v458 = vunpack.c.l.b16 %v253
        %v459 = vunpack.c.l.b16 %v254
        %v460 = vunpack.c.l.b16 %v255
        %v461 = vunpack.c.l.b16 %v256
        %v462 = vunpack.c.l.b16 %v257
        %v463 = vunpack.c.l.b16 %v258
        %v464 = vunpack.c.l.b16 %v259
        %v465 = vunpack.c.l.b16 %v260
        %v466 = vunpack.c.l.b16 %v261
        %v467 = vunpack.c.l.b16 %v262
        %v468 = vunpack.c.l.b16 %v263
        %v469 = vunpack.c.l.b16 %v264
        %v470 = vunpack.c.l.b16 %v265
        %v471 = vunpack.c.l.b16 %v266
        %v472 = vunpack.c.l.b16 %v267
        %v473 = vunpack.c.l.b16 %v268
        %v474 = vunpack.c.l.b16 %v269
        %v475 = vunpack.c.l.b16 %v270
        %v476 = vunpack.c.l.b16 %v271
        %v477 = vunpack.c.l.b16 %v272
        %v478 = vunpack.c.l.b16 %v273
        %v479 = vunpack.c.l.b16 %v274
        %v480 = vunpack.c.l.b16 %v275
        %v481 = vunpack.c.l.b16 %v276
        %v482 = vunpack.c.l.b16 %v277
        %v483 = vunpack.c.l.b16 %v278
        %v484 = vunpack.c.l.b16 %v279
        %v485 = vunpack.c.l.b16 %v280
        %v486 = vunpack.c.l.b16 %v281
        %v487 = vunpack.c.l.b16 %v282
        %v488 = vunpack.c.l.b16 %v283
        %v489 = vunpack.c.l.b16 %v284
        %v490 = vunpack.c.l.b16 %v285
        %v491 = vunpack.c.l.b16 %v286
        %v492 = vunpack.c.l.b16 %v287
        %v493 = vunpack.c.l.b16 %v288
        %v494 = vunpack.c.l.b16 %v289
        %v495 = vunpack.c.l.b16 %v290
        %v496 = vunpack.c.l.b16 %v291
        %v497 = vunpack.c.l.b16 %v292
        %v498 = vunpack.c.l.b16 %v293
        %v499 = vunpack.c.l.b16 %v294
        %v500 = vunpack.c.l.b16 %v295
        %v501 = vunpack.c.l.b16 %v296
        %v502 = vunpack.c.l.b16 %v297
        %v503 = vunpack.c.l.b16 %v298
        %v504 = vunpack.c.l.b16 %v299
        %v505 = vunpack.c.l.b16 %v300
        %v506 = vunpack.c.l.b16 %v301
        %v507 = vunpack.c.l.b16 %v302
        %v508 = vunpack.c.l.b16 %v303
        %v509 = vunpack.c.l.b16 %v304
        %v510 = vunpack.c.l.b16 %v305
        %v511 = vunpack.c.l.b16 %v306
        %v512 = vunpack.c.l.b16 %v307
        %v513 = vunpack.c.l.b16 %v308
        %v514 = vunpack.c.l.b16 %v309
        %v515 = vunpack.c.l.b16 %v310
        %v516 = vunpack.c.l.b16 %v311
        %v517 = vunpack.c.l.b16 %v312
        %v518 = vunpack.c.l.b16 %v313
        %v519 = vunpack.c.l.b16 %v314
        %v520 = vunpack.c.l.b16 %v315
        %v521 = vunpack.c.l.b16 %v316
        %v522 = vunpack.c.l.b16 %v317
        %v523 = vunpack.c.l.b16 %v318
        %v524 = vunpack.c.l.b16 %v319
        %v525 = vunpack.c.l.b16 %v320
        %v526 = vunpack.c.l.b16 %v321
        %v527 = vunpack.c.l.b16 %v322
        %v528 = vunpack.c.l.b16 %v323
        %v529 = vunpack.c.l.b16 %v324
        %v530 = vunpack.c.l.b16 %v325
        %v531 = vunpack.c.l.b16 %v326
        %v532 = vunpack.c.l.b16 %v327
        %v533 = vunpack.c.l.b16 %v328
        %v534 = vunpack.c.l.b16 %v329
        %v535 = vpack.c.b16 %v438, %v437
        %v536 = vpack.c.b16 %v440, %v439
        %v537 = vpack.c.b16 %v442, %v441
        %v538 = vpack.c.b16 %v444, %v443
        %v539 = vpack.c.b16 %v446, %v445
        %v540 = vpack.c.b16 %v448, %v447
        %v541 = vpack.c.b16 %v450, %v449
        %v542 = vpack.c.b16 %v452, %v451
        %v543 = vpack.c.b16 %v454, %v453
        %v544 = vpack.c.b16 %v456, %v455
        %v545 = vpack.c.b16 %v458, %v457
        %v546 = vpack.c.b16 %v460, %v459
        %v547 = vpack.c.b16 %v462, %v461
        %v548 = vpack.c.b16 %v464, %v463
        %v549 = vpack.c.b16 %v466, %v465
        %v550 = vpack.c.b16 %v468, %v467
        %v551 = vpack.c.b16 %v470, %v469
        %v552 = vpack.c.b16 %v472, %v471
        %v553 = vpack.c.b16 %v474, %v473
        %v554 = vpack.c.b16 %v476, %v475
        %v555 = vpack.c.b16 %v478, %v477
        %v556 = vpack.c.b16 %v480, %v479
        %v557 = vpack.c.b16 %v482, %v481
        %v558 = vpack.c.b16 %v484, %v483
        %v559 = vpack.c.b16 %v486, %v485
        %v560 = vpack.c.b16 %v488, %v487
        %v561 = vpack.c.b16 %v490, %v489
        %v562 = vpack.c.b16 %v492, %v491
        %v563 = vpack.c.b16 %v494, %v493
        %v564 = vpack.c.b16 %v496, %v495
        %v565 = vpack.c.b16 %v498, %v497
        %v566 = vpack.c.b16 %v500, %v499
        %v567 = vpack.c.b16 %v502, %v501
        %v568 = vpack.c.b16 %v504, %v503
        %v569 = vpack.c.b16 %v506, %v505
        %v570 = vpack.c.b16 %v508, %v507
        %v571 = vpack.c.b16 %v510, %v509
        %v572 = vpack.c.b16 %v512, %v511
        %v573 = vpack.c.b16 %v514, %v513
        %v574 = vpack.c.b16 %v516, %v515
        %v575 = vpack.c.b16 %v518, %v517
        %v576 = vpack.c.b16 %v520, %v519
        %v577 = vpack.c.b16 %v522, %v521
        %v578 = vpack.c.b16 %v524, %v523
        %v579 = vpack.c.b16 %v526, %v525
        %v580 = vpack.c.b16 %v528, %v527
        %v581 = vpack.c.b16 %v530, %v529
        %v582 = vpack.c.b16 %v532, %v531
        %v583 = vpack.c.b16 %v534, %v533
        %v586 = vunpack.c.l.b16 %v330
        %v587 = vunpack.c.l.b16 %v331
        %v588 = vpack.c.b16 %v587, %v586
        %vm589 = vcmask 72704
        %v591 = vsel %vm589, %v535, 0
        %v594 = vsel %vm589, %v536, 0
        %v597 = vsel %vm589, %v537, 0
        %v600 = vsel %vm589, %v538, 0
        %v603 = vsel %vm589, %v539, 0
        %v606 = vsel %vm589, %v540, 0
        %v609 = vsel %vm589, %v541, 0
        %v612 = vsel %vm589, %v542, 0
        %v615 = vsel %vm589, %v543, 0
        %v618 = vsel %vm589, %v544, 0
        %v621 = vsel %vm589, %v545, 0
        %v624 = vsel %vm589, %v546, 0
        %v627 = vsel %vm589, %v547, 0
        %v630 = vsel %vm589, %v548, 0
        %v633 = vsel %vm589, %v549, 0
        %v636 = vsel %vm589, %v550, 0
        %v639 = vsel %vm589, %v551, 0
        %v642 = vsel %vm589, %v552, 0
        %v645 = vsel %vm589, %v553, 0
        %v648 = vsel %vm589, %v554, 0
        %v651 = vsel %vm589, %v555, 0
        %v654 = vsel %vm589, %v556, 0
        %v657 = vsel %vm589, %v557, 0
        %v660 = vsel %vm589, %v558, 0
        %v663 = vsel %vm589, %v559, 0
        %v666 = vsel %vm589, %v560, 0
        %v669 = vsel %vm589, %v561, 0
        %v672 = vsel %vm589, %v562, 0
        %v675 = vsel %vm589, %v563, 0
        %v678 = vsel %vm589, %v564, 0
        %v681 = vsel %vm589, %v565, 0
        %v684 = vsel %vm589, %v566, 0
        %v687 = vsel %vm589, %v567, 0
        %v690 = vsel %vm589, %v568, 0
        %v693 = vsel %vm589, %v569, 0
        %v696 = vsel %vm589, %v570, 0
        %v699 = vsel %vm589, %v571, 0
        %v702 = vsel %vm589, %v572, 0
        %v705 = vsel %vm589, %v573, 0
        %v708 = vsel %vm589, %v574, 0
        %v711 = vsel %vm589, %v575, 0
        %v714 = vsel %vm589, %v576, 0
        %v717 = vsel %vm589, %v577, 0
        %v720 = vsel %vm589, %v578, 0
        %v723 = vsel %vm589, %v579, 0
        %v726 = vsel %vm589, %v580, 0
        %v729 = vsel %vm589, %v581, 0
        %v732 = vsel %vm589, %v582, 0
        %v735 = vsel %vm589, %v583, 0
        %vm737 = vcmask 1043456
        %vm738 = vcmask 1044480
        %v739 = vsel %vm737, 4294967295, 65535
        %v740 = vsel %vm738, %v739, 0
        %v742 = vand.u32 %v588, %v740
        %744 = vmatprep.subr.bf16.mxu0 0
        %745 = vmatpush1.bf16.msra.mxu0 0
        %746 = vmatprep.subr.bf16.mxu0 0
        %747 = vmatpush1.bf16.msra.mxu0 0
        %748 = vmatprep.subr.bf16.mxu0 0
        %749 = vmatpush1.bf16.msra.mxu0 0
        %750 = vmatprep.subr.bf16.mxu0 0
        %751 = vmatpush1.bf16.msra.mxu0 0
        %752 = vmatprep.subr.bf16.mxu0 0
        %753 = vmatpush1.bf16.msra.mxu0 0
        %754 = vmatprep.subr.bf16.mxu0 0
        %755 = vmatpush1.bf16.msra.mxu0 0
        %756 = vmatprep.subr.bf16.mxu0 0
        %757 = vmatpush1.bf16.msra.mxu0 0
        %758 = vmatprep.subr.bf16.mxu0 0
        %759 = vmatpush1.bf16.msra.mxu0 %v742
        %760 = vmatprep.subr.bf16.mxu0 0
        %761 = vmatpush2.bf16.msra.mxu0 0
        %762 = vmatprep.subr.bf16.mxu0 0
        %763 = vmatpush2.bf16.msra.mxu0 0
        %764 = vmatprep.subr.bf16.mxu0 0
        %765 = vmatpush2.bf16.msra.mxu0 0
        %766 = vmatprep.subr.bf16.mxu0 0
        %767 = vmatpush2.bf16.msra.mxu0 0
        %768 = vmatprep.subr.bf16.mxu0 0
        %769 = vmatpush2.bf16.msra.mxu0 0
        %770 = vmatprep.subr.bf16.mxu0 0
        %771 = vmatpush2.bf16.msra.mxu0 0
        %772 = vmatprep.subr.bf16.mxu0 0
        %773 = vmatpush2.bf16.msra.mxu0 0
        %774 = vmatprep.subr.bf16.mxu0 0
        %775 = vmatpush2.bf16.msra.mxu0 0
        %776 = vmatprep.mubr.bf16.mxu0 0
        %777 = vmatmul.mubr.bf16.gmra.mxu0 %v591
        %v778 = vpop.f32.mrf.mxu0
        %v779 = vadd.f32 %v337, %v778
        %v780 = vpop.f32.mrf.mxu0
        %v781 = vpop.f32.mrf.mxu0
        %v782 = vadd.f32 %v337, %v781
        %v783 = vpop.f32.mrf.mxu0
        %784 = vmatprep.mubr.bf16.mxu0 0
        %785 = vmatmul.mubr.bf16.gmra.mxu0 %v594
        %v786 = vpop.f32.mrf.mxu0
        %v787 = vadd.f32 %v337, %v786
        %v788 = vpop.f32.mrf.mxu0
        %v789 = vpop.f32.mrf.mxu0
        %v790 = vadd.f32 %v337, %v789
        %v791 = vpop.f32.mrf.mxu0
        %792 = vmatprep.mubr.bf16.mxu0 0
        %793 = vmatmul.mubr.bf16.gmra.mxu0 %v597
        %v794 = vpop.f32.mrf.mxu0
        %v795 = vadd.f32 %v337, %v794
        %v796 = vpop.f32.mrf.mxu0
        %v797 = vpop.f32.mrf.mxu0
        %v798 = vadd.f32 %v337, %v797
        %v799 = vpop.f32.mrf.mxu0
        %800 = vmatprep.mubr.bf16.mxu0 0
        %801 = vmatmul.mubr.bf16.gmra.mxu0 %v600
        %v802 = vpop.f32.mrf.mxu0
        %v803 = vadd.f32 %v337, %v802
        %v804 = vpop.f32.mrf.mxu0
        %v805 = vpop.f32.mrf.mxu0
        %v806 = vadd.f32 %v337, %v805
        %v807 = vpop.f32.mrf.mxu0
        %808 = vmatprep.mubr.bf16.mxu0 0
        %809 = vmatmul.mubr.bf16.gmra.mxu0 %v603
        %v810 = vpop.f32.mrf.mxu0
        %v811 = vadd.f32 %v337, %v810
        %v812 = vpop.f32.mrf.mxu0
        %v813 = vpop.f32.mrf.mxu0
        %v814 = vadd.f32 %v337, %v813
        %v815 = vpop.f32.mrf.mxu0
        %816 = vmatprep.mubr.bf16.mxu0 0
        %817 = vmatmul.mubr.bf16.gmra.mxu0 %v606
        %v818 = vpop.f32.mrf.mxu0
        %v819 = vadd.f32 %v337, %v818
        %v820 = vpop.f32.mrf.mxu0
        %v821 = vpop.f32.mrf.mxu0
        %v822 = vadd.f32 %v337, %v821
        %v823 = vpop.f32.mrf.mxu0
        %824 = vmatprep.mubr.bf16.mxu0 0
        %825 = vmatmul.mubr.bf16.gmra.mxu0 %v609
        %v826 = vpop.f32.mrf.mxu0
        %v827 = vadd.f32 %v337, %v826
        %v828 = vpop.f32.mrf.mxu0
        %v829 = vpop.f32.mrf.mxu0
        %v830 = vadd.f32 %v337, %v829
        %v831 = vpop.f32.mrf.mxu0
        %832 = vmatprep.mubr.bf16.mxu0 0
        %833 = vmatmul.mubr.bf16.gmra.mxu0 %v612
        %v834 = vpop.f32.mrf.mxu0
        %v835 = vadd.f32 %v337, %v834
        %v836 = vpop.f32.mrf.mxu0
        %v837 = vpop.f32.mrf.mxu0
        %v838 = vadd.f32 %v337, %v837
        %v839 = vpop.f32.mrf.mxu0
        %840 = vmatprep.mubr.bf16.mxu0 0
        %841 = vmatmul.mubr.bf16.gmra.mxu0 %v615
        %v842 = vpop.f32.mrf.mxu0
        %v843 = vadd.f32 %v337, %v842
        %v844 = vpop.f32.mrf.mxu0
        %v845 = vpop.f32.mrf.mxu0
        %v846 = vadd.f32 %v337, %v845
        %v847 = vpop.f32.mrf.mxu0
        %848 = vmatprep.mubr.bf16.mxu0 0
        %849 = vmatmul.mubr.bf16.gmra.mxu0 %v618
        %v850 = vpop.f32.mrf.mxu0
        %v851 = vadd.f32 %v337, %v850
        %v852 = vpop.f32.mrf.mxu0
        %v853 = vpop.f32.mrf.mxu0
        %v854 = vadd.f32 %v337, %v853
        %v855 = vpop.f32.mrf.mxu0
        %856 = vmatprep.mubr.bf16.mxu0 0
        %857 = vmatmul.mubr.bf16.gmra.mxu0 %v621
        %v858 = vpop.f32.mrf.mxu0
        %v859 = vadd.f32 %v337, %v858
        %v860 = vpop.f32.mrf.mxu0
        %v861 = vpop.f32.mrf.mxu0
        %v862 = vadd.f32 %v337, %v861
        %v863 = vpop.f32.mrf.mxu0
        %864 = vmatprep.mubr.bf16.mxu0 0
        %865 = vmatmul.mubr.bf16.gmra.mxu0 %v624
        %v866 = vpop.f32.mrf.mxu0
        %v867 = vadd.f32 %v337, %v866
        %v868 = vpop.f32.mrf.mxu0
        %v869 = vpop.f32.mrf.mxu0
        %v870 = vadd.f32 %v337, %v869
        %v871 = vpop.f32.mrf.mxu0
        %872 = vmatprep.mubr.bf16.mxu0 0
        %873 = vmatmul.mubr.bf16.gmra.mxu0 %v627
        %v874 = vpop.f32.mrf.mxu0
        %v875 = vadd.f32 %v337, %v874
        %v876 = vpop.f32.mrf.mxu0
        %v877 = vpop.f32.mrf.mxu0
        %v878 = vadd.f32 %v337, %v877
        %v879 = vpop.f32.mrf.mxu0
        %880 = vmatprep.mubr.bf16.mxu0 0
        %881 = vmatmul.mubr.bf16.gmra.mxu0 %v630
        %v882 = vpop.f32.mrf.mxu0
        %v883 = vadd.f32 %v337, %v882
        %v884 = vpop.f32.mrf.mxu0
        %v885 = vpop.f32.mrf.mxu0
        %v886 = vadd.f32 %v337, %v885
        %v887 = vpop.f32.mrf.mxu0
        %888 = vmatprep.mubr.bf16.mxu0 0
        %889 = vmatmul.mubr.bf16.gmra.mxu0 %v633
        %v890 = vpop.f32.mrf.mxu0
        %v891 = vadd.f32 %v337, %v890
        %v892 = vpop.f32.mrf.mxu0
        %v893 = vpop.f32.mrf.mxu0
        %v894 = vadd.f32 %v337, %v893
        %v895 = vpop.f32.mrf.mxu0
        %896 = vmatprep.mubr.bf16.mxu0 0
        %897 = vmatmul.mubr.bf16.gmra.mxu0 %v636
        %v898 = vpop.f32.mrf.mxu0
        %v899 = vadd.f32 %v337, %v898
        %v900 = vpop.f32.mrf.mxu0
        %v901 = vpop.f32.mrf.mxu0
        %v902 = vadd.f32 %v337, %v901
        %v903 = vpop.f32.mrf.mxu0
        %904 = vmatprep.mubr.bf16.mxu0 0
        %905 = vmatmul.mubr.bf16.gmra.mxu0 %v639
        %v906 = vpop.f32.mrf.mxu0
        %v907 = vadd.f32 %v337, %v906
        %v908 = vpop.f32.mrf.mxu0
        %v909 = vpop.f32.mrf.mxu0
        %v910 = vadd.f32 %v337, %v909
        %v911 = vpop.f32.mrf.mxu0
        %912 = vmatprep.mubr.bf16.mxu0 0
        %913 = vmatmul.mubr.bf16.gmra.mxu0 %v642
        %v914 = vpop.f32.mrf.mxu0
        %v915 = vadd.f32 %v337, %v914
        %v916 = vpop.f32.mrf.mxu0
        %v917 = vpop.f32.mrf.mxu0
        %v918 = vadd.f32 %v337, %v917
        %v919 = vpop.f32.mrf.mxu0
        %920 = vmatprep.mubr.bf16.mxu0 0
        %921 = vmatmul.mubr.bf16.gmra.mxu0 %v645
        %v922 = vpop.f32.mrf.mxu0
        %v923 = vadd.f32 %v337, %v922
        %v924 = vpop.f32.mrf.mxu0
        %v925 = vpop.f32.mrf.mxu0
        %v926 = vadd.f32 %v337, %v925
        %v927 = vpop.f32.mrf.mxu0
        %928 = vmatprep.mubr.bf16.mxu0 0
        %929 = vmatmul.mubr.bf16.gmra.mxu0 %v648
        %v930 = vpop.f32.mrf.mxu0
        %v931 = vadd.f32 %v337, %v930
        %v932 = vpop.f32.mrf.mxu0
        %v933 = vpop.f32.mrf.mxu0
        %v934 = vadd.f32 %v337, %v933
        %v935 = vpop.f32.mrf.mxu0
        %936 = vmatprep.mubr.bf16.mxu0 0
        %937 = vmatmul.mubr.bf16.gmra.mxu0 %v651
        %v938 = vpop.f32.mrf.mxu0
        %v939 = vadd.f32 %v337, %v938
        %v940 = vpop.f32.mrf.mxu0
        %v941 = vpop.f32.mrf.mxu0
        %v942 = vadd.f32 %v337, %v941
        %v943 = vpop.f32.mrf.mxu0
        %944 = vmatprep.mubr.bf16.mxu0 0
        %945 = vmatmul.mubr.bf16.gmra.mxu0 %v654
        %v946 = vpop.f32.mrf.mxu0
        %v947 = vadd.f32 %v337, %v946
        %v948 = vpop.f32.mrf.mxu0
        %v949 = vpop.f32.mrf.mxu0
        %v950 = vadd.f32 %v337, %v949
        %v951 = vpop.f32.mrf.mxu0
        %952 = vmatprep.mubr.bf16.mxu0 0
        %953 = vmatmul.mubr.bf16.gmra.mxu0 %v657
        %v954 = vpop.f32.mrf.mxu0
        %v955 = vadd.f32 %v337, %v954
        %v956 = vpop.f32.mrf.mxu0
        %v957 = vpop.f32.mrf.mxu0
        %v958 = vadd.f32 %v337, %v957
        %v959 = vpop.f32.mrf.mxu0
        %960 = vmatprep.mubr.bf16.mxu0 0
        %961 = vmatmul.mubr.bf16.gmra.mxu0 %v660
        %v962 = vpop.f32.mrf.mxu0
        %v963 = vadd.f32 %v337, %v962
        %v964 = vpop.f32.mrf.mxu0
        %v965 = vpop.f32.mrf.mxu0
        %v966 = vadd.f32 %v337, %v965
        %v967 = vpop.f32.mrf.mxu0
        %968 = vmatprep.mubr.bf16.mxu0 0
        %969 = vmatmul.mubr.bf16.gmra.mxu0 %v663
        %v970 = vpop.f32.mrf.mxu0
        %v971 = vadd.f32 %v337, %v970
        %v972 = vpop.f32.mrf.mxu0
        %v973 = vpop.f32.mrf.mxu0
        %v974 = vadd.f32 %v337, %v973
        %v975 = vpop.f32.mrf.mxu0
        %976 = vmatprep.mubr.bf16.mxu0 0
        %977 = vmatmul.mubr.bf16.gmra.mxu0 %v666
        %v978 = vpop.f32.mrf.mxu0
        %v979 = vadd.f32 %v337, %v978
        %v980 = vpop.f32.mrf.mxu0
        %v981 = vpop.f32.mrf.mxu0
        %v982 = vadd.f32 %v337, %v981
        %v983 = vpop.f32.mrf.mxu0
        %984 = vmatprep.mubr.bf16.mxu0 0
        %985 = vmatmul.mubr.bf16.gmra.mxu0 %v669
        %v986 = vpop.f32.mrf.mxu0
        %v987 = vadd.f32 %v337, %v986
        %v988 = vpop.f32.mrf.mxu0
        %v989 = vpop.f32.mrf.mxu0
        %v990 = vadd.f32 %v337, %v989
        %v991 = vpop.f32.mrf.mxu0
        %992 = vmatprep.mubr.bf16.mxu0 0
        %993 = vmatmul.mubr.bf16.gmra.mxu0 %v672
        %v994 = vpop.f32.mrf.mxu0
        %v995 = vadd.f32 %v337, %v994
        %v996 = vpop.f32.mrf.mxu0
        %v997 = vpop.f32.mrf.mxu0
        %v998 = vadd.f32 %v337, %v997
        %v999 = vpop.f32.mrf.mxu0
        %1000 = vmatprep.mubr.bf16.mxu0 0
        %1001 = vmatmul.mubr.bf16.gmra.mxu0 %v675
        %v1002 = vpop.f32.mrf.mxu0
        %v1003 = vadd.f32 %v337, %v1002
        %v1004 = vpop.f32.mrf.mxu0
        %v1005 = vpop.f32.mrf.mxu0
        %v1006 = vadd.f32 %v337, %v1005
        %v1007 = vpop.f32.mrf.mxu0
        %1008 = vmatprep.mubr.bf16.mxu0 0
        %1009 = vmatmul.mubr.bf16.gmra.mxu0 %v678
        %v1010 = vpop.f32.mrf.mxu0
        %v1011 = vadd.f32 %v337, %v1010
        %v1012 = vpop.f32.mrf.mxu0
        %v1013 = vpop.f32.mrf.mxu0
        %v1014 = vadd.f32 %v337, %v1013
        %v1015 = vpop.f32.mrf.mxu0
        %1016 = vmatprep.mubr.bf16.mxu0 0
        %1017 = vmatmul.mubr.bf16.gmra.mxu0 %v681
        %v1018 = vpop.f32.mrf.mxu0
        %v1019 = vadd.f32 %v337, %v1018
        %v1020 = vpop.f32.mrf.mxu0
        %v1021 = vpop.f32.mrf.mxu0
        %v1022 = vadd.f32 %v337, %v1021
        %v1023 = vpop.f32.mrf.mxu0
        %1024 = vmatprep.mubr.bf16.mxu0 0
        %1025 = vmatmul.mubr.bf16.gmra.mxu0 %v684
        %v1026 = vpop.f32.mrf.mxu0
        %v1027 = vadd.f32 %v337, %v1026
        %v1028 = vpop.f32.mrf.mxu0
        %v1029 = vpop.f32.mrf.mxu0
        %v1030 = vadd.f32 %v337, %v1029
        %v1031 = vpop.f32.mrf.mxu0
        %1032 = vmatprep.mubr.bf16.mxu0 0
        %1033 = vmatmul.mubr.bf16.gmra.mxu0 %v687
        %v1034 = vpop.f32.mrf.mxu0
        %v1035 = vadd.f32 %v337, %v1034
        %v1036 = vpop.f32.mrf.mxu0
        %v1037 = vpop.f32.mrf.mxu0
        %v1038 = vadd.f32 %v337, %v1037
        %v1039 = vpop.f32.mrf.mxu0
        %1040 = vmatprep.mubr.bf16.mxu0 0
        %1041 = vmatmul.mubr.bf16.gmra.mxu0 %v690
        %v1042 = vpop.f32.mrf.mxu0
        %v1043 = vadd.f32 %v337, %v1042
        %v1044 = vpop.f32.mrf.mxu0
        %v1045 = vpop.f32.mrf.mxu0
        %v1046 = vadd.f32 %v337, %v1045
        %v1047 = vpop.f32.mrf.mxu0
        %1048 = vmatprep.mubr.bf16.mxu0 0
        %1049 = vmatmul.mubr.bf16.gmra.mxu0 %v693
        %v1050 = vpop.f32.mrf.mxu0
        %v1051 = vadd.f32 %v337, %v1050
        %v1052 = vpop.f32.mrf.mxu0
        %v1053 = vpop.f32.mrf.mxu0
        %v1054 = vadd.f32 %v337, %v1053
        %v1055 = vpop.f32.mrf.mxu0
        %1056 = vmatprep.mubr.bf16.mxu0 0
        %1057 = vmatmul.mubr.bf16.gmra.mxu0 %v696
        %v1058 = vpop.f32.mrf.mxu0
        %v1059 = vadd.f32 %v337, %v1058
        %v1060 = vpop.f32.mrf.mxu0
        %v1061 = vpop.f32.mrf.mxu0
        %v1062 = vadd.f32 %v337, %v1061
        %v1063 = vpop.f32.mrf.mxu0
        %1064 = vmatprep.mubr.bf16.mxu0 0
        %1065 = vmatmul.mubr.bf16.gmra.mxu0 %v699
        %v1066 = vpop.f32.mrf.mxu0
        %v1067 = vadd.f32 %v337, %v1066
        %v1068 = vpop.f32.mrf.mxu0
        %v1069 = vpop.f32.mrf.mxu0
        %v1070 = vadd.f32 %v337, %v1069
        %v1071 = vpop.f32.mrf.mxu0
        %1072 = vmatprep.mubr.bf16.mxu0 0
        %1073 = vmatmul.mubr.bf16.gmra.mxu0 %v702
        %v1074 = vpop.f32.mrf.mxu0
        %v1075 = vadd.f32 %v337, %v1074
        %v1076 = vpop.f32.mrf.mxu0
        %v1077 = vpop.f32.mrf.mxu0
        %v1078 = vadd.f32 %v337, %v1077
        %v1079 = vpop.f32.mrf.mxu0
        %1080 = vmatprep.mubr.bf16.mxu0 0
        %1081 = vmatmul.mubr.bf16.gmra.mxu0 %v705
        %v1082 = vpop.f32.mrf.mxu0
        %v1083 = vadd.f32 %v337, %v1082
        %v1084 = vpop.f32.mrf.mxu0
        %v1085 = vpop.f32.mrf.mxu0
        %v1086 = vadd.f32 %v337, %v1085
        %v1087 = vpop.f32.mrf.mxu0
        %1088 = vmatprep.mubr.bf16.mxu0 0
        %1089 = vmatmul.mubr.bf16.gmra.mxu0 %v708
        %v1090 = vpop.f32.mrf.mxu0
        %v1091 = vadd.f32 %v337, %v1090
        %v1092 = vpop.f32.mrf.mxu0
        %v1093 = vpop.f32.mrf.mxu0
        %v1094 = vadd.f32 %v337, %v1093
        %v1095 = vpop.f32.mrf.mxu0
        %1096 = vmatprep.mubr.bf16.mxu0 0
        %1097 = vmatmul.mubr.bf16.gmra.mxu0 %v711
        %v1098 = vpop.f32.mrf.mxu0
        %v1099 = vadd.f32 %v337, %v1098
        %v1100 = vpop.f32.mrf.mxu0
        %v1101 = vpop.f32.mrf.mxu0
        %v1102 = vadd.f32 %v337, %v1101
        %v1103 = vpop.f32.mrf.mxu0
        %1104 = vmatprep.mubr.bf16.mxu0 0
        %1105 = vmatmul.mubr.bf16.gmra.mxu0 %v714
        %v1106 = vpop.f32.mrf.mxu0
        %v1107 = vadd.f32 %v337, %v1106
        %v1108 = vpop.f32.mrf.mxu0
        %v1109 = vpop.f32.mrf.mxu0
        %v1110 = vadd.f32 %v337, %v1109
        %v1111 = vpop.f32.mrf.mxu0
        %1112 = vmatprep.mubr.bf16.mxu0 0
        %1113 = vmatmul.mubr.bf16.gmra.mxu0 %v717
        %v1114 = vpop.f32.mrf.mxu0
        %v1115 = vadd.f32 %v337, %v1114
        %v1116 = vpop.f32.mrf.mxu0
        %v1117 = vpop.f32.mrf.mxu0
        %v1118 = vadd.f32 %v337, %v1117
        %v1119 = vpop.f32.mrf.mxu0
        %1120 = vmatprep.mubr.bf16.mxu0 0
        %1121 = vmatmul.mubr.bf16.gmra.mxu0 %v720
        %v1122 = vpop.f32.mrf.mxu0
        %v1123 = vadd.f32 %v337, %v1122
        %v1124 = vpop.f32.mrf.mxu0
        %v1125 = vpop.f32.mrf.mxu0
        %v1126 = vadd.f32 %v337, %v1125
        %v1127 = vpop.f32.mrf.mxu0
        %1128 = vmatprep.mubr.bf16.mxu0 0
        %1129 = vmatmul.mubr.bf16.gmra.mxu0 %v723
        %v1130 = vpop.f32.mrf.mxu0
        %v1131 = vadd.f32 %v337, %v1130
        %v1132 = vpop.f32.mrf.mxu0
        %v1133 = vpop.f32.mrf.mxu0
        %v1134 = vadd.f32 %v337, %v1133
        %v1135 = vpop.f32.mrf.mxu0
        %1136 = vmatprep.mubr.bf16.mxu0 0
        %1137 = vmatmul.mubr.bf16.gmra.mxu0 %v726
        %v1138 = vpop.f32.mrf.mxu0
        %v1139 = vadd.f32 %v337, %v1138
        %v1140 = vpop.f32.mrf.mxu0
        %v1141 = vpop.f32.mrf.mxu0
        %v1142 = vadd.f32 %v337, %v1141
        %v1143 = vpop.f32.mrf.mxu0
        %1144 = vmatprep.mubr.bf16.mxu0 0
        %1145 = vmatmul.mubr.bf16.gmra.mxu0 %v729
        %v1146 = vpop.f32.mrf.mxu0
        %v1147 = vadd.f32 %v337, %v1146
        %v1148 = vpop.f32.mrf.mxu0
        %v1149 = vpop.f32.mrf.mxu0
        %v1150 = vadd.f32 %v337, %v1149
        %v1151 = vpop.f32.mrf.mxu0
        %1152 = vmatprep.mubr.bf16.mxu0 0
        %1153 = vmatmul.mubr.bf16.gmra.mxu0 %v732
        %v1154 = vpop.f32.mrf.mxu0
        %v1155 = vadd.f32 %v337, %v1154
        %v1156 = vpop.f32.mrf.mxu0
        %v1157 = vpop.f32.mrf.mxu0
        %v1158 = vadd.f32 %v337, %v1157
        %v1159 = vpop.f32.mrf.mxu0
        %1160 = vmatprep.mubr.bf16.mxu0 0
        %1161 = vmatmul.mubr.bf16.gmra.mxu0 %v735
        %v1162 = vpop.f32.mrf.mxu0
        %v1163 = vadd.f32 %v337, %v1162
        %v1164 = vpop.f32.mrf.mxu0
        %v1165 = vpop.f32.mrf.mxu0
        %v1166 = vadd.f32 %v337, %v1165
        %v1167 = vpop.f32.mrf.mxu0
        %1168 = vdwg.mxu0
        %v1169 = vmax.f32 %v779, 0.0
        %v1170 = vmax.f32 %v782, 0.0
        %v1171 = vmax.f32 %v787, 0.0
        %v1172 = vmax.f32 %v790, 0.0
        %v1173 = vmax.f32 %v795, 0.0
        %v1174 = vmax.f32 %v798, 0.0
        %v1175 = vmax.f32 %v803, 0.0
        %v1176 = vmax.f32 %v806, 0.0
        %v1177 = vmax.f32 %v811, 0.0
        %v1178 = vmax.f32 %v814, 0.0
        %v1179 = vmax.f32 %v819, 0.0
        %v1180 = vmax.f32 %v822, 0.0
        %v1181 = vmax.f32 %v827, 0.0
        %v1182 = vmax.f32 %v830, 0.0
        %v1183 = vmax.f32 %v835, 0.0
        %v1184 = vmax.f32 %v838, 0.0
        %v1185 = vmax.f32 %v843, 0.0
        %v1186 = vmax.f32 %v846, 0.0
        %v1187 = vmax.f32 %v851, 0.0
        %v1188 = vmax.f32 %v854, 0.0
        %v1189 = vmax.f32 %v859, 0.0
        %v1190 = vmax.f32 %v862, 0.0
        %v1191 = vmax.f32 %v867, 0.0
        %v1192 = vmax.f32 %v870, 0.0
        %v1193 = vmax.f32 %v875, 0.0
        %v1194 = vmax.f32 %v878, 0.0
        %v1195 = vmax.f32 %v883, 0.0
        %v1196 = vmax.f32 %v886, 0.0
        %v1197 = vmax.f32 %v891, 0.0
        %v1198 = vmax.f32 %v894, 0.0
        %v1199 = vmax.f32 %v899, 0.0
        %v1200 = vmax.f32 %v902, 0.0
        %v1201 = vmax.f32 %v907, 0.0
        %v1202 = vmax.f32 %v910, 0.0
        %v1203 = vmax.f32 %v915, 0.0
        %v1204 = vmax.f32 %v918, 0.0
        %v1205 = vmax.f32 %v923, 0.0
        %v1206 = vmax.f32 %v926, 0.0
        %v1207 = vmax.f32 %v931, 0.0
        %v1208 = vmax.f32 %v934, 0.0
        %v1209 = vmax.f32 %v939, 0.0
        %v1210 = vmax.f32 %v942, 0.0
        %v1211 = vmax.f32 %v947, 0.0
        %v1212 = vmax.f32 %v950, 0.0
        %v1213 = vmax.f32 %v955, 0.0
        %v1214 = vmax.f32 %v958, 0.0
        %v1215 = vmax.f32 %v963, 0.0
        %v1216 = vmax.f32 %v966, 0.0
        %v1217 = vmax.f32 %v971, 0.0
        %v1218 = vmax.f32 %v974, 0.0
        %v1219 = vmax.f32 %v979, 0.0
        %v1220 = vmax.f32 %v982, 0.0
        %v1221 = vmax.f32 %v987, 0.0
        %v1222 = vmax.f32 %v990, 0.0
        %v1223 = vmax.f32 %v995, 0.0
        %v1224 = vmax.f32 %v998, 0.0
        %v1225 = vmax.f32 %v1003, 0.0
        %v1226 = vmax.f32 %v1006, 0.0
        %v1227 = vmax.f32 %v1011, 0.0
        %v1228 = vmax.f32 %v1014, 0.0
        %v1229 = vmax.f32 %v1019, 0.0
        %v1230 = vmax.f32 %v1022, 0.0
        %v1231 = vmax.f32 %v1027, 0.0
        %v1232 = vmax.f32 %v1030, 0.0
        %v1233 = vmax.f32 %v1035, 0.0
        %v1234 = vmax.f32 %v1038, 0.0
        %v1235 = vmax.f32 %v1043, 0.0
        %v1236 = vmax.f32 %v1046, 0.0
        %v1237 = vmax.f32 %v1051, 0.0
        %v1238 = vmax.f32 %v1054, 0.0
        %v1239 = vmax.f32 %v1059, 0.0
        %v1240 = vmax.f32 %v1062, 0.0
        %v1241 = vmax.f32 %v1067, 0.0
        %v1242 = vmax.f32 %v1070, 0.0
        %v1243 = vmax.f32 %v1075, 0.0
        %v1244 = vmax.f32 %v1078, 0.0
        %v1245 = vmax.f32 %v1083, 0.0
        %v1246 = vmax.f32 %v1086, 0.0
        %v1247 = vmax.f32 %v1091, 0.0
        %v1248 = vmax.f32 %v1094, 0.0
        %v1249 = vmax.f32 %v1099, 0.0
        %v1250 = vmax.f32 %v1102, 0.0
        %v1251 = vmax.f32 %v1107, 0.0
        %v1252 = vmax.f32 %v1110, 0.0
        %v1253 = vmax.f32 %v1115, 0.0
        %v1254 = vmax.f32 %v1118, 0.0
        %v1255 = vmax.f32 %v1123, 0.0
        %v1256 = vmax.f32 %v1126, 0.0
        %v1257 = vmax.f32 %v1131, 0.0
        %v1258 = vmax.f32 %v1134, 0.0
        %v1259 = vmax.f32 %v1139, 0.0
        %v1260 = vmax.f32 %v1142, 0.0
        %v1261 = vmax.f32 %v1147, 0.0
        %v1262 = vmax.f32 %v1150, 0.0
        %v1263 = vmax.f32 %v1155, 0.0
        %v1264 = vmax.f32 %v1158, 0.0
        %v1265 = vmax.f32 %v1163, 0.0
        %v1266 = vmax.f32 %v1166, 0.0
        %vm1267 = vcmask 523264
        %1268 = vst.msk [vmem:[%s229] sm:$0xff] %vm1267, %v1169
        %1269 = vst.msk [vmem:[%s229 + $0x8] sm:$0xff] %vm1267, %v1170
        %1270 = vst.msk [vmem:[%s229 + $0x10] sm:$0xff] %vm1267, %v1171
        %1271 = vst.msk [vmem:[%s229 + $0x18] sm:$0xff] %vm1267, %v1172
        %1272 = vst.msk [vmem:[%s229 + $0x20] sm:$0xff] %vm1267, %v1173
        %1273 = vst.msk [vmem:[%s229 + $0x28] sm:$0xff] %vm1267, %v1174
        %1274 = vst.msk [vmem:[%s229 + $0x30] sm:$0xff] %vm1267, %v1175
        %1275 = vst.msk [vmem:[%s229 + $0x38] sm:$0xff] %vm1267, %v1176
        %1276 = vst.msk [vmem:[%s229 + $0x40] sm:$0xff] %vm1267, %v1177
        %1277 = vst.msk [vmem:[%s229 + $0x48] sm:$0xff] %vm1267, %v1178
        %1278 = vst.msk [vmem:[%s229 + $0x50] sm:$0xff] %vm1267, %v1179
        %1279 = vst.msk [vmem:[%s229 + $0x58] sm:$0xff] %vm1267, %v1180
        %1280 = vst.msk [vmem:[%s229 + $0x60] sm:$0xff] %vm1267, %v1181
        %1281 = vst.msk [vmem:[%s229 + $0x68] sm:$0xff] %vm1267, %v1182
        %1282 = vst.msk [vmem:[%s229 + $0x70] sm:$0xff] %vm1267, %v1183
        %1283 = vst.msk [vmem:[%s229 + $0x78] sm:$0xff] %vm1267, %v1184
        %1284 = vst.msk [vmem:[%s229 + $0x80] sm:$0xff] %vm1267, %v1185
        %1285 = vst.msk [vmem:[%s229 + $0x88] sm:$0xff] %vm1267, %v1186
        %1286 = vst.msk [vmem:[%s229 + $0x90] sm:$0xff] %vm1267, %v1187
        %1287 = vst.msk [vmem:[%s229 + $0x98] sm:$0xff] %vm1267, %v1188
        %1288 = vst.msk [vmem:[%s229 + $0xa0] sm:$0xff] %vm1267, %v1189
        %1289 = vst.msk [vmem:[%s229 + $0xa8] sm:$0xff] %vm1267, %v1190
        %1290 = vst.msk [vmem:[%s229 + $0xb0] sm:$0xff] %vm1267, %v1191
        %1291 = vst.msk [vmem:[%s229 + $0xb8] sm:$0xff] %vm1267, %v1192
        %1292 = vst.msk [vmem:[%s229 + $0xc0] sm:$0xff] %vm1267, %v1193
        %1293 = vst.msk [vmem:[%s229 + $0xc8] sm:$0xff] %vm1267, %v1194
        %1294 = vst.msk [vmem:[%s229 + $0xd0] sm:$0xff] %vm1267, %v1195
        %1295 = vst.msk [vmem:[%s229 + $0xd8] sm:$0xff] %vm1267, %v1196
        %1296 = vst.msk [vmem:[%s229 + $0xe0] sm:$0xff] %vm1267, %v1197
        %1297 = vst.msk [vmem:[%s229 + $0xe8] sm:$0xff] %vm1267, %v1198
        %1298 = vst.msk [vmem:[%s229 + $0xf0] sm:$0xff] %vm1267, %v1199
        %1299 = vst.msk [vmem:[%s229 + $0xf8] sm:$0xff] %vm1267, %v1200
        %1300 = vst.msk [vmem:[%s229 + $0x100] sm:$0xff] %vm1267, %v1201
        %1301 = vst.msk [vmem:[%s229 + $0x108] sm:$0xff] %vm1267, %v1202
        %1302 = vst.msk [vmem:[%s229 + $0x110] sm:$0xff] %vm1267, %v1203
        %1303 = vst.msk [vmem:[%s229 + $0x118] sm:$0xff] %vm1267, %v1204
        %1304 = vst.msk [vmem:[%s229 + $0x120] sm:$0xff] %vm1267, %v1205
        %1305 = vst.msk [vmem:[%s229 + $0x128] sm:$0xff] %vm1267, %v1206
        %1306 = vst.msk [vmem:[%s229 + $0x130] sm:$0xff] %vm1267, %v1207
        %1307 = vst.msk [vmem:[%s229 + $0x138] sm:$0xff] %vm1267, %v1208
        %1308 = vst.msk [vmem:[%s229 + $0x140] sm:$0xff] %vm1267, %v1209
        %1309 = vst.msk [vmem:[%s229 + $0x148] sm:$0xff] %vm1267, %v1210
        %1310 = vst.msk [vmem:[%s229 + $0x150] sm:$0xff] %vm1267, %v1211
        %1311 = vst.msk [vmem:[%s229 + $0x158] sm:$0xff] %vm1267, %v1212
        %1312 = vst.msk [vmem:[%s229 + $0x160] sm:$0xff] %vm1267, %v1213
        %1313 = vst.msk [vmem:[%s229 + $0x168] sm:$0xff] %vm1267, %v1214
        %1314 = vst.msk [vmem:[%s229 + $0x170] sm:$0xff] %vm1267, %v1215
        %1315 = vst.msk [vmem:[%s229 + $0x178] sm:$0xff] %vm1267, %v1216
        %1316 = vst.msk [vmem:[%s229 + $0x180] sm:$0xff] %vm1267, %v1217
        %1317 = vst.msk [vmem:[%s229 + $0x188] sm:$0xff] %vm1267, %v1218
        %1318 = vst.msk [vmem:[%s229 + $0x190] sm:$0xff] %vm1267, %v1219
        %1319 = vst.msk [vmem:[%s229 + $0x198] sm:$0xff] %vm1267, %v1220
        %1320 = vst.msk [vmem:[%s229 + $0x1a0] sm:$0xff] %vm1267, %v1221
        %1321 = vst.msk [vmem:[%s229 + $0x1a8] sm:$0xff] %vm1267, %v1222
        %1322 = vst.msk [vmem:[%s229 + $0x1b0] sm:$0xff] %vm1267, %v1223
        %1323 = vst.msk [vmem:[%s229 + $0x1b8] sm:$0xff] %vm1267, %v1224
        %1324 = vst.msk [vmem:[%s229 + $0x1c0] sm:$0xff] %vm1267, %v1225
        %1325 = vst.msk [vmem:[%s229 + $0x1c8] sm:$0xff] %vm1267, %v1226
        %1326 = vst.msk [vmem:[%s229 + $0x1d0] sm:$0xff] %vm1267, %v1227
        %1327 = vst.msk [vmem:[%s229 + $0x1d8] sm:$0xff] %vm1267, %v1228
        %1328 = vst.msk [vmem:[%s229 + $0x1e0] sm:$0xff] %vm1267, %v1229
        %1329 = vst.msk [vmem:[%s229 + $0x1e8] sm:$0xff] %vm1267, %v1230
        %1330 = vst.msk [vmem:[%s229 + $0x1f0] sm:$0xff] %vm1267, %v1231
        %1331 = vst.msk [vmem:[%s229 + $0x1f8] sm:$0xff] %vm1267, %v1232
        %1332 = vst.msk [vmem:[%s229 + $0x200] sm:$0xff] %vm1267, %v1233
        %1333 = vst.msk [vmem:[%s229 + $0x208] sm:$0xff] %vm1267, %v1234
        %1334 = vst.msk [vmem:[%s229 + $0x210] sm:$0xff] %vm1267, %v1235
        %1335 = vst.msk [vmem:[%s229 + $0x218] sm:$0xff] %vm1267, %v1236
        %1336 = vst.msk [vmem:[%s229 + $0x220] sm:$0xff] %vm1267, %v1237
        %1337 = vst.msk [vmem:[%s229 + $0x228] sm:$0xff] %vm1267, %v1238
        %1338 = vst.msk [vmem:[%s229 + $0x230] sm:$0xff] %vm1267, %v1239
        %1339 = vst.msk [vmem:[%s229 + $0x238] sm:$0xff] %vm1267, %v1240
        %1340 = vst.msk [vmem:[%s229 + $0x240] sm:$0xff] %vm1267, %v1241
        %1341 = vst.msk [vmem:[%s229 + $0x248] sm:$0xff] %vm1267, %v1242
        %1342 = vst.msk [vmem:[%s229 + $0x250] sm:$0xff] %vm1267, %v1243
        %1343 = vst.msk [vmem:[%s229 + $0x258] sm:$0xff] %vm1267, %v1244
        %1344 = vst.msk [vmem:[%s229 + $0x260] sm:$0xff] %vm1267, %v1245
        %1345 = vst.msk [vmem:[%s229 + $0x268] sm:$0xff] %vm1267, %v1246
        %1346 = vst.msk [vmem:[%s229 + $0x270] sm:$0xff] %vm1267, %v1247
        %1347 = vst.msk [vmem:[%s229 + $0x278] sm:$0xff] %vm1267, %v1248
        %1348 = vst.msk [vmem:[%s229 + $0x280] sm:$0xff] %vm1267, %v1249
        %1349 = vst.msk [vmem:[%s229 + $0x288] sm:$0xff] %vm1267, %v1250
        %1350 = vst.msk [vmem:[%s229 + $0x290] sm:$0xff] %vm1267, %v1251
        %1351 = vst.msk [vmem:[%s229 + $0x298] sm:$0xff] %vm1267, %v1252
        %1352 = vst.msk [vmem:[%s229 + $0x2a0] sm:$0xff] %vm1267, %v1253
        %1353 = vst.msk [vmem:[%s229 + $0x2a8] sm:$0xff] %vm1267, %v1254
        %1354 = vst.msk [vmem:[%s229 + $0x2b0] sm:$0xff] %vm1267, %v1255
        %1355 = vst.msk [vmem:[%s229 + $0x2b8] sm:$0xff] %vm1267, %v1256
        %1356 = vst.msk [vmem:[%s229 + $0x2c0] sm:$0xff] %vm1267, %v1257
        %1357 = vst.msk [vmem:[%s229 + $0x2c8] sm:$0xff] %vm1267, %v1258
        %1358 = vst.msk [vmem:[%s229 + $0x2d0] sm:$0xff] %vm1267, %v1259
        %1359 = vst.msk [vmem:[%s229 + $0x2d8] sm:$0xff] %vm1267, %v1260
        %1360 = vst.msk [vmem:[%s229 + $0x2e0] sm:$0xff] %vm1267, %v1261
        %1361 = vst.msk [vmem:[%s229 + $0x2e8] sm:$0xff] %vm1267, %v1262
        %1362 = vst.msk [vmem:[%s229 + $0x2f0] sm:$0xff] %vm1267, %v1263
        %1363 = vst.msk [vmem:[%s229 + $0x2f8] sm:$0xff] %vm1267, %v1264
        %1364 = vst.msk [vmem:[%s229 + $0x300] sm:$0xff] %vm1267, %v1265
        %1365 = vst.msk [vmem:[%s229 + $0x308] sm:$0xff] %vm1267, %v1266
        %s1366 = smul.u32 98, %s19
        %p1367 = scmp.lt.s32.totalorder %s1366, 195
        %s1368 = scalar_select %p1367, %s1366, 195
        %p1369 = scmp.lt.s32.totalorder %s20, 0
        %s1370 = scalar_select %p1369, %s20, 0
        %s1371 = sadd.s32 %s1370, %s1368
        %s1372 = smul.addr %s1371, 8
        %s1373 = scalar_lea.vmem %s3, %s1372
        // Predicated region
        $region37: #{model_forward.5} parent=31 // pred_check
          %p1374 = pneg %p125
        $region38: #{model_forward.5} parent=31 // pred_check_branch
          %1376 = sbr.rel (%p1374) target = $region40
        $region39: #{model_forward.5} parent=31 // pred_region
          %s1377 = smul.u32 98, %s19
        $region40: #{model_forward.5} parent=31 // pred_fallthru
          _
      $region32: #{model_forward.5} parent=5 // pred_fallthru
        _
      %p1378 = scmp.le.s32.totalorder 2, %s10
      // Predicated region
      $region41: #{model_forward.5} parent=5 // pred_check
        %p1379 = pneg %p1378
      $region42: #{model_forward.5} parent=5 // pred_check_branch
        %1381 = sbr.rel (%p1379) target = $region44
      $region43: #{model_forward.5} parent=5 // pred_region
        %s1382 = ssub.s32 %s10, 2
        // Predicated region
        $region45: #{model_forward.5} parent=43 // pred_check
          %p1383 = pneg %p131
        $region46: #{model_forward.5} parent=43 // pred_check_branch
          %1385 = sbr.rel (%p1383) target = $region48
        $region47: #{model_forward.5} parent=43 // pred_region
          %s1386 = smul.u32 98, %s21
          %p1387 = scmp.lt.s32.totalorder %s1386, 195
          %s1388 = scalar_select %p1387, %s1386, 195
          %p1389 = scmp.lt.s32.totalorder %s22, 0
          %s1390 = scalar_select %p1389, %s22, 0
          %s1391 = sadd.s32 %s1390, %s1388
          %s1392 = smul.addr %s1391, 8
          %s1393 = scalar_lea.vmem %s3, %s1392
        $region48: #{model_forward.5} parent=43 // pred_fallthru
          _
      $region44: #{model_forward.5} parent=5 // pred_fallthru
        _
    $region6: #{model_forward.5} parent=1 // loop_footer
      %s14 = sadd.s32 1, %s10
    $region7: #{model_forward.5} parent=1 // loop_footer_branch
      %9 = sbr.rel target = $region3
    $region8: #{model_forward.5} parent=1 // loop_exit
      _
    %1394 = vsyncpa [#allocation3], 1
    %s1395 = scalar_lea.sflag [#allocation3], 1
    %1396 = vsyncpa %s1395, 1

// kernel: model_forward.7
$region0: #{model_forward.7}
  #allocation0 [shape = 'u32[]', space=smem, size = 0x4, offset = 0x4, fixed_abs, tag = 'smem constant byte address 0x4 - core index']
  #allocation1 [shape = 'u32[144,128]{1,0:T(1,128)}', space=vmem, size = 0x12000, scoped, tag = 'internal scratch']
  %s0 = inlined_call_operand.vmem [shape: f32[2,14,2,14,256], index: 0, kind: input, shape index: {}]
  %s1 = inlined_call_operand.vmem [shape: f32[2,14,14,128], index: 1, kind: output, shape index: {}]
  %s2 = sld [smem:[#allocation0]]
  $region37: #{model_forward.7} parent=0
    _
  %s4 = ssub.s32 1, %s2
  %s5 = scalar_select 0, %s4, %s2
  loop: start=0, step=1, limit=4
  $region2: #{model_forward.7} parent=0 // loop_pre_header
    _
  $region3: #{model_forward.7} parent=0 // loop_header
    %s7 = sphi 0, %s11
    %p8 = scmp.ge.s32.totalorder %s7, 4
    %s17 = sphi 0, %s19
    %s20 = sphi 0, %s17
    %s21 = sphi 0, %s20
    %s37 = sphi 0, %s21
    %s43 = sphi 0, %s45
    %s46 = sphi 0, %s43
    %s47 = sphi 0, %s46
    %s63 = sphi 0, %s47
  $region4: #{model_forward.7} parent=0 // loop_header_branch
    %10 = sbr.rel (%p8) target = $region8
  $region5: #{model_forward.7} parent=0 // loop_body
    %s12 = ssub.s32 %s7, 1
    %s13 = ssub.s32 %s7, 2
    %s14 = sadd.s32 %s7, 1
    %s15 = ssub.s32 %s7, %s14
    %p16 = scmp.eq.s32.totalorder %s15, 0
    %s18 = sadd.s32 %s17, 1
    %s19 = scalar_select %p16, %s17, %s18
    %p22 = pneg %p16
    %p23 = scmp.eq.s32.totalorder %s7, 1
    %p24 = por %p22, %p23
    %p25 = scmp.ne.s32.totalorder %s17, %s20
    %p26 = scmp.eq.s32.totalorder %s7, 0
    %p27 = por %p25, %p26
    %p28 = scmp.ne.s32.totalorder %s17, %s20
    %p29 = scmp.eq.s32.totalorder %s12, 1
    %p30 = por %p28, %p29
    %p31 = scmp.ne.s32.totalorder %s20, %s21
    %p32 = scmp.eq.s32.totalorder %s12, 0
    %p33 = por %p31, %p32
    %p34 = scmp.ne.s32.totalorder %s20, %s21
    %p35 = scmp.eq.s32.totalorder %s13, 1
    %p36 = por %p34, %p35
    %p38 = scmp.ne.s32.totalorder %s21, %s37
    %p39 = scmp.eq.s32.totalorder %s13, 0
    %p40 = por %p38, %p39
    %s41 = ssub.s32 %s7, %s14
    %p42 = scmp.eq.s32.totalorder %s41, 0
    %s44 = sadd.s32 %s43, 1
    %s45 = scalar_select %p42, %s43, %s44
    %p48 = pneg %p42
    %p49 = scmp.eq.s32.totalorder %s7, 1
    %p50 = por %p48, %p49
    %p51 = scmp.ne.s32.totalorder %s43, %s46
    %p52 = scmp.eq.s32.totalorder %s7, 0
    %p53 = por %p51, %p52
    %p54 = scmp.ne.s32.totalorder %s43, %s46
    %p55 = scmp.eq.s32.totalorder %s12, 1
    %p56 = por %p54, %p55
    %p57 = scmp.ne.s32.totalorder %s46, %s47
    %p58 = scmp.eq.s32.totalorder %s12, 0
    %p59 = por %p57, %p58
    %p60 = scmp.ne.s32.totalorder %s46, %s47
    %p61 = scmp.eq.s32.totalorder %s13, 1
    %p62 = por %p60, %p61
    %p64 = scmp.ne.s32.totalorder %s47, %s63
    %p65 = scmp.eq.s32.totalorder %s13, 0
    %p66 = por %p64, %p65
    %p67 = scmp.le.s32.totalorder 1, %s7
    %p68 = scmp.lt.s32.totalorder %s7, 3
    %p69 = pnand %p67, %p68
    %p70 = pneg %p69
    // Predicated region
    $region9: #{model_forward.7} parent=5 // pred_check
      _
    $region10: #{model_forward.7} parent=5 // pred_check_branch
      %72 = sbr.rel (%p69) target = $region12
    $region11: #{model_forward.7} parent=5 // pred_region
      %s73 = ssub.s32 %s7, 1
    $region12: #{model_forward.7} parent=5 // pred_fallthru
      _
    %p74 = scmp.lt.s32.totalorder %s7, 2
    // Predicated region
    $region13: #{model_forward.7} parent=5 // pred_check
      %p75 = pneg %p74
    $region14: #{model_forward.7} parent=5 // pred_check_branch
      %77 = sbr.rel (%p75) target = $region16
    $region15: #{model_forward.7} parent=5 // pred_region
      // Predicated region
      $region17: #{model_forward.7} parent=15 // pred_check
        %p78 = pneg %p27
      $region18: #{model_forward.7} parent=15 // pred_check_branch
        %80 = sbr.rel (%p78) target = $region20
      $region19: #{model_forward.7} parent=15 // pred_region
        %p81 = scmp.lt.s32.totalorder %s7, 1
        %s82 = scalar_select %p81, %s7, 1
        %s83 = smul.addr %s82, 112
        %s84 = smul.addr %s83, 8
        %s85 = scalar_lea.vmem %s0, %s84
      $region20: #{model_forward.7} parent=15 // pred_fallthru
        _
    $region16: #{model_forward.7} parent=5 // pred_fallthru
      _
    %p86 = scmp.le.s32.totalorder 1, %s7
    %p87 = scmp.lt.s32.totalorder %s7, 3
    %p88 = pnand %p86, %p87
    %p89 = pneg %p88
    // Predicated region
    $region21: #{model_forward.7} parent=5 // pred_check
      _
    $region22: #{model_forward.7} parent=5 // pred_check_branch
      %91 = sbr.rel (%p88) target = $region24
    $region23: #{model_forward.7} parent=5 // pred_region
      %s92 = ssub.s32 %s7, 1
      %p93 = scmp.lt.s32.totalorder %s12, 1
      %s94 = scalar_select %p93, %s12, 1
      %s95 = smul.addr %s94, 112
      %s96 = smul.addr %s95, 8
      %s97 = scalar_lea.vmem %s0, %s96
      %p98 = pneg %p33
      %p99 = pneg %p30
      %p100 = pneg %p59
      %p101 = pneg %p56
      %p102 = scmp.lt.s32.totalorder %s12, 1
      %s103 = scalar_select %p102, %s12, 1
      %s104 = smul.addr %s103, 28
      %s105 = smul.addr %s104, 8
      %s106 = scalar_lea.vmem %s1, %s105
      %p107 = scmp.lt.s32.totalorder %s12, 1
      %s108 = scalar_select %p107, %s12, 1
      %s109 = smul.addr %s108, 112
      %s110 = smul.addr %s109, 8
      %s111 = scalar_lea.vmem %s0, %s110
      %p112 = scmp.lt.s32.totalorder %s12, 1
      %s113 = scalar_select %p112, %s12, 1
      %s114 = smul.addr %s113, 28
      %s115 = smul.addr %s114, 8
      %s116 = scalar_lea.vmem %s1, %s115
      %v117 = vld [vmem:[%s111] sm:$0xff]
      %v118 = vld [vmem:[%s111 + $0x8] sm:$0xff]
      %v119 = vld [vmem:[%s111 + $0x10] sm:$0x3f]
      %v120 = vld [vmem:[%s111 + $0x18] sm:$0x3f]
      %v121 = vld [vmem:[%s111 + $0x20] sm:$0xff]
      %v122 = vld [vmem:[%s111 + $0x28] sm:$0xff]
      %v123 = vld [vmem:[%s111 + $0x30] sm:$0x3f]
      %v124 = vld [vmem:[%s111 + $0x38] sm:$0x3f]
      %v125 = vld [vmem:[%s111 + $0x40] sm:$0xff]
      %v126 = vld [vmem:[%s111 + $0x48] sm:$0xff]
      %v127 = vld [vmem:[%s111 + $0x50] sm:$0x3f]
      %v128 = vld [vmem:[%s111 + $0x58] sm:$0x3f]
      %v129 = vld [vmem:[%s111 + $0x60] sm:$0xff]
      %v130 = vld [vmem:[%s111 + $0x68] sm:$0xff]
      %v131 = vld [vmem:[%s111 + $0x70] sm:$0x3f]
      %v132 = vld [vmem:[%s111 + $0x78] sm:$0x3f]
      %v133 = vld [vmem:[%s111 + $0x80] sm:$0xff]
      %v134 = vld [vmem:[%s111 + $0x88] sm:$0xff]
      %v135 = vld [vmem:[%s111 + $0x90] sm:$0x3f]
      %v136 = vld [vmem:[%s111 + $0x98] sm:$0x3f]
      %v137 = vld [vmem:[%s111 + $0xa0] sm:$0xff]
      %v138 = vld [vmem:[%s111 + $0xa8] sm:$0xff]
      %v139 = vld [vmem:[%s111 + $0xb0] sm:$0x3f]
      %v140 = vld [vmem:[%s111 + $0xb8] sm:$0x3f]
      %v141 = vld [vmem:[%s111 + $0xc0] sm:$0xff]
      %v142 = vld [vmem:[%s111 + $0xc8] sm:$0xff]
      %v143 = vld [vmem:[%s111 + $0xd0] sm:$0x3f]
      %v144 = vld [vmem:[%s111 + $0xd8] sm:$0x3f]
      %v145 = vld [vmem:[%s111 + $0xe0] sm:$0xff]
      %v146 = vld [vmem:[%s111 + $0xe8] sm:$0xff]
      %v147 = vld [vmem:[%s111 + $0xf0] sm:$0x3f]
      %v148 = vld [vmem:[%s111 + $0xf8] sm:$0x3f]
      %v149 = vld [vmem:[%s111 + $0x100] sm:$0xff]
      %v150 = vld [vmem:[%s111 + $0x108] sm:$0xff]
      %v151 = vld [vmem:[%s111 + $0x110] sm:$0x3f]
      %v152 = vld [vmem:[%s111 + $0x118] sm:$0x3f]
      %v153 = vld [vmem:[%s111 + $0x120] sm:$0xff]
      %v154 = vld [vmem:[%s111 + $0x128] sm:$0xff]
      %v155 = vld [vmem:[%s111 + $0x130] sm:$0x3f]
      %v156 = vld [vmem:[%s111 + $0x138] sm:$0x3f]
      %v157 = vld [vmem:[%s111 + $0x140] sm:$0xff]
      %v158 = vld [vmem:[%s111 + $0x148] sm:$0xff]
      %v159 = vld [vmem:[%s111 + $0x150] sm:$0x3f]
      %v160 = vld [vmem:[%s111 + $0x158] sm:$0x3f]
      %v161 = vld [vmem:[%s111 + $0x160] sm:$0xff]
      %v162 = vld [vmem:[%s111 + $0x168] sm:$0xff]
      %v163 = vld [vmem:[%s111 + $0x170] sm:$0x3f]
      %v164 = vld [vmem:[%s111 + $0x178] sm:$0x3f]
      %v165 = vld [vmem:[%s111 + $0x180] sm:$0xff]
      %v166 = vld [vmem:[%s111 + $0x188] sm:$0xff]
      %v167 = vld [vmem:[%s111 + $0x190] sm:$0x3f]
      %v168 = vld [vmem:[%s111 + $0x198] sm:$0x3f]
      %v169 = vld [vmem:[%s111 + $0x1a0] sm:$0xff]
      %v170 = vld [vmem:[%s111 + $0x1a8] sm:$0xff]
      %v171 = vld [vmem:[%s111 + $0x1b0] sm:$0x3f]
      %v172 = vld [vmem:[%s111 + $0x1b8] sm:$0x3f]
      %v173 = vld [vmem:[%s111 + $0x1c0] sm:$0xff]
      %v174 = vld [vmem:[%s111 + $0x1c8] sm:$0xff]
      %v175 = vld [vmem:[%s111 + $0x1d0] sm:$0x3f]
      %v176 = vld [vmem:[%s111 + $0x1d8] sm:$0x3f]
      %v177 = vld [vmem:[%s111 + $0x1e0] sm:$0xff]
      %v178 = vld [vmem:[%s111 + $0x1e8] sm:$0xff]
      %v179 = vld [vmem:[%s111 + $0x1f0] sm:$0x3f]
      %v180 = vld [vmem:[%s111 + $0x1f8] sm:$0x3f]
      %v181 = vld [vmem:[%s111 + $0x200] sm:$0xff]
      %v182 = vld [vmem:[%s111 + $0x208] sm:$0xff]
      %v183 = vld [vmem:[%s111 + $0x210] sm:$0x3f]
      %v184 = vld [vmem:[%s111 + $0x218] sm:$0x3f]
      %v185 = vld [vmem:[%s111 + $0x220] sm:$0xff]
      %v186 = vld [vmem:[%s111 + $0x228] sm:$0xff]
      %v187 = vld [vmem:[%s111 + $0x230] sm:$0x3f]
      %v188 = vld [vmem:[%s111 + $0x238] sm:$0x3f]
      %v189 = vld [vmem:[%s111 + $0x240] sm:$0xff]
      %v190 = vld [vmem:[%s111 + $0x248] sm:$0xff]
      %v191 = vld [vmem:[%s111 + $0x250] sm:$0x3f]
      %v192 = vld [vmem:[%s111 + $0x258] sm:$0x3f]
      %v193 = vld [vmem:[%s111 + $0x260] sm:$0xff]
      %v194 = vld [vmem:[%s111 + $0x268] sm:$0xff]
      %v195 = vld [vmem:[%s111 + $0x270] sm:$0x3f]
      %v196 = vld [vmem:[%s111 + $0x278] sm:$0x3f]
      %v197 = vld [vmem:[%s111 + $0x280] sm:$0xff]
      %v198 = vld [vmem:[%s111 + $0x288] sm:$0xff]
      %v199 = vld [vmem:[%s111 + $0x290] sm:$0x3f]
      %v200 = vld [vmem:[%s111 + $0x298] sm:$0x3f]
      %v201 = vld [vmem:[%s111 + $0x2a0] sm:$0xff]
      %v202 = vld [vmem:[%s111 + $0x2a8] sm:$0xff]
      %v203 = vld [vmem:[%s111 + $0x2b0] sm:$0x3f]
      %v204 = vld [vmem:[%s111 + $0x2b8] sm:$0x3f]
      %v205 = vld [vmem:[%s111 + $0x2c0] sm:$0xff]
      %v206 = vld [vmem:[%s111 + $0x2c8] sm:$0xff]
      %v207 = vld [vmem:[%s111 + $0x2d0] sm:$0x3f]
      %v208 = vld [vmem:[%s111 + $0x2d8] sm:$0x3f]
      %v209 = vld [vmem:[%s111 + $0x2e0] sm:$0xff]
      %v210 = vld [vmem:[%s111 + $0x2e8] sm:$0xff]
      %v211 = vld [vmem:[%s111 + $0x2f0] sm:$0x3f]
      %v212 = vld [vmem:[%s111 + $0x2f8] sm:$0x3f]
      %v213 = vld [vmem:[%s111 + $0x300] sm:$0xff]
      %v214 = vld [vmem:[%s111 + $0x308] sm:$0xff]
      %v215 = vld [vmem:[%s111 + $0x310] sm:$0x3f]
      %v216 = vld [vmem:[%s111 + $0x318] sm:$0x3f]
      %v217 = vld [vmem:[%s111 + $0x320] sm:$0xff]
      %v218 = vld [vmem:[%s111 + $0x328] sm:$0xff]
      %v219 = vld [vmem:[%s111 + $0x330] sm:$0x3f]
      %v220 = vld [vmem:[%s111 + $0x338] sm:$0x3f]
      %v221 = vld [vmem:[%s111 + $0x340] sm:$0xff]
      %v222 = vld [vmem:[%s111 + $0x348] sm:$0xff]
      %v223 = vld [vmem:[%s111 + $0x350] sm:$0x3f]
      %v224 = vld [vmem:[%s111 + $0x358] sm:$0x3f]
      %v225 = vld [vmem:[%s111 + $0x360] sm:$0xff]
      %v226 = vld [vmem:[%s111 + $0x368] sm:$0xff]
      %v227 = vld [vmem:[%s111 + $0x370] sm:$0x3f]
      %v228 = vld [vmem:[%s111 + $0x378] sm:$0x3f]
      %v229 = vmax.f32 %v117, %v121
      %v230 = vmax.f32 %v118, %v122
      %v231 = vmax.f32 %v119, %v123
      %v232 = vmax.f32 %v120, %v124
      %v233 = vmax.f32 %v125, %v129
      %v234 = vmax.f32 %v126, %v130
      %v235 = vmax.f32 %v127, %v131
      %v236 = vmax.f32 %v128, %v132
      %v237 = vmax.f32 %v133, %v137
      %v238 = vmax.f32 %v134, %v138
      %v239 = vmax.f32 %v135, %v139
      %v240 = vmax.f32 %v136, %v140
      %v241 = vmax.f32 %v141, %v145
      %v242 = vmax.f32 %v142, %v146
      %v243 = vmax.f32 %v143, %v147
      %v244 = vmax.f32 %v144, %v148
      %v245 = vmax.f32 %v149, %v153
      %v246 = vmax.f32 %v150, %v154
      %v247 = vmax.f32 %v151, %v155
      %v248 = vmax.f32 %v152, %v156
      %v249 = vmax.f32 %v157, %v161
      %v250 = vmax.f32 %v158, %v162
      %v251 = vmax.f32 %v159, %v163
      %v252 = vmax.f32 %v160, %v164
      %v253 = vmax.f32 %v165, %v169
      %v254 = vmax.f32 %v166, %v170
      %v255 = vmax.f32 %v167, %v171
      %v256 = vmax.f32 %v168, %v172
      %v257 = vmax.f32 %v173, %v177
      %v258 = vmax.f32 %v174, %v178
      %v259 = vmax.f32 %v175, %v179
      %v260 = vmax.f32 %v176, %v180
      %v261 = vmax.f32 %v181, %v185
      %v262 = vmax.f32 %v182, %v186
      %v263 = vmax.f32 %v183, %v187
      %v264 = vmax.f32 %v184, %v188
      %v265 = vmax.f32 %v189, %v193
      %v266 = vmax.f32 %v190, %v194
      %v267 = vmax.f32 %v191, %v195
      %v268 = vmax.f32 %v192, %v196
      %v269 = vmax.f32 %v197, %v201
      %v270 = vmax.f32 %v198, %v202
      %v271 = vmax.f32 %v199, %v203
      %v272 = vmax.f32 %v200, %v204
      %v273 = vmax.f32 %v205, %v209
      %v274 = vmax.f32 %v206, %v210
      %v275 = vmax.f32 %v207, %v211
      %v276 = vmax.f32 %v208, %v212
      %v277 = vmax.f32 %v213, %v217
      %v278 = vmax.f32 %v214, %v218
      %v279 = vmax.f32 %v215, %v219
      %v280 = vmax.f32 %v216, %v220
      %v281 = vmax.f32 %v221, %v225
      %v282 = vmax.f32 %v222, %v226
      %v283 = vmax.f32 %v223, %v227
      %v284 = vmax.f32 %v224, %v228
      %v285 = vmax.f32 %v229, %v230
      %v286 = vmax.f32 %v231, %v232
      %v287 = vmax.f32 %v233, %v234
      %v288 = vmax.f32 %v235, %v236
      %v289 = vmax.f32 %v237, %v238
      %v290 = vmax.f32 %v239, %v240
      %v291 = vmax.f32 %v241, %v242
      %v292 = vmax.f32 %v243, %v244
      %v293 = vmax.f32 %v245, %v246
      %v294 = vmax.f32 %v247, %v248
      %v295 = vmax.f32 %v249, %v250
      %v296 = vmax.f32 %v251, %v252
      %v297 = vmax.f32 %v253, %v254
      %v298 = vmax.f32 %v255, %v256
      %v299 = vmax.f32 %v257, %v258
      %v300 = vmax.f32 %v259, %v260
      %v301 = vmax.f32 %v261, %v262
      %v302 = vmax.f32 %v263, %v264
      %v303 = vmax.f32 %v265, %v266
      %v304 = vmax.f32 %v267, %v268
      %v305 = vmax.f32 %v269, %v270
      %v306 = vmax.f32 %v271, %v272
      %v307 = vmax.f32 %v273, %v274
      %v308 = vmax.f32 %v275, %v276
      %v309 = vmax.f32 %v277, %v278
      %v310 = vmax.f32 %v279, %v280
      %v311 = vmax.f32 %v281, %v282
      %v312 = vmax.f32 %v283, %v284
      %313 = vst [vmem:[%s116] sm:$0xff] %v285
      %314 = vst [vmem:[%s116 + $0x8] sm:$0x3f] %v286
      %315 = vst [vmem:[%s116 + $0x10] sm:$0xff] %v287
      %316 = vst [vmem:[%s116 + $0x18] sm:$0x3f] %v288
      %317 = vst [vmem:[%s116 + $0x20] sm:$0xff] %v289
      %318 = vst [vmem:[%s116 + $0x28] sm:$0x3f] %v290
      %319 = vst [vmem:[%s116 + $0x30] sm:$0xff] %v291
      %320 = vst [vmem:[%s116 + $0x38] sm:$0x3f] %v292
      %321 = vst [vmem:[%s116 + $0x40] sm:$0xff] %v293
      %322 = vst [vmem:[%s116 + $0x48] sm:$0x3f] %v294
      %323 = vst [vmem:[%s116 + $0x50] sm:$0xff] %v295
      %324 = vst [vmem:[%s116 + $0x58] sm:$0x3f] %v296
      %325 = vst [vmem:[%s116 + $0x60] sm:$0xff] %v297
      %326 = vst [vmem:[%s116 + $0x68] sm:$0x3f] %v298
      %327 = vst [vmem:[%s116 + $0x70] sm:$0xff] %v299
      %328 = vst [vmem:[%s116 + $0x78] sm:$0x3f] %v300
      %329 = vst [vmem:[%s116 + $0x80] sm:$0xff] %v301
      %330 = vst [vmem:[%s116 + $0x88] sm:$0x3f] %v302
      %331 = vst [vmem:[%s116 + $0x90] sm:$0xff] %v303
      %332 = vst [vmem:[%s116 + $0x98] sm:$0x3f] %v304
      %333 = vst [vmem:[%s116 + $0xa0] sm:$0xff] %v305
      %334 = vst [vmem:[%s116 + $0xa8] sm:$0x3f] %v306
      %335 = vst [vmem:[%s116 + $0xb0] sm:$0xff] %v307
      %336 = vst [vmem:[%s116 + $0xb8] sm:$0x3f] %v308
      %337 = vst [vmem:[%s116 + $0xc0] sm:$0xff] %v309
      %338 = vst [vmem:[%s116 + $0xc8] sm:$0x3f] %v310
      %339 = vst [vmem:[%s116 + $0xd0] sm:$0xff] %v311
      %340 = vst [vmem:[%s116 + $0xd8] sm:$0x3f] %v312
      %p341 = scmp.lt.s32.totalorder %s12, 1
      %s342 = scalar_select %p341, %s12, 1
      %s343 = smul.addr %s342, 28
      %s344 = smul.addr %s343, 8
      %s345 = scalar_lea.vmem %s1, %s344
      // Predicated region
      $region25: #{model_forward.7} parent=23 // pred_check
        %p346 = pneg %p56
      $region26: #{model_forward.7} parent=23 // pred_check_branch
        %348 = sbr.rel (%p346) target = $region28
      $region27: #{model_forward.7} parent=23 // pred_region
        _
      $region28: #{model_forward.7} parent=23 // pred_fallthru
        _
    $region24: #{model_forward.7} parent=5 // pred_fallthru
      _
    %p349 = scmp.le.s32.totalorder 2, %s7
    // Predicated region
    $region29: #{model_forward.7} parent=5 // pred_check
      %p350 = pneg %p349
    $region30: #{model_forward.7} parent=5 // pred_check_branch
      %352 = sbr.rel (%p350) target = $region32
    $region31: #{model_forward.7} parent=5 // pred_region
      %s353 = ssub.s32 %s7, 2
      // Predicated region
      $region33: #{model_forward.7} parent=31 // pred_check
        %p354 = pneg %p62
      $region34: #{model_forward.7} parent=31 // pred_check_branch
        %356 = sbr.rel (%p354) target = $region36
      $region35: #{model_forward.7} parent=31 // pred_region
        %p357 = scmp.lt.s32.totalorder %s13, 1
        %s358 = scalar_select %p357, %s13, 1
        %s359 = smul.addr %s358, 28
        %s360 = smul.addr %s359, 8
        %s361 = scalar_lea.vmem %s1, %s360
      $region36: #{model_forward.7} parent=31 // pred_fallthru
        _
    $region32: #{model_forward.7} parent=5 // pred_fallthru
      _
  $region6: #{model_forward.7} parent=0 // loop_footer
    %s11 = sadd.s32 1, %s7
  $region7: #{model_forward.7} parent=0 // loop_footer_branch
    %6 = sbr.rel target = $region3
  $region8: #{model_forward.7} parent=0 // loop_exit
    _

// kernel: model_forward.6
$region0: #{model_forward.6}
  #allocation0 [shape = 'u32[]', space=smem, size = 0x4, offset = 0x4, fixed_abs, tag = 'smem constant byte address 0x4 - core index']
  #allocation1 [shape = 'u32[144,128]{1,0:T(1,128)}', space=vmem, size = 0x12000, scoped, tag = 'internal scratch']
  %s0 = inlined_call_operand.vmem [shape: bf16[1568,576], index: 0, kind: input, shape index: {}]
  %s1 = inlined_call_operand.vmem [shape: bf16[576,128], index: 1, kind: input, shape index: {}]
  %s2 = inlined_call_operand.hbm [shape: f32[1,128], index: 2, kind: input, shape index: {}]
  %s3 = inlined_call_operand.vmem [shape: f32[1568,128], index: 3, kind: output, shape index: {}]
  %s4 = sld [smem:[#allocation0]]
  $region49: #{model_forward.6} parent=0
    _
  %s6 = ssub.s32 1, %s4
  %s7 = scalar_select 0, %s6, %s4
  $region1: #{model_forward.6} parent=0
    #allocation2 [shape = 'u8[512]{0}', space=vmem, size = 0x400, scoped, tag = 'input window, operand 2, single buffered']
    #allocation3 [shape = 's32[2]{0}', space=sflag, size = 0x8, scoped, tag = 'scoped memory for model_forward.6']
    %8 = vsyncpa [#allocation3], 0
    loop: start=0, step=1, limit=4
    $region2: #{model_forward.6} parent=1 // loop_pre_header
      _
    $region3: #{model_forward.6} parent=1 // loop_header
      %s10 = sphi 0, %s14
      %p11 = scmp.ge.s32.totalorder %s10, 4
      %s17 = sphi 0, %s29
      %s18 = sphi 0, %s25
      %s19 = sphi 0, %s17
      %s20 = sphi 0, %s18
      %s21 = sphi 0, %s19
      %s22 = sphi 0, %s20
      %s32 = sphi 0, %s34
      %s35 = sphi 0, %s32
      %s36 = sphi 0, %s35
      %s52 = sphi 0, %s36
      %s58 = sphi 0, %s60
      %s61 = sphi 0, %s58
      %s62 = sphi 0, %s61
      %s78 = sphi 0, %s62
      %s84 = sphi 0, %s86
      %s87 = sphi 0, %s84
      %s88 = sphi 0, %s87
      %s104 = sphi 0, %s88
      %s112 = sphi 0, %s114
      %s115 = sphi 0, %s112
      %s116 = sphi 0, %s115
      %s132 = sphi 0, %s116
    $region4: #{model_forward.6} parent=1 // loop_header_branch
      %13 = sbr.rel (%p11) target = $region8
    $region5: #{model_forward.6} parent=1 // loop_body
      %s15 = ssub.s32 %s10, 1
      %s16 = ssub.s32 %s10, 2
      %s23 = sadd.s32 1, %s18
      %p24 = scmp.ge.s32.totalorder %s23, 1
      %s25 = scalar_select %p24, 0, %s23
      %s26 = sadd.s32 1, %s17
      %s27 = scalar_select %p24, %s26, %s17
      %p28 = scmp.ge.s32.totalorder %s27, 2
      %s29 = scalar_select %p28, 0, %s27
      %s30 = ssub.s32 %s17, %s29
      %p31 = scmp.eq.s32.totalorder %s30, 0
      %s33 = sadd.s32 %s32, 1
      %s34 = scalar_select %p31, %s32, %s33
      %p37 = pneg %p31
      %p38 = scmp.eq.s32.totalorder %s10, 1
      %p39 = por %p37, %p38
      %p40 = scmp.ne.s32.totalorder %s32, %s35
      %p41 = scmp.eq.s32.totalorder %s10, 0
      %p42 = por %p40, %p41
      %p43 = scmp.ne.s32.totalorder %s32, %s35
      %p44 = scmp.eq.s32.totalorder %s15, 1
      %p45 = por %p43, %p44
      %p46 = scmp.ne.s32.totalorder %s35, %s36
      %p47 = scmp.eq.s32.totalorder %s15, 0
      %p48 = por %p46, %p47
      %p49 = scmp.ne.s32.totalorder %s35, %s36
      %p50 = scmp.eq.s32.totalorder %s16, 1
      %p51 = por %p49, %p50
      %p53 = scmp.ne.s32.totalorder %s36, %s52
      %p54 = scmp.eq.s32.totalorder %s16, 0
      %p55 = por %p53, %p54
      %s56 = ssub.s32 %s18, %s25
      %p57 = scmp.eq.s32.totalorder %s56, 0
      %s59 = sadd.s32 %s58, 1
      %s60 = scalar_select %p57, %s58, %s59
      %p63 = pneg %p57
      %p64 = scmp.eq.s32.totalorder %s10, 1
      %p65 = por %p63, %p64
      %p66 = scmp.ne.s32.totalorder %s58, %s61
      %p67 = scmp.eq.s32.totalorder %s10, 0
      %p68 = por %p66, %p67
      %p69 = scmp.ne.s32.totalorder %s58, %s61
      %p70 = scmp.eq.s32.totalorder %s15, 1
      %p71 = por %p69, %p70
      %p72 = scmp.ne.s32.totalorder %s61, %s62
      %p73 = scmp.eq.s32.totalorder %s15, 0
      %p74 = por %p72, %p73
      %p75 = scmp.ne.s32.totalorder %s61, %s62
      %p76 = scmp.eq.s32.totalorder %s16, 1
      %p77 = por %p75, %p76
      %p79 = scmp.ne.s32.totalorder %s62, %s78
      %p80 = scmp.eq.s32.totalorder %s16, 0
      %p81 = por %p79, %p80
      %s82 = ssub.s32 %s18, %s25
      %p83 = scmp.eq.s32.totalorder %s82, 0
      %s85 = sadd.s32 %s84, 1
      %s86 = scalar_select %p83, %s84, %s85
      %p89 = pneg %p83
      %p90 = scmp.eq.s32.totalorder %s10, 1
      %p91 = por %p89, %p90
      %p92 = scmp.ne.s32.totalorder %s84, %s87
      %p93 = scmp.eq.s32.totalorder %s10, 0
      %p94 = por %p92, %p93
      %p95 = scmp.ne.s32.totalorder %s84, %s87
      %p96 = scmp.eq.s32.totalorder %s15, 1
      %p97 = por %p95, %p96
      %p98 = scmp.ne.s32.totalorder %s87, %s88
      %p99 = scmp.eq.s32.totalorder %s15, 0
      %p100 = por %p98, %p99
      %p101 = scmp.ne.s32.totalorder %s87, %s88
      %p102 = scmp.eq.s32.totalorder %s16, 1
      %p103 = por %p101, %p102
      %p105 = scmp.ne.s32.totalorder %s88, %s104
      %p106 = scmp.eq.s32.totalorder %s16, 0
      %p107 = por %p105, %p106
      %s108 = ssub.s32 %s17, %s29
      %s109 = ssub.s32 %s18, %s25
      %s110 = sor.u32 %s108, %s109
      %p111 = scmp.eq.s32.totalorder %s110, 0
      %s113 = sadd.s32 %s112, 1
      %s114 = scalar_select %p111, %s112, %s113
      %p117 = pneg %p111
      %p118 = scmp.eq.s32.totalorder %s10, 1
      %p119 = por %p117, %p118
      %p120 = scmp.ne.s32.totalorder %s112, %s115
      %p121 = scmp.eq.s32.totalorder %s10, 0
      %p122 = por %p120, %p121
      %p123 = scmp.ne.s32.totalorder %s112, %s115
      %p124 = scmp.eq.s32.totalorder %s15, 1
      %p125 = por %p123, %p124
      %p126 = scmp.ne.s32.totalorder %s115, %s116
      %p127 = scmp.eq.s32.totalorder %s15, 0
      %p128 = por %p126, %p127
      %p129 = scmp.ne.s32.totalorder %s115, %s116
      %p130 = scmp.eq.s32.totalorder %s16, 1
      %p131 = por %p129, %p130
      %p133 = scmp.ne.s32.totalorder %s116, %s132
      %p134 = scmp.eq.s32.totalorder %s16, 0
      %p135 = por %p133, %p134
      %p136 = scmp.le.s32.totalorder 1, %s10
      %p137 = scmp.lt.s32.totalorder %s10, 3
      %p138 = pnand %p136, %p137
      %p139 = pneg %p138
      // Predicated region
      $region9: #{model_forward.6} parent=5 // pred_check
        _
      $region10: #{model_forward.6} parent=5 // pred_check_branch
        %141 = sbr.rel (%p138) target = $region12
      $region11: #{model_forward.6} parent=5 // pred_region
        %s142 = ssub.s32 %s10, 1
        // Predicated region
        $region13: #{model_forward.6} parent=11 // pred_check
          %p143 = pneg %p74
        $region14: #{model_forward.6} parent=11 // pred_check_branch
          %145 = sbr.rel (%p143) target = $region16
        $region15: #{model_forward.6} parent=11 // pred_region
          %p146 = scmp.lt.s32.totalorder %s20, 0
          %s147 = scalar_select %p146, %s20, 0
          %s148 = smul.addr %s147, 4
          %s149 = scalar_lea.vmem %s1, %s148
        $region16: #{model_forward.6} parent=11 // pred_fallthru
          _
        // Predicated region
        $region17: #{model_forward.6} parent=11 // pred_check
          %p150 = pneg %p100
        $region18: #{model_forward.6} parent=11 // pred_check_branch
          %152 = sbr.rel (%p150) target = $region20
        $region19: #{model_forward.6} parent=11 // pred_region
          %s154 = ssub.s32 16, 16
          %155 = vsyncadd [#allocation3], %s154
          %s156 = smul.addr %s20, 16
          %s157 = scalar_lea.hbm %s2, %s156
          %s159 = sshll.u32 [#allocation2], 4
          %s160 = int_to_ptr.vmem [resolvable:$true] %s159
          %162 = dma.hbm_to_vmem [thread:$0]  %s157, 16, %s160, [#allocation3]
        $region20: #{model_forward.6} parent=11 // pred_fallthru
          _
      $region12: #{model_forward.6} parent=5 // pred_fallthru
        _
      %p163 = scmp.lt.s32.totalorder %s10, 2
      // Predicated region
      $region21: #{model_forward.6} parent=5 // pred_check
        %p164 = pneg %p163
      $region22: #{model_forward.6} parent=5 // pred_check_branch
        %166 = sbr.rel (%p164) target = $region24
      $region23: #{model_forward.6} parent=5 // pred_region
        // Predicated region
        $region25: #{model_forward.6} parent=23 // pred_check
          %p167 = pneg %p42
        $region26: #{model_forward.6} parent=23 // pred_check_branch
          %169 = sbr.rel (%p167) target = $region28
        $region27: #{model_forward.6} parent=23 // pred_region
          %s170 = smul.u32 98, %s17
          %p171 = scmp.lt.s32.totalorder %s170, 195
          %s172 = scalar_select %p171, %s170, 195
          %s173 = smul.addr %s172, 5
          %s174 = smul.addr %s173, 4
          %s175 = scalar_lea.vmem %s0, %s174
          %s176 = smul.u32 98, %s17
        $region28: #{model_forward.6} parent=23 // pred_fallthru
          _
      $region24: #{model_forward.6} parent=5 // pred_fallthru
        _
      %p177 = scmp.le.s32.totalorder 1, %s10
      %p178 = scmp.lt.s32.totalorder %s10, 3
      %p179 = pnand %p177, %p178
      %p180 = pneg %p179
      // Predicated region
      $region29: #{model_forward.6} parent=5 // pred_check
        _
      $region30: #{model_forward.6} parent=5 // pred_check_branch
        %182 = sbr.rel (%p179) target = $region32
      $region31: #{model_forward.6} parent=5 // pred_region
        %s183 = ssub.s32 %s10, 1
        // Predicated region
        $region33: #{model_forward.6} parent=31 // pred_check
          %p184 = pneg %p100
        $region34: #{model_forward.6} parent=31 // pred_check_branch
          %186 = sbr.rel (%p184) target = $region36
        $region35: #{model_forward.6} parent=31 // pred_region
          %187 = dma.done [#allocation3], 16
        $region36: #{model_forward.6} parent=31 // pred_fallthru
          _
        %s188 = smul.u32 98, %s19
        %p189 = scmp.lt.s32.totalorder %s188, 195
        %s190 = scalar_select %p189, %s188, 195
        %s191 = smul.addr %s190, 5
        %s192 = smul.addr %s191, 4
        %s193 = scalar_lea.vmem %s0, %s192
        %p194 = pneg %p48
        %p195 = pneg %p45
        %p196 = scmp.lt.s32.totalorder %s20, 0
        %s197 = scalar_select %p196, %s20, 0
        %s198 = smul.addr %s197, 4
        %s199 = scalar_lea.vmem %s1, %s198
        %p200 = pneg %p74
        %p201 = pneg %p71
        %p202 = pneg %p100
        %p203 = pneg %p97
        %p204 = pneg %p128
        %p205 = pneg %p125
        %s206 = smul.u32 98, %s19
        %p207 = scmp.lt.s32.totalorder %s206, 195
        %s208 = scalar_select %p207, %s206, 195
        %p209 = scmp.lt.s32.totalorder %s20, 0
        %s210 = scalar_select %p209, %s20, 0
        %s211 = sadd.s32 %s210, %s208
        %s212 = smul.addr %s211, 8
        %s213 = scalar_lea.vmem %s3, %s212
        %s214 = smul.u32 98, %s19
        %p215 = scmp.lt.s32.totalorder %s214, 195
        %s216 = scalar_select %p215, %s214, 195
        %s217 = smul.addr %s216, 5
        %s218 = smul.addr %s217, 4
        %s219 = scalar_lea.vmem %s0, %s218
        %s220 = smul.u32 98, %s19
        %p221 = scmp.lt.s32.totalorder %s20, 0
        %s222 = scalar_select %p221, %s20, 0
        %s223 = smul.addr %s222, 4
        %s224 = scalar_lea.vmem %s1, %s223
        %s225 = smul.u32 98, %s19
        %p226 = scmp.lt.s32.totalorder %s225, 195
        %s227 = scalar_select %p226, %s225, 195
        %p228 = scmp.lt.s32.totalorder %s20, 0
        %s229 = scalar_select %p228, %s20, 0
        %s230 = sadd.s32 %s229, %s227
        %s231 = smul.addr %s230, 8
        %s232 = scalar_lea.vmem %s3, %s231
        %s233 = smul.u32 98, %s19
        %v235 = vld [vmem:[%s219] sm:$0xff]
        %v236 = vld [vmem:[%s219 + $0x8] sm:$0xff]
        %v237 = vld [vmem:[%s219 + $0x10] sm:$0xf]
        %v238 = vld [vmem:[%s219 + $0x14] sm:$0xff]
        %v239 = vld [vmem:[%s219 + $0x1c] sm:$0xff]
        %v240 = vld [vmem:[%s219 + $0x24] sm:$0xf]
        %v241 = vld [vmem:[%s219 + $0x28] sm:$0xff]
        %v242 = vld [vmem:[%s219 + $0x30] sm:$0xff]
        %v243 = vld [vmem:[%s219 + $0x38] sm:$0xf]
        %v244 = vld [vmem:[%s219 + $0x3c] sm:$0xff]
        %v245 = vld [vmem:[%s219 + $0x44] sm:$0xff]
        %v246 = vld [vmem:[%s219 + $0x4c] sm:$0xf]
        %v247 = vld [vmem:[%s219 + $0x50] sm:$0xff]
        %v248 = vld [vmem:[%s219 + $0x58] sm:$0xff]
        %v249 = vld [vmem:[%s219 + $0x60] sm:$0xf]
        %v250 = vld [vmem:[%s219 + $0x64] sm:$0xff]
        %v251 = vld [vmem:[%s219 + $0x6c] sm:$0xff]
        %v252 = vld [vmem:[%s219 + $0x74] sm:$0xf]
        %v253 = vld [vmem:[%s219 + $0x78] sm:$0xff]
        %v254 = vld [vmem:[%s219 + $0x80] sm:$0xff]
        %v255 = vld [vmem:[%s219 + $0x88] sm:$0xf]
        %v256 = vld [vmem:[%s219 + $0x8c] sm:$0xff]
        %v257 = vld [vmem:[%s219 + $0x94] sm:$0xff]
        %v258 = vld [vmem:[%s219 + $0x9c] sm:$0xf]
        %v259 = vld [vmem:[%s219 + $0xa0] sm:$0xff]
        %v260 = vld [vmem:[%s219 + $0xa8] sm:$0xff]
        %v261 = vld [vmem:[%s219 + $0xb0] sm:$0xf]
        %v262 = vld [vmem:[%s219 + $0xb4] sm:$0xff]
        %v263 = vld [vmem:[%s219 + $0xbc] sm:$0xff]
        %v264 = vld [vmem:[%s219 + $0xc4] sm:$0xf]
        %v265 = vld [vmem:[%s219 + $0xc8] sm:$0xff]
        %v266 = vld [vmem:[%s219 + $0xd0] sm:$0xff]
        %v267 = vld [vmem:[%s219 + $0xd8] sm:$0xf]
        %v268 = vld [vmem:[%s219 + $0xdc] sm:$0xff]
        %v269 = vld [vmem:[%s219 + $0xe4] sm:$0xff]
        %v270 = vld [vmem:[%s219 + $0xec] sm:$0xf]
        %v271 = vld [vmem:[%s219 + $0xf0] sm:$0xff]
        %v272 = vld [vmem:[%s219 + $0xf8] sm:$0xff]
        %v273 = vld [vmem:[%s219 + $0x100] sm:$0xf]
        %v274 = vld [vmem:[%s219 + $0x104] sm:$0xff]
        %v275 = vld [vmem:[%s219 + $0x10c] sm:$0xff]
        %v276 = vld [vmem:[%s219 + $0x114] sm:$0xf]
        %v277 = vld [vmem:[%s219 + $0x118] sm:$0xff]
        %v278 = vld [vmem:[%s219 + $0x120] sm:$0xff]
        %v279 = vld [vmem:[%s219 + $0x128] sm:$0xf]
        %v280 = vld [vmem:[%s219 + $0x12c] sm:$0xff]
        %v281 = vld [vmem:[%s219 + $0x134] sm:$0xff]
        %v282 = vld [vmem:[%s219 + $0x13c] sm:$0xf]
        %v283 = vld [vmem:[%s219 + $0x140] sm:$0xff]
        %v284 = vld [vmem:[%s219 + $0x148] sm:$0xff]
        %v285 = vld [vmem:[%s219 + $0x150] sm:$0xf]
        %v286 = vld [vmem:[%s219 + $0x154] sm:$0xff]
        %v287 = vld [vmem:[%s219 + $0x15c] sm:$0xff]
        %v288 = vld [vmem:[%s219 + $0x164] sm:$0xf]
        %v289 = vld [vmem:[%s219 + $0x168] sm:$0xff]
        %v290 = vld [vmem:[%s219 + $0x170] sm:$0xff]
        %v291 = vld [vmem:[%s219 + $0x178] sm:$0xf]
        %v292 = vld [vmem:[%s219 + $0x17c] sm:$0xff]
        %v293 = vld [vmem:[%s219 + $0x184] sm:$0xff]
        %v294 = vld [vmem:[%s219 + $0x18c] sm:$0xf]
        %v295 = vld [vmem:[%s219 + $0x190] sm:$0xff]
        %v296 = vld [vmem:[%s219 + $0x198] sm:$0xff]
        %v297 = vld [vmem:[%s219 + $0x1a0] sm:$0xf]
        %v298 = vld [vmem:[%s219 + $0x1a4] sm:$0xff]
        %v299 = vld [vmem:[%s219 + $0x1ac] sm:$0xff]
        %v300 = vld [vmem:[%s219 + $0x1b4] sm:$0xf]
        %v301 = vld [vmem:[%s219 + $0x1b8] sm:$0xff]
        %v302 = vld [vmem:[%s219 + $0x1c0] sm:$0xff]
        %v303 = vld [vmem:[%s219 + $0x1c8] sm:$0xf]
        %v304 = vld [vmem:[%s219 + $0x1cc] sm:$0xff]
        %v305 = vld [vmem:[%s219 + $0x1d4] sm:$0xff]
        %v306 = vld [vmem:[%s219 + $0x1dc] sm:$0xf]
        %v307 = vld [vmem:[%s219 + $0x1e0] sm:$0xff]
        %v308 = vld [vmem:[%s219 + $0x1e8] sm:$0xff]
        %v309 = vld [vmem:[%s219 + $0x1f0] sm:$0xf]
        %v310 = vld [vmem:[%s219 + $0x1f4] sm:$0xff]
        %v311 = vld [vmem:[%s219 + $0x1fc] sm:$0xff]
        %v312 = vld [vmem:[%s219 + $0x204] sm:$0xf]
        %v313 = vld [vmem:[%s219 + $0x208] sm:$0xff]
        %v314 = vld [vmem:[%s219 + $0x210] sm:$0xff]
        %v315 = vld [vmem:[%s219 + $0x218] sm:$0xf]
        %v316 = vld [vmem:[%s219 + $0x21c] sm:$0xff]
        %v317 = vld [vmem:[%s219 + $0x224] sm:$0xff]
        %v318 = vld [vmem:[%s219 + $0x22c] sm:$0xf]
        %v319 = vld [vmem:[%s219 + $0x230] sm:$0xff]
        %v320 = vld [vmem:[%s219 + $0x238] sm:$0xff]
        %v321 = vld [vmem:[%s219 + $0x240] sm:$0xf]
        %v322 = vld [vmem:[%s219 + $0x244] sm:$0xff]
        %v323 = vld [vmem:[%s219 + $0x24c] sm:$0xff]
        %v324 = vld [vmem:[%s219 + $0x254] sm:$0xf]
        %v325 = vld [vmem:[%s219 + $0x258] sm:$0xff]
        %v326 = vld [vmem:[%s219 + $0x260] sm:$0xff]
        %v327 = vld [vmem:[%s219 + $0x268] sm:$0xf]
        %v328 = vld [vmem:[%s219 + $0x26c] sm:$0xff]
        %v329 = vld [vmem:[%s219 + $0x274] sm:$0xff]
        %v330 = vld [vmem:[%s219 + $0x27c] sm:$0xf]
        %v331 = vld [vmem:[%s219 + $0x280] sm:$0xff]
        %v332 = vld [vmem:[%s219 + $0x288] sm:$0xff]
        %v333 = vld [vmem:[%s219 + $0x290] sm:$0xf]
        %v334 = vld [vmem:[%s219 + $0x294] sm:$0xff]
        %v335 = vld [vmem:[%s219 + $0x29c] sm:$0xff]
        %v336 = vld [vmem:[%s219 + $0x2a4] sm:$0xf]
        %v337 = vld [vmem:[%s219 + $0x2a8] sm:$0xff]
        %v338 = vld [vmem:[%s219 + $0x2b0] sm:$0xff]
        %v339 = vld [vmem:[%s219 + $0x2b8] sm:$0xf]
        %v340 = vld [vmem:[%s219 + $0x2bc] sm:$0xff]
        %v341 = vld [vmem:[%s219 + $0x2c4] sm:$0xff]
        %v342 = vld [vmem:[%s219 + $0x2cc] sm:$0xf]
        %v343 = vld [vmem:[%s219 + $0x2d0] sm:$0xff]
        %v344 = vld [vmem:[%s219 + $0x2d8] sm:$0xff]
        %v345 = vld [vmem:[%s219 + $0x2e0] sm:$0xf]
        %v346 = vld [vmem:[%s219 + $0x2e4] sm:$0xff]
        %v347 = vld [vmem:[%s219 + $0x2ec] sm:$0xff]
        %v348 = vld [vmem:[%s219 + $0x2f4] sm:$0xf]
        %v349 = vld [vmem:[%s219 + $0x2f8] sm:$0xff]
        %v350 = vld [vmem:[%s219 + $0x300] sm:$0xff]
        %v351 = vld [vmem:[%s219 + $0x308] sm:$0xf]
        %v352 = vld [vmem:[%s219 + $0x30c] sm:$0xff]
        %v353 = vld [vmem:[%s219 + $0x314] sm:$0xff]
        %v354 = vld [vmem:[%s219 + $0x31c] sm:$0xf]
        %v355 = vld [vmem:[%s219 + $0x320] sm:$0xff]
        %v356 = vld [vmem:[%s219 + $0x328] sm:$0xff]
        %v357 = vld [vmem:[%s219 + $0x330] sm:$0xf]
        %v358 = vld [vmem:[%s219 + $0x334] sm:$0xff]
        %v359 = vld [vmem:[%s219 + $0x33c] sm:$0xff]
        %v360 = vld [vmem:[%s219 + $0x344] sm:$0xf]
        %v361 = vld [vmem:[%s219 + $0x348] sm:$0xff]
        %v362 = vld [vmem:[%s219 + $0x350] sm:$0xff]
        %v363 = vld [vmem:[%s219 + $0x358] sm:$0xf]
        %v364 = vld [vmem:[%s219 + $0x35c] sm:$0xff]
        %v365 = vld [vmem:[%s219 + $0x364] sm:$0xff]
        %v366 = vld [vmem:[%s219 + $0x36c] sm:$0xf]
        %v367 = vld [vmem:[%s219 + $0x370] sm:$0xff]
        %v368 = vld [vmem:[%s219 + $0x378] sm:$0xff]
        %v369 = vld [vmem:[%s219 + $0x380] sm:$0xf]
        %v370 = vld [vmem:[%s219 + $0x384] sm:$0xff]
        %v371 = vld [vmem:[%s219 + $0x38c] sm:$0xff]
        %v372 = vld [vmem:[%s219 + $0x394] sm:$0xf]
        %v373 = vld [vmem:[%s219 + $0x398] sm:$0xff]
        %v374 = vld [vmem:[%s219 + $0x3a0] sm:$0xff]
        %v375 = vld [vmem:[%s219 + $0x3a8] sm:$0xf]
        %v376 = vld [vmem:[%s219 + $0x3ac] sm:$0xff]
        %v377 = vld [vmem:[%s219 + $0x3b4] sm:$0xff]
        %v378 = vld [vmem:[%s219 + $0x3bc] sm:$0xf]
        %v379 = vld [vmem:[%s219 + $0x3c0] sm:$0xff]
        %v380 = vld [vmem:[%s219 + $0x3c8] sm:$0xff]
        %v381 = vld [vmem:[%s219 + $0x3d0] sm:$0xf]
        %v382 = vld [vmem:[%s219 + $0x3d4] sm:$0xff]
        %v383 = vld [vmem:[%s219 + $0x3dc] sm:$0xff]
        %v384 = vld [vmem:[%s219 + $0x3e4] sm:$0xf]
        %v385 = vld [vmem:[%s219 + $0x3e8] sm:$0xff]
        %v386 = vld [vmem:[%s219 + $0x3f0] sm:$0xff]
        %v387 = vld [vmem:[%s219 + $0x3f8] sm:$0xf]
        %v388 = vld [vmem:[%s219 + $0x3fc] sm:$0xff]
        %v389 = vld [vmem:[%s219 + $0x404] sm:$0xff]
        %v390 = vld [vmem:[%s219 + $0x40c] sm:$0xf]
        %v391 = vld [vmem:[%s219 + $0x410] sm:$0xff]
        %v392 = vld [vmem:[%s219 + $0x418] sm:$0xff]
        %v393 = vld [vmem:[%s219 + $0x420] sm:$0xf]
        %v394 = vld [vmem:[%s219 + $0x424] sm:$0xff]
        %v395 = vld [vmem:[%s219 + $0x42c] sm:$0xff]
        %v396 = vld [vmem:[%s219 + $0x434] sm:$0xf]
        %v397 = vld [vmem:[%s219 + $0x438] sm:$0xff]
        %v398 = vld [vmem:[%s219 + $0x440] sm:$0xff]
        %v399 = vld [vmem:[%s219 + $0x448] sm:$0xf]
        %v400 = vld [vmem:[%s219 + $0x44c] sm:$0xff]
        %v401 = vld [vmem:[%s219 + $0x454] sm:$0xff]
        %v402 = vld [vmem:[%s219 + $0x45c] sm:$0xf]
        %v403 = vld [vmem:[%s219 + $0x460] sm:$0xff]
        %v404 = vld [vmem:[%s219 + $0x468] sm:$0xff]
        %v405 = vld [vmem:[%s219 + $0x470] sm:$0xf]
        %v406 = vld [vmem:[%s219 + $0x474] sm:$0xff]
        %v407 = vld [vmem:[%s219 + $0x47c] sm:$0xff]
        %v408 = vld [vmem:[%s219 + $0x484] sm:$0xf]
        %v409 = vld [vmem:[%s219 + $0x488] sm:$0xff]
        %v410 = vld [vmem:[%s219 + $0x490] sm:$0xff]
        %v411 = vld [vmem:[%s219 + $0x498] sm:$0xf]
        %v412 = vld [vmem:[%s219 + $0x49c] sm:$0xff]
        %v413 = vld [vmem:[%s219 + $0x4a4] sm:$0xff]
        %v414 = vld [vmem:[%s219 + $0x4ac] sm:$0xf]
        %v415 = vld [vmem:[%s219 + $0x4b0] sm:$0xff]
        %v416 = vld [vmem:[%s219 + $0x4b8] sm:$0xff]
        %v417 = vld [vmem:[%s219 + $0x4c0] sm:$0xf]
        %v418 = vld [vmem:[%s219 + $0x4c4] sm:$0xff]
        %v419 = vld [vmem:[%s219 + $0x4cc] sm:$0xff]
        %v420 = vld [vmem:[%s219 + $0x4d4] sm:$0xf]
        %v421 = vld [vmem:[%s219 + $0x4d8] sm:$0xff]
        %v422 = vld [vmem:[%s219 + $0x4e0] sm:$0xff]
        %v423 = vld [vmem:[%s219 + $0x4e8] sm:$0xf]
        %v424 = vld [vmem:[%s219 + $0x4ec] sm:$0xff]
        %v425 = vld [vmem:[%s219 + $0x4f4] sm:$0xff]
        %v426 = vld [vmem:[%s219 + $0x4fc] sm:$0xf]
        %v427 = vld [vmem:[%s219 + $0x500] sm:$0xff]
        %v428 = vld [vmem:[%s219 + $0x508] sm:$0xff]
        %v429 = vld [vmem:[%s219 + $0x510] sm:$0xf]
        %v430 = vld [vmem:[%s219 + $0x514] sm:$0xff]
        %v431 = vld [vmem:[%s219 + $0x51c] sm:$0xff]
        %v432 = vld [vmem:[%s219 + $0x524] sm:$0xf]
        %v433 = vld [vmem:[%s219 + $0x528] sm:$0xff]
        %v434 = vld [vmem:[%s219 + $0x530] sm:$0xff]
        %v435 = vld [vmem:[%s219 + $0x538] sm:$0xf]
        %v436 = vld [vmem:[%s219 + $0x53c] sm:$0xff]
        %v437 = vld [vmem:[%s219 + $0x544] sm:$0xff]
        %v438 = vld [vmem:[%s219 + $0x54c] sm:$0xf]
        %v439 = vld [vmem:[%s219 + $0x550] sm:$0xff]
        %v440 = vld [vmem:[%s219 + $0x558] sm:$0xff]
        %v441 = vld [vmem:[%s219 + $0x560] sm:$0xf]
        %v442 = vld [vmem:[%s219 + $0x564] sm:$0xff]
        %v443 = vld [vmem:[%s219 + $0x56c] sm:$0xff]
        %v444 = vld [vmem:[%s219 + $0x574] sm:$0xf]
        %v445 = vld [vmem:[%s219 + $0x578] sm:$0xff]
        %v446 = vld [vmem:[%s219 + $0x580] sm:$0xff]
        %v447 = vld [vmem:[%s219 + $0x588] sm:$0xf]
        %v448 = vld [vmem:[%s219 + $0x58c] sm:$0xff]
        %v449 = vld [vmem:[%s219 + $0x594] sm:$0xff]
        %v450 = vld [vmem:[%s219 + $0x59c] sm:$0xf]
        %v451 = vld [vmem:[%s219 + $0x5a0] sm:$0xff]
        %v452 = vld [vmem:[%s219 + $0x5a8] sm:$0xff]
        %v453 = vld [vmem:[%s219 + $0x5b0] sm:$0xf]
        %v454 = vld [vmem:[%s219 + $0x5b4] sm:$0xff]
        %v455 = vld [vmem:[%s219 + $0x5bc] sm:$0xff]
        %v456 = vld [vmem:[%s219 + $0x5c4] sm:$0xf]
        %v457 = vld [vmem:[%s219 + $0x5c8] sm:$0xff]
        %v458 = vld [vmem:[%s219 + $0x5d0] sm:$0xff]
        %v459 = vld [vmem:[%s219 + $0x5d8] sm:$0xf]
        %v460 = vld [vmem:[%s219 + $0x5dc] sm:$0xff]
        %v461 = vld [vmem:[%s219 + $0x5e4] sm:$0xff]
        %v462 = vld [vmem:[%s219 + $0x5ec] sm:$0xf]
        %v463 = vld [vmem:[%s219 + $0x5f0] sm:$0xff]
        %v464 = vld [vmem:[%s219 + $0x5f8] sm:$0xff]
        %v465 = vld [vmem:[%s219 + $0x600] sm:$0xf]
        %v466 = vld [vmem:[%s219 + $0x604] sm:$0xff]
        %v467 = vld [vmem:[%s219 + $0x60c] sm:$0xff]
        %v468 = vld [vmem:[%s219 + $0x614] sm:$0xf]
        %v469 = vld [vmem:[%s219 + $0x618] sm:$0xff]
        %v470 = vld [vmem:[%s219 + $0x620] sm:$0xff]
        %v471 = vld [vmem:[%s219 + $0x628] sm:$0xf]
        %v472 = vld [vmem:[%s219 + $0x62c] sm:$0xff]
        %v473 = vld [vmem:[%s219 + $0x634] sm:$0xff]
        %v474 = vld [vmem:[%s219 + $0x63c] sm:$0xf]
        %v475 = vld [vmem:[%s219 + $0x640] sm:$0xff]
        %v476 = vld [vmem:[%s219 + $0x648] sm:$0xff]
        %v477 = vld [vmem:[%s219 + $0x650] sm:$0xf]
        %v478 = vld [vmem:[%s219 + $0x654] sm:$0xff]
        %v479 = vld [vmem:[%s219 + $0x65c] sm:$0xff]
        %v480 = vld [vmem:[%s219 + $0x664] sm:$0xf]
        %v481 = vld [vmem:[%s219 + $0x668] sm:$0xff]
        %v482 = vld [vmem:[%s219 + $0x670] sm:$0xff]
        %v483 = vld [vmem:[%s219 + $0x678] sm:$0xf]
        %v484 = vld [vmem:[%s219 + $0x67c] sm:$0xff]
        %v485 = vld [vmem:[%s219 + $0x684] sm:$0xff]
        %v486 = vld [vmem:[%s219 + $0x68c] sm:$0xf]
        %v487 = vld [vmem:[%s219 + $0x690] sm:$0xff]
        %v488 = vld [vmem:[%s219 + $0x698] sm:$0xff]
        %v489 = vld [vmem:[%s219 + $0x6a0] sm:$0xf]
        %v490 = vld [vmem:[%s219 + $0x6a4] sm:$0xff]
        %v491 = vld [vmem:[%s219 + $0x6ac] sm:$0xff]
        %v492 = vld [vmem:[%s219 + $0x6b4] sm:$0xf]
        %v493 = vld [vmem:[%s219 + $0x6b8] sm:$0xff]
        %v494 = vld [vmem:[%s219 + $0x6c0] sm:$0xff]
        %v495 = vld [vmem:[%s219 + $0x6c8] sm:$0xf]
        %v496 = vld [vmem:[%s219 + $0x6cc] sm:$0xff]
        %v497 = vld [vmem:[%s219 + $0x6d4] sm:$0xff]
        %v498 = vld [vmem:[%s219 + $0x6dc] sm:$0xf]
        %v499 = vld [vmem:[%s219 + $0x6e0] sm:$0xff]
        %v500 = vld [vmem:[%s219 + $0x6e8] sm:$0xff]
        %v501 = vld [vmem:[%s219 + $0x6f0] sm:$0xf]
        %v502 = vld [vmem:[%s219 + $0x6f4] sm:$0xff]
        %v503 = vld [vmem:[%s219 + $0x6fc] sm:$0xff]
        %v504 = vld [vmem:[%s219 + $0x704] sm:$0xf]
        %v505 = vld [vmem:[%s219 + $0x708] sm:$0xff]
        %v506 = vld [vmem:[%s219 + $0x710] sm:$0xff]
        %v507 = vld [vmem:[%s219 + $0x718] sm:$0xf]
        %v508 = vld [vmem:[%s219 + $0x71c] sm:$0xff]
        %v509 = vld [vmem:[%s219 + $0x724] sm:$0xff]
        %v510 = vld [vmem:[%s219 + $0x72c] sm:$0xf]
        %v511 = vld [vmem:[%s219 + $0x730] sm:$0xff]
        %v512 = vld [vmem:[%s219 + $0x738] sm:$0xff]
        %v513 = vld [vmem:[%s219 + $0x740] sm:$0xf]
        %v514 = vld [vmem:[%s219 + $0x744] sm:$0xff]
        %v515 = vld [vmem:[%s219 + $0x74c] sm:$0xff]
        %v516 = vld [vmem:[%s219 + $0x754] sm:$0xf]
        %v517 = vld [vmem:[%s219 + $0x758] sm:$0xff]
        %v518 = vld [vmem:[%s219 + $0x760] sm:$0xff]
        %v519 = vld [vmem:[%s219 + $0x768] sm:$0xf]
        %v520 = vld [vmem:[%s219 + $0x76c] sm:$0xff]
        %v521 = vld [vmem:[%s219 + $0x774] sm:$0xff]
        %v522 = vld [vmem:[%s219 + $0x77c] sm:$0xf]
        %v523 = vld [vmem:[%s219 + $0x780] sm:$0xff]
        %v524 = vld [vmem:[%s219 + $0x788] sm:$0xff]
        %v525 = vld [vmem:[%s219 + $0x790] sm:$0xf]
        %v526 = vld [vmem:[%s219 + $0x794] sm:$0xff]
        %v527 = vld [vmem:[%s219 + $0x79c] sm:$0xff]
        %v528 = vld [vmem:[%s219 + $0x7a4] sm:$0xf]
        %v529 = vld [vmem:[%s224] sm:$0xf]
        %v530 = vld [vmem:[%s224 + $0x4] sm:$0xf]
        %v531 = vld [vmem:[%s224 + $0x8] sm:$0xf]
        %v532 = vld [vmem:[%s224 + $0xc] sm:$0xf]
        %v533 = vld [vmem:[%s224 + $0x10] sm:$0xf]
        %v534 = vld [vmem:[%s224 + $0x14] sm:$0xf]
        %v535 = vld [vmem:[%s224 + $0x18] sm:$0xf]
        %v536 = vld [vmem:[%s224 + $0x1c] sm:$0xf]
        %v537 = vld [vmem:[%s224 + $0x20] sm:$0xf]
        %v538 = vld [vmem:[%s224 + $0x24] sm:$0xf]
        %v539 = vld [vmem:[%s224 + $0x28] sm:$0xf]
        %v540 = vld [vmem:[%s224 + $0x2c] sm:$0xf]
        %v541 = vld [vmem:[%s224 + $0x30] sm:$0xf]
        %v542 = vld [vmem:[%s224 + $0x34] sm:$0xf]
        %v543 = vld [vmem:[%s224 + $0x38] sm:$0xf]
        %v544 = vld [vmem:[%s224 + $0x3c] sm:$0xf]
        %v545 = vld [vmem:[%s224 + $0x40] sm:$0xf]
        %v546 = vld [vmem:[%s224 + $0x44] sm:$0xf]
        %v547 = vld [vmem:[%s224 + $0x48] sm:$0xf]
        %v548 = vld [vmem:[%s224 + $0x4c] sm:$0xf]
        %v549 = vld [vmem:[%s224 + $0x50] sm:$0xf]
        %v550 = vld [vmem:[%s224 + $0x54] sm:$0xf]
        %v551 = vld [vmem:[%s224 + $0x58] sm:$0xf]
        %v552 = vld [vmem:[%s224 + $0x5c] sm:$0xf]
        %v553 = vld [vmem:[%s224 + $0x60] sm:$0xf]
        %v554 = vld [vmem:[%s224 + $0x64] sm:$0xf]
        %v555 = vld [vmem:[%s224 + $0x68] sm:$0xf]
        %v556 = vld [vmem:[%s224 + $0x6c] sm:$0xf]
        %v557 = vld [vmem:[%s224 + $0x70] sm:$0xf]
        %v558 = vld [vmem:[%s224 + $0x74] sm:$0xf]
        %v559 = vld [vmem:[%s224 + $0x78] sm:$0xf]
        %v560 = vld [vmem:[%s224 + $0x7c] sm:$0xf]
        %v561 = vld [vmem:[%s224 + $0x80] sm:$0xf]
        %v562 = vld [vmem:[%s224 + $0x84] sm:$0xf]
        %v563 = vld [vmem:[%s224 + $0x88] sm:$0xf]
        %v564 = vld [vmem:[%s224 + $0x8c] sm:$0xf]
        %v565 = vld [vmem:[%s224 + $0x90] sm:$0xf]
        %v566 = vld [vmem:[%s224 + $0x94] sm:$0xf]
        %v567 = vld [vmem:[%s224 + $0x98] sm:$0xf]
        %v568 = vld [vmem:[%s224 + $0x9c] sm:$0xf]
        %v569 = vld [vmem:[%s224 + $0xa0] sm:$0xf]
        %v570 = vld [vmem:[%s224 + $0xa4] sm:$0xf]
        %v571 = vld [vmem:[%s224 + $0xa8] sm:$0xf]
        %v572 = vld [vmem:[%s224 + $0xac] sm:$0xf]
        %v573 = vld [vmem:[%s224 + $0xb0] sm:$0xf]
        %v574 = vld [vmem:[%s224 + $0xb4] sm:$0xf]
        %v575 = vld [vmem:[%s224 + $0xb8] sm:$0xf]
        %v576 = vld [vmem:[%s224 + $0xbc] sm:$0xf]
        %v577 = vld [vmem:[%s224 + $0xc0] sm:$0xf]
        %v578 = vld [vmem:[%s224 + $0xc4] sm:$0xf]
        %v579 = vld [vmem:[%s224 + $0xc8] sm:$0xf]
        %v580 = vld [vmem:[%s224 + $0xcc] sm:$0xf]
        %v581 = vld [vmem:[%s224 + $0xd0] sm:$0xf]
        %v582 = vld [vmem:[%s224 + $0xd4] sm:$0xf]
        %v583 = vld [vmem:[%s224 + $0xd8] sm:$0xf]
        %v584 = vld [vmem:[%s224 + $0xdc] sm:$0xf]
        %v585 = vld [vmem:[%s224 + $0xe0] sm:$0xf]
        %v586 = vld [vmem:[%s224 + $0xe4] sm:$0xf]
        %v587 = vld [vmem:[%s224 + $0xe8] sm:$0xf]
        %v588 = vld [vmem:[%s224 + $0xec] sm:$0xf]
        %v589 = vld [vmem:[%s224 + $0xf0] sm:$0xf]
        %v590 = vld [vmem:[%s224 + $0xf4] sm:$0xf]
        %v591 = vld [vmem:[%s224 + $0xf8] sm:$0xf]
        %v592 = vld [vmem:[%s224 + $0xfc] sm:$0xf]
        %v593 = vld [vmem:[%s224 + $0x100] sm:$0xf]
        %v594 = vld [vmem:[%s224 + $0x104] sm:$0xf]
        %v595 = vld [vmem:[%s224 + $0x108] sm:$0xf]
        %v596 = vld [vmem:[%s224 + $0x10c] sm:$0xf]
        %v597 = vld [vmem:[%s224 + $0x110] sm:$0xf]
        %v598 = vld [vmem:[%s224 + $0x114] sm:$0xf]
        %v599 = vld [vmem:[%s224 + $0x118] sm:$0xf]
        %v600 = vld [vmem:[%s224 + $0x11c] sm:$0xf]
        %v601 = vld [vmem:[#allocation2] sm:$0x1]
        %v603 = vlaneseq
        %v604 = vshrl.u32 %v603, 7
        %v605 = vsub.s32 0, %v604
        %v606 = vrot.slane %v601, %v605
        %v902 = vunpack.c.l.b16 %v235
        %v903 = vunpack.c.h.b16 %v235
        %v904 = vunpack.c.l.b16 %v236
        %v905 = vunpack.c.h.b16 %v236
        %v906 = vunpack.c.l.b16 %v237
        %v907 = vunpack.c.l.b16 %v238
        %v908 = vunpack.c.h.b16 %v238
        %v909 = vunpack.c.l.b16 %v239
        %v910 = vunpack.c.h.b16 %v239
        %v911 = vunpack.c.l.b16 %v240
        %v912 = vunpack.c.l.b16 %v241
        %v913 = vunpack.c.h.b16 %v241
        %v914 = vunpack.c.l.b16 %v242
        %v915 = vunpack.c.h.b16 %v242
        %v916 = vunpack.c.l.b16 %v243
        %v917 = vunpack.c.l.b16 %v244
        %v918 = vunpack.c.h.b16 %v244
        %v919 = vunpack.c.l.b16 %v245
        %v920 = vunpack.c.h.b16 %v245
        %v921 = vunpack.c.l.b16 %v246
        %v922 = vunpack.c.l.b16 %v247
        %v923 = vunpack.c.h.b16 %v247
        %v924 = vunpack.c.l.b16 %v248
        %v925 = vunpack.c.h.b16 %v248
        %v926 = vunpack.c.l.b16 %v249
        %v927 = vunpack.c.l.b16 %v250
        %v928 = vunpack.c.h.b16 %v250
        %v929 = vunpack.c.l.b16 %v251
        %v930 = vunpack.c.h.b16 %v251
        %v931 = vunpack.c.l.b16 %v252
        %v932 = vunpack.c.l.b16 %v253
        %v933 = vunpack.c.h.b16 %v253
        %v934 = vunpack.c.l.b16 %v254
        %v935 = vunpack.c.h.b16 %v254
        %v936 = vunpack.c.l.b16 %v255
        %v937 = vunpack.c.l.b16 %v256
        %v938 = vunpack.c.h.b16 %v256
        %v939 = vunpack.c.l.b16 %v257
        %v940 = vunpack.c.h.b16 %v257
        %v941 = vunpack.c.l.b16 %v258
        %v942 = vunpack.c.l.b16 %v259
        %v943 = vunpack.c.h.b16 %v259
        %v944 = vunpack.c.l.b16 %v260
        %v945 = vunpack.c.h.b16 %v260
        %v946 = vunpack.c.l.b16 %v261
        %v947 = vunpack.c.l.b16 %v262
        %v948 = vunpack.c.h.b16 %v262
        %v949 = vunpack.c.l.b16 %v263
        %v950 = vunpack.c.h.b16 %v263
        %v951 = vunpack.c.l.b16 %v264
        %v952 = vunpack.c.l.b16 %v265
        %v953 = vunpack.c.h.b16 %v265
        %v954 = vunpack.c.l.b16 %v266
        %v955 = vunpack.c.h.b16 %v266
        %v956 = vunpack.c.l.b16 %v267
        %v957 = vunpack.c.l.b16 %v268
        %v958 = vunpack.c.h.b16 %v268
        %v959 = vunpack.c.l.b16 %v269
        %v960 = vunpack.c.h.b16 %v269
        %v961 = vunpack.c.l.b16 %v270
        %v962 = vunpack.c.l.b16 %v271
        %v963 = vunpack.c.h.b16 %v271
        %v964 = vunpack.c.l.b16 %v272
        %v965 = vunpack.c.h.b16 %v272
        %v966 = vunpack.c.l.b16 %v273
        %v967 = vunpack.c.l.b16 %v274
        %v968 = vunpack.c.h.b16 %v274
        %v969 = vunpack.c.l.b16 %v275
        %v970 = vunpack.c.h.b16 %v275
        %v971 = vunpack.c.l.b16 %v276
        %v972 = vunpack.c.l.b16 %v277
        %v973 = vunpack.c.h.b16 %v277
        %v974 = vunpack.c.l.b16 %v278
        %v975 = vunpack.c.h.b16 %v278
        %v976 = vunpack.c.l.b16 %v279
        %v977 = vunpack.c.l.b16 %v280
        %v978 = vunpack.c.h.b16 %v280
        %v979 = vunpack.c.l.b16 %v281
        %v980 = vunpack.c.h.b16 %v281
        %v981 = vunpack.c.l.b16 %v282
        %v982 = vunpack.c.l.b16 %v283
        %v983 = vunpack.c.h.b16 %v283
        %v984 = vunpack.c.l.b16 %v284
        %v985 = vunpack.c.h.b16 %v284
        %v986 = vunpack.c.l.b16 %v285
        %v987 = vunpack.c.l.b16 %v286
        %v988 = vunpack.c.h.b16 %v286
        %v989 = vunpack.c.l.b16 %v287
        %v990 = vunpack.c.h.b16 %v287
        %v991 = vunpack.c.l.b16 %v288
        %v992 = vunpack.c.l.b16 %v289
        %v993 = vunpack.c.h.b16 %v289
        %v994 = vunpack.c.l.b16 %v290
        %v995 = vunpack.c.h.b16 %v290
        %v996 = vunpack.c.l.b16 %v291
        %v997 = vunpack.c.l.b16 %v292
        %v998 = vunpack.c.h.b16 %v292
        %v999 = vunpack.c.l.b16 %v293
        %v1000 = vunpack.c.h.b16 %v293
        %v1001 = vunpack.c.l.b16 %v294
        %v1002 = vunpack.c.l.b16 %v295
        %v1003 = vunpack.c.h.b16 %v295
        %v1004 = vunpack.c.l.b16 %v296
        %v1005 = vunpack.c.h.b16 %v296
        %v1006 = vunpack.c.l.b16 %v297
        %v1007 = vunpack.c.l.b16 %v298
        %v1008 = vunpack.c.h.b16 %v298
        %v1009 = vunpack.c.l.b16 %v299
        %v1010 = vunpack.c.h.b16 %v299
        %v1011 = vunpack.c.l.b16 %v300
        %v1012 = vunpack.c.l.b16 %v301
        %v1013 = vunpack.c.h.b16 %v301
        %v1014 = vunpack.c.l.b16 %v302
        %v1015 = vunpack.c.h.b16 %v302
        %v1016 = vunpack.c.l.b16 %v303
        %v1017 = vunpack.c.l.b16 %v304
        %v1018 = vunpack.c.h.b16 %v304
        %v1019 = vunpack.c.l.b16 %v305
        %v1020 = vunpack.c.h.b16 %v305
        %v1021 = vunpack.c.l.b16 %v306
        %v1022 = vunpack.c.l.b16 %v307
        %v1023 = vunpack.c.h.b16 %v307
        %v1024 = vunpack.c.l.b16 %v308
        %v1025 = vunpack.c.h.b16 %v308
        %v1026 = vunpack.c.l.b16 %v309
        %v1027 = vunpack.c.l.b16 %v310
        %v1028 = vunpack.c.h.b16 %v310
        %v1029 = vunpack.c.l.b16 %v311
        %v1030 = vunpack.c.h.b16 %v311
        %v1031 = vunpack.c.l.b16 %v312
        %v1032 = vunpack.c.l.b16 %v313
        %v1033 = vunpack.c.h.b16 %v313
        %v1034 = vunpack.c.l.b16 %v314
        %v1035 = vunpack.c.h.b16 %v314
        %v1036 = vunpack.c.l.b16 %v315
        %v1037 = vunpack.c.l.b16 %v316
        %v1038 = vunpack.c.h.b16 %v316
        %v1039 = vunpack.c.l.b16 %v317
        %v1040 = vunpack.c.h.b16 %v317
        %v1041 = vunpack.c.l.b16 %v318
        %v1042 = vunpack.c.l.b16 %v319
        %v1043 = vunpack.c.h.b16 %v319
        %v1044 = vunpack.c.l.b16 %v320
        %v1045 = vunpack.c.h.b16 %v320
        %v1046 = vunpack.c.l.b16 %v321
        %v1047 = vunpack.c.l.b16 %v322
        %v1048 = vunpack.c.h.b16 %v322
        %v1049 = vunpack.c.l.b16 %v323
        %v1050 = vunpack.c.h.b16 %v323
        %v1051 = vunpack.c.l.b16 %v324
        %v1052 = vunpack.c.l.b16 %v325
        %v1053 = vunpack.c.h.b16 %v325
        %v1054 = vunpack.c.l.b16 %v326
        %v1055 = vunpack.c.h.b16 %v326
        %v1056 = vunpack.c.l.b16 %v327
        %v1057 = vunpack.c.l.b16 %v328
        %v1058 = vunpack.c.h.b16 %v328
        %v1059 = vunpack.c.l.b16 %v329
        %v1060 = vunpack.c.h.b16 %v329
        %v1061 = vunpack.c.l.b16 %v330
        %v1062 = vunpack.c.l.b16 %v331
        %v1063 = vunpack.c.h.b16 %v331
        %v1064 = vunpack.c.l.b16 %v332
        %v1065 = vunpack.c.h.b16 %v332
        %v1066 = vunpack.c.l.b16 %v333
        %v1067 = vunpack.c.l.b16 %v334
        %v1068 = vunpack.c.h.b16 %v334
        %v1069 = vunpack.c.l.b16 %v335
        %v1070 = vunpack.c.h.b16 %v335
        %v1071 = vunpack.c.l.b16 %v336
        %v1072 = vunpack.c.l.b16 %v337
        %v1073 = vunpack.c.h.b16 %v337
        %v1074 = vunpack.c.l.b16 %v338
        %v1075 = vunpack.c.h.b16 %v338
        %v1076 = vunpack.c.l.b16 %v339
        %v1077 = vunpack.c.l.b16 %v340
        %v1078 = vunpack.c.h.b16 %v340
        %v1079 = vunpack.c.l.b16 %v341
        %v1080 = vunpack.c.h.b16 %v341
        %v1081 = vunpack.c.l.b16 %v342
        %v1082 = vunpack.c.l.b16 %v343
        %v1083 = vunpack.c.h.b16 %v343
        %v1084 = vunpack.c.l.b16 %v344
        %v1085 = vunpack.c.h.b16 %v344
        %v1086 = vunpack.c.l.b16 %v345
        %v1087 = vunpack.c.l.b16 %v346
        %v1088 = vunpack.c.h.b16 %v346
        %v1089 = vunpack.c.l.b16 %v347
        %v1090 = vunpack.c.h.b16 %v347
        %v1091 = vunpack.c.l.b16 %v348
        %v1092 = vunpack.c.l.b16 %v349
        %v1093 = vunpack.c.h.b16 %v349
        %v1094 = vunpack.c.l.b16 %v350
        %v1095 = vunpack.c.h.b16 %v350
        %v1096 = vunpack.c.l.b16 %v351
        %v1097 = vunpack.c.l.b16 %v352
        %v1098 = vunpack.c.h.b16 %v352
        %v1099 = vunpack.c.l.b16 %v353
        %v1100 = vunpack.c.h.b16 %v353
        %v1101 = vunpack.c.l.b16 %v354
        %v1102 = vunpack.c.l.b16 %v355
        %v1103 = vunpack.c.h.b16 %v355
        %v1104 = vunpack.c.l.b16 %v356
        %v1105 = vunpack.c.h.b16 %v356
        %v1106 = vunpack.c.l.b16 %v357
        %v1107 = vunpack.c.l.b16 %v358
        %v1108 = vunpack.c.h.b16 %v358
        %v1109 = vunpack.c.l.b16 %v359
        %v1110 = vunpack.c.h.b16 %v359
        %v1111 = vunpack.c.l.b16 %v360
        %v1112 = vunpack.c.l.b16 %v361
        %v1113 = vunpack.c.h.b16 %v361
        %v1114 = vunpack.c.l.b16 %v362
        %v1115 = vunpack.c.h.b16 %v362
        %v1116 = vunpack.c.l.b16 %v363
        %v1117 = vunpack.c.l.b16 %v364
        %v1118 = vunpack.c.h.b16 %v364
        %v1119 = vunpack.c.l.b16 %v365
        %v1120 = vunpack.c.h.b16 %v365
        %v1121 = vunpack.c.l.b16 %v366
        %v1122 = vunpack.c.l.b16 %v367
        %v1123 = vunpack.c.h.b16 %v367
        %v1124 = vunpack.c.l.b16 %v368
        %v1125 = vunpack.c.h.b16 %v368
        %v1126 = vunpack.c.l.b16 %v369
        %v1127 = vunpack.c.l.b16 %v370
        %v1128 = vunpack.c.h.b16 %v370
        %v1129 = vunpack.c.l.b16 %v371
        %v1130 = vunpack.c.h.b16 %v371
        %v1131 = vunpack.c.l.b16 %v372
        %v1132 = vunpack.c.l.b16 %v373
        %v1133 = vunpack.c.h.b16 %v373
        %v1134 = vunpack.c.l.b16 %v374
        %v1135 = vunpack.c.h.b16 %v374
        %v1136 = vunpack.c.l.b16 %v375
        %v1137 = vunpack.c.l.b16 %v376
        %v1138 = vunpack.c.h.b16 %v376
        %v1139 = vunpack.c.l.b16 %v377
        %v1140 = vunpack.c.h.b16 %v377
        %v1141 = vunpack.c.l.b16 %v378
        %v1142 = vunpack.c.l.b16 %v379
        %v1143 = vunpack.c.h.b16 %v379
        %v1144 = vunpack.c.l.b16 %v380
        %v1145 = vunpack.c.h.b16 %v380
        %v1146 = vunpack.c.l.b16 %v381
        %v1147 = vunpack.c.l.b16 %v382
        %v1148 = vunpack.c.h.b16 %v382
        %v1149 = vunpack.c.l.b16 %v383
        %v1150 = vunpack.c.h.b16 %v383
        %v1151 = vunpack.c.l.b16 %v384
        %v1152 = vunpack.c.l.b16 %v385
        %v1153 = vunpack.c.h.b16 %v385
        %v1154 = vunpack.c.l.b16 %v386
        %v1155 = vunpack.c.h.b16 %v386
        %v1156 = vunpack.c.l.b16 %v387
        %v1157 = vunpack.c.l.b16 %v388
        %v1158 = vunpack.c.h.b16 %v388
        %v1159 = vunpack.c.l.b16 %v389
        %v1160 = vunpack.c.h.b16 %v389
        %v1161 = vunpack.c.l.b16 %v390
        %v1162 = vunpack.c.l.b16 %v391
        %v1163 = vunpack.c.h.b16 %v391
        %v1164 = vunpack.c.l.b16 %v392
        %v1165 = vunpack.c.h.b16 %v392
        %v1166 = vunpack.c.l.b16 %v393
        %v1167 = vunpack.c.l.b16 %v394
        %v1168 = vunpack.c.h.b16 %v394
        %v1169 = vunpack.c.l.b16 %v395
        %v1170 = vunpack.c.h.b16 %v395
        %v1171 = vunpack.c.l.b16 %v396
        %v1172 = vunpack.c.l.b16 %v397
        %v1173 = vunpack.c.h.b16 %v397
        %v1174 = vunpack.c.l.b16 %v398
        %v1175 = vunpack.c.h.b16 %v398
        %v1176 = vunpack.c.l.b16 %v399
        %v1177 = vunpack.c.l.b16 %v400
        %v1178 = vunpack.c.h.b16 %v400
        %v1179 = vunpack.c.l.b16 %v401
        %v1180 = vunpack.c.h.b16 %v401
        %v1181 = vunpack.c.l.b16 %v402
        %v1182 = vunpack.c.l.b16 %v403
        %v1183 = vunpack.c.h.b16 %v403
        %v1184 = vunpack.c.l.b16 %v404
        %v1185 = vunpack.c.h.b16 %v404
        %v1186 = vunpack.c.l.b16 %v405
        %v1187 = vunpack.c.l.b16 %v406
        %v1188 = vunpack.c.h.b16 %v406
        %v1189 = vunpack.c.l.b16 %v407
        %v1190 = vunpack.c.h.b16 %v407
        %v1191 = vunpack.c.l.b16 %v408
        %v1192 = vunpack.c.l.b16 %v409
        %v1193 = vunpack.c.h.b16 %v409
        %v1194 = vunpack.c.l.b16 %v410
        %v1195 = vunpack.c.h.b16 %v410
        %v1196 = vunpack.c.l.b16 %v411
        %v1197 = vunpack.c.l.b16 %v412
        %v1198 = vunpack.c.h.b16 %v412
        %v1199 = vunpack.c.l.b16 %v413
        %v1200 = vunpack.c.h.b16 %v413
        %v1201 = vunpack.c.l.b16 %v414
        %v1202 = vunpack.c.l.b16 %v415
        %v1203 = vunpack.c.h.b16 %v415
        %v1204 = vunpack.c.l.b16 %v416
        %v1205 = vunpack.c.h.b16 %v416
        %v1206 = vunpack.c.l.b16 %v417
        %v1207 = vunpack.c.l.b16 %v418
        %v1208 = vunpack.c.h.b16 %v418
        %v1209 = vunpack.c.l.b16 %v419
        %v1210 = vunpack.c.h.b16 %v419
        %v1211 = vunpack.c.l.b16 %v420
        %v1212 = vunpack.c.l.b16 %v421
        %v1213 = vunpack.c.h.b16 %v421
        %v1214 = vunpack.c.l.b16 %v422
        %v1215 = vunpack.c.h.b16 %v422
        %v1216 = vunpack.c.l.b16 %v423
        %v1217 = vunpack.c.l.b16 %v424
        %v1218 = vunpack.c.h.b16 %v424
        %v1219 = vunpack.c.l.b16 %v425
        %v1220 = vunpack.c.h.b16 %v425
        %v1221 = vunpack.c.l.b16 %v426
        %v1222 = vunpack.c.l.b16 %v427
        %v1223 = vunpack.c.h.b16 %v427
        %v1224 = vunpack.c.l.b16 %v428
        %v1225 = vunpack.c.h.b16 %v428
        %v1226 = vunpack.c.l.b16 %v429
        %v1227 = vunpack.c.l.b16 %v430
        %v1228 = vunpack.c.h.b16 %v430
        %v1229 = vunpack.c.l.b16 %v431
        %v1230 = vunpack.c.h.b16 %v431
        %v1231 = vunpack.c.l.b16 %v432
        %v1232 = vunpack.c.l.b16 %v433
        %v1233 = vunpack.c.h.b16 %v433
        %v1234 = vunpack.c.l.b16 %v434
        %v1235 = vunpack.c.h.b16 %v434
        %v1236 = vunpack.c.l.b16 %v435
        %v1237 = vunpack.c.l.b16 %v436
        %v1238 = vunpack.c.h.b16 %v436
        %v1239 = vunpack.c.l.b16 %v437
        %v1240 = vunpack.c.h.b16 %v437
        %v1241 = vunpack.c.l.b16 %v438
        %v1242 = vunpack.c.l.b16 %v439
        %v1243 = vunpack.c.h.b16 %v439
        %v1244 = vunpack.c.l.b16 %v440
        %v1245 = vunpack.c.h.b16 %v440
        %v1246 = vunpack.c.l.b16 %v441
        %v1247 = vunpack.c.l.b16 %v442
        %v1248 = vunpack.c.h.b16 %v442
        %v1249 = vunpack.c.l.b16 %v443
        %v1250 = vunpack.c.h.b16 %v443
        %v1251 = vunpack.c.l.b16 %v444
        %v1252 = vunpack.c.l.b16 %v445
        %v1253 = vunpack.c.h.b16 %v445
        %v1254 = vunpack.c.l.b16 %v446
        %v1255 = vunpack.c.h.b16 %v446
        %v1256 = vunpack.c.l.b16 %v447
        %v1257 = vunpack.c.l.b16 %v448
        %v1258 = vunpack.c.h.b16 %v448
        %v1259 = vunpack.c.l.b16 %v449
        %v1260 = vunpack.c.h.b16 %v449
        %v1261 = vunpack.c.l.b16 %v450
        %v1262 = vunpack.c.l.b16 %v451
        %v1263 = vunpack.c.h.b16 %v451
        %v1264 = vunpack.c.l.b16 %v452
        %v1265 = vunpack.c.h.b16 %v452
        %v1266 = vunpack.c.l.b16 %v453
        %v1267 = vunpack.c.l.b16 %v454
        %v1268 = vunpack.c.h.b16 %v454
        %v1269 = vunpack.c.l.b16 %v455
        %v1270 = vunpack.c.h.b16 %v455
        %v1271 = vunpack.c.l.b16 %v456
        %v1272 = vunpack.c.l.b16 %v457
        %v1273 = vunpack.c.h.b16 %v457
        %v1274 = vunpack.c.l.b16 %v458
        %v1275 = vunpack.c.h.b16 %v458
        %v1276 = vunpack.c.l.b16 %v459
        %v1277 = vunpack.c.l.b16 %v460
        %v1278 = vunpack.c.h.b16 %v460
        %v1279 = vunpack.c.l.b16 %v461
        %v1280 = vunpack.c.h.b16 %v461
        %v1281 = vunpack.c.l.b16 %v462
        %v1282 = vunpack.c.l.b16 %v463
        %v1283 = vunpack.c.h.b16 %v463
        %v1284 = vunpack.c.l.b16 %v464
        %v1285 = vunpack.c.h.b16 %v464
        %v1286 = vunpack.c.l.b16 %v465
        %v1287 = vunpack.c.l.b16 %v466
        %v1288 = vunpack.c.h.b16 %v466
        %v1289 = vunpack.c.l.b16 %v467
        %v1290 = vunpack.c.h.b16 %v467
        %v1291 = vunpack.c.l.b16 %v468
        %v1292 = vunpack.c.l.b16 %v469
        %v1293 = vunpack.c.h.b16 %v469
        %v1294 = vunpack.c.l.b16 %v470
        %v1295 = vunpack.c.h.b16 %v470
        %v1296 = vunpack.c.l.b16 %v471
        %v1297 = vunpack.c.l.b16 %v472
        %v1298 = vunpack.c.h.b16 %v472
        %v1299 = vunpack.c.l.b16 %v473
        %v1300 = vunpack.c.h.b16 %v473
        %v1301 = vunpack.c.l.b16 %v474
        %v1302 = vunpack.c.l.b16 %v475
        %v1303 = vunpack.c.h.b16 %v475
        %v1304 = vunpack.c.l.b16 %v476
        %v1305 = vunpack.c.h.b16 %v476
        %v1306 = vunpack.c.l.b16 %v477
        %v1307 = vunpack.c.l.b16 %v478
        %v1308 = vunpack.c.h.b16 %v478
        %v1309 = vunpack.c.l.b16 %v479
        %v1310 = vunpack.c.h.b16 %v479
        %v1311 = vunpack.c.l.b16 %v480
        %v1312 = vunpack.c.l.b16 %v481
        %v1313 = vunpack.c.h.b16 %v481
        %v1314 = vunpack.c.l.b16 %v482
        %v1315 = vunpack.c.h.b16 %v482
        %v1316 = vunpack.c.l.b16 %v483
        %v1317 = vunpack.c.l.b16 %v484
        %v1318 = vunpack.c.h.b16 %v484
        %v1319 = vunpack.c.l.b16 %v485
        %v1320 = vunpack.c.h.b16 %v485
        %v1321 = vunpack.c.l.b16 %v486
        %v1322 = vunpack.c.l.b16 %v487
        %v1323 = vunpack.c.h.b16 %v487
        %v1324 = vunpack.c.l.b16 %v488
        %v1325 = vunpack.c.h.b16 %v488
        %v1326 = vunpack.c.l.b16 %v489
        %v1327 = vunpack.c.l.b16 %v490
        %v1328 = vunpack.c.h.b16 %v490
        %v1329 = vunpack.c.l.b16 %v491
        %v1330 = vunpack.c.h.b16 %v491
        %v1331 = vunpack.c.l.b16 %v492
        %v1332 = vunpack.c.l.b16 %v493
        %v1333 = vunpack.c.h.b16 %v493
        %v1334 = vunpack.c.l.b16 %v494
        %v1335 = vunpack.c.h.b16 %v494
        %v1336 = vunpack.c.l.b16 %v495
        %v1337 = vunpack.c.l.b16 %v496
        %v1338 = vunpack.c.h.b16 %v496
        %v1339 = vunpack.c.l.b16 %v497
        %v1340 = vunpack.c.h.b16 %v497
        %v1341 = vunpack.c.l.b16 %v498
        %v1342 = vunpack.c.l.b16 %v499
        %v1343 = vunpack.c.h.b16 %v499
        %v1344 = vunpack.c.l.b16 %v500
        %v1345 = vunpack.c.h.b16 %v500
        %v1346 = vunpack.c.l.b16 %v501
        %v1347 = vunpack.c.l.b16 %v502
        %v1348 = vunpack.c.h.b16 %v502
        %v1349 = vunpack.c.l.b16 %v503
        %v1350 = vunpack.c.h.b16 %v503
        %v1351 = vunpack.c.l.b16 %v504
        %v1352 = vunpack.c.l.b16 %v505
        %v1353 = vunpack.c.h.b16 %v505
        %v1354 = vunpack.c.l.b16 %v506
        %v1355 = vunpack.c.h.b16 %v506
        %v1356 = vunpack.c.l.b16 %v507
        %v1357 = vunpack.c.l.b16 %v508
        %v1358 = vunpack.c.h.b16 %v508
        %v1359 = vunpack.c.l.b16 %v509
        %v1360 = vunpack.c.h.b16 %v509
        %v1361 = vunpack.c.l.b16 %v510
        %v1362 = vunpack.c.l.b16 %v511
        %v1363 = vunpack.c.h.b16 %v511
        %v1364 = vunpack.c.l.b16 %v512
        %v1365 = vunpack.c.h.b16 %v512
        %v1366 = vunpack.c.l.b16 %v513
        %v1367 = vunpack.c.l.b16 %v514
        %v1368 = vunpack.c.h.b16 %v514
        %v1369 = vunpack.c.l.b16 %v515
        %v1370 = vunpack.c.h.b16 %v515
        %v1371 = vunpack.c.l.b16 %v516
        %v1372 = vunpack.c.l.b16 %v517
        %v1373 = vunpack.c.h.b16 %v517
        %v1374 = vunpack.c.l.b16 %v518
        %v1375 = vunpack.c.h.b16 %v518
        %v1376 = vunpack.c.l.b16 %v519
        %v1377 = vunpack.c.l.b16 %v520
        %v1378 = vunpack.c.h.b16 %v520
        %v1379 = vunpack.c.l.b16 %v521
        %v1380 = vunpack.c.h.b16 %v521
        %v1381 = vunpack.c.l.b16 %v522
        %v1382 = vunpack.c.l.b16 %v523
        %v1383 = vunpack.c.h.b16 %v523
        %v1384 = vunpack.c.l.b16 %v524
        %v1385 = vunpack.c.h.b16 %v524
        %v1386 = vunpack.c.l.b16 %v525
        %v1387 = vunpack.c.l.b16 %v526
        %v1388 = vunpack.c.h.b16 %v526
        %v1389 = vunpack.c.l.b16 %v527
        %v1390 = vunpack.c.h.b16 %v527
        %v1391 = vunpack.c.l.b16 %v528
        %v1392 = vpack.c.b16 %v907, %v902
        %v1393 = vpack.c.b16 %v908, %v903
        %v1394 = vpack.c.b16 %v909, %v904
        %v1395 = vpack.c.b16 %v910, %v905
        %v1396 = vpack.c.b16 %v911, %v906
        %v1397 = vpack.c.b16 %v917, %v912
        %v1398 = vpack.c.b16 %v918, %v913
        %v1399 = vpack.c.b16 %v919, %v914
        %v1400 = vpack.c.b16 %v920, %v915
        %v1401 = vpack.c.b16 %v921, %v916
        %v1402 = vpack.c.b16 %v927, %v922
        %v1403 = vpack.c.b16 %v928, %v923
        %v1404 = vpack.c.b16 %v929, %v924
        %v1405 = vpack.c.b16 %v930, %v925
        %v1406 = vpack.c.b16 %v931, %v926
        %v1407 = vpack.c.b16 %v937, %v932
        %v1408 = vpack.c.b16 %v938, %v933
        %v1409 = vpack.c.b16 %v939, %v934
        %v1410 = vpack.c.b16 %v940, %v935
        %v1411 = vpack.c.b16 %v941, %v936
        %v1412 = vpack.c.b16 %v947, %v942
        %v1413 = vpack.c.b16 %v948, %v943
        %v1414 = vpack.c.b16 %v949, %v944
        %v1415 = vpack.c.b16 %v950, %v945
        %v1416 = vpack.c.b16 %v951, %v946
        %v1417 = vpack.c.b16 %v957, %v952
        %v1418 = vpack.c.b16 %v958, %v953
        %v1419 = vpack.c.b16 %v959, %v954
        %v1420 = vpack.c.b16 %v960, %v955
        %v1421 = vpack.c.b16 %v961, %v956
        %v1422 = vpack.c.b16 %v967, %v962
        %v1423 = vpack.c.b16 %v968, %v963
        %v1424 = vpack.c.b16 %v969, %v964
        %v1425 = vpack.c.b16 %v970, %v965
        %v1426 = vpack.c.b16 %v971, %v966
        %v1427 = vpack.c.b16 %v977, %v972
        %v1428 = vpack.c.b16 %v978, %v973
        %v1429 = vpack.c.b16 %v979, %v974
        %v1430 = vpack.c.b16 %v980, %v975
        %v1431 = vpack.c.b16 %v981, %v976
        %v1432 = vpack.c.b16 %v987, %v982
        %v1433 = vpack.c.b16 %v988, %v983
        %v1434 = vpack.c.b16 %v989, %v984
        %v1435 = vpack.c.b16 %v990, %v985
        %v1436 = vpack.c.b16 %v991, %v986
        %v1437 = vpack.c.b16 %v997, %v992
        %v1438 = vpack.c.b16 %v998, %v993
        %v1439 = vpack.c.b16 %v999, %v994
        %v1440 = vpack.c.b16 %v1000, %v995
        %v1441 = vpack.c.b16 %v1001, %v996
        %v1442 = vpack.c.b16 %v1007, %v1002
        %v1443 = vpack.c.b16 %v1008, %v1003
        %v1444 = vpack.c.b16 %v1009, %v1004
        %v1445 = vpack.c.b16 %v1010, %v1005
        %v1446 = vpack.c.b16 %v1011, %v1006
        %v1447 = vpack.c.b16 %v1017, %v1012
        %v1448 = vpack.c.b16 %v1018, %v1013
        %v1449 = vpack.c.b16 %v1019, %v1014
        %v1450 = vpack.c.b16 %v1020, %v1015
        %v1451 = vpack.c.b16 %v1021, %v1016
        %v1452 = vpack.c.b16 %v1027, %v1022
        %v1453 = vpack.c.b16 %v1028, %v1023
        %v1454 = vpack.c.b16 %v1029, %v1024
        %v1455 = vpack.c.b16 %v1030, %v1025
        %v1456 = vpack.c.b16 %v1031, %v1026
        %v1457 = vpack.c.b16 %v1037, %v1032
        %v1458 = vpack.c.b16 %v1038, %v1033
        %v1459 = vpack.c.b16 %v1039, %v1034
        %v1460 = vpack.c.b16 %v1040, %v1035
        %v1461 = vpack.c.b16 %v1041, %v1036
        %v1462 = vpack.c.b16 %v1047, %v1042
        %v1463 = vpack.c.b16 %v1048, %v1043
        %v1464 = vpack.c.b16 %v1049, %v1044
        %v1465 = vpack.c.b16 %v1050, %v1045
        %v1466 = vpack.c.b16 %v1051, %v1046
        %v1467 = vpack.c.b16 %v1057, %v1052
        %v1468 = vpack.c.b16 %v1058, %v1053
        %v1469 = vpack.c.b16 %v1059, %v1054
        %v1470 = vpack.c.b16 %v1060, %v1055
        %v1471 = vpack.c.b16 %v1061, %v1056
        %v1472 = vpack.c.b16 %v1067, %v1062
        %v1473 = vpack.c.b16 %v1068, %v1063
        %v1474 = vpack.c.b16 %v1069, %v1064
        %v1475 = vpack.c.b16 %v1070, %v1065
        %v1476 = vpack.c.b16 %v1071, %v1066
        %v1477 = vpack.c.b16 %v1077, %v1072
        %v1478 = vpack.c.b16 %v1078, %v1073
        %v1479 = vpack.c.b16 %v1079, %v1074
        %v1480 = vpack.c.b16 %v1080, %v1075
        %v1481 = vpack.c.b16 %v1081, %v1076
        %v1482 = vpack.c.b16 %v1087, %v1082
        %v1483 = vpack.c.b16 %v1088, %v1083
        %v1484 = vpack.c.b16 %v1089, %v1084
        %v1485 = vpack.c.b16 %v1090, %v1085
        %v1486 = vpack.c.b16 %v1091, %v1086
        %v1487 = vpack.c.b16 %v1097, %v1092
        %v1488 = vpack.c.b16 %v1098, %v1093
        %v1489 = vpack.c.b16 %v1099, %v1094
        %v1490 = vpack.c.b16 %v1100, %v1095
        %v1491 = vpack.c.b16 %v1101, %v1096
        %v1492 = vpack.c.b16 %v1107, %v1102
        %v1493 = vpack.c.b16 %v1108, %v1103
        %v1494 = vpack.c.b16 %v1109, %v1104
        %v1495 = vpack.c.b16 %v1110, %v1105
        %v1496 = vpack.c.b16 %v1111, %v1106
        %v1497 = vpack.c.b16 %v1117, %v1112
        %v1498 = vpack.c.b16 %v1118, %v1113
        %v1499 = vpack.c.b16 %v1119, %v1114
        %v1500 = vpack.c.b16 %v1120, %v1115
        %v1501 = vpack.c.b16 %v1121, %v1116
        %v1502 = vpack.c.b16 %v1127, %v1122
        %v1503 = vpack.c.b16 %v1128, %v1123
        %v1504 = vpack.c.b16 %v1129, %v1124
        %v1505 = vpack.c.b16 %v1130, %v1125
        %v1506 = vpack.c.b16 %v1131, %v1126
        %v1507 = vpack.c.b16 %v1137, %v1132
        %v1508 = vpack.c.b16 %v1138, %v1133
        %v1509 = vpack.c.b16 %v1139, %v1134
        %v1510 = vpack.c.b16 %v1140, %v1135
        %v1511 = vpack.c.b16 %v1141, %v1136
        %v1512 = vpack.c.b16 %v1147, %v1142
        %v1513 = vpack.c.b16 %v1148, %v1143
        %v1514 = vpack.c.b16 %v1149, %v1144
        %v1515 = vpack.c.b16 %v1150, %v1145
        %v1516 = vpack.c.b16 %v1151, %v1146
        %v1517 = vpack.c.b16 %v1157, %v1152
        %v1518 = vpack.c.b16 %v1158, %v1153
        %v1519 = vpack.c.b16 %v1159, %v1154
        %v1520 = vpack.c.b16 %v1160, %v1155
        %v1521 = vpack.c.b16 %v1161, %v1156
        %v1522 = vpack.c.b16 %v1167, %v1162
        %v1523 = vpack.c.b16 %v1168, %v1163
        %v1524 = vpack.c.b16 %v1169, %v1164
        %v1525 = vpack.c.b16 %v1170, %v1165
        %v1526 = vpack.c.b16 %v1171, %v1166
        %v1527 = vpack.c.b16 %v1177, %v1172
        %v1528 = vpack.c.b16 %v1178, %v1173
        %v1529 = vpack.c.b16 %v1179, %v1174
        %v1530 = vpack.c.b16 %v1180, %v1175
        %v1531 = vpack.c.b16 %v1181, %v1176
        %v1532 = vpack.c.b16 %v1187, %v1182
        %v1533 = vpack.c.b16 %v1188, %v1183
        %v1534 = vpack.c.b16 %v1189, %v1184
        %v1535 = vpack.c.b16 %v1190, %v1185
        %v1536 = vpack.c.b16 %v1191, %v1186
        %v1537 = vpack.c.b16 %v1197, %v1192
        %v1538 = vpack.c.b16 %v1198, %v1193
        %v1539 = vpack.c.b16 %v1199, %v1194
        %v1540 = vpack.c.b16 %v1200, %v1195
        %v1541 = vpack.c.b16 %v1201, %v1196
        %v1542 = vpack.c.b16 %v1207, %v1202
        %v1543 = vpack.c.b16 %v1208, %v1203
        %v1544 = vpack.c.b16 %v1209, %v1204
        %v1545 = vpack.c.b16 %v1210, %v1205
        %v1546 = vpack.c.b16 %v1211, %v1206
        %v1547 = vpack.c.b16 %v1217, %v1212
        %v1548 = vpack.c.b16 %v1218, %v1213
        %v1549 = vpack.c.b16 %v1219, %v1214
        %v1550 = vpack.c.b16 %v1220, %v1215
        %v1551 = vpack.c.b16 %v1221, %v1216
        %v1552 = vpack.c.b16 %v1227, %v1222
        %v1553 = vpack.c.b16 %v1228, %v1223
        %v1554 = vpack.c.b16 %v1229, %v1224
        %v1555 = vpack.c.b16 %v1230, %v1225
        %v1556 = vpack.c.b16 %v1231, %v1226
        %v1557 = vpack.c.b16 %v1237, %v1232
        %v1558 = vpack.c.b16 %v1238, %v1233
        %v1559 = vpack.c.b16 %v1239, %v1234
        %v1560 = vpack.c.b16 %v1240, %v1235
        %v1561 = vpack.c.b16 %v1241, %v1236
        %v1562 = vpack.c.b16 %v1247, %v1242
        %v1563 = vpack.c.b16 %v1248, %v1243
        %v1564 = vpack.c.b16 %v1249, %v1244
        %v1565 = vpack.c.b16 %v1250, %v1245
        %v1566 = vpack.c.b16 %v1251, %v1246
        %v1567 = vpack.c.b16 %v1257, %v1252
        %v1568 = vpack.c.b16 %v1258, %v1253
        %v1569 = vpack.c.b16 %v1259, %v1254
        %v1570 = vpack.c.b16 %v1260, %v1255
        %v1571 = vpack.c.b16 %v1261, %v1256
        %v1572 = vpack.c.b16 %v1267, %v1262
        %v1573 = vpack.c.b16 %v1268, %v1263
        %v1574 = vpack.c.b16 %v1269, %v1264
        %v1575 = vpack.c.b16 %v1270, %v1265
        %v1576 = vpack.c.b16 %v1271, %v1266
        %v1577 = vpack.c.b16 %v1277, %v1272
        %v1578 = vpack.c.b16 %v1278, %v1273
        %v1579 = vpack.c.b16 %v1279, %v1274
        %v1580 = vpack.c.b16 %v1280, %v1275
        %v1581 = vpack.c.b16 %v1281, %v1276
        %v1582 = vpack.c.b16 %v1287, %v1282
        %v1583 = vpack.c.b16 %v1288, %v1283
        %v1584 = vpack.c.b16 %v1289, %v1284
        %v1585 = vpack.c.b16 %v1290, %v1285
        %v1586 = vpack.c.b16 %v1291, %v1286
        %v1587 = vpack.c.b16 %v1297, %v1292
        %v1588 = vpack.c.b16 %v1298, %v1293
        %v1589 = vpack.c.b16 %v1299, %v1294
        %v1590 = vpack.c.b16 %v1300, %v1295
        %v1591 = vpack.c.b16 %v1301, %v1296
        %v1592 = vpack.c.b16 %v1307, %v1302
        %v1593 = vpack.c.b16 %v1308, %v1303
        %v1594 = vpack.c.b16 %v1309, %v1304
        %v1595 = vpack.c.b16 %v1310, %v1305
        %v1596 = vpack.c.b16 %v1311, %v1306
        %v1597 = vpack.c.b16 %v1317, %v1312
        %v1598 = vpack.c.b16 %v1318, %v1313
        %v1599 = vpack.c.b16 %v1319, %v1314
        %v1600 = vpack.c.b16 %v1320, %v1315
        %v1601 = vpack.c.b16 %v1321, %v1316
        %v1602 = vpack.c.b16 %v1327, %v1322
        %v1603 = vpack.c.b16 %v1328, %v1323
        %v1604 = vpack.c.b16 %v1329, %v1324
        %v1605 = vpack.c.b16 %v1330, %v1325
        %v1606 = vpack.c.b16 %v1331, %v1326
        %v1607 = vpack.c.b16 %v1337, %v1332
        %v1608 = vpack.c.b16 %v1338, %v1333
        %v1609 = vpack.c.b16 %v1339, %v1334
        %v1610 = vpack.c.b16 %v1340, %v1335
        %v1611 = vpack.c.b16 %v1341, %v1336
        %v1612 = vpack.c.b16 %v1347, %v1342
        %v1613 = vpack.c.b16 %v1348, %v1343
        %v1614 = vpack.c.b16 %v1349, %v1344
        %v1615 = vpack.c.b16 %v1350, %v1345
        %v1616 = vpack.c.b16 %v1351, %v1346
        %v1617 = vpack.c.b16 %v1357, %v1352
        %v1618 = vpack.c.b16 %v1358, %v1353
        %v1619 = vpack.c.b16 %v1359, %v1354
        %v1620 = vpack.c.b16 %v1360, %v1355
        %v1621 = vpack.c.b16 %v1361, %v1356
        %v1622 = vpack.c.b16 %v1367, %v1362
        %v1623 = vpack.c.b16 %v1368, %v1363
        %v1624 = vpack.c.b16 %v1369, %v1364
        %v1625 = vpack.c.b16 %v1370, %v1365
        %v1626 = vpack.c.b16 %v1371, %v1366
        %v1627 = vpack.c.b16 %v1377, %v1372
        %v1628 = vpack.c.b16 %v1378, %v1373
        %v1629 = vpack.c.b16 %v1379, %v1374
        %v1630 = vpack.c.b16 %v1380, %v1375
        %v1631 = vpack.c.b16 %v1381, %v1376
        %v1632 = vpack.c.b16 %v1387, %v1382
        %v1633 = vpack.c.b16 %v1388, %v1383
        %v1634 = vpack.c.b16 %v1389, %v1384
        %v1635 = vpack.c.b16 %v1390, %v1385
        %v1636 = vpack.c.b16 %v1391, %v1386
        %v1905 = vunpack.c.l.b16 %v529
        %v1906 = vunpack.c.l.b16 %v530
        %v1907 = vunpack.c.l.b16 %v531
        %v1908 = vunpack.c.l.b16 %v532
        %v1909 = vunpack.c.l.b16 %v533
        %v1910 = vunpack.c.l.b16 %v534
        %v1911 = vunpack.c.l.b16 %v535
        %v1912 = vunpack.c.l.b16 %v536
        %v1913 = vunpack.c.l.b16 %v537
        %v1914 = vunpack.c.l.b16 %v538
        %v1915 = vunpack.c.l.b16 %v539
        %v1916 = vunpack.c.l.b16 %v540
        %v1917 = vunpack.c.l.b16 %v541
        %v1918 = vunpack.c.l.b16 %v542
        %v1919 = vunpack.c.l.b16 %v543
        %v1920 = vunpack.c.l.b16 %v544
        %v1921 = vunpack.c.l.b16 %v545
        %v1922 = vunpack.c.l.b16 %v546
        %v1923 = vunpack.c.l.b16 %v547
        %v1924 = vunpack.c.l.b16 %v548
        %v1925 = vunpack.c.l.b16 %v549
        %v1926 = vunpack.c.l.b16 %v550
        %v1927 = vunpack.c.l.b16 %v551
        %v1928 = vunpack.c.l.b16 %v552
        %v1929 = vunpack.c.l.b16 %v553
        %v1930 = vunpack.c.l.b16 %v554
        %v1931 = vunpack.c.l.b16 %v555
        %v1932 = vunpack.c.l.b16 %v556
        %v1933 = vunpack.c.l.b16 %v557
        %v1934 = vunpack.c.l.b16 %v558
        %v1935 = vunpack.c.l.b16 %v559
        %v1936 = vunpack.c.l.b16 %v560
        %v1937 = vunpack.c.l.b16 %v561
        %v1938 = vunpack.c.l.b16 %v562
        %v1939 = vunpack.c.l.b16 %v563
        %v1940 = vunpack.c.l.b16 %v564
        %v1941 = vunpack.c.l.b16 %v565
        %v1942 = vunpack.c.l.b16 %v566
        %v1943 = vunpack.c.l.b16 %v567
        %v1944 = vunpack.c.l.b16 %v568
        %v1945 = vunpack.c.l.b16 %v569
        %v1946 = vunpack.c.l.b16 %v570
        %v1947 = vunpack.c.l.b16 %v571
        %v1948 = vunpack.c.l.b16 %v572
        %v1949 = vunpack.c.l.b16 %v573
        %v1950 = vunpack.c.l.b16 %v574
        %v1951 = vunpack.c.l.b16 %v575
        %v1952 = vunpack.c.l.b16 %v576
        %v1953 = vunpack.c.l.b16 %v577
        %v1954 = vunpack.c.l.b16 %v578
        %v1955 = vunpack.c.l.b16 %v579
        %v1956 = vunpack.c.l.b16 %v580
        %v1957 = vunpack.c.l.b16 %v581
        %v1958 = vunpack.c.l.b16 %v582
        %v1959 = vunpack.c.l.b16 %v583
        %v1960 = vunpack.c.l.b16 %v584
        %v1961 = vunpack.c.l.b16 %v585
        %v1962 = vunpack.c.l.b16 %v586
        %v1963 = vunpack.c.l.b16 %v587
        %v1964 = vunpack.c.l.b16 %v588
        %v1965 = vunpack.c.l.b16 %v589
        %v1966 = vunpack.c.l.b16 %v590
        %v1967 = vunpack.c.l.b16 %v591
        %v1968 = vunpack.c.l.b16 %v592
        %v1969 = vunpack.c.l.b16 %v593
        %v1970 = vunpack.c.l.b16 %v594
        %v1971 = vunpack.c.l.b16 %v595
        %v1972 = vunpack.c.l.b16 %v596
        %v1973 = vunpack.c.l.b16 %v597
        %v1974 = vunpack.c.l.b16 %v598
        %v1975 = vunpack.c.l.b16 %v599
        %v1976 = vunpack.c.l.b16 %v600
        %v1977 = vpack.c.b16 %v1906, %v1905
        %v1978 = vpack.c.b16 %v1908, %v1907
        %v1979 = vpack.c.b16 %v1910, %v1909
        %v1980 = vpack.c.b16 %v1912, %v1911
        %v1981 = vpack.c.b16 %v1914, %v1913
        %v1982 = vpack.c.b16 %v1916, %v1915
        %v1983 = vpack.c.b16 %v1918, %v1917
        %v1984 = vpack.c.b16 %v1920, %v1919
        %v1985 = vpack.c.b16 %v1922, %v1921
        %v1986 = vpack.c.b16 %v1924, %v1923
        %v1987 = vpack.c.b16 %v1926, %v1925
        %v1988 = vpack.c.b16 %v1928, %v1927
        %v1989 = vpack.c.b16 %v1930, %v1929
        %v1990 = vpack.c.b16 %v1932, %v1931
        %v1991 = vpack.c.b16 %v1934, %v1933
        %v1992 = vpack.c.b16 %v1936, %v1935
        %v1993 = vpack.c.b16 %v1938, %v1937
        %v1994 = vpack.c.b16 %v1940, %v1939
        %v1995 = vpack.c.b16 %v1942, %v1941
        %v1996 = vpack.c.b16 %v1944, %v1943
        %v1997 = vpack.c.b16 %v1946, %v1945
        %v1998 = vpack.c.b16 %v1948, %v1947
        %v1999 = vpack.c.b16 %v1950, %v1949
        %v2000 = vpack.c.b16 %v1952, %v1951
        %v2001 = vpack.c.b16 %v1954, %v1953
        %v2002 = vpack.c.b16 %v1956, %v1955
        %v2003 = vpack.c.b16 %v1958, %v1957
        %v2004 = vpack.c.b16 %v1960, %v1959
        %v2005 = vpack.c.b16 %v1962, %v1961
        %v2006 = vpack.c.b16 %v1964, %v1963
        %v2007 = vpack.c.b16 %v1966, %v1965
        %v2008 = vpack.c.b16 %v1968, %v1967
        %v2009 = vpack.c.b16 %v1970, %v1969
        %v2010 = vpack.c.b16 %v1972, %v1971
        %v2011 = vpack.c.b16 %v1974, %v1973
        %v2012 = vpack.c.b16 %v1976, %v1975
        %vm2049 = vcmask 523264
        %v2051 = vsel %vm2049, %v1396, 0
        %v2054 = vsel %vm2049, %v1401, 0
        %v2057 = vsel %vm2049, %v1406, 0
        %v2060 = vsel %vm2049, %v1411, 0
        %v2063 = vsel %vm2049, %v1416, 0
        %v2066 = vsel %vm2049, %v1421, 0
        %v2069 = vsel %vm2049, %v1426, 0
        %v2072 = vsel %vm2049, %v1431, 0
        %v2075 = vsel %vm2049, %v1436, 0
        %v2078 = vsel %vm2049, %v1441, 0
        %v2081 = vsel %vm2049, %v1446, 0
        %v2084 = vsel %vm2049, %v1451, 0
        %v2087 = vsel %vm2049, %v1456, 0
        %v2090 = vsel %vm2049, %v1461, 0
        %v2093 = vsel %vm2049, %v1466, 0
        %v2096 = vsel %vm2049, %v1471, 0
        %v2099 = vsel %vm2049, %v1476, 0
        %v2102 = vsel %vm2049, %v1481, 0
        %v2105 = vsel %vm2049, %v1486, 0
        %v2108 = vsel %vm2049, %v1491, 0
        %v2111 = vsel %vm2049, %v1496, 0
        %v2114 = vsel %vm2049, %v1501, 0
        %v2117 = vsel %vm2049, %v1506, 0
        %v2120 = vsel %vm2049, %v1511, 0
        %v2123 = vsel %vm2049, %v1516, 0
        %v2126 = vsel %vm2049, %v1521, 0
        %v2129 = vsel %vm2049, %v1526, 0
        %v2132 = vsel %vm2049, %v1531, 0
        %v2135 = vsel %vm2049, %v1536, 0
        %v2138 = vsel %vm2049, %v1541, 0
        %v2141 = vsel %vm2049, %v1546, 0
        %v2144 = vsel %vm2049, %v1551, 0
        %v2147 = vsel %vm2049, %v1556, 0
        %v2150 = vsel %vm2049, %v1561, 0
        %v2153 = vsel %vm2049, %v1566, 0
        %v2156 = vsel %vm2049, %v1571, 0
        %v2159 = vsel %vm2049, %v1576, 0
        %v2162 = vsel %vm2049, %v1581, 0
        %v2165 = vsel %vm2049, %v1586, 0
        %v2168 = vsel %vm2049, %v1591, 0
        %v2171 = vsel %vm2049, %v1596, 0
        %v2174 = vsel %vm2049, %v1601, 0
        %v2177 = vsel %vm2049, %v1606, 0
        %v2180 = vsel %vm2049, %v1611, 0
        %v2183 = vsel %vm2049, %v1616, 0
        %v2186 = vsel %vm2049, %v1621, 0
        %v2189 = vsel %vm2049, %v1626, 0
        %v2192 = vsel %vm2049, %v1631, 0
        %v2195 = vsel %vm2049, %v1636, 0
        %2197 = vmatprep.subr.bf16.mxu0 0
        %2198 = vmatpush1.bf16.msra.mxu0 %v1984
        %2199 = vmatprep.subr.bf16.mxu0 0
        %2200 = vmatpush1.bf16.msra.mxu0 %v1983
        %2201 = vmatprep.subr.bf16.mxu0 0
        %2202 = vmatpush1.bf16.msra.mxu0 %v1982
        %2203 = vmatprep.subr.bf16.mxu0 0
        %2204 = vmatpush1.bf16.msra.mxu0 %v1981
        %2205 = vmatprep.subr.bf16.mxu0 0
        %2206 = vmatpush1.bf16.msra.mxu0 %v1980
        %2207 = vmatprep.subr.bf16.mxu0 0
        %2208 = vmatpush1.bf16.msra.mxu0 %v1979
        %2209 = vmatprep.subr.bf16.mxu0 0
        %2210 = vmatpush1.bf16.msra.mxu0 %v1978
        %2211 = vmatprep.subr.bf16.mxu0 0
        %2212 = vmatpush1.bf16.msra.mxu0 %v1977
        %2213 = vmatprep.subr.bf16.mxu0 0
        %2214 = vmatpush2.bf16.msra.mxu0 %v1992
        %2215 = vmatprep.subr.bf16.mxu0 0
        %2216 = vmatpush2.bf16.msra.mxu0 %v1991
        %2217 = vmatprep.subr.bf16.mxu0 0
        %2218 = vmatpush2.bf16.msra.mxu0 %v1990
        %2219 = vmatprep.subr.bf16.mxu0 0
        %2220 = vmatpush2.bf16.msra.mxu0 %v1989
        %2221 = vmatprep.subr.bf16.mxu0 0
        %2222 = vmatpush2.bf16.msra.mxu0 %v1988
        %2223 = vmatprep.subr.bf16.mxu0 0
        %2224 = vmatpush2.bf16.msra.mxu0 %v1987
        %2225 = vmatprep.subr.bf16.mxu0 0
        %2226 = vmatpush2.bf16.msra.mxu0 %v1986
        %2227 = vmatprep.subr.bf16.mxu0 0
        %2228 = vmatpush2.bf16.msra.mxu0 %v1985
        %2229 = vmatprep.mubr.bf16.mxu0 %v1393
        %2230 = vmatmul.mubr.bf16.gmra.mxu0 %v1392
        %v2231 = vpop.f32.mrf.mxu0
        %v2232 = vadd.f32 %v606, %v2231
        %v2233 = vpop.f32.mrf.mxu0
        %v2234 = vpop.f32.mrf.mxu0
        %v2235 = vadd.f32 %v606, %v2234
        %v2236 = vpop.f32.mrf.mxu0
        %2237 = vmatprep.mubr.bf16.mxu0 %v1398
        %2238 = vmatmul.mubr.bf16.gmra.mxu0 %v1397
        %v2239 = vpop.f32.mrf.mxu0
        %v2240 = vadd.f32 %v606, %v2239
        %v2241 = vpop.f32.mrf.mxu0
        %v2242 = vpop.f32.mrf.mxu0
        %v2243 = vadd.f32 %v606, %v2242
        %v2244 = vpop.f32.mrf.mxu0
        %2245 = vmatprep.mubr.bf16.mxu0 %v1403
        %2246 = vmatmul.mubr.bf16.gmra.mxu0 %v1402
        %v2247 = vpop.f32.mrf.mxu0
        %v2248 = vadd.f32 %v606, %v2247
        %v2249 = vpop.f32.mrf.mxu0
        %v2250 = vpop.f32.mrf.mxu0
        %v2251 = vadd.f32 %v606, %v2250
        %v2252 = vpop.f32.mrf.mxu0
        %2253 = vmatprep.mubr.bf16.mxu0 %v1408
        %2254 = vmatmul.mubr.bf16.gmra.mxu0 %v1407
        %v2255 = vpop.f32.mrf.mxu0
        %v2256 = vadd.f32 %v606, %v2255
        %v2257 = vpop.f32.mrf.mxu0
        %v2258 = vpop.f32.mrf.mxu0
        %v2259 = vadd.f32 %v606, %v2258
        %v2260 = vpop.f32.mrf.mxu0
        %2261 = vmatprep.mubr.bf16.mxu0 %v1413
        %2262 = vmatmul.mubr.bf16.gmra.mxu0 %v1412
        %v2263 = vpop.f32.mrf.mxu0
        %v2264 = vadd.f32 %v606, %v2263
        %v2265 = vpop.f32.mrf.mxu0
        %v2266 = vpop.f32.mrf.mxu0
        %v2267 = vadd.f32 %v606, %v2266
        %v2268 = vpop.f32.mrf.mxu0
        %2269 = vmatprep.mubr.bf16.mxu0 %v1418
        %2270 = vmatmul.mubr.bf16.gmra.mxu0 %v1417
        %v2271 = vpop.f32.mrf.mxu0
        %v2272 = vadd.f32 %v606, %v2271
        %v2273 = vpop.f32.mrf.mxu0
        %v2274 = vpop.f32.mrf.mxu0
        %v2275 = vadd.f32 %v606, %v2274
        %v2276 = vpop.f32.mrf.mxu0
        %2277 = vmatprep.mubr.bf16.mxu0 %v1423
        %2278 = vmatmul.mubr.bf16.gmra.mxu0 %v1422
        %v2279 = vpop.f32.mrf.mxu0
        %v2280 = vadd.f32 %v606, %v2279
        %v2281 = vpop.f32.mrf.mxu0
        %v2282 = vpop.f32.mrf.mxu0
        %v2283 = vadd.f32 %v606, %v2282
        %v2284 = vpop.f32.mrf.mxu0
        %2285 = vmatprep.mubr.bf16.mxu0 %v1428
        %2286 = vmatmul.mubr.bf16.gmra.mxu0 %v1427
        %v2287 = vpop.f32.mrf.mxu0
        %v2288 = vadd.f32 %v606, %v2287
        %v2289 = vpop.f32.mrf.mxu0
        %v2290 = vpop.f32.mrf.mxu0
        %v2291 = vadd.f32 %v606, %v2290
        %v2292 = vpop.f32.mrf.mxu0
        %2293 = vmatprep.mubr.bf16.mxu0 %v1433
        %2294 = vmatmul.mubr.bf16.gmra.mxu0 %v1432
        %v2295 = vpop.f32.mrf.mxu0
        %v2296 = vadd.f32 %v606, %v2295
        %v2297 = vpop.f32.mrf.mxu0
        %v2298 = vpop.f32.mrf.mxu0
        %v2299 = vadd.f32 %v606, %v2298
        %v2300 = vpop.f32.mrf.mxu0
        %2301 = vmatprep.mubr.bf16.mxu0 %v1438
        %2302 = vmatmul.mubr.bf16.gmra.mxu0 %v1437
        %v2303 = vpop.f32.mrf.mxu0
        %v2304 = vadd.f32 %v606, %v2303
        %v2305 = vpop.f32.mrf.mxu0
        %v2306 = vpop.f32.mrf.mxu0
        %v2307 = vadd.f32 %v606, %v2306
        %v2308 = vpop.f32.mrf.mxu0
        %2309 = vmatprep.mubr.bf16.mxu0 %v1443
        %2310 = vmatmul.mubr.bf16.gmra.mxu0 %v1442
        %v2311 = vpop.f32.mrf.mxu0
        %v2312 = vadd.f32 %v606, %v2311
        %v2313 = vpop.f32.mrf.mxu0
        %v2314 = vpop.f32.mrf.mxu0
        %v2315 = vadd.f32 %v606, %v2314
        %v2316 = vpop.f32.mrf.mxu0
        %2317 = vmatprep.mubr.bf16.mxu0 %v1448
        %2318 = vmatmul.mubr.bf16.gmra.mxu0 %v1447
        %v2319 = vpop.f32.mrf.mxu0
        %v2320 = vadd.f32 %v606, %v2319
        %v2321 = vpop.f32.mrf.mxu0
        %v2322 = vpop.f32.mrf.mxu0
        %v2323 = vadd.f32 %v606, %v2322
        %v2324 = vpop.f32.mrf.mxu0
        %2325 = vmatprep.mubr.bf16.mxu0 %v1453
        %2326 = vmatmul.mubr.bf16.gmra.mxu0 %v1452
        %v2327 = vpop.f32.mrf.mxu0
        %v2328 = vadd.f32 %v606, %v2327
        %v2329 = vpop.f32.mrf.mxu0
        %v2330 = vpop.f32.mrf.mxu0
        %v2331 = vadd.f32 %v606, %v2330
        %v2332 = vpop.f32.mrf.mxu0
        %2333 = vmatprep.mubr.bf16.mxu0 %v1458
        %2334 = vmatmul.mubr.bf16.gmra.mxu0 %v1457
        %v2335 = vpop.f32.mrf.mxu0
        %v2336 = vadd.f32 %v606, %v2335
        %v2337 = vpop.f32.mrf.mxu0
        %v2338 = vpop.f32.mrf.mxu0
        %v2339 = vadd.f32 %v606, %v2338
        %v2340 = vpop.f32.mrf.mxu0
        %2341 = vmatprep.mubr.bf16.mxu0 %v1463
        %2342 = vmatmul.mubr.bf16.gmra.mxu0 %v1462
        %v2343 = vpop.f32.mrf.mxu0
        %v2344 = vadd.f32 %v606, %v2343
        %v2345 = vpop.f32.mrf.mxu0
        %v2346 = vpop.f32.mrf.mxu0
        %v2347 = vadd.f32 %v606, %v2346
        %v2348 = vpop.f32.mrf.mxu0
        %2349 = vmatprep.mubr.bf16.mxu0 %v1468
        %2350 = vmatmul.mubr.bf16.gmra.mxu0 %v1467
        %v2351 = vpop.f32.mrf.mxu0
        %v2352 = vadd.f32 %v606, %v2351
        %v2353 = vpop.f32.mrf.mxu0
        %v2354 = vpop.f32.mrf.mxu0
        %v2355 = vadd.f32 %v606, %v2354
        %v2356 = vpop.f32.mrf.mxu0
        %2357 = vmatprep.mubr.bf16.mxu0 %v1473
        %2358 = vmatmul.mubr.bf16.gmra.mxu0 %v1472
        %v2359 = vpop.f32.mrf.mxu0
        %v2360 = vadd.f32 %v606, %v2359
        %v2361 = vpop.f32.mrf.mxu0
        %v2362 = vpop.f32.mrf.mxu0
        %v2363 = vadd.f32 %v606, %v2362
        %v2364 = vpop.f32.mrf.mxu0
        %2365 = vmatprep.mubr.bf16.mxu0 %v1478
        %2366 = vmatmul.mubr.bf16.gmra.mxu0 %v1477
        %v2367 = vpop.f32.mrf.mxu0
        %v2368 = vadd.f32 %v606, %v2367
        %v2369 = vpop.f32.mrf.mxu0
        %v2370 = vpop.f32.mrf.mxu0
        %v2371 = vadd.f32 %v606, %v2370
        %v2372 = vpop.f32.mrf.mxu0
        %2373 = vmatprep.mubr.bf16.mxu0 %v1483
        %2374 = vmatmul.mubr.bf16.gmra.mxu0 %v1482
        %v2375 = vpop.f32.mrf.mxu0
        %v2376 = vadd.f32 %v606, %v2375
        %v2377 = vpop.f32.mrf.mxu0
        %v2378 = vpop.f32.mrf.mxu0
        %v2379 = vadd.f32 %v606, %v2378
        %v2380 = vpop.f32.mrf.mxu0
        %2381 = vmatprep.mubr.bf16.mxu0 %v1488
        %2382 = vmatmul.mubr.bf16.gmra.mxu0 %v1487
        %v2383 = vpop.f32.mrf.mxu0
        %v2384 = vadd.f32 %v606, %v2383
        %v2385 = vpop.f32.mrf.mxu0
        %v2386 = vpop.f32.mrf.mxu0
        %v2387 = vadd.f32 %v606, %v2386
        %v2388 = vpop.f32.mrf.mxu0
        %2389 = vmatprep.mubr.bf16.mxu0 %v1493
        %2390 = vmatmul.mubr.bf16.gmra.mxu0 %v1492
        %v2391 = vpop.f32.mrf.mxu0
        %v2392 = vadd.f32 %v606, %v2391
        %v2393 = vpop.f32.mrf.mxu0
        %v2394 = vpop.f32.mrf.mxu0
        %v2395 = vadd.f32 %v606, %v2394
        %v2396 = vpop.f32.mrf.mxu0
        %2397 = vmatprep.mubr.bf16.mxu0 %v1498
        %2398 = vmatmul.mubr.bf16.gmra.mxu0 %v1497
        %v2399 = vpop.f32.mrf.mxu0
        %v2400 = vadd.f32 %v606, %v2399
        %v2401 = vpop.f32.mrf.mxu0
        %v2402 = vpop.f32.mrf.mxu0
        %v2403 = vadd.f32 %v606, %v2402
        %v2404 = vpop.f32.mrf.mxu0
        %2405 = vmatprep.mubr.bf16.mxu0 %v1503
        %2406 = vmatmul.mubr.bf16.gmra.mxu0 %v1502
        %v2407 = vpop.f32.mrf.mxu0
        %v2408 = vadd.f32 %v606, %v2407
        %v2409 = vpop.f32.mrf.mxu0
        %v2410 = vpop.f32.mrf.mxu0
        %v2411 = vadd.f32 %v606, %v2410
        %v2412 = vpop.f32.mrf.mxu0
        %2413 = vmatprep.mubr.bf16.mxu0 %v1508
        %2414 = vmatmul.mubr.bf16.gmra.mxu0 %v1507
        %v2415 = vpop.f32.mrf.mxu0
        %v2416 = vadd.f32 %v606, %v2415
        %v2417 = vpop.f32.mrf.mxu0
        %v2418 = vpop.f32.mrf.mxu0
        %v2419 = vadd.f32 %v606, %v2418
        %v2420 = vpop.f32.mrf.mxu0
        %2421 = vmatprep.mubr.bf16.mxu0 %v1513
        %2422 = vmatmul.mubr.bf16.gmra.mxu0 %v1512
        %v2423 = vpop.f32.mrf.mxu0
        %v2424 = vadd.f32 %v606, %v2423
        %v2425 = vpop.f32.mrf.mxu0
        %v2426 = vpop.f32.mrf.mxu0
        %v2427 = vadd.f32 %v606, %v2426
        %v2428 = vpop.f32.mrf.mxu0
        %2429 = vmatprep.mubr.bf16.mxu0 %v1518
        %2430 = vmatmul.mubr.bf16.gmra.mxu0 %v1517
        %v2431 = vpop.f32.mrf.mxu0
        %v2432 = vadd.f32 %v606, %v2431
        %v2433 = vpop.f32.mrf.mxu0
        %v2434 = vpop.f32.mrf.mxu0
        %v2435 = vadd.f32 %v606, %v2434
        %v2436 = vpop.f32.mrf.mxu0
        %2437 = vmatprep.mubr.bf16.mxu0 %v1523
        %2438 = vmatmul.mubr.bf16.gmra.mxu0 %v1522
        %v2439 = vpop.f32.mrf.mxu0
        %v2440 = vadd.f32 %v606, %v2439
        %v2441 = vpop.f32.mrf.mxu0
        %v2442 = vpop.f32.mrf.mxu0
        %v2443 = vadd.f32 %v606, %v2442
        %v2444 = vpop.f32.mrf.mxu0
        %2445 = vmatprep.mubr.bf16.mxu0 %v1528
        %2446 = vmatmul.mubr.bf16.gmra.mxu0 %v1527
        %v2447 = vpop.f32.mrf.mxu0
        %v2448 = vadd.f32 %v606, %v2447
        %v2449 = vpop.f32.mrf.mxu0
        %v2450 = vpop.f32.mrf.mxu0
        %v2451 = vadd.f32 %v606, %v2450
        %v2452 = vpop.f32.mrf.mxu0
        %2453 = vmatprep.mubr.bf16.mxu0 %v1533
        %2454 = vmatmul.mubr.bf16.gmra.mxu0 %v1532
        %v2455 = vpop.f32.mrf.mxu0
        %v2456 = vadd.f32 %v606, %v2455
        %v2457 = vpop.f32.mrf.mxu0
        %v2458 = vpop.f32.mrf.mxu0
        %v2459 = vadd.f32 %v606, %v2458
        %v2460 = vpop.f32.mrf.mxu0
        %2461 = vmatprep.mubr.bf16.mxu0 %v1538
        %2462 = vmatmul.mubr.bf16.gmra.mxu0 %v1537
        %v2463 = vpop.f32.mrf.mxu0
        %v2464 = vadd.f32 %v606, %v2463
        %v2465 = vpop.f32.mrf.mxu0
        %v2466 = vpop.f32.mrf.mxu0
        %v2467 = vadd.f32 %v606, %v2466
        %v2468 = vpop.f32.mrf.mxu0
        %2469 = vmatprep.mubr.bf16.mxu0 %v1543
        %2470 = vmatmul.mubr.bf16.gmra.mxu0 %v1542
        %v2471 = vpop.f32.mrf.mxu0
        %v2472 = vadd.f32 %v606, %v2471
        %v2473 = vpop.f32.mrf.mxu0
        %v2474 = vpop.f32.mrf.mxu0
        %v2475 = vadd.f32 %v606, %v2474
        %v2476 = vpop.f32.mrf.mxu0
        %2477 = vmatprep.mubr.bf16.mxu0 %v1548
        %2478 = vmatmul.mubr.bf16.gmra.mxu0 %v1547
        %v2479 = vpop.f32.mrf.mxu0
        %v2480 = vadd.f32 %v606, %v2479
        %v2481 = vpop.f32.mrf.mxu0
        %v2482 = vpop.f32.mrf.mxu0
        %v2483 = vadd.f32 %v606, %v2482
        %v2484 = vpop.f32.mrf.mxu0
        %2485 = vmatprep.mubr.bf16.mxu0 %v1553
        %2486 = vmatmul.mubr.bf16.gmra.mxu0 %v1552
        %v2487 = vpop.f32.mrf.mxu0
        %v2488 = vadd.f32 %v606, %v2487
        %v2489 = vpop.f32.mrf.mxu0
        %v2490 = vpop.f32.mrf.mxu0
        %v2491 = vadd.f32 %v606, %v2490
        %v2492 = vpop.f32.mrf.mxu0
        %2493 = vmatprep.mubr.bf16.mxu0 %v1558
        %2494 = vmatmul.mubr.bf16.gmra.mxu0 %v1557
        %v2495 = vpop.f32.mrf.mxu0
        %v2496 = vadd.f32 %v606, %v2495
        %v2497 = vpop.f32.mrf.mxu0
        %v2498 = vpop.f32.mrf.mxu0
        %v2499 = vadd.f32 %v606, %v2498
        %v2500 = vpop.f32.mrf.mxu0
        %2501 = vmatprep.mubr.bf16.mxu0 %v1563
        %2502 = vmatmul.mubr.bf16.gmra.mxu0 %v1562
        %v2503 = vpop.f32.mrf.mxu0
        %v2504 = vadd.f32 %v606, %v2503
        %v2505 = vpop.f32.mrf.mxu0
        %v2506 = vpop.f32.mrf.mxu0
        %v2507 = vadd.f32 %v606, %v2506
        %v2508 = vpop.f32.mrf.mxu0
        %2509 = vmatprep.mubr.bf16.mxu0 %v1568
        %2510 = vmatmul.mubr.bf16.gmra.mxu0 %v1567
        %v2511 = vpop.f32.mrf.mxu0
        %v2512 = vadd.f32 %v606, %v2511
        %v2513 = vpop.f32.mrf.mxu0
        %v2514 = vpop.f32.mrf.mxu0
        %v2515 = vadd.f32 %v606, %v2514
        %v2516 = vpop.f32.mrf.mxu0
        %2517 = vmatprep.mubr.bf16.mxu0 %v1573
        %2518 = vmatmul.mubr.bf16.gmra.mxu0 %v1572
        %v2519 = vpop.f32.mrf.mxu0
        %v2520 = vadd.f32 %v606, %v2519
        %v2521 = vpop.f32.mrf.mxu0
        %v2522 = vpop.f32.mrf.mxu0
        %v2523 = vadd.f32 %v606, %v2522
        %v2524 = vpop.f32.mrf.mxu0
        %2525 = vmatprep.mubr.bf16.mxu0 %v1578
        %2526 = vmatmul.mubr.bf16.gmra.mxu0 %v1577
        %v2527 = vpop.f32.mrf.mxu0
        %v2528 = vadd.f32 %v606, %v2527
        %v2529 = vpop.f32.mrf.mxu0
        %v2530 = vpop.f32.mrf.mxu0
        %v2531 = vadd.f32 %v606, %v2530
        %v2532 = vpop.f32.mrf.mxu0
        %2533 = vmatprep.mubr.bf16.mxu0 %v1583
        %2534 = vmatmul.mubr.bf16.gmra.mxu0 %v1582
        %v2535 = vpop.f32.mrf.mxu0
        %v2536 = vadd.f32 %v606, %v2535
        %v2537 = vpop.f32.mrf.mxu0
        %v2538 = vpop.f32.mrf.mxu0
        %v2539 = vadd.f32 %v606, %v2538
        %v2540 = vpop.f32.mrf.mxu0
        %2541 = vmatprep.mubr.bf16.mxu0 %v1588
        %2542 = vmatmul.mubr.bf16.gmra.mxu0 %v1587
        %v2543 = vpop.f32.mrf.mxu0
        %v2544 = vadd.f32 %v606, %v2543
        %v2545 = vpop.f32.mrf.mxu0
        %v2546 = vpop.f32.mrf.mxu0
        %v2547 = vadd.f32 %v606, %v2546
        %v2548 = vpop.f32.mrf.mxu0
        %2549 = vmatprep.mubr.bf16.mxu0 %v1593
        %2550 = vmatmul.mubr.bf16.gmra.mxu0 %v1592
        %v2551 = vpop.f32.mrf.mxu0
        %v2552 = vadd.f32 %v606, %v2551
        %v2553 = vpop.f32.mrf.mxu0
        %v2554 = vpop.f32.mrf.mxu0
        %v2555 = vadd.f32 %v606, %v2554
        %v2556 = vpop.f32.mrf.mxu0
        %2557 = vmatprep.mubr.bf16.mxu0 %v1598
        %2558 = vmatmul.mubr.bf16.gmra.mxu0 %v1597
        %v2559 = vpop.f32.mrf.mxu0
        %v2560 = vadd.f32 %v606, %v2559
        %v2561 = vpop.f32.mrf.mxu0
        %v2562 = vpop.f32.mrf.mxu0
        %v2563 = vadd.f32 %v606, %v2562
        %v2564 = vpop.f32.mrf.mxu0
        %2565 = vmatprep.mubr.bf16.mxu0 %v1603
        %2566 = vmatmul.mubr.bf16.gmra.mxu0 %v1602
        %v2567 = vpop.f32.mrf.mxu0
        %v2568 = vadd.f32 %v606, %v2567
        %v2569 = vpop.f32.mrf.mxu0
        %v2570 = vpop.f32.mrf.mxu0
        %v2571 = vadd.f32 %v606, %v2570
        %v2572 = vpop.f32.mrf.mxu0
        %2573 = vmatprep.mubr.bf16.mxu0 %v1608
        %2574 = vmatmul.mubr.bf16.gmra.mxu0 %v1607
        %v2575 = vpop.f32.mrf.mxu0
        %v2576 = vadd.f32 %v606, %v2575
        %v2577 = vpop.f32.mrf.mxu0
        %v2578 = vpop.f32.mrf.mxu0
        %v2579 = vadd.f32 %v606, %v2578
        %v2580 = vpop.f32.mrf.mxu0
        %2581 = vmatprep.mubr.bf16.mxu0 %v1613
        %2582 = vmatmul.mubr.bf16.gmra.mxu0 %v1612
        %v2583 = vpop.f32.mrf.mxu0
        %v2584 = vadd.f32 %v606, %v2583
        %v2585 = vpop.f32.mrf.mxu0
        %v2586 = vpop.f32.mrf.mxu0
        %v2587 = vadd.f32 %v606, %v2586
        %v2588 = vpop.f32.mrf.mxu0
        %2589 = vmatprep.mubr.bf16.mxu0 %v1618
        %2590 = vmatmul.mubr.bf16.gmra.mxu0 %v1617
        %v2591 = vpop.f32.mrf.mxu0
        %v2592 = vadd.f32 %v606, %v2591
        %v2593 = vpop.f32.mrf.mxu0
        %v2594 = vpop.f32.mrf.mxu0
        %v2595 = vadd.f32 %v606, %v2594
        %v2596 = vpop.f32.mrf.mxu0
        %2597 = vmatprep.mubr.bf16.mxu0 %v1623
        %2598 = vmatmul.mubr.bf16.gmra.mxu0 %v1622
        %v2599 = vpop.f32.mrf.mxu0
        %v2600 = vadd.f32 %v606, %v2599
        %v2601 = vpop.f32.mrf.mxu0
        %v2602 = vpop.f32.mrf.mxu0
        %v2603 = vadd.f32 %v606, %v2602
        %v2604 = vpop.f32.mrf.mxu0
        %2605 = vmatprep.mubr.bf16.mxu0 %v1628
        %2606 = vmatmul.mubr.bf16.gmra.mxu0 %v1627
        %v2607 = vpop.f32.mrf.mxu0
        %v2608 = vadd.f32 %v606, %v2607
        %v2609 = vpop.f32.mrf.mxu0
        %v2610 = vpop.f32.mrf.mxu0
        %v2611 = vadd.f32 %v606, %v2610
        %v2612 = vpop.f32.mrf.mxu0
        %2613 = vmatprep.mubr.bf16.mxu0 %v1633
        %2614 = vmatmul.mubr.bf16.gmra.mxu0 %v1632
        %v2615 = vpop.f32.mrf.mxu0
        %v2616 = vadd.f32 %v606, %v2615
        %v2617 = vpop.f32.mrf.mxu0
        %v2618 = vpop.f32.mrf.mxu0
        %v2619 = vadd.f32 %v606, %v2618
        %v2620 = vpop.f32.mrf.mxu0
        %2621 = vdwg.mxu0
        %2622 = vmatprep.subr.bf16.mxu0 0
        %2623 = vmatpush1.bf16.msra.mxu0 %v2000
        %2624 = vmatprep.subr.bf16.mxu0 0
        %2625 = vmatpush1.bf16.msra.mxu0 %v1999
        %2626 = vmatprep.subr.bf16.mxu0 0
        %2627 = vmatpush1.bf16.msra.mxu0 %v1998
        %2628 = vmatprep.subr.bf16.mxu0 0
        %2629 = vmatpush1.bf16.msra.mxu0 %v1997
        %2630 = vmatprep.subr.bf16.mxu0 0
        %2631 = vmatpush1.bf16.msra.mxu0 %v1996
        %2632 = vmatprep.subr.bf16.mxu0 0
        %2633 = vmatpush1.bf16.msra.mxu0 %v1995
        %2634 = vmatprep.subr.bf16.mxu0 0
        %2635 = vmatpush1.bf16.msra.mxu0 %v1994
        %2636 = vmatprep.subr.bf16.mxu0 0
        %2637 = vmatpush1.bf16.msra.mxu0 %v1993
        %2638 = vmatprep.subr.bf16.mxu0 0
        %2639 = vmatpush2.bf16.msra.mxu0 %v2008
        %2640 = vmatprep.subr.bf16.mxu0 0
        %2641 = vmatpush2.bf16.msra.mxu0 %v2007
        %2642 = vmatprep.subr.bf16.mxu0 0
        %2643 = vmatpush2.bf16.msra.mxu0 %v2006
        %2644 = vmatprep.subr.bf16.mxu0 0
        %2645 = vmatpush2.bf16.msra.mxu0 %v2005
        %2646 = vmatprep.subr.bf16.mxu0 0
        %2647 = vmatpush2.bf16.msra.mxu0 %v2004
        %2648 = vmatprep.subr.bf16.mxu0 0
        %2649 = vmatpush2.bf16.msra.mxu0 %v2003
        %2650 = vmatprep.subr.bf16.mxu0 0
        %2651 = vmatpush2.bf16.msra.mxu0 %v2002
        %2652 = vmatprep.subr.bf16.mxu0 0
        %2653 = vmatpush2.bf16.msra.mxu0 %v2001
        %2654 = vmatprep.mubr.bf16.mxu0 %v1395
        %2655 = vmatmul.mubr.bf16.gmra.mxu0 %v1394
        %v2656 = vpop.f32.mrf.mxu0
        %v2657 = vadd.f32 %v2232, %v2656
        %v2658 = vpop.f32.mrf.mxu0
        %v2659 = vpop.f32.mrf.mxu0
        %v2660 = vadd.f32 %v2235, %v2659
        %v2661 = vpop.f32.mrf.mxu0
        %2662 = vmatprep.mubr.bf16.mxu0 %v1400
        %2663 = vmatmul.mubr.bf16.gmra.mxu0 %v1399
        %v2664 = vpop.f32.mrf.mxu0
        %v2665 = vadd.f32 %v2240, %v2664
        %v2666 = vpop.f32.mrf.mxu0
        %v2667 = vpop.f32.mrf.mxu0
        %v2668 = vadd.f32 %v2243, %v2667
        %v2669 = vpop.f32.mrf.mxu0
        %2670 = vmatprep.mubr.bf16.mxu0 %v1405
        %2671 = vmatmul.mubr.bf16.gmra.mxu0 %v1404
        %v2672 = vpop.f32.mrf.mxu0
        %v2673 = vadd.f32 %v2248, %v2672
        %v2674 = vpop.f32.mrf.mxu0
        %v2675 = vpop.f32.mrf.mxu0
        %v2676 = vadd.f32 %v2251, %v2675
        %v2677 = vpop.f32.mrf.mxu0
        %2678 = vmatprep.mubr.bf16.mxu0 %v1410
        %2679 = vmatmul.mubr.bf16.gmra.mxu0 %v1409
        %v2680 = vpop.f32.mrf.mxu0
        %v2681 = vadd.f32 %v2256, %v2680
        %v2682 = vpop.f32.mrf.mxu0
        %v2683 = vpop.f32.mrf.mxu0
        %v2684 = vadd.f32 %v2259, %v2683
        %v2685 = vpop.f32.mrf.mxu0
        %2686 = vmatprep.mubr.bf16.mxu0 %v1415
        %2687 = vmatmul.mubr.bf16.gmra.mxu0 %v1414
        %v2688 = vpop.f32.mrf.mxu0
        %v2689 = vadd.f32 %v2264, %v2688
        %v2690 = vpop.f32.mrf.mxu0
        %v2691 = vpop.f32.mrf.mxu0
        %v2692 = vadd.f32 %v2267, %v2691
        %v2693 = vpop.f32.mrf.mxu0
        %2694 = vmatprep.mubr.bf16.mxu0 %v1420
        %2695 = vmatmul.mubr.bf16.gmra.mxu0 %v1419
        %v2696 = vpop.f32.mrf.mxu0
        %v2697 = vadd.f32 %v2272, %v2696
        %v2698 = vpop.f32.mrf.mxu0
        %v2699 = vpop.f32.mrf.mxu0
        %v2700 = vadd.f32 %v2275, %v2699
        %v2701 = vpop.f32.mrf.mxu0
        %2702 = vmatprep.mubr.bf16.mxu0 %v1425
        %2703 = vmatmul.mubr.bf16.gmra.mxu0 %v1424
        %v2704 = vpop.f32.mrf.mxu0
        %v2705 = vadd.f32 %v2280, %v2704
        %v2706 = vpop.f32.mrf.mxu0
        %v2707 = vpop.f32.mrf.mxu0
        %v2708 = vadd.f32 %v2283, %v2707
        %v2709 = vpop.f32.mrf.mxu0
        %2710 = vmatprep.mubr.bf16.mxu0 %v1430
        %2711 = vmatmul.mubr.bf16.gmra.mxu0 %v1429
        %v2712 = vpop.f32.mrf.mxu0
        %v2713 = vadd.f32 %v2288, %v2712
        %v2714 = vpop.f32.mrf.mxu0
        %v2715 = vpop.f32.mrf.mxu0
        %v2716 = vadd.f32 %v2291, %v2715
        %v2717 = vpop.f32.mrf.mxu0
        %2718 = vmatprep.mubr.bf16.mxu0 %v1435
        %2719 = vmatmul.mubr.bf16.gmra.mxu0 %v1434
        %v2720 = vpop.f32.mrf.mxu0
        %v2721 = vadd.f32 %v2296, %v2720
        %v2722 = vpop.f32.mrf.mxu0
        %v2723 = vpop.f32.mrf.mxu0
        %v2724 = vadd.f32 %v2299, %v2723
        %v2725 = vpop.f32.mrf.mxu0
        %2726 = vmatprep.mubr.bf16.mxu0 %v1440
        %2727 = vmatmul.mubr.bf16.gmra.mxu0 %v1439
        %v2728 = vpop.f32.mrf.mxu0
        %v2729 = vadd.f32 %v2304, %v2728
        %v2730 = vpop.f32.mrf.mxu0
        %v2731 = vpop.f32.mrf.mxu0
        %v2732 = vadd.f32 %v2307, %v2731
        %v2733 = vpop.f32.mrf.mxu0
        %2734 = vmatprep.mubr.bf16.mxu0 %v1445
        %2735 = vmatmul.mubr.bf16.gmra.mxu0 %v1444
        %v2736 = vpop.f32.mrf.mxu0
        %v2737 = vadd.f32 %v2312, %v2736
        %v2738 = vpop.f32.mrf.mxu0
        %v2739 = vpop.f32.mrf.mxu0
        %v2740 = vadd.f32 %v2315, %v2739
        %v2741 = vpop.f32.mrf.mxu0
        %2742 = vmatprep.mubr.bf16.mxu0 %v1450
        %2743 = vmatmul.mubr.bf16.gmra.mxu0 %v1449
        %v2744 = vpop.f32.mrf.mxu0
        %v2745 = vadd.f32 %v2320, %v2744
        %v2746 = vpop.f32.mrf.mxu0
        %v2747 = vpop.f32.mrf.mxu0
        %v2748 = vadd.f32 %v2323, %v2747
        %v2749 = vpop.f32.mrf.mxu0
        %2750 = vmatprep.mubr.bf16.mxu0 %v1455
        %2751 = vmatmul.mubr.bf16.gmra.mxu0 %v1454
        %v2752 = vpop.f32.mrf.mxu0
        %v2753 = vadd.f32 %v2328, %v2752
        %v2754 = vpop.f32.mrf.mxu0
        %v2755 = vpop.f32.mrf.mxu0
        %v2756 = vadd.f32 %v2331, %v2755
        %v2757 = vpop.f32.mrf.mxu0
        %2758 = vmatprep.mubr.bf16.mxu0 %v1460
        %2759 = vmatmul.mubr.bf16.gmra.mxu0 %v1459
        %v2760 = vpop.f32.mrf.mxu0
        %v2761 = vadd.f32 %v2336, %v2760
        %v2762 = vpop.f32.mrf.mxu0
        %v2763 = vpop.f32.mrf.mxu0
        %v2764 = vadd.f32 %v2339, %v2763
        %v2765 = vpop.f32.mrf.mxu0
        %2766 = vmatprep.mubr.bf16.mxu0 %v1465
        %2767 = vmatmul.mubr.bf16.gmra.mxu0 %v1464
        %v2768 = vpop.f32.mrf.mxu0
        %v2769 = vadd.f32 %v2344, %v2768
        %v2770 = vpop.f32.mrf.mxu0
        %v2771 = vpop.f32.mrf.mxu0
        %v2772 = vadd.f32 %v2347, %v2771
        %v2773 = vpop.f32.mrf.mxu0
        %2774 = vmatprep.mubr.bf16.mxu0 %v1470
        %2775 = vmatmul.mubr.bf16.gmra.mxu0 %v1469
        %v2776 = vpop.f32.mrf.mxu0
        %v2777 = vadd.f32 %v2352, %v2776
        %v2778 = vpop.f32.mrf.mxu0
        %v2779 = vpop.f32.mrf.mxu0
        %v2780 = vadd.f32 %v2355, %v2779
        %v2781 = vpop.f32.mrf.mxu0
        %2782 = vmatprep.mubr.bf16.mxu0 %v1475
        %2783 = vmatmul.mubr.bf16.gmra.mxu0 %v1474
        %v2784 = vpop.f32.mrf.mxu0
        %v2785 = vadd.f32 %v2360, %v2784
        %v2786 = vpop.f32.mrf.mxu0
        %v2787 = vpop.f32.mrf.mxu0
        %v2788 = vadd.f32 %v2363, %v2787
        %v2789 = vpop.f32.mrf.mxu0
        %2790 = vmatprep.mubr.bf16.mxu0 %v1480
        %2791 = vmatmul.mubr.bf16.gmra.mxu0 %v1479
        %v2792 = vpop.f32.mrf.mxu0
        %v2793 = vadd.f32 %v2368, %v2792
        %v2794 = vpop.f32.mrf.mxu0
        %v2795 = vpop.f32.mrf.mxu0
        %v2796 = vadd.f32 %v2371, %v2795
        %v2797 = vpop.f32.mrf.mxu0
        %2798 = vmatprep.mubr.bf16.mxu0 %v1485
        %2799 = vmatmul.mubr.bf16.gmra.mxu0 %v1484
        %v2800 = vpop.f32.mrf.mxu0
        %v2801 = vadd.f32 %v2376, %v2800
        %v2802 = vpop.f32.mrf.mxu0
        %v2803 = vpop.f32.mrf.mxu0
        %v2804 = vadd.f32 %v2379, %v2803
        %v2805 = vpop.f32.mrf.mxu0
        %2806 = vmatprep.mubr.bf16.mxu0 %v1490
        %2807 = vmatmul.mubr.bf16.gmra.mxu0 %v1489
        %v2808 = vpop.f32.mrf.mxu0
        %v2809 = vadd.f32 %v2384, %v2808
        %v2810 = vpop.f32.mrf.mxu0
        %v2811 = vpop.f32.mrf.mxu0
        %v2812 = vadd.f32 %v2387, %v2811
        %v2813 = vpop.f32.mrf.mxu0
        %2814 = vmatprep.mubr.bf16.mxu0 %v1495
        %2815 = vmatmul.mubr.bf16.gmra.mxu0 %v1494
        %v2816 = vpop.f32.mrf.mxu0
        %v2817 = vadd.f32 %v2392, %v2816
        %v2818 = vpop.f32.mrf.mxu0
        %v2819 = vpop.f32.mrf.mxu0
        %v2820 = vadd.f32 %v2395, %v2819
        %v2821 = vpop.f32.mrf.mxu0
        %2822 = vmatprep.mubr.bf16.mxu0 %v1500
        %2823 = vmatmul.mubr.bf16.gmra.mxu0 %v1499
        %v2824 = vpop.f32.mrf.mxu0
        %v2825 = vadd.f32 %v2400, %v2824
        %v2826 = vpop.f32.mrf.mxu0
        %v2827 = vpop.f32.mrf.mxu0
        %v2828 = vadd.f32 %v2403, %v2827
        %v2829 = vpop.f32.mrf.mxu0
        %2830 = vmatprep.mubr.bf16.mxu0 %v1505
        %2831 = vmatmul.mubr.bf16.gmra.mxu0 %v1504
        %v2832 = vpop.f32.mrf.mxu0
        %v2833 = vadd.f32 %v2408, %v2832
        %v2834 = vpop.f32.mrf.mxu0
        %v2835 = vpop.f32.mrf.mxu0
        %v2836 = vadd.f32 %v2411, %v2835
        %v2837 = vpop.f32.mrf.mxu0
        %2838 = vmatprep.mubr.bf16.mxu0 %v1510
        %2839 = vmatmul.mubr.bf16.gmra.mxu0 %v1509
        %v2840 = vpop.f32.mrf.mxu0
        %v2841 = vadd.f32 %v2416, %v2840
        %v2842 = vpop.f32.mrf.mxu0
        %v2843 = vpop.f32.mrf.mxu0
        %v2844 = vadd.f32 %v2419, %v2843
        %v2845 = vpop.f32.mrf.mxu0
        %2846 = vmatprep.mubr.bf16.mxu0 %v1515
        %2847 = vmatmul.mubr.bf16.gmra.mxu0 %v1514
        %v2848 = vpop.f32.mrf.mxu0
        %v2849 = vadd.f32 %v2424, %v2848
        %v2850 = vpop.f32.mrf.mxu0
        %v2851 = vpop.f32.mrf.mxu0
        %v2852 = vadd.f32 %v2427, %v2851
        %v2853 = vpop.f32.mrf.mxu0
        %2854 = vmatprep.mubr.bf16.mxu0 %v1520
        %2855 = vmatmul.mubr.bf16.gmra.mxu0 %v1519
        %v2856 = vpop.f32.mrf.mxu0
        %v2857 = vadd.f32 %v2432, %v2856
        %v2858 = vpop.f32.mrf.mxu0
        %v2859 = vpop.f32.mrf.mxu0
        %v2860 = vadd.f32 %v2435, %v2859
        %v2861 = vpop.f32.mrf.mxu0
        %2862 = vmatprep.mubr.bf16.mxu0 %v1525
        %2863 = vmatmul.mubr.bf16.gmra.mxu0 %v1524
        %v2864 = vpop.f32.mrf.mxu0
        %v2865 = vadd.f32 %v2440, %v2864
        %v2866 = vpop.f32.mrf.mxu0
        %v2867 = vpop.f32.mrf.mxu0
        %v2868 = vadd.f32 %v2443, %v2867
        %v2869 = vpop.f32.mrf.mxu0
        %2870 = vmatprep.mubr.bf16.mxu0 %v1530
        %2871 = vmatmul.mubr.bf16.gmra.mxu0 %v1529
        %v2872 = vpop.f32.mrf.mxu0
        %v2873 = vadd.f32 %v2448, %v2872
        %v2874 = vpop.f32.mrf.mxu0
        %v2875 = vpop.f32.mrf.mxu0
        %v2876 = vadd.f32 %v2451, %v2875
        %v2877 = vpop.f32.mrf.mxu0
        %2878 = vmatprep.mubr.bf16.mxu0 %v1535
        %2879 = vmatmul.mubr.bf16.gmra.mxu0 %v1534
        %v2880 = vpop.f32.mrf.mxu0
        %v2881 = vadd.f32 %v2456, %v2880
        %v2882 = vpop.f32.mrf.mxu0
        %v2883 = vpop.f32.mrf.mxu0
        %v2884 = vadd.f32 %v2459, %v2883
        %v2885 = vpop.f32.mrf.mxu0
        %2886 = vmatprep.mubr.bf16.mxu0 %v1540
        %2887 = vmatmul.mubr.bf16.gmra.mxu0 %v1539
        %v2888 = vpop.f32.mrf.mxu0
        %v2889 = vadd.f32 %v2464, %v2888
        %v2890 = vpop.f32.mrf.mxu0
        %v2891 = vpop.f32.mrf.mxu0
        %v2892 = vadd.f32 %v2467, %v2891
        %v2893 = vpop.f32.mrf.mxu0
        %2894 = vmatprep.mubr.bf16.mxu0 %v1545
        %2895 = vmatmul.mubr.bf16.gmra.mxu0 %v1544
        %v2896 = vpop.f32.mrf.mxu0
        %v2897 = vadd.f32 %v2472, %v2896
        %v2898 = vpop.f32.mrf.mxu0
        %v2899 = vpop.f32.mrf.mxu0
        %v2900 = vadd.f32 %v2475, %v2899
        %v2901 = vpop.f32.mrf.mxu0
        %2902 = vmatprep.mubr.bf16.mxu0 %v1550
        %2903 = vmatmul.mubr.bf16.gmra.mxu0 %v1549
        %v2904 = vpop.f32.mrf.mxu0
        %v2905 = vadd.f32 %v2480, %v2904
        %v2906 = vpop.f32.mrf.mxu0
        %v2907 = vpop.f32.mrf.mxu0
        %v2908 = vadd.f32 %v2483, %v2907
        %v2909 = vpop.f32.mrf.mxu0
        %2910 = vmatprep.mubr.bf16.mxu0 %v1555
        %2911 = vmatmul.mubr.bf16.gmra.mxu0 %v1554
        %v2912 = vpop.f32.mrf.mxu0
        %v2913 = vadd.f32 %v2488, %v2912
        %v2914 = vpop.f32.mrf.mxu0
        %v2915 = vpop.f32.mrf.mxu0
        %v2916 = vadd.f32 %v2491, %v2915
        %v2917 = vpop.f32.mrf.mxu0
        %2918 = vmatprep.mubr.bf16.mxu0 %v1560
        %2919 = vmatmul.mubr.bf16.gmra.mxu0 %v1559
        %v2920 = vpop.f32.mrf.mxu0
        %v2921 = vadd.f32 %v2496, %v2920
        %v2922 = vpop.f32.mrf.mxu0
        %v2923 = vpop.f32.mrf.mxu0
        %v2924 = vadd.f32 %v2499, %v2923
        %v2925 = vpop.f32.mrf.mxu0
        %2926 = vmatprep.mubr.bf16.mxu0 %v1565
        %2927 = vmatmul.mubr.bf16.gmra.mxu0 %v1564
        %v2928 = vpop.f32.mrf.mxu0
        %v2929 = vadd.f32 %v2504, %v2928
        %v2930 = vpop.f32.mrf.mxu0
        %v2931 = vpop.f32.mrf.mxu0
        %v2932 = vadd.f32 %v2507, %v2931
        %v2933 = vpop.f32.mrf.mxu0
        %2934 = vmatprep.mubr.bf16.mxu0 %v1570
        %2935 = vmatmul.mubr.bf16.gmra.mxu0 %v1569
        %v2936 = vpop.f32.mrf.mxu0
        %v2937 = vadd.f32 %v2512, %v2936
        %v2938 = vpop.f32.mrf.mxu0
        %v2939 = vpop.f32.mrf.mxu0
        %v2940 = vadd.f32 %v2515, %v2939
        %v2941 = vpop.f32.mrf.mxu0
        %2942 = vmatprep.mubr.bf16.mxu0 %v1575
        %2943 = vmatmul.mubr.bf16.gmra.mxu0 %v1574
        %v2944 = vpop.f32.mrf.mxu0
        %v2945 = vadd.f32 %v2520, %v2944
        %v2946 = vpop.f32.mrf.mxu0
        %v2947 = vpop.f32.mrf.mxu0
        %v2948 = vadd.f32 %v2523, %v2947
        %v2949 = vpop.f32.mrf.mxu0
        %2950 = vmatprep.mubr.bf16.mxu0 %v1580
        %2951 = vmatmul.mubr.bf16.gmra.mxu0 %v1579
        %v2952 = vpop.f32.mrf.mxu0
        %v2953 = vadd.f32 %v2528, %v2952
        %v2954 = vpop.f32.mrf.mxu0
        %v2955 = vpop.f32.mrf.mxu0
        %v2956 = vadd.f32 %v2531, %v2955
        %v2957 = vpop.f32.mrf.mxu0
        %2958 = vmatprep.mubr.bf16.mxu0 %v1585
        %2959 = vmatmul.mubr.bf16.gmra.mxu0 %v1584
        %v2960 = vpop.f32.mrf.mxu0
        %v2961 = vadd.f32 %v2536, %v2960
        %v2962 = vpop.f32.mrf.mxu0
        %v2963 = vpop.f32.mrf.mxu0
        %v2964 = vadd.f32 %v2539, %v2963
        %v2965 = vpop.f32.mrf.mxu0
        %2966 = vmatprep.mubr.bf16.mxu0 %v1590
        %2967 = vmatmul.mubr.bf16.gmra.mxu0 %v1589
        %v2968 = vpop.f32.mrf.mxu0
        %v2969 = vadd.f32 %v2544, %v2968
        %v2970 = vpop.f32.mrf.mxu0
        %v2971 = vpop.f32.mrf.mxu0
        %v2972 = vadd.f32 %v2547, %v2971
        %v2973 = vpop.f32.mrf.mxu0
        %2974 = vmatprep.mubr.bf16.mxu0 %v1595
        %2975 = vmatmul.mubr.bf16.gmra.mxu0 %v1594
        %v2976 = vpop.f32.mrf.mxu0
        %v2977 = vadd.f32 %v2552, %v2976
        %v2978 = vpop.f32.mrf.mxu0
        %v2979 = vpop.f32.mrf.mxu0
        %v2980 = vadd.f32 %v2555, %v2979
        %v2981 = vpop.f32.mrf.mxu0
        %2982 = vmatprep.mubr.bf16.mxu0 %v1600
        %2983 = vmatmul.mubr.bf16.gmra.mxu0 %v1599
        %v2984 = vpop.f32.mrf.mxu0
        %v2985 = vadd.f32 %v2560, %v2984
        %v2986 = vpop.f32.mrf.mxu0
        %v2987 = vpop.f32.mrf.mxu0
        %v2988 = vadd.f32 %v2563, %v2987
        %v2989 = vpop.f32.mrf.mxu0
        %2990 = vmatprep.mubr.bf16.mxu0 %v1605
        %2991 = vmatmul.mubr.bf16.gmra.mxu0 %v1604
        %v2992 = vpop.f32.mrf.mxu0
        %v2993 = vadd.f32 %v2568, %v2992
        %v2994 = vpop.f32.mrf.mxu0
        %v2995 = vpop.f32.mrf.mxu0
        %v2996 = vadd.f32 %v2571, %v2995
        %v2997 = vpop.f32.mrf.mxu0
        %2998 = vmatprep.mubr.bf16.mxu0 %v1610
        %2999 = vmatmul.mubr.bf16.gmra.mxu0 %v1609
        %v3000 = vpop.f32.mrf.mxu0
        %v3001 = vadd.f32 %v2576, %v3000
        %v3002 = vpop.f32.mrf.mxu0
        %v3003 = vpop.f32.mrf.mxu0
        %v3004 = vadd.f32 %v2579, %v3003
        %v3005 = vpop.f32.mrf.mxu0
        %3006 = vmatprep.mubr.bf16.mxu0 %v1615
        %3007 = vmatmul.mubr.bf16.gmra.mxu0 %v1614
        %v3008 = vpop.f32.mrf.mxu0
        %v3009 = vadd.f32 %v2584, %v3008
        %v3010 = vpop.f32.mrf.mxu0
        %v3011 = vpop.f32.mrf.mxu0
        %v3012 = vadd.f32 %v2587, %v3011
        %v3013 = vpop.f32.mrf.mxu0
        %3014 = vmatprep.mubr.bf16.mxu0 %v1620
        %3015 = vmatmul.mubr.bf16.gmra.mxu0 %v1619
        %v3016 = vpop.f32.mrf.mxu0
        %v3017 = vadd.f32 %v2592, %v3016
        %v3018 = vpop.f32.mrf.mxu0
        %v3019 = vpop.f32.mrf.mxu0
        %v3020 = vadd.f32 %v2595, %v3019
        %v3021 = vpop.f32.mrf.mxu0
        %3022 = vmatprep.mubr.bf16.mxu0 %v1625
        %3023 = vmatmul.mubr.bf16.gmra.mxu0 %v1624
        %v3024 = vpop.f32.mrf.mxu0
        %v3025 = vadd.f32 %v2600, %v3024
        %v3026 = vpop.f32.mrf.mxu0
        %v3027 = vpop.f32.mrf.mxu0
        %v3028 = vadd.f32 %v2603, %v3027
        %v3029 = vpop.f32.mrf.mxu0
        %3030 = vmatprep.mubr.bf16.mxu0 %v1630
        %3031 = vmatmul.mubr.bf16.gmra.mxu0 %v1629
        %v3032 = vpop.f32.mrf.mxu0
        %v3033 = vadd.f32 %v2608, %v3032
        %v3034 = vpop.f32.mrf.mxu0
        %v3035 = vpop.f32.mrf.mxu0
        %v3036 = vadd.f32 %v2611, %v3035
        %v3037 = vpop.f32.mrf.mxu0
        %3038 = vmatprep.mubr.bf16.mxu0 %v1635
        %3039 = vmatmul.mubr.bf16.gmra.mxu0 %v1634
        %v3040 = vpop.f32.mrf.mxu0
        %v3041 = vadd.f32 %v2616, %v3040
        %v3042 = vpop.f32.mrf.mxu0
        %v3043 = vpop.f32.mrf.mxu0
        %v3044 = vadd.f32 %v2619, %v3043
        %v3045 = vpop.f32.mrf.mxu0
        %3046 = vdwg.mxu0
        %3047 = vmatprep.subr.bf16.mxu0 0
        %3048 = vmatpush1.bf16.msra.mxu0 0
        %3049 = vmatprep.subr.bf16.mxu0 0
        %3050 = vmatpush1.bf16.msra.mxu0 0
        %3051 = vmatprep.subr.bf16.mxu0 0
        %3052 = vmatpush1.bf16.msra.mxu0 0
        %3053 = vmatprep.subr.bf16.mxu0 0
        %3054 = vmatpush1.bf16.msra.mxu0 0
        %3055 = vmatprep.subr.bf16.mxu0 0
        %3056 = vmatpush1.bf16.msra.mxu0 %v2012
        %3057 = vmatprep.subr.bf16.mxu0 0
        %3058 = vmatpush1.bf16.msra.mxu0 %v2011
        %3059 = vmatprep.subr.bf16.mxu0 0
        %3060 = vmatpush1.bf16.msra.mxu0 %v2010
        %3061 = vmatprep.subr.bf16.mxu0 0
        %3062 = vmatpush1.bf16.msra.mxu0 %v2009
        %3063 = vmatprep.subr.bf16.mxu0 0
        %3064 = vmatpush2.bf16.msra.mxu0 0
        %3065 = vmatprep.subr.bf16.mxu0 0
        %3066 = vmatpush2.bf16.msra.mxu0 0
        %3067 = vmatprep.subr.bf16.mxu0 0
        %3068 = vmatpush2.bf16.msra.mxu0 0
        %3069 = vmatprep.subr.bf16.mxu0 0
        %3070 = vmatpush2.bf16.msra.mxu0 0
        %3071 = vmatprep.subr.bf16.mxu0 0
        %3072 = vmatpush2.bf16.msra.mxu0 0
        %3073 = vmatprep.subr.bf16.mxu0 0
        %3074 = vmatpush2.bf16.msra.mxu0 0
        %3075 = vmatprep.subr.bf16.mxu0 0
        %3076 = vmatpush2.bf16.msra.mxu0 0
        %3077 = vmatprep.subr.bf16.mxu0 0
        %3078 = vmatpush2.bf16.msra.mxu0 0
        %3079 = vmatprep.mubr.bf16.mxu0 0
        %3080 = vmatmul.mubr.bf16.gmra.mxu0 %v2051
        %v3081 = vpop.f32.mrf.mxu0
        %v3082 = vadd.f32 %v2657, %v3081
        %v3083 = vpop.f32.mrf.mxu0
        %v3084 = vpop.f32.mrf.mxu0
        %v3085 = vadd.f32 %v2660, %v3084
        %v3086 = vpop.f32.mrf.mxu0
        %3087 = vmatprep.mubr.bf16.mxu0 0
        %3088 = vmatmul.mubr.bf16.gmra.mxu0 %v2054
        %v3089 = vpop.f32.mrf.mxu0
        %v3090 = vadd.f32 %v2665, %v3089
        %v3091 = vpop.f32.mrf.mxu0
        %v3092 = vpop.f32.mrf.mxu0
        %v3093 = vadd.f32 %v2668, %v3092
        %v3094 = vpop.f32.mrf.mxu0
        %3095 = vmatprep.mubr.bf16.mxu0 0
        %3096 = vmatmul.mubr.bf16.gmra.mxu0 %v2057
        %v3097 = vpop.f32.mrf.mxu0
        %v3098 = vadd.f32 %v2673, %v3097
        %v3099 = vpop.f32.mrf.mxu0
        %v3100 = vpop.f32.mrf.mxu0
        %v3101 = vadd.f32 %v2676, %v3100
        %v3102 = vpop.f32.mrf.mxu0
        %3103 = vmatprep.mubr.bf16.mxu0 0
        %3104 = vmatmul.mubr.bf16.gmra.mxu0 %v2060
        %v3105 = vpop.f32.mrf.mxu0
        %v3106 = vadd.f32 %v2681, %v3105
        %v3107 = vpop.f32.mrf.mxu0
        %v3108 = vpop.f32.mrf.mxu0
        %v3109 = vadd.f32 %v2684, %v3108
        %v3110 = vpop.f32.mrf.mxu0
        %3111 = vmatprep.mubr.bf16.mxu0 0
        %3112 = vmatmul.mubr.bf16.gmra.mxu0 %v2063
        %v3113 = vpop.f32.mrf.mxu0
        %v3114 = vadd.f32 %v2689, %v3113
        %v3115 = vpop.f32.mrf.mxu0
        %v3116 = vpop.f32.mrf.mxu0
        %v3117 = vadd.f32 %v2692, %v3116
        %v3118 = vpop.f32.mrf.mxu0
        %3119 = vmatprep.mubr.bf16.mxu0 0
        %3120 = vmatmul.mubr.bf16.gmra.mxu0 %v2066
        %v3121 = vpop.f32.mrf.mxu0
        %v3122 = vadd.f32 %v2697, %v3121
        %v3123 = vpop.f32.mrf.mxu0
        %v3124 = vpop.f32.mrf.mxu0
        %v3125 = vadd.f32 %v2700, %v3124
        %v3126 = vpop.f32.mrf.mxu0
        %3127 = vmatprep.mubr.bf16.mxu0 0
        %3128 = vmatmul.mubr.bf16.gmra.mxu0 %v2069
        %v3129 = vpop.f32.mrf.mxu0
        %v3130 = vadd.f32 %v2705, %v3129
        %v3131 = vpop.f32.mrf.mxu0
        %v3132 = vpop.f32.mrf.mxu0
        %v3133 = vadd.f32 %v2708, %v3132
        %v3134 = vpop.f32.mrf.mxu0
        %3135 = vmatprep.mubr.bf16.mxu0 0
        %3136 = vmatmul.mubr.bf16.gmra.mxu0 %v2072
        %v3137 = vpop.f32.mrf.mxu0
        %v3138 = vadd.f32 %v2713, %v3137
        %v3139 = vpop.f32.mrf.mxu0
        %v3140 = vpop.f32.mrf.mxu0
        %v3141 = vadd.f32 %v2716, %v3140
        %v3142 = vpop.f32.mrf.mxu0
        %3143 = vmatprep.mubr.bf16.mxu0 0
        %3144 = vmatmul.mubr.bf16.gmra.mxu0 %v2075
        %v3145 = vpop.f32.mrf.mxu0
        %v3146 = vadd.f32 %v2721, %v3145
        %v3147 = vpop.f32.mrf.mxu0
        %v3148 = vpop.f32.mrf.mxu0
        %v3149 = vadd.f32 %v2724, %v3148
        %v3150 = vpop.f32.mrf.mxu0
        %3151 = vmatprep.mubr.bf16.mxu0 0
        %3152 = vmatmul.mubr.bf16.gmra.mxu0 %v2078
        %v3153 = vpop.f32.mrf.mxu0
        %v3154 = vadd.f32 %v2729, %v3153
        %v3155 = vpop.f32.mrf.mxu0
        %v3156 = vpop.f32.mrf.mxu0
        %v3157 = vadd.f32 %v2732, %v3156
        %v3158 = vpop.f32.mrf.mxu0
        %3159 = vmatprep.mubr.bf16.mxu0 0
        %3160 = vmatmul.mubr.bf16.gmra.mxu0 %v2081
        %v3161 = vpop.f32.mrf.mxu0
        %v3162 = vadd.f32 %v2737, %v3161
        %v3163 = vpop.f32.mrf.mxu0
        %v3164 = vpop.f32.mrf.mxu0
        %v3165 = vadd.f32 %v2740, %v3164
        %v3166 = vpop.f32.mrf.mxu0
        %3167 = vmatprep.mubr.bf16.mxu0 0
        %3168 = vmatmul.mubr.bf16.gmra.mxu0 %v2084
        %v3169 = vpop.f32.mrf.mxu0
        %v3170 = vadd.f32 %v2745, %v3169
        %v3171 = vpop.f32.mrf.mxu0
        %v3172 = vpop.f32.mrf.mxu0
        %v3173 = vadd.f32 %v2748, %v3172
        %v3174 = vpop.f32.mrf.mxu0
        %3175 = vmatprep.mubr.bf16.mxu0 0
        %3176 = vmatmul.mubr.bf16.gmra.mxu0 %v2087
        %v3177 = vpop.f32.mrf.mxu0
        %v3178 = vadd.f32 %v2753, %v3177
        %v3179 = vpop.f32.mrf.mxu0
        %v3180 = vpop.f32.mrf.mxu0
        %v3181 = vadd.f32 %v2756, %v3180
        %v3182 = vpop.f32.mrf.mxu0
        %3183 = vmatprep.mubr.bf16.mxu0 0
        %3184 = vmatmul.mubr.bf16.gmra.mxu0 %v2090
        %v3185 = vpop.f32.mrf.mxu0
        %v3186 = vadd.f32 %v2761, %v3185
        %v3187 = vpop.f32.mrf.mxu0
        %v3188 = vpop.f32.mrf.mxu0
        %v3189 = vadd.f32 %v2764, %v3188
        %v3190 = vpop.f32.mrf.mxu0
        %3191 = vmatprep.mubr.bf16.mxu0 0
        %3192 = vmatmul.mubr.bf16.gmra.mxu0 %v2093
        %v3193 = vpop.f32.mrf.mxu0
        %v3194 = vadd.f32 %v2769, %v3193
        %v3195 = vpop.f32.mrf.mxu0
        %v3196 = vpop.f32.mrf.mxu0
        %v3197 = vadd.f32 %v2772, %v3196
        %v3198 = vpop.f32.mrf.mxu0
        %3199 = vmatprep.mubr.bf16.mxu0 0
        %3200 = vmatmul.mubr.bf16.gmra.mxu0 %v2096
        %v3201 = vpop.f32.mrf.mxu0
        %v3202 = vadd.f32 %v2777, %v3201
        %v3203 = vpop.f32.mrf.mxu0
        %v3204 = vpop.f32.mrf.mxu0
        %v3205 = vadd.f32 %v2780, %v3204
        %v3206 = vpop.f32.mrf.mxu0
        %3207 = vmatprep.mubr.bf16.mxu0 0
        %3208 = vmatmul.mubr.bf16.gmra.mxu0 %v2099
        %v3209 = vpop.f32.mrf.mxu0
        %v3210 = vadd.f32 %v2785, %v3209
        %v3211 = vpop.f32.mrf.mxu0
        %v3212 = vpop.f32.mrf.mxu0
        %v3213 = vadd.f32 %v2788, %v3212
        %v3214 = vpop.f32.mrf.mxu0
        %3215 = vmatprep.mubr.bf16.mxu0 0
        %3216 = vmatmul.mubr.bf16.gmra.mxu0 %v2102
        %v3217 = vpop.f32.mrf.mxu0
        %v3218 = vadd.f32 %v2793, %v3217
        %v3219 = vpop.f32.mrf.mxu0
        %v3220 = vpop.f32.mrf.mxu0
        %v3221 = vadd.f32 %v2796, %v3220
        %v3222 = vpop.f32.mrf.mxu0
        %3223 = vmatprep.mubr.bf16.mxu0 0
        %3224 = vmatmul.mubr.bf16.gmra.mxu0 %v2105
        %v3225 = vpop.f32.mrf.mxu0
        %v3226 = vadd.f32 %v2801, %v3225
        %v3227 = vpop.f32.mrf.mxu0
        %v3228 = vpop.f32.mrf.mxu0
        %v3229 = vadd.f32 %v2804, %v3228
        %v3230 = vpop.f32.mrf.mxu0
        %3231 = vmatprep.mubr.bf16.mxu0 0
        %3232 = vmatmul.mubr.bf16.gmra.mxu0 %v2108
        %v3233 = vpop.f32.mrf.mxu0
        %v3234 = vadd.f32 %v2809, %v3233
        %v3235 = vpop.f32.mrf.mxu0
        %v3236 = vpop.f32.mrf.mxu0
        %v3237 = vadd.f32 %v2812, %v3236
        %v3238 = vpop.f32.mrf.mxu0
        %3239 = vmatprep.mubr.bf16.mxu0 0
        %3240 = vmatmul.mubr.bf16.gmra.mxu0 %v2111
        %v3241 = vpop.f32.mrf.mxu0
        %v3242 = vadd.f32 %v2817, %v3241
        %v3243 = vpop.f32.mrf.mxu0
        %v3244 = vpop.f32.mrf.mxu0
        %v3245 = vadd.f32 %v2820, %v3244
        %v3246 = vpop.f32.mrf.mxu0
        %3247 = vmatprep.mubr.bf16.mxu0 0
        %3248 = vmatmul.mubr.bf16.gmra.mxu0 %v2114
        %v3249 = vpop.f32.mrf.mxu0
        %v3250 = vadd.f32 %v2825, %v3249
        %v3251 = vpop.f32.mrf.mxu0
        %v3252 = vpop.f32.mrf.mxu0
        %v3253 = vadd.f32 %v2828, %v3252
        %v3254 = vpop.f32.mrf.mxu0
        %3255 = vmatprep.mubr.bf16.mxu0 0
        %3256 = vmatmul.mubr.bf16.gmra.mxu0 %v2117
        %v3257 = vpop.f32.mrf.mxu0
        %v3258 = vadd.f32 %v2833, %v3257
        %v3259 = vpop.f32.mrf.mxu0
        %v3260 = vpop.f32.mrf.mxu0
        %v3261 = vadd.f32 %v2836, %v3260
        %v3262 = vpop.f32.mrf.mxu0
        %3263 = vmatprep.mubr.bf16.mxu0 0
        %3264 = vmatmul.mubr.bf16.gmra.mxu0 %v2120
        %v3265 = vpop.f32.mrf.mxu0
        %v3266 = vadd.f32 %v2841, %v3265
        %v3267 = vpop.f32.mrf.mxu0
        %v3268 = vpop.f32.mrf.mxu0
        %v3269 = vadd.f32 %v2844, %v3268
        %v3270 = vpop.f32.mrf.mxu0
        %3271 = vmatprep.mubr.bf16.mxu0 0
        %3272 = vmatmul.mubr.bf16.gmra.mxu0 %v2123
        %v3273 = vpop.f32.mrf.mxu0
        %v3274 = vadd.f32 %v2849, %v3273
        %v3275 = vpop.f32.mrf.mxu0
        %v3276 = vpop.f32.mrf.mxu0
        %v3277 = vadd.f32 %v2852, %v3276
        %v3278 = vpop.f32.mrf.mxu0
        %3279 = vmatprep.mubr.bf16.mxu0 0
        %3280 = vmatmul.mubr.bf16.gmra.mxu0 %v2126
        %v3281 = vpop.f32.mrf.mxu0
        %v3282 = vadd.f32 %v2857, %v3281
        %v3283 = vpop.f32.mrf.mxu0
        %v3284 = vpop.f32.mrf.mxu0
        %v3285 = vadd.f32 %v2860, %v3284
        %v3286 = vpop.f32.mrf.mxu0
        %3287 = vmatprep.mubr.bf16.mxu0 0
        %3288 = vmatmul.mubr.bf16.gmra.mxu0 %v2129
        %v3289 = vpop.f32.mrf.mxu0
        %v3290 = vadd.f32 %v2865, %v3289
        %v3291 = vpop.f32.mrf.mxu0
        %v3292 = vpop.f32.mrf.mxu0
        %v3293 = vadd.f32 %v2868, %v3292
        %v3294 = vpop.f32.mrf.mxu0
        %3295 = vmatprep.mubr.bf16.mxu0 0
        %3296 = vmatmul.mubr.bf16.gmra.mxu0 %v2132
        %v3297 = vpop.f32.mrf.mxu0
        %v3298 = vadd.f32 %v2873, %v3297
        %v3299 = vpop.f32.mrf.mxu0
        %v3300 = vpop.f32.mrf.mxu0
        %v3301 = vadd.f32 %v2876, %v3300
        %v3302 = vpop.f32.mrf.mxu0
        %3303 = vmatprep.mubr.bf16.mxu0 0
        %3304 = vmatmul.mubr.bf16.gmra.mxu0 %v2135
        %v3305 = vpop.f32.mrf.mxu0
        %v3306 = vadd.f32 %v2881, %v3305
        %v3307 = vpop.f32.mrf.mxu0
        %v3308 = vpop.f32.mrf.mxu0
        %v3309 = vadd.f32 %v2884, %v3308
        %v3310 = vpop.f32.mrf.mxu0
        %3311 = vmatprep.mubr.bf16.mxu0 0
        %3312 = vmatmul.mubr.bf16.gmra.mxu0 %v2138
        %v3313 = vpop.f32.mrf.mxu0
        %v3314 = vadd.f32 %v2889, %v3313
        %v3315 = vpop.f32.mrf.mxu0
        %v3316 = vpop.f32.mrf.mxu0
        %v3317 = vadd.f32 %v2892, %v3316
        %v3318 = vpop.f32.mrf.mxu0
        %3319 = vmatprep.mubr.bf16.mxu0 0
        %3320 = vmatmul.mubr.bf16.gmra.mxu0 %v2141
        %v3321 = vpop.f32.mrf.mxu0
        %v3322 = vadd.f32 %v2897, %v3321
        %v3323 = vpop.f32.mrf.mxu0
        %v3324 = vpop.f32.mrf.mxu0
        %v3325 = vadd.f32 %v2900, %v3324
        %v3326 = vpop.f32.mrf.mxu0
        %3327 = vmatprep.mubr.bf16.mxu0 0
        %3328 = vmatmul.mubr.bf16.gmra.mxu0 %v2144
        %v3329 = vpop.f32.mrf.mxu0
        %v3330 = vadd.f32 %v2905, %v3329
        %v3331 = vpop.f32.mrf.mxu0
        %v3332 = vpop.f32.mrf.mxu0
        %v3333 = vadd.f32 %v2908, %v3332
        %v3334 = vpop.f32.mrf.mxu0
        %3335 = vmatprep.mubr.bf16.mxu0 0
        %3336 = vmatmul.mubr.bf16.gmra.mxu0 %v2147
        %v3337 = vpop.f32.mrf.mxu0
        %v3338 = vadd.f32 %v2913, %v3337
        %v3339 = vpop.f32.mrf.mxu0
        %v3340 = vpop.f32.mrf.mxu0
        %v3341 = vadd.f32 %v2916, %v3340
        %v3342 = vpop.f32.mrf.mxu0
        %3343 = vmatprep.mubr.bf16.mxu0 0
        %3344 = vmatmul.mubr.bf16.gmra.mxu0 %v2150
        %v3345 = vpop.f32.mrf.mxu0
        %v3346 = vadd.f32 %v2921, %v3345
        %v3347 = vpop.f32.mrf.mxu0
        %v3348 = vpop.f32.mrf.mxu0
        %v3349 = vadd.f32 %v2924, %v3348
        %v3350 = vpop.f32.mrf.mxu0
        %3351 = vmatprep.mubr.bf16.mxu0 0
        %3352 = vmatmul.mubr.bf16.gmra.mxu0 %v2153
        %v3353 = vpop.f32.mrf.mxu0
        %v3354 = vadd.f32 %v2929, %v3353
        %v3355 = vpop.f32.mrf.mxu0
        %v3356 = vpop.f32.mrf.mxu0
        %v3357 = vadd.f32 %v2932, %v3356
        %v3358 = vpop.f32.mrf.mxu0
        %3359 = vmatprep.mubr.bf16.mxu0 0
        %3360 = vmatmul.mubr.bf16.gmra.mxu0 %v2156
        %v3361 = vpop.f32.mrf.mxu0
        %v3362 = vadd.f32 %v2937, %v3361
        %v3363 = vpop.f32.mrf.mxu0
        %v3364 = vpop.f32.mrf.mxu0
        %v3365 = vadd.f32 %v2940, %v3364
        %v3366 = vpop.f32.mrf.mxu0
        %3367 = vmatprep.mubr.bf16.mxu0 0
        %3368 = vmatmul.mubr.bf16.gmra.mxu0 %v2159
        %v3369 = vpop.f32.mrf.mxu0
        %v3370 = vadd.f32 %v2945, %v3369
        %v3371 = vpop.f32.mrf.mxu0
        %v3372 = vpop.f32.mrf.mxu0
        %v3373 = vadd.f32 %v2948, %v3372
        %v3374 = vpop.f32.mrf.mxu0
        %3375 = vmatprep.mubr.bf16.mxu0 0
        %3376 = vmatmul.mubr.bf16.gmra.mxu0 %v2162
        %v3377 = vpop.f32.mrf.mxu0
        %v3378 = vadd.f32 %v2953, %v3377
        %v3379 = vpop.f32.mrf.mxu0
        %v3380 = vpop.f32.mrf.mxu0
        %v3381 = vadd.f32 %v2956, %v3380
        %v3382 = vpop.f32.mrf.mxu0
        %3383 = vmatprep.mubr.bf16.mxu0 0
        %3384 = vmatmul.mubr.bf16.gmra.mxu0 %v2165
        %v3385 = vpop.f32.mrf.mxu0
        %v3386 = vadd.f32 %v2961, %v3385
        %v3387 = vpop.f32.mrf.mxu0
        %v3388 = vpop.f32.mrf.mxu0
        %v3389 = vadd.f32 %v2964, %v3388
        %v3390 = vpop.f32.mrf.mxu0
        %3391 = vmatprep.mubr.bf16.mxu0 0
        %3392 = vmatmul.mubr.bf16.gmra.mxu0 %v2168
        %v3393 = vpop.f32.mrf.mxu0
        %v3394 = vadd.f32 %v2969, %v3393
        %v3395 = vpop.f32.mrf.mxu0
        %v3396 = vpop.f32.mrf.mxu0
        %v3397 = vadd.f32 %v2972, %v3396
        %v3398 = vpop.f32.mrf.mxu0
        %3399 = vmatprep.mubr.bf16.mxu0 0
        %3400 = vmatmul.mubr.bf16.gmra.mxu0 %v2171
        %v3401 = vpop.f32.mrf.mxu0
        %v3402 = vadd.f32 %v2977, %v3401
        %v3403 = vpop.f32.mrf.mxu0
        %v3404 = vpop.f32.mrf.mxu0
        %v3405 = vadd.f32 %v2980, %v3404
        %v3406 = vpop.f32.mrf.mxu0
        %3407 = vmatprep.mubr.bf16.mxu0 0
        %3408 = vmatmul.mubr.bf16.gmra.mxu0 %v2174
        %v3409 = vpop.f32.mrf.mxu0
        %v3410 = vadd.f32 %v2985, %v3409
        %v3411 = vpop.f32.mrf.mxu0
        %v3412 = vpop.f32.mrf.mxu0
        %v3413 = vadd.f32 %v2988, %v3412
        %v3414 = vpop.f32.mrf.mxu0
        %3415 = vmatprep.mubr.bf16.mxu0 0
        %3416 = vmatmul.mubr.bf16.gmra.mxu0 %v2177
        %v3417 = vpop.f32.mrf.mxu0
        %v3418 = vadd.f32 %v2993, %v3417
        %v3419 = vpop.f32.mrf.mxu0
        %v3420 = vpop.f32.mrf.mxu0
        %v3421 = vadd.f32 %v2996, %v3420
        %v3422 = vpop.f32.mrf.mxu0
        %3423 = vmatprep.mubr.bf16.mxu0 0
        %3424 = vmatmul.mubr.bf16.gmra.mxu0 %v2180
        %v3425 = vpop.f32.mrf.mxu0
        %v3426 = vadd.f32 %v3001, %v3425
        %v3427 = vpop.f32.mrf.mxu0
        %v3428 = vpop.f32.mrf.mxu0
        %v3429 = vadd.f32 %v3004, %v3428
        %v3430 = vpop.f32.mrf.mxu0
        %3431 = vmatprep.mubr.bf16.mxu0 0
        %3432 = vmatmul.mubr.bf16.gmra.mxu0 %v2183
        %v3433 = vpop.f32.mrf.mxu0
        %v3434 = vadd.f32 %v3009, %v3433
        %v3435 = vpop.f32.mrf.mxu0
        %v3436 = vpop.f32.mrf.mxu0
        %v3437 = vadd.f32 %v3012, %v3436
        %v3438 = vpop.f32.mrf.mxu0
        %3439 = vmatprep.mubr.bf16.mxu0 0
        %3440 = vmatmul.mubr.bf16.gmra.mxu0 %v2186
        %v3441 = vpop.f32.mrf.mxu0
        %v3442 = vadd.f32 %v3017, %v3441
        %v3443 = vpop.f32.mrf.mxu0
        %v3444 = vpop.f32.mrf.mxu0
        %v3445 = vadd.f32 %v3020, %v3444
        %v3446 = vpop.f32.mrf.mxu0
        %3447 = vmatprep.mubr.bf16.mxu0 0
        %3448 = vmatmul.mubr.bf16.gmra.mxu0 %v2189
        %v3449 = vpop.f32.mrf.mxu0
        %v3450 = vadd.f32 %v3025, %v3449
        %v3451 = vpop.f32.mrf.mxu0
        %v3452 = vpop.f32.mrf.mxu0
        %v3453 = vadd.f32 %v3028, %v3452
        %v3454 = vpop.f32.mrf.mxu0
        %3455 = vmatprep.mubr.bf16.mxu0 0
        %3456 = vmatmul.mubr.bf16.gmra.mxu0 %v2192
        %v3457 = vpop.f32.mrf.mxu0
        %v3458 = vadd.f32 %v3033, %v3457
        %v3459 = vpop.f32.mrf.mxu0
        %v3460 = vpop.f32.mrf.mxu0
        %v3461 = vadd.f32 %v3036, %v3460
        %v3462 = vpop.f32.mrf.mxu0
        %3463 = vmatprep.mubr.bf16.mxu0 0
        %3464 = vmatmul.mubr.bf16.gmra.mxu0 %v2195
        %v3465 = vpop.f32.mrf.mxu0
        %v3466 = vadd.f32 %v3041, %v3465
        %v3467 = vpop.f32.mrf.mxu0
        %v3468 = vpop.f32.mrf.mxu0
        %v3469 = vadd.f32 %v3044, %v3468
        %v3470 = vpop.f32.mrf.mxu0
        %3471 = vdwg.mxu0
        %v3472 = vmax.f32 %v3082, 0.0
        %v3473 = vmax.f32 %v3085, 0.0
        %v3474 = vmax.f32 %v3090, 0.0
        %v3475 = vmax.f32 %v3093, 0.0
        %v3476 = vmax.f32 %v3098, 0.0
        %v3477 = vmax.f32 %v3101, 0.0
        %v3478 = vmax.f32 %v3106, 0.0
        %v3479 = vmax.f32 %v3109, 0.0
        %v3480 = vmax.f32 %v3114, 0.0
        %v3481 = vmax.f32 %v3117, 0.0
        %v3482 = vmax.f32 %v3122, 0.0
        %v3483 = vmax.f32 %v3125, 0.0
        %v3484 = vmax.f32 %v3130, 0.0
        %v3485 = vmax.f32 %v3133, 0.0
        %v3486 = vmax.f32 %v3138, 0.0
        %v3487 = vmax.f32 %v3141, 0.0
        %v3488 = vmax.f32 %v3146, 0.0
        %v3489 = vmax.f32 %v3149, 0.0
        %v3490 = vmax.f32 %v3154, 0.0
        %v3491 = vmax.f32 %v3157, 0.0
        %v3492 = vmax.f32 %v3162, 0.0
        %v3493 = vmax.f32 %v3165, 0.0
        %v3494 = vmax.f32 %v3170, 0.0
        %v3495 = vmax.f32 %v3173, 0.0
        %v3496 = vmax.f32 %v3178, 0.0
        %v3497 = vmax.f32 %v3181, 0.0
        %v3498 = vmax.f32 %v3186, 0.0
        %v3499 = vmax.f32 %v3189, 0.0
        %v3500 = vmax.f32 %v3194, 0.0
        %v3501 = vmax.f32 %v3197, 0.0
        %v3502 = vmax.f32 %v3202, 0.0
        %v3503 = vmax.f32 %v3205, 0.0
        %v3504 = vmax.f32 %v3210, 0.0
        %v3505 = vmax.f32 %v3213, 0.0
        %v3506 = vmax.f32 %v3218, 0.0
        %v3507 = vmax.f32 %v3221, 0.0
        %v3508 = vmax.f32 %v3226, 0.0
        %v3509 = vmax.f32 %v3229, 0.0
        %v3510 = vmax.f32 %v3234, 0.0
        %v3511 = vmax.f32 %v3237, 0.0
        %v3512 = vmax.f32 %v3242, 0.0
        %v3513 = vmax.f32 %v3245, 0.0
        %v3514 = vmax.f32 %v3250, 0.0
        %v3515 = vmax.f32 %v3253, 0.0
        %v3516 = vmax.f32 %v3258, 0.0
        %v3517 = vmax.f32 %v3261, 0.0
        %v3518 = vmax.f32 %v3266, 0.0
        %v3519 = vmax.f32 %v3269, 0.0
        %v3520 = vmax.f32 %v3274, 0.0
        %v3521 = vmax.f32 %v3277, 0.0
        %v3522 = vmax.f32 %v3282, 0.0
        %v3523 = vmax.f32 %v3285, 0.0
        %v3524 = vmax.f32 %v3290, 0.0
        %v3525 = vmax.f32 %v3293, 0.0
        %v3526 = vmax.f32 %v3298, 0.0
        %v3527 = vmax.f32 %v3301, 0.0
        %v3528 = vmax.f32 %v3306, 0.0
        %v3529 = vmax.f32 %v3309, 0.0
        %v3530 = vmax.f32 %v3314, 0.0
        %v3531 = vmax.f32 %v3317, 0.0
        %v3532 = vmax.f32 %v3322, 0.0
        %v3533 = vmax.f32 %v3325, 0.0
        %v3534 = vmax.f32 %v3330, 0.0
        %v3535 = vmax.f32 %v3333, 0.0
        %v3536 = vmax.f32 %v3338, 0.0
        %v3537 = vmax.f32 %v3341, 0.0
        %v3538 = vmax.f32 %v3346, 0.0
        %v3539 = vmax.f32 %v3349, 0.0
        %v3540 = vmax.f32 %v3354, 0.0
        %v3541 = vmax.f32 %v3357, 0.0
        %v3542 = vmax.f32 %v3362, 0.0
        %v3543 = vmax.f32 %v3365, 0.0
        %v3544 = vmax.f32 %v3370, 0.0
        %v3545 = vmax.f32 %v3373, 0.0
        %v3546 = vmax.f32 %v3378, 0.0
        %v3547 = vmax.f32 %v3381, 0.0
        %v3548 = vmax.f32 %v3386, 0.0
        %v3549 = vmax.f32 %v3389, 0.0
        %v3550 = vmax.f32 %v3394, 0.0
        %v3551 = vmax.f32 %v3397, 0.0
        %v3552 = vmax.f32 %v3402, 0.0
        %v3553 = vmax.f32 %v3405, 0.0
        %v3554 = vmax.f32 %v3410, 0.0
        %v3555 = vmax.f32 %v3413, 0.0
        %v3556 = vmax.f32 %v3418, 0.0
        %v3557 = vmax.f32 %v3421, 0.0
        %v3558 = vmax.f32 %v3426, 0.0
        %v3559 = vmax.f32 %v3429, 0.0
        %v3560 = vmax.f32 %v3434, 0.0
        %v3561 = vmax.f32 %v3437, 0.0
        %v3562 = vmax.f32 %v3442, 0.0
        %v3563 = vmax.f32 %v3445, 0.0
        %v3564 = vmax.f32 %v3450, 0.0
        %v3565 = vmax.f32 %v3453, 0.0
        %v3566 = vmax.f32 %v3458, 0.0
        %v3567 = vmax.f32 %v3461, 0.0
        %v3568 = vmax.f32 %v3466, 0.0
        %v3569 = vmax.f32 %v3469, 0.0
        %3570 = vst [vmem:[%s232] sm:$0xff] %v3472
        %3571 = vst [vmem:[%s232 + $0x8] sm:$0xff] %v3473
        %3572 = vst [vmem:[%s232 + $0x10] sm:$0xff] %v3474
        %3573 = vst [vmem:[%s232 + $0x18] sm:$0xff] %v3475
        %3574 = vst [vmem:[%s232 + $0x20] sm:$0xff] %v3476
        %3575 = vst [vmem:[%s232 + $0x28] sm:$0xff] %v3477
        %3576 = vst [vmem:[%s232 + $0x30] sm:$0xff] %v3478
        %3577 = vst [vmem:[%s232 + $0x38] sm:$0xff] %v3479
        %3578 = vst [vmem:[%s232 + $0x40] sm:$0xff] %v3480
        %3579 = vst [vmem:[%s232 + $0x48] sm:$0xff] %v3481
        %3580 = vst [vmem:[%s232 + $0x50] sm:$0xff] %v3482
        %3581 = vst [vmem:[%s232 + $0x58] sm:$0xff] %v3483
        %3582 = vst [vmem:[%s232 + $0x60] sm:$0xff] %v3484
        %3583 = vst [vmem:[%s232 + $0x68] sm:$0xff] %v3485
        %3584 = vst [vmem:[%s232 + $0x70] sm:$0xff] %v3486
        %3585 = vst [vmem:[%s232 + $0x78] sm:$0xff] %v3487
        %3586 = vst [vmem:[%s232 + $0x80] sm:$0xff] %v3488
        %3587 = vst [vmem:[%s232 + $0x88] sm:$0xff] %v3489
        %3588 = vst [vmem:[%s232 + $0x90] sm:$0xff] %v3490
        %3589 = vst [vmem:[%s232 + $0x98] sm:$0xff] %v3491
        %3590 = vst [vmem:[%s232 + $0xa0] sm:$0xff] %v3492
        %3591 = vst [vmem:[%s232 + $0xa8] sm:$0xff] %v3493
        %3592 = vst [vmem:[%s232 + $0xb0] sm:$0xff] %v3494
        %3593 = vst [vmem:[%s232 + $0xb8] sm:$0xff] %v3495
        %3594 = vst [vmem:[%s232 + $0xc0] sm:$0xff] %v3496
        %3595 = vst [vmem:[%s232 + $0xc8] sm:$0xff] %v3497
        %3596 = vst [vmem:[%s232 + $0xd0] sm:$0xff] %v3498
        %3597 = vst [vmem:[%s232 + $0xd8] sm:$0xff] %v3499
        %3598 = vst [vmem:[%s232 + $0xe0] sm:$0xff] %v3500
        %3599 = vst [vmem:[%s232 + $0xe8] sm:$0xff] %v3501
        %3600 = vst [vmem:[%s232 + $0xf0] sm:$0xff] %v3502
        %3601 = vst [vmem:[%s232 + $0xf8] sm:$0xff] %v3503
        %3602 = vst [vmem:[%s232 + $0x100] sm:$0xff] %v3504
        %3603 = vst [vmem:[%s232 + $0x108] sm:$0xff] %v3505
        %3604 = vst [vmem:[%s232 + $0x110] sm:$0xff] %v3506
        %3605 = vst [vmem:[%s232 + $0x118] sm:$0xff] %v3507
        %3606 = vst [vmem:[%s232 + $0x120] sm:$0xff] %v3508
        %3607 = vst [vmem:[%s232 + $0x128] sm:$0xff] %v3509
        %3608 = vst [vmem:[%s232 + $0x130] sm:$0xff] %v3510
        %3609 = vst [vmem:[%s232 + $0x138] sm:$0xff] %v3511
        %3610 = vst [vmem:[%s232 + $0x140] sm:$0xff] %v3512
        %3611 = vst [vmem:[%s232 + $0x148] sm:$0xff] %v3513
        %3612 = vst [vmem:[%s232 + $0x150] sm:$0xff] %v3514
        %3613 = vst [vmem:[%s232 + $0x158] sm:$0xff] %v3515
        %3614 = vst [vmem:[%s232 + $0x160] sm:$0xff] %v3516
        %3615 = vst [vmem:[%s232 + $0x168] sm:$0xff] %v3517
        %3616 = vst [vmem:[%s232 + $0x170] sm:$0xff] %v3518
        %3617 = vst [vmem:[%s232 + $0x178] sm:$0xff] %v3519
        %3618 = vst [vmem:[%s232 + $0x180] sm:$0xff] %v3520
        %3619 = vst [vmem:[%s232 + $0x188] sm:$0xff] %v3521
        %3620 = vst [vmem:[%s232 + $0x190] sm:$0xff] %v3522
        %3621 = vst [vmem:[%s232 + $0x198] sm:$0xff] %v3523
        %3622 = vst [vmem:[%s232 + $0x1a0] sm:$0xff] %v3524
        %3623 = vst [vmem:[%s232 + $0x1a8] sm:$0xff] %v3525
        %3624 = vst [vmem:[%s232 + $0x1b0] sm:$0xff] %v3526
        %3625 = vst [vmem:[%s232 + $0x1b8] sm:$0xff] %v3527
        %3626 = vst [vmem:[%s232 + $0x1c0] sm:$0xff] %v3528
        %3627 = vst [vmem:[%s232 + $0x1c8] sm:$0xff] %v3529
        %3628 = vst [vmem:[%s232 + $0x1d0] sm:$0xff] %v3530
        %3629 = vst [vmem:[%s232 + $0x1d8] sm:$0xff] %v3531
        %3630 = vst [vmem:[%s232 + $0x1e0] sm:$0xff] %v3532
        %3631 = vst [vmem:[%s232 + $0x1e8] sm:$0xff] %v3533
        %3632 = vst [vmem:[%s232 + $0x1f0] sm:$0xff] %v3534
        %3633 = vst [vmem:[%s232 + $0x1f8] sm:$0xff] %v3535
        %3634 = vst [vmem:[%s232 + $0x200] sm:$0xff] %v3536
        %3635 = vst [vmem:[%s232 + $0x208] sm:$0xff] %v3537
        %3636 = vst [vmem:[%s232 + $0x210] sm:$0xff] %v3538
        %3637 = vst [vmem:[%s232 + $0x218] sm:$0xff] %v3539
        %3638 = vst [vmem:[%s232 + $0x220] sm:$0xff] %v3540
        %3639 = vst [vmem:[%s232 + $0x228] sm:$0xff] %v3541
        %3640 = vst [vmem:[%s232 + $0x230] sm:$0xff] %v3542
        %3641 = vst [vmem:[%s232 + $0x238] sm:$0xff] %v3543
        %3642 = vst [vmem:[%s232 + $0x240] sm:$0xff] %v3544
        %3643 = vst [vmem:[%s232 + $0x248] sm:$0xff] %v3545
        %3644 = vst [vmem:[%s232 + $0x250] sm:$0xff] %v3546
        %3645 = vst [vmem:[%s232 + $0x258] sm:$0xff] %v3547
        %3646 = vst [vmem:[%s232 + $0x260] sm:$0xff] %v3548
        %3647 = vst [vmem:[%s232 + $0x268] sm:$0xff] %v3549
        %3648 = vst [vmem:[%s232 + $0x270] sm:$0xff] %v3550
        %3649 = vst [vmem:[%s232 + $0x278] sm:$0xff] %v3551
        %3650 = vst [vmem:[%s232 + $0x280] sm:$0xff] %v3552
        %3651 = vst [vmem:[%s232 + $0x288] sm:$0xff] %v3553
        %3652 = vst [vmem:[%s232 + $0x290] sm:$0xff] %v3554
        %3653 = vst [vmem:[%s232 + $0x298] sm:$0xff] %v3555
        %3654 = vst [vmem:[%s232 + $0x2a0] sm:$0xff] %v3556
        %3655 = vst [vmem:[%s232 + $0x2a8] sm:$0xff] %v3557
        %3656 = vst [vmem:[%s232 + $0x2b0] sm:$0xff] %v3558
        %3657 = vst [vmem:[%s232 + $0x2b8] sm:$0xff] %v3559
        %3658 = vst [vmem:[%s232 + $0x2c0] sm:$0xff] %v3560
        %3659 = vst [vmem:[%s232 + $0x2c8] sm:$0xff] %v3561
        %3660 = vst [vmem:[%s232 + $0x2d0] sm:$0xff] %v3562
        %3661 = vst [vmem:[%s232 + $0x2d8] sm:$0xff] %v3563
        %3662 = vst [vmem:[%s232 + $0x2e0] sm:$0xff] %v3564
        %3663 = vst [vmem:[%s232 + $0x2e8] sm:$0xff] %v3565
        %3664 = vst [vmem:[%s232 + $0x2f0] sm:$0xff] %v3566
        %3665 = vst [vmem:[%s232 + $0x2f8] sm:$0xff] %v3567
        %3666 = vst [vmem:[%s232 + $0x300] sm:$0xff] %v3568
        %3667 = vst [vmem:[%s232 + $0x308] sm:$0xff] %v3569
        %s3668 = smul.u32 98, %s19
        %p3669 = scmp.lt.s32.totalorder %s3668, 195
        %s3670 = scalar_select %p3669, %s3668, 195
        %p3671 = scmp.lt.s32.totalorder %s20, 0
        %s3672 = scalar_select %p3671, %s20, 0
        %s3673 = sadd.s32 %s3672, %s3670
        %s3674 = smul.addr %s3673, 8
        %s3675 = scalar_lea.vmem %s3, %s3674
        // Predicated region
        $region37: #{model_forward.6} parent=31 // pred_check
          %p3676 = pneg %p125
        $region38: #{model_forward.6} parent=31 // pred_check_branch
          %3678 = sbr.rel (%p3676) target = $region40
        $region39: #{model_forward.6} parent=31 // pred_region
          %s3679 = smul.u32 98, %s19
        $region40: #{model_forward.6} parent=31 // pred_fallthru
          _
      $region32: #{model_forward.6} parent=5 // pred_fallthru
        _
      %p3680 = scmp.le.s32.totalorder 2, %s10
      // Predicated region
      $region41: #{model_forward.6} parent=5 // pred_check
        %p3681 = pneg %p3680
      $region42: #{model_forward.6} parent=5 // pred_check_branch
        %3683 = sbr.rel (%p3681) target = $region44
      $region43: #{model_forward.6} parent=5 // pred_region
        %s3684 = ssub.s32 %s10, 2
        // Predicated region
        $region45: #{model_forward.6} parent=43 // pred_check
          %p3685 = pneg %p131
        $region46: #{model_forward.6} parent=43 // pred_check_branch
          %3687 = sbr.rel (%p3685) target = $region48
        $region47: #{model_forward.6} parent=43 // pred_region
          %s3688 = smul.u32 98, %s21
          %p3689 = scmp.lt.s32.totalorder %s3688, 195
          %s3690 = scalar_select %p3689, %s3688, 195
          %p3691 = scmp.lt.s32.totalorder %s22, 0
          %s3692 = scalar_select %p3691, %s22, 0
          %s3693 = sadd.s32 %s3692, %s3690
          %s3694 = smul.addr %s3693, 8
          %s3695 = scalar_lea.vmem %s3, %s3694
        $region48: #{model_forward.6} parent=43 // pred_fallthru
          _
      $region44: #{model_forward.6} parent=5 // pred_fallthru
        _
    $region6: #{model_forward.6} parent=1 // loop_footer
      %s14 = sadd.s32 1, %s10
    $region7: #{model_forward.6} parent=1 // loop_footer_branch
      %9 = sbr.rel target = $region3
    $region8: #{model_forward.6} parent=1 // loop_exit
      _
    %3696 = vsyncpa [#allocation3], 1
    %s3697 = scalar_lea.sflag [#allocation3], 1
    %3698 = vsyncpa %s3697, 1

// kernel: model_forward.9
$region0: #{model_forward.9}
  #allocation0 [shape = 'u32[]', space=smem, size = 0x4, offset = 0x4, fixed_abs, tag = 'smem constant byte address 0x4 - core index']
  #allocation1 [shape = 'u32[144,128]{1,0:T(1,128)}', space=vmem, size = 0x12000, scoped, tag = 'internal scratch']
  %s0 = inlined_call_operand.vmem [shape: bf16[2,1024], index: 0, kind: input, shape index: {}]
  %s1 = inlined_call_operand.vmem [shape: bf16[1024,128], index: 1, kind: input, shape index: {}]
  %s2 = inlined_call_operand.vmem [shape: f32[1,128], index: 2, kind: input, shape index: {}]
  %s3 = inlined_call_operand.hbm [shape: f32[2,128], index: 3, kind: output, shape index: {}]
  %s4 = sld [smem:[#allocation0]]
  $region22: #{model_forward.9} parent=0
    _
  %s6 = ssub.s32 1, %s4
  %s7 = scalar_select 0, %s6, %s4
  $region1: #{model_forward.9} parent=0
    #allocation2 [shape = 'u8[1024]{0}', space=vmem, size = 0x400, scoped, tag = 'output window, operand 0, single buffered']
    #allocation3 [shape = 's32[1]{0}', space=sflag, size = 0x4, scoped, tag = 'scoped memory for model_forward.9']
    %8 = vsyncpa [#allocation3], 0
    // Predicated region
    $region2: #{model_forward.9} parent=1 // pred_check
      _
    $region3: #{model_forward.9} parent=1 // pred_check_branch
      %10 = sbr.rel (0) target = $region5
    $region4: #{model_forward.9} parent=1 // pred_region
      _
    $region5: #{model_forward.9} parent=1 // pred_fallthru
      _
    // Predicated region
    $region6: #{model_forward.9} parent=1 // pred_check
      _
    $region7: #{model_forward.9} parent=1 // pred_check_branch
      %12 = sbr.rel (0) target = $region9
    $region8: #{model_forward.9} parent=1 // pred_region
      _
    $region9: #{model_forward.9} parent=1 // pred_fallthru
      _
    // Predicated region
    $region10: #{model_forward.9} parent=1 // pred_check
      _
    $region11: #{model_forward.9} parent=1 // pred_check_branch
      %14 = sbr.rel (0) target = $region13
    $region12: #{model_forward.9} parent=1 // pred_region
      _
    $region13: #{model_forward.9} parent=1 // pred_fallthru
      _
    %v16 = vld [vmem:[%s0] sm:$0xff]
    %v17 = vld [vmem:[%s1] sm:$0xf]
    %v18 = vld [vmem:[%s1 + $0x4] sm:$0xf]
    %v19 = vld [vmem:[%s1 + $0x8] sm:$0xf]
    %v20 = vld [vmem:[%s1 + $0xc] sm:$0xf]
    %v21 = vld [vmem:[%s1 + $0x10] sm:$0xf]
    %v22 = vld [vmem:[%s1 + $0x14] sm:$0xf]
    %v23 = vld [vmem:[%s1 + $0x18] sm:$0xf]
    %v24 = vld [vmem:[%s1 + $0x1c] sm:$0xf]
    %v25 = vld [vmem:[%s1 + $0x20] sm:$0xf]
    %v26 = vld [vmem:[%s1 + $0x24] sm:$0xf]
    %v27 = vld [vmem:[%s1 + $0x28] sm:$0xf]
    %v28 = vld [vmem:[%s1 + $0x2c] sm:$0xf]
    %v29 = vld [vmem:[%s1 + $0x30] sm:$0xf]
    %v30 = vld [vmem:[%s1 + $0x34] sm:$0xf]
    %v31 = vld [vmem:[%s1 + $0x38] sm:$0xf]
    %v32 = vld [vmem:[%s1 + $0x3c] sm:$0xf]
    %v33 = vld [vmem:[%s1 + $0x40] sm:$0xf]
    %v34 = vld [vmem:[%s1 + $0x44] sm:$0xf]
    %v35 = vld [vmem:[%s1 + $0x48] sm:$0xf]
    %v36 = vld [vmem:[%s1 + $0x4c] sm:$0xf]
    %v37 = vld [vmem:[%s1 + $0x50] sm:$0xf]
    %v38 = vld [vmem:[%s1 + $0x54] sm:$0xf]
    %v39 = vld [vmem:[%s1 + $0x58] sm:$0xf]
    %v40 = vld [vmem:[%s1 + $0x5c] sm:$0xf]
    %v41 = vld [vmem:[%s1 + $0x60] sm:$0xf]
    %v42 = vld [vmem:[%s1 + $0x64] sm:$0xf]
    %v43 = vld [vmem:[%s1 + $0x68] sm:$0xf]
    %v44 = vld [vmem:[%s1 + $0x6c] sm:$0xf]
    %v45 = vld [vmem:[%s1 + $0x70] sm:$0xf]
    %v46 = vld [vmem:[%s1 + $0x74] sm:$0xf]
    %v47 = vld [vmem:[%s1 + $0x78] sm:$0xf]
    %v48 = vld [vmem:[%s1 + $0x7c] sm:$0xf]
    %v49 = vld [vmem:[%s1 + $0x80] sm:$0xf]
    %v50 = vld [vmem:[%s1 + $0x84] sm:$0xf]
    %v51 = vld [vmem:[%s1 + $0x88] sm:$0xf]
    %v52 = vld [vmem:[%s1 + $0x8c] sm:$0xf]
    %v53 = vld [vmem:[%s1 + $0x90] sm:$0xf]
    %v54 = vld [vmem:[%s1 + $0x94] sm:$0xf]
    %v55 = vld [vmem:[%s1 + $0x98] sm:$0xf]
    %v56 = vld [vmem:[%s1 + $0x9c] sm:$0xf]
    %v57 = vld [vmem:[%s1 + $0xa0] sm:$0xf]
    %v58 = vld [vmem:[%s1 + $0xa4] sm:$0xf]
    %v59 = vld [vmem:[%s1 + $0xa8] sm:$0xf]
    %v60 = vld [vmem:[%s1 + $0xac] sm:$0xf]
    %v61 = vld [vmem:[%s1 + $0xb0] sm:$0xf]
    %v62 = vld [vmem:[%s1 + $0xb4] sm:$0xf]
    %v63 = vld [vmem:[%s1 + $0xb8] sm:$0xf]
    %v64 = vld [vmem:[%s1 + $0xbc] sm:$0xf]
    %v65 = vld [vmem:[%s1 + $0xc0] sm:$0xf]
    %v66 = vld [vmem:[%s1 + $0xc4] sm:$0xf]
    %v67 = vld [vmem:[%s1 + $0xc8] sm:$0xf]
    %v68 = vld [vmem:[%s1 + $0xcc] sm:$0xf]
    %v69 = vld [vmem:[%s1 + $0xd0] sm:$0xf]
    %v70 = vld [vmem:[%s1 + $0xd4] sm:$0xf]
    %v71 = vld [vmem:[%s1 + $0xd8] sm:$0xf]
    %v72 = vld [vmem:[%s1 + $0xdc] sm:$0xf]
    %v73 = vld [vmem:[%s1 + $0xe0] sm:$0xf]
    %v74 = vld [vmem:[%s1 + $0xe4] sm:$0xf]
    %v75 = vld [vmem:[%s1 + $0xe8] sm:$0xf]
    %v76 = vld [vmem:[%s1 + $0xec] sm:$0xf]
    %v77 = vld [vmem:[%s1 + $0xf0] sm:$0xf]
    %v78 = vld [vmem:[%s1 + $0xf4] sm:$0xf]
    %v79 = vld [vmem:[%s1 + $0xf8] sm:$0xf]
    %v80 = vld [vmem:[%s1 + $0xfc] sm:$0xf]
    %v81 = vld [vmem:[%s1 + $0x100] sm:$0xf]
    %v82 = vld [vmem:[%s1 + $0x104] sm:$0xf]
    %v83 = vld [vmem:[%s1 + $0x108] sm:$0xf]
    %v84 = vld [vmem:[%s1 + $0x10c] sm:$0xf]
    %v85 = vld [vmem:[%s1 + $0x110] sm:$0xf]
    %v86 = vld [vmem:[%s1 + $0x114] sm:$0xf]
    %v87 = vld [vmem:[%s1 + $0x118] sm:$0xf]
    %v88 = vld [vmem:[%s1 + $0x11c] sm:$0xf]
    %v89 = vld [vmem:[%s1 + $0x120] sm:$0xf]
    %v90 = vld [vmem:[%s1 + $0x124] sm:$0xf]
    %v91 = vld [vmem:[%s1 + $0x128] sm:$0xf]
    %v92 = vld [vmem:[%s1 + $0x12c] sm:$0xf]
    %v93 = vld [vmem:[%s1 + $0x130] sm:$0xf]
    %v94 = vld [vmem:[%s1 + $0x134] sm:$0xf]
    %v95 = vld [vmem:[%s1 + $0x138] sm:$0xf]
    %v96 = vld [vmem:[%s1 + $0x13c] sm:$0xf]
    %v97 = vld [vmem:[%s1 + $0x140] sm:$0xf]
    %v98 = vld [vmem:[%s1 + $0x144] sm:$0xf]
    %v99 = vld [vmem:[%s1 + $0x148] sm:$0xf]
    %v100 = vld [vmem:[%s1 + $0x14c] sm:$0xf]
    %v101 = vld [vmem:[%s1 + $0x150] sm:$0xf]
    %v102 = vld [vmem:[%s1 + $0x154] sm:$0xf]
    %v103 = vld [vmem:[%s1 + $0x158] sm:$0xf]
    %v104 = vld [vmem:[%s1 + $0x15c] sm:$0xf]
    %v105 = vld [vmem:[%s1 + $0x160] sm:$0xf]
    %v106 = vld [vmem:[%s1 + $0x164] sm:$0xf]
    %v107 = vld [vmem:[%s1 + $0x168] sm:$0xf]
    %v108 = vld [vmem:[%s1 + $0x16c] sm:$0xf]
    %v109 = vld [vmem:[%s1 + $0x170] sm:$0xf]
    %v110 = vld [vmem:[%s1 + $0x174] sm:$0xf]
    %v111 = vld [vmem:[%s1 + $0x178] sm:$0xf]
    %v112 = vld [vmem:[%s1 + $0x17c] sm:$0xf]
    %v113 = vld [vmem:[%s1 + $0x180] sm:$0xf]
    %v114 = vld [vmem:[%s1 + $0x184] sm:$0xf]
    %v115 = vld [vmem:[%s1 + $0x188] sm:$0xf]
    %v116 = vld [vmem:[%s1 + $0x18c] sm:$0xf]
    %v117 = vld [vmem:[%s1 + $0x190] sm:$0xf]
    %v118 = vld [vmem:[%s1 + $0x194] sm:$0xf]
    %v119 = vld [vmem:[%s1 + $0x198] sm:$0xf]
    %v120 = vld [vmem:[%s1 + $0x19c] sm:$0xf]
    %v121 = vld [vmem:[%s1 + $0x1a0] sm:$0xf]
    %v122 = vld [vmem:[%s1 + $0x1a4] sm:$0xf]
    %v123 = vld [vmem:[%s1 + $0x1a8] sm:$0xf]
    %v124 = vld [vmem:[%s1 + $0x1ac] sm:$0xf]
    %v125 = vld [vmem:[%s1 + $0x1b0] sm:$0xf]
    %v126 = vld [vmem:[%s1 + $0x1b4] sm:$0xf]
    %v127 = vld [vmem:[%s1 + $0x1b8] sm:$0xf]
    %v128 = vld [vmem:[%s1 + $0x1bc] sm:$0xf]
    %v129 = vld [vmem:[%s1 + $0x1c0] sm:$0xf]
    %v130 = vld [vmem:[%s1 + $0x1c4] sm:$0xf]
    %v131 = vld [vmem:[%s1 + $0x1c8] sm:$0xf]
    %v132 = vld [vmem:[%s1 + $0x1cc] sm:$0xf]
    %v133 = vld [vmem:[%s1 + $0x1d0] sm:$0xf]
    %v134 = vld [vmem:[%s1 + $0x1d4] sm:$0xf]
    %v135 = vld [vmem:[%s1 + $0x1d8] sm:$0xf]
    %v136 = vld [vmem:[%s1 + $0x1dc] sm:$0xf]
    %v137 = vld [vmem:[%s1 + $0x1e0] sm:$0xf]
    %v138 = vld [vmem:[%s1 + $0x1e4] sm:$0xf]
    %v139 = vld [vmem:[%s1 + $0x1e8] sm:$0xf]
    %v140 = vld [vmem:[%s1 + $0x1ec] sm:$0xf]
    %v141 = vld [vmem:[%s1 + $0x1f0] sm:$0xf]
    %v142 = vld [vmem:[%s1 + $0x1f4] sm:$0xf]
    %v143 = vld [vmem:[%s1 + $0x1f8] sm:$0xf]
    %v144 = vld [vmem:[%s1 + $0x1fc] sm:$0xf]
    %v145 = vld [vmem:[%s2] sm:$0x1]
    %v147 = vlaneseq
    %v148 = vshrl.u32 %v147, 7
    %v149 = vsub.s32 0, %v148
    %v150 = vrot.slane %v145, %v149
    %v153 = vcombine.high %v16, %v16
    %v155 = vunpack.c.l.s4 1966171168
    %v156 = vunpack.c.0.s8 %v155
    %v157 = vlaneseq
    %v158 = vshrl.u32 %v157, 7
    %v159 = vsub.s32 %v156, %v158
    %v160 = vrot.slane %v16, %v159
    %v162 = vunpack.c.l.s4 1966171168
    %v163 = vunpack.c.0.s8 %v162
    %v164 = vlaneseq
    %v165 = vshrl.u32 %v164, 7
    %v166 = vsub.s32 %v163, %v165
    %v167 = vrot.slane %v153, %v166
    %v168 = vcombine.high %v160, %v160
    %v169 = vcombine.high %v167, %v167
    %v171 = vunpack.c.l.s4 1966171168
    %v172 = vunpack.c.0.s8 %v171
    %v173 = vlaneseq
    %v174 = vshrl.u32 %v173, 7
    %v175 = vsub.s32 %v172, %v174
    %v176 = vrot.slane %v160, %v175
    %v178 = vunpack.c.l.s4 1966171168
    %v179 = vunpack.c.0.s8 %v178
    %v180 = vlaneseq
    %v181 = vshrl.u32 %v180, 7
    %v182 = vsub.s32 %v179, %v181
    %v183 = vrot.slane %v167, %v182
    %v185 = vunpack.c.l.s4 1966171168
    %v186 = vunpack.c.0.s8 %v185
    %v187 = vlaneseq
    %v188 = vshrl.u32 %v187, 7
    %v189 = vsub.s32 %v186, %v188
    %v190 = vrot.slane %v168, %v189
    %v192 = vunpack.c.l.s4 1966171168
    %v193 = vunpack.c.0.s8 %v192
    %v194 = vlaneseq
    %v195 = vshrl.u32 %v194, 7
    %v196 = vsub.s32 %v193, %v195
    %v197 = vrot.slane %v169, %v196
    %v198 = vcombine.high %v176, %v176
    %v199 = vcombine.high %v183, %v183
    %v200 = vcombine.high %v190, %v190
    %v201 = vcombine.high %v197, %v197
    %v338 = vunpack.c.l.b16 %v17
    %v339 = vunpack.c.l.b16 %v18
    %v340 = vunpack.c.l.b16 %v19
    %v341 = vunpack.c.l.b16 %v20
    %v342 = vunpack.c.l.b16 %v21
    %v343 = vunpack.c.l.b16 %v22
    %v344 = vunpack.c.l.b16 %v23
    %v345 = vunpack.c.l.b16 %v24
    %v346 = vunpack.c.l.b16 %v25
    %v347 = vunpack.c.l.b16 %v26
    %v348 = vunpack.c.l.b16 %v27
    %v349 = vunpack.c.l.b16 %v28
    %v350 = vunpack.c.l.b16 %v29
    %v351 = vunpack.c.l.b16 %v30
    %v352 = vunpack.c.l.b16 %v31
    %v353 = vunpack.c.l.b16 %v32
    %v354 = vunpack.c.l.b16 %v33
    %v355 = vunpack.c.l.b16 %v34
    %v356 = vunpack.c.l.b16 %v35
    %v357 = vunpack.c.l.b16 %v36
    %v358 = vunpack.c.l.b16 %v37
    %v359 = vunpack.c.l.b16 %v38
    %v360 = vunpack.c.l.b16 %v39
    %v361 = vunpack.c.l.b16 %v40
    %v362 = vunpack.c.l.b16 %v41
    %v363 = vunpack.c.l.b16 %v42
    %v364 = vunpack.c.l.b16 %v43
    %v365 = vunpack.c.l.b16 %v44
    %v366 = vunpack.c.l.b16 %v45
    %v367 = vunpack.c.l.b16 %v46
    %v368 = vunpack.c.l.b16 %v47
    %v369 = vunpack.c.l.b16 %v48
    %v370 = vunpack.c.l.b16 %v49
    %v371 = vunpack.c.l.b16 %v50
    %v372 = vunpack.c.l.b16 %v51
    %v373 = vunpack.c.l.b16 %v52
    %v374 = vunpack.c.l.b16 %v53
    %v375 = vunpack.c.l.b16 %v54
    %v376 = vunpack.c.l.b16 %v55
    %v377 = vunpack.c.l.b16 %v56
    %v378 = vunpack.c.l.b16 %v57
    %v379 = vunpack.c.l.b16 %v58
    %v380 = vunpack.c.l.b16 %v59
    %v381 = vunpack.c.l.b16 %v60
    %v382 = vunpack.c.l.b16 %v61
    %v383 = vunpack.c.l.b16 %v62
    %v384 = vunpack.c.l.b16 %v63
    %v385 = vunpack.c.l.b16 %v64
    %v386 = vunpack.c.l.b16 %v65
    %v387 = vunpack.c.l.b16 %v66
    %v388 = vunpack.c.l.b16 %v67
    %v389 = vunpack.c.l.b16 %v68
    %v390 = vunpack.c.l.b16 %v69
    %v391 = vunpack.c.l.b16 %v70
    %v392 = vunpack.c.l.b16 %v71
    %v393 = vunpack.c.l.b16 %v72
    %v394 = vunpack.c.l.b16 %v73
    %v395 = vunpack.c.l.b16 %v74
    %v396 = vunpack.c.l.b16 %v75
    %v397 = vunpack.c.l.b16 %v76
    %v398 = vunpack.c.l.b16 %v77
    %v399 = vunpack.c.l.b16 %v78
    %v400 = vunpack.c.l.b16 %v79
    %v401 = vunpack.c.l.b16 %v80
    %v402 = vunpack.c.l.b16 %v81
    %v403 = vunpack.c.l.b16 %v82
    %v404 = vunpack.c.l.b16 %v83
    %v405 = vunpack.c.l.b16 %v84
    %v406 = vunpack.c.l.b16 %v85
    %v407 = vunpack.c.l.b16 %v86
    %v408 = vunpack.c.l.b16 %v87
    %v409 = vunpack.c.l.b16 %v88
    %v410 = vunpack.c.l.b16 %v89
    %v411 = vunpack.c.l.b16 %v90
    %v412 = vunpack.c.l.b16 %v91
    %v413 = vunpack.c.l.b16 %v92
    %v414 = vunpack.c.l.b16 %v93
    %v415 = vunpack.c.l.b16 %v94
    %v416 = vunpack.c.l.b16 %v95
    %v417 = vunpack.c.l.b16 %v96
    %v418 = vunpack.c.l.b16 %v97
    %v419 = vunpack.c.l.b16 %v98
    %v420 = vunpack.c.l.b16 %v99
    %v421 = vunpack.c.l.b16 %v100
    %v422 = vunpack.c.l.b16 %v101
    %v423 = vunpack.c.l.b16 %v102
    %v424 = vunpack.c.l.b16 %v103
    %v425 = vunpack.c.l.b16 %v104
    %v426 = vunpack.c.l.b16 %v105
    %v427 = vunpack.c.l.b16 %v106
    %v428 = vunpack.c.l.b16 %v107
    %v429 = vunpack.c.l.b16 %v108
    %v430 = vunpack.c.l.b16 %v109
    %v431 = vunpack.c.l.b16 %v110
    %v432 = vunpack.c.l.b16 %v111
    %v433 = vunpack.c.l.b16 %v112
    %v434 = vunpack.c.l.b16 %v113
    %v435 = vunpack.c.l.b16 %v114
    %v436 = vunpack.c.l.b16 %v115
    %v437 = vunpack.c.l.b16 %v116
    %v438 = vunpack.c.l.b16 %v117
    %v439 = vunpack.c.l.b16 %v118
    %v440 = vunpack.c.l.b16 %v119
    %v441 = vunpack.c.l.b16 %v120
    %v442 = vunpack.c.l.b16 %v121
    %v443 = vunpack.c.l.b16 %v122
    %v444 = vunpack.c.l.b16 %v123
    %v445 = vunpack.c.l.b16 %v124
    %v446 = vunpack.c.l.b16 %v125
    %v447 = vunpack.c.l.b16 %v126
    %v448 = vunpack.c.l.b16 %v127
    %v449 = vunpack.c.l.b16 %v128
    %v450 = vunpack.c.l.b16 %v129
    %v451 = vunpack.c.l.b16 %v130
    %v452 = vunpack.c.l.b16 %v131
    %v453 = vunpack.c.l.b16 %v132
    %v454 = vunpack.c.l.b16 %v133
    %v455 = vunpack.c.l.b16 %v134
    %v456 = vunpack.c.l.b16 %v135
    %v457 = vunpack.c.l.b16 %v136
    %v458 = vunpack.c.l.b16 %v137
    %v459 = vunpack.c.l.b16 %v138
    %v460 = vunpack.c.l.b16 %v139
    %v461 = vunpack.c.l.b16 %v140
    %v462 = vunpack.c.l.b16 %v141
    %v463 = vunpack.c.l.b16 %v142
    %v464 = vunpack.c.l.b16 %v143
    %v465 = vunpack.c.l.b16 %v144
    %v466 = vpack.c.b16 %v339, %v338
    %v467 = vpack.c.b16 %v341, %v340
    %v468 = vpack.c.b16 %v343, %v342
    %v469 = vpack.c.b16 %v345, %v344
    %v470 = vpack.c.b16 %v347, %v346
    %v471 = vpack.c.b16 %v349, %v348
    %v472 = vpack.c.b16 %v351, %v350
    %v473 = vpack.c.b16 %v353, %v352
    %v474 = vpack.c.b16 %v355, %v354
    %v475 = vpack.c.b16 %v357, %v356
    %v476 = vpack.c.b16 %v359, %v358
    %v477 = vpack.c.b16 %v361, %v360
    %v478 = vpack.c.b16 %v363, %v362
    %v479 = vpack.c.b16 %v365, %v364
    %v480 = vpack.c.b16 %v367, %v366
    %v481 = vpack.c.b16 %v369, %v368
    %v482 = vpack.c.b16 %v371, %v370
    %v483 = vpack.c.b16 %v373, %v372
    %v484 = vpack.c.b16 %v375, %v374
    %v485 = vpack.c.b16 %v377, %v376
    %v486 = vpack.c.b16 %v379, %v378
    %v487 = vpack.c.b16 %v381, %v380
    %v488 = vpack.c.b16 %v383, %v382
    %v489 = vpack.c.b16 %v385, %v384
    %v490 = vpack.c.b16 %v387, %v386
    %v491 = vpack.c.b16 %v389, %v388
    %v492 = vpack.c.b16 %v391, %v390
    %v493 = vpack.c.b16 %v393, %v392
    %v494 = vpack.c.b16 %v395, %v394
    %v495 = vpack.c.b16 %v397, %v396
    %v496 = vpack.c.b16 %v399, %v398
    %v497 = vpack.c.b16 %v401, %v400
    %v498 = vpack.c.b16 %v403, %v402
    %v499 = vpack.c.b16 %v405, %v404
    %v500 = vpack.c.b16 %v407, %v406
    %v501 = vpack.c.b16 %v409, %v408
    %v502 = vpack.c.b16 %v411, %v410
    %v503 = vpack.c.b16 %v413, %v412
    %v504 = vpack.c.b16 %v415, %v414
    %v505 = vpack.c.b16 %v417, %v416
    %v506 = vpack.c.b16 %v419, %v418
    %v507 = vpack.c.b16 %v421, %v420
    %v508 = vpack.c.b16 %v423, %v422
    %v509 = vpack.c.b16 %v425, %v424
    %v510 = vpack.c.b16 %v427, %v426
    %v511 = vpack.c.b16 %v429, %v428
    %v512 = vpack.c.b16 %v431, %v430
    %v513 = vpack.c.b16 %v433, %v432
    %v514 = vpack.c.b16 %v435, %v434
    %v515 = vpack.c.b16 %v437, %v436
    %v516 = vpack.c.b16 %v439, %v438
    %v517 = vpack.c.b16 %v441, %v440
    %v518 = vpack.c.b16 %v443, %v442
    %v519 = vpack.c.b16 %v445, %v444
    %v520 = vpack.c.b16 %v447, %v446
    %v521 = vpack.c.b16 %v449, %v448
    %v522 = vpack.c.b16 %v451, %v450
    %v523 = vpack.c.b16 %v453, %v452
    %v524 = vpack.c.b16 %v455, %v454
    %v525 = vpack.c.b16 %v457, %v456
    %v526 = vpack.c.b16 %v459, %v458
    %v527 = vpack.c.b16 %v461, %v460
    %v528 = vpack.c.b16 %v463, %v462
    %v529 = vpack.c.b16 %v465, %v464
    %594 = vmatprep.subr.bf16.mxu0 0
    %595 = vmatpush1.bf16.msra.mxu0 %v473
    %596 = vmatprep.subr.bf16.mxu0 0
    %597 = vmatpush1.bf16.msra.mxu0 %v472
    %598 = vmatprep.subr.bf16.mxu0 0
    %599 = vmatpush1.bf16.msra.mxu0 %v471
    %600 = vmatprep.subr.bf16.mxu0 0
    %601 = vmatpush1.bf16.msra.mxu0 %v470
    %602 = vmatprep.subr.bf16.mxu0 0
    %603 = vmatpush1.bf16.msra.mxu0 %v469
    %604 = vmatprep.subr.bf16.mxu0 0
    %605 = vmatpush1.bf16.msra.mxu0 %v468
    %606 = vmatprep.subr.bf16.mxu0 0
    %607 = vmatpush1.bf16.msra.mxu0 %v467
    %608 = vmatprep.subr.bf16.mxu0 0
    %609 = vmatpush1.bf16.msra.mxu0 %v466
    %610 = vmatprep.subr.bf16.mxu0 0
    %611 = vmatpush2.bf16.msra.mxu0 %v481
    %612 = vmatprep.subr.bf16.mxu0 0
    %613 = vmatpush2.bf16.msra.mxu0 %v480
    %614 = vmatprep.subr.bf16.mxu0 0
    %615 = vmatpush2.bf16.msra.mxu0 %v479
    %616 = vmatprep.subr.bf16.mxu0 0
    %617 = vmatpush2.bf16.msra.mxu0 %v478
    %618 = vmatprep.subr.bf16.mxu0 0
    %619 = vmatpush2.bf16.msra.mxu0 %v477
    %620 = vmatprep.subr.bf16.mxu0 0
    %621 = vmatpush2.bf16.msra.mxu0 %v476
    %622 = vmatprep.subr.bf16.mxu0 0
    %623 = vmatpush2.bf16.msra.mxu0 %v475
    %624 = vmatprep.subr.bf16.mxu0 0
    %625 = vmatpush2.bf16.msra.mxu0 %v474
    %626 = vmatprep.mubr.bf16.mxu0 %v190
    %627 = vmatmul.mubr.bf16.gmra.mxu0 %v176
    %v628 = vpop.f32.mrf.mxu0
    %v629 = vadd.f32 %v150, %v628
    %v630 = vpop.f32.mrf.mxu0
    %v631 = vpop.f32.mrf.mxu0
    %v632 = vpop.f32.mrf.mxu0
    %633 = vdwg.mxu0
    %634 = vmatprep.subr.bf16.mxu0 0
    %635 = vmatpush1.bf16.msra.mxu0 %v489
    %636 = vmatprep.subr.bf16.mxu0 0
    %637 = vmatpush1.bf16.msra.mxu0 %v488
    %638 = vmatprep.subr.bf16.mxu0 0
    %639 = vmatpush1.bf16.msra.mxu0 %v487
    %640 = vmatprep.subr.bf16.mxu0 0
    %641 = vmatpush1.bf16.msra.mxu0 %v486
    %642 = vmatprep.subr.bf16.mxu0 0
    %643 = vmatpush1.bf16.msra.mxu0 %v485
    %644 = vmatprep.subr.bf16.mxu0 0
    %645 = vmatpush1.bf16.msra.mxu0 %v484
    %646 = vmatprep.subr.bf16.mxu0 0
    %647 = vmatpush1.bf16.msra.mxu0 %v483
    %648 = vmatprep.subr.bf16.mxu0 0
    %649 = vmatpush1.bf16.msra.mxu0 %v482
    %650 = vmatprep.subr.bf16.mxu0 0
    %651 = vmatpush2.bf16.msra.mxu0 %v497
    %652 = vmatprep.subr.bf16.mxu0 0
    %653 = vmatpush2.bf16.msra.mxu0 %v496
    %654 = vmatprep.subr.bf16.mxu0 0
    %655 = vmatpush2.bf16.msra.mxu0 %v495
    %656 = vmatprep.subr.bf16.mxu0 0
    %657 = vmatpush2.bf16.msra.mxu0 %v494
    %658 = vmatprep.subr.bf16.mxu0 0
    %659 = vmatpush2.bf16.msra.mxu0 %v493
    %660 = vmatprep.subr.bf16.mxu0 0
    %661 = vmatpush2.bf16.msra.mxu0 %v492
    %662 = vmatprep.subr.bf16.mxu0 0
    %663 = vmatpush2.bf16.msra.mxu0 %v491
    %664 = vmatprep.subr.bf16.mxu0 0
    %665 = vmatpush2.bf16.msra.mxu0 %v490
    %666 = vmatprep.mubr.bf16.mxu0 %v200
    %667 = vmatmul.mubr.bf16.gmra.mxu0 %v198
    %v668 = vpop.f32.mrf.mxu0
    %v669 = vadd.f32 %v629, %v668
    %v670 = vpop.f32.mrf.mxu0
    %v671 = vpop.f32.mrf.mxu0
    %v672 = vpop.f32.mrf.mxu0
    %673 = vdwg.mxu0
    %674 = vmatprep.subr.bf16.mxu0 0
    %675 = vmatpush1.bf16.msra.mxu0 %v505
    %676 = vmatprep.subr.bf16.mxu0 0
    %677 = vmatpush1.bf16.msra.mxu0 %v504
    %678 = vmatprep.subr.bf16.mxu0 0
    %679 = vmatpush1.bf16.msra.mxu0 %v503
    %680 = vmatprep.subr.bf16.mxu0 0
    %681 = vmatpush1.bf16.msra.mxu0 %v502
    %682 = vmatprep.subr.bf16.mxu0 0
    %683 = vmatpush1.bf16.msra.mxu0 %v501
    %684 = vmatprep.subr.bf16.mxu0 0
    %685 = vmatpush1.bf16.msra.mxu0 %v500
    %686 = vmatprep.subr.bf16.mxu0 0
    %687 = vmatpush1.bf16.msra.mxu0 %v499
    %688 = vmatprep.subr.bf16.mxu0 0
    %689 = vmatpush1.bf16.msra.mxu0 %v498
    %690 = vmatprep.subr.bf16.mxu0 0
    %691 = vmatpush2.bf16.msra.mxu0 %v513
    %692 = vmatprep.subr.bf16.mxu0 0
    %693 = vmatpush2.bf16.msra.mxu0 %v512
    %694 = vmatprep.subr.bf16.mxu0 0
    %695 = vmatpush2.bf16.msra.mxu0 %v511
    %696 = vmatprep.subr.bf16.mxu0 0
    %697 = vmatpush2.bf16.msra.mxu0 %v510
    %698 = vmatprep.subr.bf16.mxu0 0
    %699 = vmatpush2.bf16.msra.mxu0 %v509
    %700 = vmatprep.subr.bf16.mxu0 0
    %701 = vmatpush2.bf16.msra.mxu0 %v508
    %702 = vmatprep.subr.bf16.mxu0 0
    %703 = vmatpush2.bf16.msra.mxu0 %v507
    %704 = vmatprep.subr.bf16.mxu0 0
    %705 = vmatpush2.bf16.msra.mxu0 %v506
    %706 = vmatprep.mubr.bf16.mxu0 %v197
    %707 = vmatmul.mubr.bf16.gmra.mxu0 %v183
    %v708 = vpop.f32.mrf.mxu0
    %v709 = vadd.f32 %v669, %v708
    %v710 = vpop.f32.mrf.mxu0
    %v711 = vpop.f32.mrf.mxu0
    %v712 = vpop.f32.mrf.mxu0
    %713 = vdwg.mxu0
    %714 = vmatprep.subr.bf16.mxu0 0
    %715 = vmatpush1.bf16.msra.mxu0 %v521
    %716 = vmatprep.subr.bf16.mxu0 0
    %717 = vmatpush1.bf16.msra.mxu0 %v520
    %718 = vmatprep.subr.bf16.mxu0 0
    %719 = vmatpush1.bf16.msra.mxu0 %v519
    %720 = vmatprep.subr.bf16.mxu0 0
    %721 = vmatpush1.bf16.msra.mxu0 %v518
    %722 = vmatprep.subr.bf16.mxu0 0
    %723 = vmatpush1.bf16.msra.mxu0 %v517
    %724 = vmatprep.subr.bf16.mxu0 0
    %725 = vmatpush1.bf16.msra.mxu0 %v516
    %726 = vmatprep.subr.bf16.mxu0 0
    %727 = vmatpush1.bf16.msra.mxu0 %v515
    %728 = vmatprep.subr.bf16.mxu0 0
    %729 = vmatpush1.bf16.msra.mxu0 %v514
    %730 = vmatprep.subr.bf16.mxu0 0
    %731 = vmatpush2.bf16.msra.mxu0 %v529
    %732 = vmatprep.subr.bf16.mxu0 0
    %733 = vmatpush2.bf16.msra.mxu0 %v528
    %734 = vmatprep.subr.bf16.mxu0 0
    %735 = vmatpush2.bf16.msra.mxu0 %v527
    %736 = vmatprep.subr.bf16.mxu0 0
    %737 = vmatpush2.bf16.msra.mxu0 %v526
    %738 = vmatprep.subr.bf16.mxu0 0
    %739 = vmatpush2.bf16.msra.mxu0 %v525
    %740 = vmatprep.subr.bf16.mxu0 0
    %741 = vmatpush2.bf16.msra.mxu0 %v524
    %742 = vmatprep.subr.bf16.mxu0 0
    %743 = vmatpush2.bf16.msra.mxu0 %v523
    %744 = vmatprep.subr.bf16.mxu0 0
    %745 = vmatpush2.bf16.msra.mxu0 %v522
    %746 = vmatprep.mubr.bf16.mxu0 %v201
    %747 = vmatmul.mubr.bf16.gmra.mxu0 %v199
    %v748 = vpop.f32.mrf.mxu0
    %v749 = vadd.f32 %v709, %v748
    %v750 = vpop.f32.mrf.mxu0
    %v751 = vpop.f32.mrf.mxu0
    %v752 = vpop.f32.mrf.mxu0
    %753 = vdwg.mxu0
    %754 = vst [vmem:[#allocation2] sm:$0x3] %v749
    // Predicated region
    $region14: #{model_forward.9} parent=1 // pred_check
      _
    $region15: #{model_forward.9} parent=1 // pred_check_branch
      %756 = sbr.rel (0) target = $region17
    $region16: #{model_forward.9} parent=1 // pred_region
      %s758 = ssub.s32 32, 32
      %759 = vsyncadd [#allocation3], %s758
      %s761 = sshll.u32 [#allocation2], 4
      %s762 = int_to_ptr.vmem [resolvable:$true] %s761
      %764 = dma.vmem_to_hbm [thread:$0]  %s762, 32, %s3, [#allocation3]
    $region17: #{model_forward.9} parent=1 // pred_fallthru
      _
    // Predicated region
    $region18: #{model_forward.9} parent=1 // pred_check
      _
    $region19: #{model_forward.9} parent=1 // pred_check_branch
      %766 = sbr.rel (0) target = $region21
    $region20: #{model_forward.9} parent=1 // pred_region
      %767 = dma.done [#allocation3], 32
    $region21: #{model_forward.9} parent=1 // pred_fallthru
      _
    %768 = vsyncpa [#allocation3], 1

// kernel: model_forward.8
$region0: #{model_forward.8}
  #allocation0 [shape = 'u32[]', space=smem, size = 0x4, offset = 0x4, fixed_abs, tag = 'smem constant byte address 0x4 - core index']
  #allocation1 [shape = 'u32[144,128]{1,0:T(1,128)}', space=vmem, size = 0x12000, scoped, tag = 'internal scratch']
  #allocation2 [shape = 'f32[2,512]{1,0:T(2,128)}', space=vmem, size = 0x1000, scoped, tag = 'scratch operand']
  %s0 = inlined_call_operand.vmem [shape: bf16[2,25088], index: 0, kind: input, shape index: {}]
  %s1 = inlined_call_operand.hbm [shape: bf16[25088,1024], index: 1, kind: input, shape index: {}]
  %s2 = inlined_call_operand.hbm [shape: f32[1,1024], index: 2, kind: input, shape index: {}]
  %s3 = inlined_call_operand.vmem [shape: f32[2,1024], index: 3, kind: output, shape index: {}]
  %s4 = sld [smem:[#allocation0]]
  $region61: #{model_forward.8} parent=0
    _
  %s6 = ssub.s32 1, %s4
  %s7 = scalar_select 0, %s6, %s4
  $region1: #{model_forward.8} parent=0
    #allocation3 [shape = 'u8[7340032]{0}', space=vmem, size = 0x700000, scoped, tag = 'input window, operand 1']
    #allocation4 [shape = 's32[2]{0}', space=sflag, size = 0x8, scoped, tag = 'scoped memory for model_forward.8']
    #allocation5 [shape = 'u8[4096]{0}', space=vmem, size = 0x1000, scoped, tag = 'input window, operand 2']
    #allocation6 [shape = 's32[2]{0}', space=sflag, size = 0x8, scoped, tag = 'scoped memory for model_forward.8']
    %8 = vsyncpa [#allocation4], 0
    %s9 = scalar_lea.sflag [#allocation4], 1
    %10 = vsyncpa %s9, 0
    %11 = vsyncpa [#allocation6], 0
    %s12 = scalar_lea.sflag [#allocation6], 1
    %13 = vsyncpa %s12, 0
    loop: start=0, step=1, limit=16
    $region2: #{model_forward.8} parent=1 // loop_pre_header
      _
    $region3: #{model_forward.8} parent=1 // loop_header
      %s15 = sphi 0, %s19
      %p16 = scmp.ge.s32.totalorder %s15, 16
      %s22 = sphi 0, %s41
      %s23 = sphi 0, %s37
      %s24 = sphi 0, %s33
      %s25 = sphi 0, %s22
      %s26 = sphi 0, %s23
      %s27 = sphi 0, %s24
      %s28 = sphi 0, %s25
      %s29 = sphi 0, %s26
      %s30 = sphi 0, %s27
      %s46 = sphi 0, %s48
      %s49 = sphi 0, %s46
      %s50 = sphi 0, %s49
      %s66 = sphi 0, %s50
      %s74 = sphi 0, %s76
      %s77 = sphi 0, %s74
      %s78 = sphi 0, %s77
      %s94 = sphi 0, %s78
      %s100 = sphi 0, %s102
      %s103 = sphi 0, %s100
      %s104 = sphi 0, %s103
      %s120 = sphi 0, %s104
      %s128 = sphi 0, %s130
      %s131 = sphi 0, %s128
      %s132 = sphi 0, %s131
      %s148 = sphi 0, %s132
    $region4: #{model_forward.8} parent=1 // loop_header_branch
      %18 = sbr.rel (%p16) target = $region8
    $region5: #{model_forward.8} parent=1 // loop_body
      %s20 = ssub.s32 %s15, 1
      %s21 = ssub.s32 %s15, 2
      %s31 = sadd.s32 1, %s24
      %p32 = scmp.ge.s32.totalorder %s31, 7
      %s33 = scalar_select %p32, 0, %s31
      %s34 = sadd.s32 1, %s23
      %s35 = scalar_select %p32, %s34, %s23
      %p36 = scmp.ge.s32.totalorder %s35, 2
      %s37 = scalar_select %p36, 0, %s35
      %s38 = sadd.s32 1, %s22
      %s39 = scalar_select %p36, %s38, %s22
      %p40 = scmp.ge.s32.totalorder %s39, 1
      %s41 = scalar_select %p40, 0, %s39
      %s42 = ssub.s32 %s22, %s41
      %s43 = ssub.s32 %s24, %s33
      %s44 = sor.u32 %s42, %s43
      %p45 = scmp.eq.s32.totalorder %s44, 0
      %s47 = sadd.s32 %s46, 1
      %s48 = scalar_select %p45, %s46, %s47
      %p51 = pneg %p45
      %p52 = scmp.eq.s32.totalorder %s15, 13
      %p53 = por %p51, %p52
      %p54 = scmp.ne.s32.totalorder %s46, %s49
      %p55 = scmp.eq.s32.totalorder %s15, 0
      %p56 = por %p54, %p55
      %p57 = scmp.ne.s32.totalorder %s46, %s49
      %p58 = scmp.eq.s32.totalorder %s20, 13
      %p59 = por %p57, %p58
      %p60 = scmp.ne.s32.totalorder %s49, %s50
      %p61 = scmp.eq.s32.totalorder %s20, 0
      %p62 = por %p60, %p61
      %p63 = scmp.ne.s32.totalorder %s49, %s50
      %p64 = scmp.eq.s32.totalorder %s21, 13
      %p65 = por %p63, %p64
      %p67 = scmp.ne.s32.totalorder %s50, %s66
      %p68 = scmp.eq.s32.totalorder %s21, 0
      %p69 = por %p67, %p68
      %s70 = ssub.s32 %s24, %s33
      %s71 = ssub.s32 %s23, %s37
      %s72 = sor.u32 %s70, %s71
      %p73 = scmp.eq.s32.totalorder %s72, 0
      %s75 = sadd.s32 %s74, 1
      %s76 = scalar_select %p73, %s74, %s75
      %p79 = pneg %p73
      %p80 = scmp.eq.s32.totalorder %s15, 13
      %p81 = por %p79, %p80
      %p82 = scmp.ne.s32.totalorder %s74, %s77
      %p83 = scmp.eq.s32.totalorder %s15, 0
      %p84 = por %p82, %p83
      %p85 = scmp.ne.s32.totalorder %s74, %s77
      %p86 = scmp.eq.s32.totalorder %s20, 13
      %p87 = por %p85, %p86
      %p88 = scmp.ne.s32.totalorder %s77, %s78
      %p89 = scmp.eq.s32.totalorder %s20, 0
      %p90 = por %p88, %p89
      %p91 = scmp.ne.s32.totalorder %s77, %s78
      %p92 = scmp.eq.s32.totalorder %s21, 13
      %p93 = por %p91, %p92
      %p95 = scmp.ne.s32.totalorder %s78, %s94
      %p96 = scmp.eq.s32.totalorder %s21, 0
      %p97 = por %p95, %p96
      %s98 = ssub.s32 %s23, %s37
      %p99 = scmp.eq.s32.totalorder %s98, 0
      %s101 = sadd.s32 %s100, 1
      %s102 = scalar_select %p99, %s100, %s101
      %p105 = pneg %p99
      %p106 = scmp.eq.s32.totalorder %s15, 13
      %p107 = por %p105, %p106
      %p108 = scmp.ne.s32.totalorder %s100, %s103
      %p109 = scmp.eq.s32.totalorder %s15, 0
      %p110 = por %p108, %p109
      %p111 = scmp.ne.s32.totalorder %s100, %s103
      %p112 = scmp.eq.s32.totalorder %s20, 13
      %p113 = por %p111, %p112
      %p114 = scmp.ne.s32.totalorder %s103, %s104
      %p115 = scmp.eq.s32.totalorder %s20, 0
      %p116 = por %p114, %p115
      %p117 = scmp.ne.s32.totalorder %s103, %s104
      %p118 = scmp.eq.s32.totalorder %s21, 13
      %p119 = por %p117, %p118
      %p121 = scmp.ne.s32.totalorder %s104, %s120
      %p122 = scmp.eq.s32.totalorder %s21, 0
      %p123 = por %p121, %p122
      %s124 = ssub.s32 %s22, %s41
      %s125 = ssub.s32 %s23, %s37
      %s126 = sor.u32 %s124, %s125
      %p127 = scmp.eq.s32.totalorder %s126, 0
      %s129 = sadd.s32 %s128, 1
      %s130 = scalar_select %p127, %s128, %s129
      %p133 = pneg %p127
      %p134 = scmp.eq.s32.totalorder %s15, 13
      %p135 = por %p133, %p134
      %p136 = scmp.ne.s32.totalorder %s128, %s131
      %p137 = scmp.eq.s32.totalorder %s15, 0
      %p138 = por %p136, %p137
      %p139 = scmp.ne.s32.totalorder %s128, %s131
      %p140 = scmp.eq.s32.totalorder %s20, 13
      %p141 = por %p139, %p140
      %p142 = scmp.ne.s32.totalorder %s131, %s132
      %p143 = scmp.eq.s32.totalorder %s20, 0
      %p144 = por %p142, %p143
      %p145 = scmp.ne.s32.totalorder %s131, %s132
      %p146 = scmp.eq.s32.totalorder %s21, 13
      %p147 = por %p145, %p146
      %p149 = scmp.ne.s32.totalorder %s132, %s148
      %p150 = scmp.eq.s32.totalorder %s21, 0
      %p151 = por %p149, %p150
      %p152 = scmp.le.s32.totalorder 1, %s15
      %p153 = scmp.lt.s32.totalorder %s15, 15
      %p154 = pnand %p152, %p153
      %p155 = pneg %p154
      // Predicated region
      $region9: #{model_forward.8} parent=5 // pred_check
        _
      $region10: #{model_forward.8} parent=5 // pred_check_branch
        %157 = sbr.rel (%p154) target = $region12
      $region11: #{model_forward.8} parent=5 // pred_region
        %s158 = ssub.s32 %s15, 1
      $region12: #{model_forward.8} parent=5 // pred_fallthru
        _
      %p159 = scmp.lt.s32.totalorder %s15, 14
      // Predicated region
      $region13: #{model_forward.8} parent=5 // pred_check
        %p160 = pneg %p159
      $region14: #{model_forward.8} parent=5 // pred_check_branch
        %162 = sbr.rel (%p160) target = $region16
      $region15: #{model_forward.8} parent=5 // pred_region
        // Predicated region
        $region17: #{model_forward.8} parent=15 // pred_check
          %p163 = pneg %p56
        $region18: #{model_forward.8} parent=15 // pred_check_branch
          %165 = sbr.rel (%p163) target = $region20
        $region19: #{model_forward.8} parent=15 // pred_region
          %s166 = smul.u32 28, %s24
          %p167 = scmp.lt.s32.totalorder %s22, 0
          %s168 = scalar_select %p167, %s22, 0
          %p169 = scmp.lt.s32.totalorder %s166, 195
          %s170 = scalar_select %p169, %s166, 195
          %s171 = smul.addr %s168, 196
          %s172 = sadd.s32 %s170, %s171
          %s173 = scalar_lea.vmem %s0, %s172
          %s174 = smul.u32 28, %s24
        $region20: #{model_forward.8} parent=15 // pred_fallthru
          _
        // Predicated region
        $region21: #{model_forward.8} parent=15 // pred_check
          %p175 = pneg %p84
        $region22: #{model_forward.8} parent=15 // pred_check_branch
          %177 = sbr.rel (%p175) target = $region24
        $region23: #{model_forward.8} parent=15 // pred_region
          %s178 = sand.u32 %s74, 1
          %s179 = scalar_lea.sflag [#allocation4], %s178
          %s180 = sand.u32 %s74, 1
          %s181 = smul.addr %s180, 7168
          %s182 = scalar_lea.vmem [#allocation3], %s181
          %s183 = smul.u32 448, %s24
          %s184 = smul.u32 4, %s23
          %s186 = ssub.s32 114688, 114688
          %187 = vsyncadd %s179, %s186
          %s188 = smul.addr %s183, 8
          %s189 = sadd.s32 %s184, %s188
          %s190 = smul.addr %s189, 64
          %s191 = scalar_lea.hbm %s1, %s190
          %s192 = sshll.u32 %s182, 4
          %s193 = int_to_ptr.vmem [resolvable:$true] %s192
          %198 = dma.hbm_to_vmem [thread:$0]  %s191, 114688, %s193, %s179, 512, 256, 16
        $region24: #{model_forward.8} parent=15 // pred_fallthru
          _
        // Predicated region
        $region25: #{model_forward.8} parent=15 // pred_check
          %p199 = pneg %p110
        $region26: #{model_forward.8} parent=15 // pred_check_branch
          %201 = sbr.rel (%p199) target = $region28
        $region27: #{model_forward.8} parent=15 // pred_region
          %s202 = sand.u32 %s100, 1
          %s203 = scalar_lea.sflag [#allocation6], %s202
          %s204 = sand.u32 %s100, 1
          %s205 = smul.addr %s204, 4
          %s206 = scalar_lea.vmem [#allocation5], %s205
          %s207 = smul.u32 4, %s23
          %s209 = ssub.s32 64, 64
          %210 = vsyncadd %s203, %s209
          %s211 = smul.addr %s207, 16
          %s212 = scalar_lea.hbm %s2, %s211
          %s214 = sshll.u32 %s206, 4
          %s215 = int_to_ptr.vmem [resolvable:$true] %s214
          %217 = dma.hbm_to_vmem [thread:$0]  %s212, 64, %s215, %s203
        $region28: #{model_forward.8} parent=15 // pred_fallthru
          _
      $region16: #{model_forward.8} parent=5 // pred_fallthru
        _
      %p218 = scmp.le.s32.totalorder 1, %s15
      %p219 = scmp.lt.s32.totalorder %s15, 15
      %p220 = pnand %p218, %p219
      %p221 = pneg %p220
      // Predicated region
      $region29: #{model_forward.8} parent=5 // pred_check
        _
      $region30: #{model_forward.8} parent=5 // pred_check_branch
        %223 = sbr.rel (%p220) target = $region32
      $region31: #{model_forward.8} parent=5 // pred_region
        %s224 = ssub.s32 %s15, 1
        %s225 = sand.u32 %s77, 1
        %s226 = scalar_lea.sflag [#allocation4], %s225
        %s227 = sand.u32 %s77, 1
        %s228 = smul.addr %s227, 7168
        %s229 = scalar_lea.vmem [#allocation3], %s228
        // Predicated region
        $region33: #{model_forward.8} parent=31 // pred_check
          %p230 = pneg %p90
        $region34: #{model_forward.8} parent=31 // pred_check_branch
          %232 = sbr.rel (%p230) target = $region36
        $region35: #{model_forward.8} parent=31 // pred_region
          %233 = dma.done %s226, 114688
        $region36: #{model_forward.8} parent=31 // pred_fallthru
          _
        %s234 = sand.u32 %s103, 1
        %s235 = scalar_lea.sflag [#allocation6], %s234
        %s236 = sand.u32 %s103, 1
        %s237 = smul.addr %s236, 4
        %s238 = scalar_lea.vmem [#allocation5], %s237
        // Predicated region
        $region37: #{model_forward.8} parent=31 // pred_check
          %p239 = pneg %p116
        $region38: #{model_forward.8} parent=31 // pred_check_branch
          %241 = sbr.rel (%p239) target = $region40
        $region39: #{model_forward.8} parent=31 // pred_region
          %242 = dma.done %s235, 64
        $region40: #{model_forward.8} parent=31 // pred_fallthru
          _
        %s243 = smul.u32 28, %s27
        %p244 = scmp.lt.s32.totalorder %s25, 0
        %s245 = scalar_select %p244, %s25, 0
        %p246 = scmp.lt.s32.totalorder %s243, 195
        %s247 = scalar_select %p246, %s243, 195
        %s248 = smul.addr %s245, 196
        %s249 = sadd.s32 %s247, %s248
        %s250 = scalar_lea.vmem %s0, %s249
        %p251 = pneg %p62
        %p252 = pneg %p59
        %s253 = sand.u32 %s77, 1
        %s254 = scalar_lea.sflag [#allocation4], %s253
        %s255 = sand.u32 %s77, 1
        %s256 = smul.addr %s255, 7168
        %s257 = scalar_lea.vmem [#allocation3], %s256
        %p258 = pneg %p90
        %p259 = pneg %p87
        %s260 = sand.u32 %s103, 1
        %s261 = scalar_lea.sflag [#allocation6], %s260
        %s262 = sand.u32 %s103, 1
        %s263 = smul.addr %s262, 4
        %s264 = scalar_lea.vmem [#allocation5], %s263
        %p265 = pneg %p116
        %p266 = pneg %p113
        %p267 = pneg %p144
        %p268 = pneg %p141
        %s269 = smul.u32 4, %s26
        %p270 = scmp.lt.s32.totalorder %s25, 0
        %s271 = scalar_select %p270, %s25, 0
        %p272 = scmp.lt.s32.totalorder %s269, 7
        %s273 = scalar_select %p272, %s269, 7
        %s274 = smul.addr %s271, 8
        %s275 = sadd.s32 %s273, %s274
        %s276 = smul.addr %s275, 2
        %s277 = scalar_lea.vmem %s3, %s276
        %s278 = smul.u32 28, %s27
        %p279 = scmp.lt.s32.totalorder %s25, 0
        %s280 = scalar_select %p279, %s25, 0
        %p281 = scmp.lt.s32.totalorder %s278, 195
        %s282 = scalar_select %p281, %s278, 195
        %s283 = smul.addr %s280, 196
        %s284 = sadd.s32 %s282, %s283
        %s285 = scalar_lea.vmem %s0, %s284
        %s286 = smul.u32 28, %s27
        %s287 = smul.u32 448, %s27
        %s288 = smul.u32 4, %s26
        %s289 = smul.u32 4, %s26
        %s290 = smul.u32 4, %s26
        %p291 = scmp.lt.s32.totalorder %s25, 0
        %s292 = scalar_select %p291, %s25, 0
        %p293 = scmp.lt.s32.totalorder %s290, 7
        %s294 = scalar_select %p293, %s290, 7
        %s295 = smul.addr %s292, 8
        %s296 = sadd.s32 %s294, %s295
        %s297 = smul.addr %s296, 2
        %s298 = scalar_lea.vmem %s3, %s297
        %s299 = smul.u32 4, %s26
        %p300 = scmp.eq.s32.totalorder %s27, 0
        // Predicated region
        $region41: #{model_forward.8} parent=31 // pred_check
          %p301 = pneg %p300
        $region42: #{model_forward.8} parent=31 // pred_check_branch
          %303 = sbr.rel (%p301) target = $region44
        $region43: #{model_forward.8} parent=31 // pred_region
          %304 = vst [vmem:[#allocation2] sm:$0xff] 0.0
        $region44: #{model_forward.8} parent=31 // pred_fallthru
          _
        %v305 = vld [vmem:[#allocation2] sm:$0xff]
        %v306 = vld [vmem:[%s285] sm:$0xff]
        %v307 = vld [vmem:[%s285 + $0x8] sm:$0xff]
        %v308 = vld [vmem:[%s285 + $0x10] sm:$0xff]
        %v309 = vld [vmem:[%s285 + $0x18] sm:$0xf]
        %v310 = vld [vmem:[%s229] sm:$0xff]
        %v311 = vld [vmem:[%s229 + $0x8] sm:$0xff]
        %v312 = vld [vmem:[%s229 + $0x10] sm:$0xff]
        %v313 = vld [vmem:[%s229 + $0x18] sm:$0xff]
        %v314 = vld [vmem:[%s229 + $0x20] sm:$0xff]
        %v315 = vld [vmem:[%s229 + $0x28] sm:$0xff]
        %v316 = vld [vmem:[%s229 + $0x30] sm:$0xff]
        %v317 = vld [vmem:[%s229 + $0x38] sm:$0xff]
        %v318 = vld [vmem:[%s229 + $0x40] sm:$0xff]
        %v319 = vld [vmem:[%s229 + $0x48] sm:$0xff]
        %v320 = vld [vmem:[%s229 + $0x50] sm:$0xff]
        %v321 = vld [vmem:[%s229 + $0x58] sm:$0xff]
        %v322 = vld [vmem:[%s229 + $0x60] sm:$0xff]
        %v323 = vld [vmem:[%s229 + $0x68] sm:$0xff]
        %v324 = vld [vmem:[%s229 + $0x70] sm:$0xff]
        %v325 = vld [vmem:[%s229 + $0x78] sm:$0xff]
        %v326 = vld [vmem:[%s229 + $0x80] sm:$0xff]
        %v327 = vld [vmem:[%s229 + $0x88] sm:$0xff]
        %v328 = vld [vmem:[%s229 + $0x90] sm:$0xff]
        %v329 = vld [vmem:[%s229 + $0x98] sm:$0xff]
        %v330 = vld [vmem:[%s229 + $0xa0] sm:$0xff]
        %v331 = vld [vmem:[%s229 + $0xa8] sm:$0xff]
        %v332 = vld [vmem:[%s229 + $0xb0] sm:$0xff]
        %v333 = vld [vmem:[%s229 + $0xb8] sm:$0xff]
        %v334 = vld [vmem:[%s229 + $0xc0] sm:$0xff]
        %v335 = vld [vmem:[%s229 + $0xc8] sm:$0xff]
        %v336 = vld [vmem:[%s229 + $0xd0] sm:$0xff]
        %v337 = vld [vmem:[%s229 + $0xd8] sm:$0xff]
        %v338 = vld [vmem:[%s229 + $0xe0] sm:$0xff]
        %v339 = vld [vmem:[%s229 + $0xe8] sm:$0xff]
        %v340 = vld [vmem:[%s229 + $0xf0] sm:$0xff]
        %v341 = vld [vmem:[%s229 + $0xf8] sm:$0xff]
        %v342 = vld [vmem:[%s229 + $0x100] sm:$0xff]
        %v343 = vld [vmem:[%s229 + $0x108] sm:$0xff]
        %v344 = vld [vmem:[%s229 + $0x110] sm:$0xff]
        %v345 = vld [vmem:[%s229 + $0x118] sm:$0xff]
        %v346 = vld [vmem:[%s229 + $0x120] sm:$0xff]
        %v347 = vld [vmem:[%s229 + $0x128] sm:$0xff]
        %v348 = vld [vmem:[%s229 + $0x130] sm:$0xff]
        %v349 = vld [vmem:[%s229 + $0x138] sm:$0xff]
        %v350 = vld [vmem:[%s229 + $0x140] sm:$0xff]
        %v351 = vld [vmem:[%s229 + $0x148] sm:$0xff]
        %v352 = vld [vmem:[%s229 + $0x150] sm:$0xff]
        %v353 = vld [vmem:[%s229 + $0x158] sm:$0xff]
        %v354 = vld [vmem:[%s229 + $0x160] sm:$0xff]
        %v355 = vld [vmem:[%s229 + $0x168] sm:$0xff]
        %v356 = vld [vmem:[%s229 + $0x170] sm:$0xff]
        %v357 = vld [vmem:[%s229 + $0x178] sm:$0xff]
        %v358 = vld [vmem:[%s229 + $0x180] sm:$0xff]
        %v359 = vld [vmem:[%s229 + $0x188] sm:$0xff]
        %v360 = vld [vmem:[%s229 + $0x190] sm:$0xff]
        %v361 = vld [vmem:[%s229 + $0x198] sm:$0xff]
        %v362 = vld [vmem:[%s229 + $0x1a0] sm:$0xff]
        %v363 = vld [vmem:[%s229 + $0x1a8] sm:$0xff]
        %v364 = vld [vmem:[%s229 + $0x1b0] sm:$0xff]
        %v365 = vld [vmem:[%s229 + $0x1b8] sm:$0xff]
        %v366 = vld [vmem:[%s229 + $0x1c0] sm:$0xff]
        %v367 = vld [vmem:[%s229 + $0x1c8] sm:$0xff]
        %v368 = vld [vmem:[%s229 + $0x1d0] sm:$0xff]
        %v369 = vld [vmem:[%s229 + $0x1d8] sm:$0xff]
        %v370 = vld [vmem:[%s229 + $0x1e0] sm:$0xff]
        %v371 = vld [vmem:[%s229 + $0x1e8] sm:$0xff]
        %v372 = vld [vmem:[%s229 + $0x1f0] sm:$0xff]
        %v373 = vld [vmem:[%s229 + $0x1f8] sm:$0xff]
        %v374 = vld [vmem:[%s229 + $0x200] sm:$0xff]
        %v375 = vld [vmem:[%s229 + $0x208] sm:$0xff]
        %v376 = vld [vmem:[%s229 + $0x210] sm:$0xff]
        %v377 = vld [vmem:[%s229 + $0x218] sm:$0xff]
        %v378 = vld [vmem:[%s229 + $0x220] sm:$0xff]
        %v379 = vld [vmem:[%s229 + $0x228] sm:$0xff]
        %v380 = vld [vmem:[%s229 + $0x230] sm:$0xff]
        %v381 = vld [vmem:[%s229 + $0x238] sm:$0xff]
        %v382 = vld [vmem:[%s229 + $0x240] sm:$0xff]
        %v383 = vld [vmem:[%s229 + $0x248] sm:$0xff]
        %v384 = vld [vmem:[%s229 + $0x250] sm:$0xff]
        %v385 = vld [vmem:[%s229 + $0x258] sm:$0xff]
        %v386 = vld [vmem:[%s229 + $0x260] sm:$0xff]
        %v387 = vld [vmem:[%s229 + $0x268] sm:$0xff]
        %v388 = vld [vmem:[%s229 + $0x270] sm:$0xff]
        %v389 = vld [vmem:[%s229 + $0x278] sm:$0xff]
        %v390 = vld [vmem:[%s229 + $0x280] sm:$0xff]
        %v391 = vld [vmem:[%s229 + $0x288] sm:$0xff]
        %v392 = vld [vmem:[%s229 + $0x290] sm:$0xff]
        %v393 = vld [vmem:[%s229 + $0x298] sm:$0xff]
        %v394 = vld [vmem:[%s229 + $0x2a0] sm:$0xff]
        %v395 = vld [vmem:[%s229 + $0x2a8] sm:$0xff]
        %v396 = vld [vmem:[%s229 + $0x2b0] sm:$0xff]
        %v397 = vld [vmem:[%s229 + $0x2b8] sm:$0xff]
        %v398 = vld [vmem:[%s229 + $0x2c0] sm:$0xff]
        %v399 = vld [vmem:[%s229 + $0x2c8] sm:$0xff]
        %v400 = vld [vmem:[%s229 + $0x2d0] sm:$0xff]
        %v401 = vld [vmem:[%s229 + $0x2d8] sm:$0xff]
        %v402 = vld [vmem:[%s229 + $0x2e0] sm:$0xff]
        %v403 = vld [vmem:[%s229 + $0x2e8] sm:$0xff]
        %v404 = vld [vmem:[%s229 + $0x2f0] sm:$0xff]
        %v405 = vld [vmem:[%s229 + $0x2f8] sm:$0xff]
        %v406 = vld [vmem:[%s229 + $0x300] sm:$0xff]
        %v407 = vld [vmem:[%s229 + $0x308] sm:$0xff]
        %v408 = vld [vmem:[%s229 + $0x310] sm:$0xff]
        %v409 = vld [vmem:[%s229 + $0x318] sm:$0xff]
        %v410 = vld [vmem:[%s229 + $0x320] sm:$0xff]
        %v411 = vld [vmem:[%s229 + $0x328] sm:$0xff]
        %v412 = vld [vmem:[%s229 + $0x330] sm:$0xff]
        %v413 = vld [vmem:[%s229 + $0x338] sm:$0xff]
        %v414 = vld [vmem:[%s229 + $0x340] sm:$0xff]
        %v415 = vld [vmem:[%s229 + $0x348] sm:$0xff]
        %v416 = vld [vmem:[%s229 + $0x350] sm:$0xff]
        %v417 = vld [vmem:[%s229 + $0x358] sm:$0xff]
        %v418 = vld [vmem:[%s229 + $0x360] sm:$0xff]
        %v419 = vld [vmem:[%s229 + $0x368] sm:$0xff]
        %v420 = vld [vmem:[%s229 + $0x370] sm:$0xff]
        %v421 = vld [vmem:[%s229 + $0x378] sm:$0xff]
        %v422 = vld [vmem:[%s229 + $0x380] sm:$0xff]
        %v423 = vld [vmem:[%s229 + $0x388] sm:$0xff]
        %v424 = vld [vmem:[%s229 + $0x390] sm:$0xff]
        %v425 = vld [vmem:[%s229 + $0x398] sm:$0xff]
        %v426 = vld [vmem:[%s229 + $0x3a0] sm:$0xff]
        %v427 = vld [vmem:[%s229 + $0x3a8] sm:$0xff]
        %v428 = vld [vmem:[%s229 + $0x3b0] sm:$0xff]
        %v429 = vld [vmem:[%s229 + $0x3b8] sm:$0xff]
        %v430 = vld [vmem:[%s229 + $0x3c0] sm:$0xff]
        %v431 = vld [vmem:[%s229 + $0x3c8] sm:$0xff]
        %v432 = vld [vmem:[%s229 + $0x3d0] sm:$0xff]
        %v433 = vld [vmem:[%s229 + $0x3d8] sm:$0xff]
        %v434 = vld [vmem:[%s229 + $0x3e0] sm:$0xff]
        %v435 = vld [vmem:[%s229 + $0x3e8] sm:$0xff]
        %v436 = vld [vmem:[%s229 + $0x3f0] sm:$0xff]
        %v437 = vld [vmem:[%s229 + $0x3f8] sm:$0xff]
        %v438 = vld [vmem:[%s229 + $0x400] sm:$0xff]
        %v439 = vld [vmem:[%s229 + $0x408] sm:$0xff]
        %v440 = vld [vmem:[%s229 + $0x410] sm:$0xff]
        %v441 = vld [vmem:[%s229 + $0x418] sm:$0xff]
        %v442 = vld [vmem:[%s229 + $0x420] sm:$0xff]
        %v443 = vld [vmem:[%s229 + $0x428] sm:$0xff]
        %v444 = vld [vmem:[%s229 + $0x430] sm:$0xff]
        %v445 = vld [vmem:[%s229 + $0x438] sm:$0xff]
        %v446 = vld [vmem:[%s229 + $0x440] sm:$0xff]
        %v447 = vld [vmem:[%s229 + $0x448] sm:$0xff]
        %v448 = vld [vmem:[%s229 + $0x450] sm:$0xff]
        %v449 = vld [vmem:[%s229 + $0x458] sm:$0xff]
        %v450 = vld [vmem:[%s229 + $0x460] sm:$0xff]
        %v451 = vld [vmem:[%s229 + $0x468] sm:$0xff]
        %v452 = vld [vmem:[%s229 + $0x470] sm:$0xff]
        %v453 = vld [vmem:[%s229 + $0x478] sm:$0xff]
        %v454 = vld [vmem:[%s229 + $0x480] sm:$0xff]
        %v455 = vld [vmem:[%s229 + $0x488] sm:$0xff]
        %v456 = vld [vmem:[%s229 + $0x490] sm:$0xff]
        %v457 = vld [vmem:[%s229 + $0x498] sm:$0xff]
        %v458 = vld [vmem:[%s229 + $0x4a0] sm:$0xff]
        %v459 = vld [vmem:[%s229 + $0x4a8] sm:$0xff]
        %v460 = vld [vmem:[%s229 + $0x4b0] sm:$0xff]
        %v461 = vld [vmem:[%s229 + $0x4b8] sm:$0xff]
        %v462 = vld [vmem:[%s229 + $0x4c0] sm:$0xff]
        %v463 = vld [vmem:[%s229 + $0x4c8] sm:$0xff]
        %v464 = vld [vmem:[%s229 + $0x4d0] sm:$0xff]
        %v465 = vld [vmem:[%s229 + $0x4d8] sm:$0xff]
        %v466 = vld [vmem:[%s229 + $0x4e0] sm:$0xff]
        %v467 = vld [vmem:[%s229 + $0x4e8] sm:$0xff]
        %v468 = vld [vmem:[%s229 + $0x4f0] sm:$0xff]
        %v469 = vld [vmem:[%s229 + $0x4f8] sm:$0xff]
        %v470 = vld [vmem:[%s229 + $0x500] sm:$0xff]
        %v471 = vld [vmem:[%s229 + $0x508] sm:$0xff]
        %v472 = vld [vmem:[%s229 + $0x510] sm:$0xff]
        %v473 = vld [vmem:[%s229 + $0x518] sm:$0xff]
        %v474 = vld [vmem:[%s229 + $0x520] sm:$0xff]
        %v475 = vld [vmem:[%s229 + $0x528] sm:$0xff]
        %v476 = vld [vmem:[%s229 + $0x530] sm:$0xff]
        %v477 = vld [vmem:[%s229 + $0x538] sm:$0xff]
        %v478 = vld [vmem:[%s229 + $0x540] sm:$0xff]
        %v479 = vld [vmem:[%s229 + $0x548] sm:$0xff]
        %v480 = vld [vmem:[%s229 + $0x550] sm:$0xff]
        %v481 = vld [vmem:[%s229 + $0x558] sm:$0xff]
        %v482 = vld [vmem:[%s229 + $0x560] sm:$0xff]
        %v483 = vld [vmem:[%s229 + $0x568] sm:$0xff]
        %v484 = vld [vmem:[%s229 + $0x570] sm:$0xff]
        %v485 = vld [vmem:[%s229 + $0x578] sm:$0xff]
        %v486 = vld [vmem:[%s229 + $0x580] sm:$0xff]
        %v487 = vld [vmem:[%s229 + $0x588] sm:$0xff]
        %v488 = vld [vmem:[%s229 + $0x590] sm:$0xff]
        %v489 = vld [vmem:[%s229 + $0x598] sm:$0xff]
        %v490 = vld [vmem:[%s229 + $0x5a0] sm:$0xff]
        %v491 = vld [vmem:[%s229 + $0x5a8] sm:$0xff]
        %v492 = vld [vmem:[%s229 + $0x5b0] sm:$0xff]
        %v493 = vld [vmem:[%s229 + $0x5b8] sm:$0xff]
        %v494 = vld [vmem:[%s229 + $0x5c0] sm:$0xff]
        %v495 = vld [vmem:[%s229 + $0x5c8] sm:$0xff]
        %v496 = vld [vmem:[%s229 + $0x5d0] sm:$0xff]
        %v497 = vld [vmem:[%s229 + $0x5d8] sm:$0xff]
        %v498 = vld [vmem:[%s229 + $0x5e0] sm:$0xff]
        %v499 = vld [vmem:[%s229 + $0x5e8] sm:$0xff]
        %v500 = vld [vmem:[%s229 + $0x5f0] sm:$0xff]
        %v501 = vld [vmem:[%s229 + $0x5f8] sm:$0xff]
        %v502 = vld [vmem:[%s229 + $0x600] sm:$0xff]
        %v503 = vld [vmem:[%s229 + $0x608] sm:$0xff]
        %v504 = vld [vmem:[%s229 + $0x610] sm:$0xff]
        %v505 = vld [vmem:[%s229 + $0x618] sm:$0xff]
        %v506 = vld [vmem:[%s229 + $0x620] sm:$0xff]
        %v507 = vld [vmem:[%s229 + $0x628] sm:$0xff]
        %v508 = vld [vmem:[%s229 + $0x630] sm:$0xff]
        %v509 = vld [vmem:[%s229 + $0x638] sm:$0xff]
        %v510 = vld [vmem:[%s229 + $0x640] sm:$0xff]
        %v511 = vld [vmem:[%s229 + $0x648] sm:$0xff]
        %v512 = vld [vmem:[%s229 + $0x650] sm:$0xff]
        %v513 = vld [vmem:[%s229 + $0x658] sm:$0xff]
        %v514 = vld [vmem:[%s229 + $0x660] sm:$0xff]
        %v515 = vld [vmem:[%s229 + $0x668] sm:$0xff]
        %v516 = vld [vmem:[%s229 + $0x670] sm:$0xff]
        %v517 = vld [vmem:[%s229 + $0x678] sm:$0xff]
        %v518 = vld [vmem:[%s229 + $0x680] sm:$0xff]
        %v519 = vld [vmem:[%s229 + $0x688] sm:$0xff]
        %v520 = vld [vmem:[%s229 + $0x690] sm:$0xff]
        %v521 = vld [vmem:[%s229 + $0x698] sm:$0xff]
        %v522 = vld [vmem:[%s229 + $0x6a0] sm:$0xff]
        %v523 = vld [vmem:[%s229 + $0x6a8] sm:$0xff]
        %v524 = vld [vmem:[%s229 + $0x6b0] sm:$0xff]
        %v525 = vld [vmem:[%s229 + $0x6b8] sm:$0xff]
        %v526 = vld [vmem:[%s229 + $0x6c0] sm:$0xff]
        %v527 = vld [vmem:[%s229 + $0x6c8] sm:$0xff]
        %v528 = vld [vmem:[%s229 + $0x6d0] sm:$0xff]
        %v529 = vld [vmem:[%s229 + $0x6d8] sm:$0xff]
        %v530 = vld [vmem:[%s229 + $0x6e0] sm:$0xff]
        %v531 = vld [vmem:[%s229 + $0x6e8] sm:$0xff]
        %v532 = vld [vmem:[%s229 + $0x6f0] sm:$0xff]
        %v533 = vld [vmem:[%s229 + $0x6f8] sm:$0xff]
        %v534 = vld [vmem:[%s229 + $0x700] sm:$0xff]
        %v535 = vld [vmem:[%s229 + $0x708] sm:$0xff]
        %v536 = vld [vmem:[%s229 + $0x710] sm:$0xff]
        %v537 = vld [vmem:[%s229 + $0x718] sm:$0xff]
        %v538 = vld [vmem:[%s229 + $0x720] sm:$0xff]
        %v539 = vld [vmem:[%s229 + $0x728] sm:$0xff]
        %v540 = vld [vmem:[%s229 + $0x730] sm:$0xff]
        %v541 = vld [vmem:[%s229 + $0x738] sm:$0xff]
        %v542 = vld [vmem:[%s229 + $0x740] sm:$0xff]
        %v543 = vld [vmem:[%s229 + $0x748] sm:$0xff]
        %v544 = vld [vmem:[%s229 + $0x750] sm:$0xff]
        %v545 = vld [vmem:[%s229 + $0x758] sm:$0xff]
        %v546 = vld [vmem:[%s229 + $0x760] sm:$0xff]
        %v547 = vld [vmem:[%s229 + $0x768] sm:$0xff]
        %v548 = vld [vmem:[%s229 + $0x770] sm:$0xff]
        %v549 = vld [vmem:[%s229 + $0x778] sm:$0xff]
        %v550 = vld [vmem:[%s229 + $0x780] sm:$0xff]
        %v551 = vld [vmem:[%s229 + $0x788] sm:$0xff]
        %v552 = vld [vmem:[%s229 + $0x790] sm:$0xff]
        %v553 = vld [vmem:[%s229 + $0x798] sm:$0xff]
        %v554 = vld [vmem:[%s229 + $0x7a0] sm:$0xff]
        %v555 = vld [vmem:[%s229 + $0x7a8] sm:$0xff]
        %v556 = vld [vmem:[%s229 + $0x7b0] sm:$0xff]
        %v557 = vld [vmem:[%s229 + $0x7b8] sm:$0xff]
        %v558 = vld [vmem:[%s229 + $0x7c0] sm:$0xff]
        %v559 = vld [vmem:[%s229 + $0x7c8] sm:$0xff]
        %v560 = vld [vmem:[%s229 + $0x7d0] sm:$0xff]
        %v561 = vld [vmem:[%s229 + $0x7d8] sm:$0xff]
        %v562 = vld [vmem:[%s229 + $0x7e0] sm:$0xff]
        %v563 = vld [vmem:[%s229 + $0x7e8] sm:$0xff]
        %v564 = vld [vmem:[%s229 + $0x7f0] sm:$0xff]
        %v565 = vld [vmem:[%s229 + $0x7f8] sm:$0xff]
        %v566 = vld [vmem:[%s229 + $0x800] sm:$0xff]
        %v567 = vld [vmem:[%s229 + $0x808] sm:$0xff]
        %v568 = vld [vmem:[%s229 + $0x810] sm:$0xff]
        %v569 = vld [vmem:[%s229 + $0x818] sm:$0xff]
        %v570 = vld [vmem:[%s229 + $0x820] sm:$0xff]
        %v571 = vld [vmem:[%s229 + $0x828] sm:$0xff]
        %v572 = vld [vmem:[%s229 + $0x830] sm:$0xff]
        %v573 = vld [vmem:[%s229 + $0x838] sm:$0xff]
        %v574 = vld [vmem:[%s229 + $0x840] sm:$0xff]
        %v575 = vld [vmem:[%s229 + $0x848] sm:$0xff]
        %v576 = vld [vmem:[%s229 + $0x850] sm:$0xff]
        %v577 = vld [vmem:[%s229 + $0x858] sm:$0xff]
        %v578 = vld [vmem:[%s229 + $0x860] sm:$0xff]
        %v579 = vld [vmem:[%s229 + $0x868] sm:$0xff]
        %v580 = vld [vmem:[%s229 + $0x870] sm:$0xff]
        %v581 = vld [vmem:[%s229 + $0x878] sm:$0xff]
        %v582 = vld [vmem:[%s229 + $0x880] sm:$0xff]
        %v583 = vld [vmem:[%s229 + $0x888] sm:$0xff]
        %v584 = vld [vmem:[%s229 + $0x890] sm:$0xff]
        %v585 = vld [vmem:[%s229 + $0x898] sm:$0xff]
        %v586 = vld [vmem:[%s229 + $0x8a0] sm:$0xff]
        %v587 = vld [vmem:[%s229 + $0x8a8] sm:$0xff]
        %v588 = vld [vmem:[%s229 + $0x8b0] sm:$0xff]
        %v589 = vld [vmem:[%s229 + $0x8b8] sm:$0xff]
        %v590 = vld [vmem:[%s229 + $0x8c0] sm:$0xff]
        %v591 = vld [vmem:[%s229 + $0x8c8] sm:$0xff]
        %v592 = vld [vmem:[%s229 + $0x8d0] sm:$0xff]
        %v593 = vld [vmem:[%s229 + $0x8d8] sm:$0xff]
        %v594 = vld [vmem:[%s229 + $0x8e0] sm:$0xff]
        %v595 = vld [vmem:[%s229 + $0x8e8] sm:$0xff]
        %v596 = vld [vmem:[%s229 + $0x8f0] sm:$0xff]
        %v597 = vld [vmem:[%s229 + $0x8f8] sm:$0xff]
        %v598 = vld [vmem:[%s229 + $0x900] sm:$0xff]
        %v599 = vld [vmem:[%s229 + $0x908] sm:$0xff]
        %v600 = vld [vmem:[%s229 + $0x910] sm:$0xff]
        %v601 = vld [vmem:[%s229 + $0x918] sm:$0xff]
        %v602 = vld [vmem:[%s229 + $0x920] sm:$0xff]
        %v603 = vld [vmem:[%s229 + $0x928] sm:$0xff]
        %v604 = vld [vmem:[%s229 + $0x930] sm:$0xff]
        %v605 = vld [vmem:[%s229 + $0x938] sm:$0xff]
        %v606 = vld [vmem:[%s229 + $0x940] sm:$0xff]
        %v607 = vld [vmem:[%s229 + $0x948] sm:$0xff]
        %v608 = vld [vmem:[%s229 + $0x950] sm:$0xff]
        %v609 = vld [vmem:[%s229 + $0x958] sm:$0xff]
        %v610 = vld [vmem:[%s229 + $0x960] sm:$0xff]
        %v611 = vld [vmem:[%s229 + $0x968] sm:$0xff]
        %v612 = vld [vmem:[%s229 + $0x970] sm:$0xff]
        %v613 = vld [vmem:[%s229 + $0x978] sm:$0xff]
        %v614 = vld [vmem:[%s229 + $0x980] sm:$0xff]
        %v615 = vld [vmem:[%s229 + $0x988] sm:$0xff]
        %v616 = vld [vmem:[%s229 + $0x990] sm:$0xff]
        %v617 = vld [vmem:[%s229 + $0x998] sm:$0xff]
        %v618 = vld [vmem:[%s229 + $0x9a0] sm:$0xff]
        %v619 = vld [vmem:[%s229 + $0x9a8] sm:$0xff]
        %v620 = vld [vmem:[%s229 + $0x9b0] sm:$0xff]
        %v621 = vld [vmem:[%s229 + $0x9b8] sm:$0xff]
        %v622 = vld [vmem:[%s229 + $0x9c0] sm:$0xff]
        %v623 = vld [vmem:[%s229 + $0x9c8] sm:$0xff]
        %v624 = vld [vmem:[%s229 + $0x9d0] sm:$0xff]
        %v625 = vld [vmem:[%s229 + $0x9d8] sm:$0xff]
        %v626 = vld [vmem:[%s229 + $0x9e0] sm:$0xff]
        %v627 = vld [vmem:[%s229 + $0x9e8] sm:$0xff]
        %v628 = vld [vmem:[%s229 + $0x9f0] sm:$0xff]
        %v629 = vld [vmem:[%s229 + $0x9f8] sm:$0xff]
        %v630 = vld [vmem:[%s229 + $0xa00] sm:$0xff]
        %v631 = vld [vmem:[%s229 + $0xa08] sm:$0xff]
        %v632 = vld [vmem:[%s229 + $0xa10] sm:$0xff]
        %v633 = vld [vmem:[%s229 + $0xa18] sm:$0xff]
        %v634 = vld [vmem:[%s229 + $0xa20] sm:$0xff]
        %v635 = vld [vmem:[%s229 + $0xa28] sm:$0xff]
        %v636 = vld [vmem:[%s229 + $0xa30] sm:$0xff]
        %v637 = vld [vmem:[%s229 + $0xa38] sm:$0xff]
        %v638 = vld [vmem:[%s229 + $0xa40] sm:$0xff]
        %v639 = vld [vmem:[%s229 + $0xa48] sm:$0xff]
        %v640 = vld [vmem:[%s229 + $0xa50] sm:$0xff]
        %v641 = vld [vmem:[%s229 + $0xa58] sm:$0xff]
        %v642 = vld [vmem:[%s229 + $0xa60] sm:$0xff]
        %v643 = vld [vmem:[%s229 + $0xa68] sm:$0xff]
        %v644 = vld [vmem:[%s229 + $0xa70] sm:$0xff]
        %v645 = vld [vmem:[%s229 + $0xa78] sm:$0xff]
        %v646 = vld [vmem:[%s229 + $0xa80] sm:$0xff]
        %v647 = vld [vmem:[%s229 + $0xa88] sm:$0xff]
        %v648 = vld [vmem:[%s229 + $0xa90] sm:$0xff]
        %v649 = vld [vmem:[%s229 + $0xa98] sm:$0xff]
        %v650 = vld [vmem:[%s229 + $0xaa0] sm:$0xff]
        %v651 = vld [vmem:[%s229 + $0xaa8] sm:$0xff]
        %v652 = vld [vmem:[%s229 + $0xab0] sm:$0xff]
        %v653 = vld [vmem:[%s229 + $0xab8] sm:$0xff]
        %v654 = vld [vmem:[%s229 + $0xac0] sm:$0xff]
        %v655 = vld [vmem:[%s229 + $0xac8] sm:$0xff]
        %v656 = vld [vmem:[%s229 + $0xad0] sm:$0xff]
        %v657 = vld [vmem:[%s229 + $0xad8] sm:$0xff]
        %v658 = vld [vmem:[%s229 + $0xae0] sm:$0xff]
        %v659 = vld [vmem:[%s229 + $0xae8] sm:$0xff]
        %v660 = vld [vmem:[%s229 + $0xaf0] sm:$0xff]
        %v661 = vld [vmem:[%s229 + $0xaf8] sm:$0xff]
        %v662 = vld [vmem:[%s229 + $0xb00] sm:$0xff]
        %v663 = vld [vmem:[%s229 + $0xb08] sm:$0xff]
        %v664 = vld [vmem:[%s229 + $0xb10] sm:$0xff]
        %v665 = vld [vmem:[%s229 + $0xb18] sm:$0xff]
        %v666 = vld [vmem:[%s229 + $0xb20] sm:$0xff]
        %v667 = vld [vmem:[%s229 + $0xb28] sm:$0xff]
        %v668 = vld [vmem:[%s229 + $0xb30] sm:$0xff]
        %v669 = vld [vmem:[%s229 + $0xb38] sm:$0xff]
        %v670 = vld [vmem:[%s229 + $0xb40] sm:$0xff]
        %v671 = vld [vmem:[%s229 + $0xb48] sm:$0xff]
        %v672 = vld [vmem:[%s229 + $0xb50] sm:$0xff]
        %v673 = vld [vmem:[%s229 + $0xb58] sm:$0xff]
        %v674 = vld [vmem:[%s229 + $0xb60] sm:$0xff]
        %v675 = vld [vmem:[%s229 + $0xb68] sm:$0xff]
        %v676 = vld [vmem:[%s229 + $0xb70] sm:$0xff]
        %v677 = vld [vmem:[%s229 + $0xb78] sm:$0xff]
        %v678 = vld [vmem:[%s229 + $0xb80] sm:$0xff]
        %v679 = vld [vmem:[%s229 + $0xb88] sm:$0xff]
        %v680 = vld [vmem:[%s229 + $0xb90] sm:$0xff]
        %v681 = vld [vmem:[%s229 + $0xb98] sm:$0xff]
        %v682 = vld [vmem:[%s229 + $0xba0] sm:$0xff]
        %v683 = vld [vmem:[%s229 + $0xba8] sm:$0xff]
        %v684 = vld [vmem:[%s229 + $0xbb0] sm:$0xff]
        %v685 = vld [vmem:[%s229 + $0xbb8] sm:$0xff]
        %v686 = vld [vmem:[%s229 + $0xbc0] sm:$0xff]
        %v687 = vld [vmem:[%s229 + $0xbc8] sm:$0xff]
        %v688 = vld [vmem:[%s229 + $0xbd0] sm:$0xff]
        %v689 = vld [vmem:[%s229 + $0xbd8] sm:$0xff]
        %v690 = vld [vmem:[%s229 + $0xbe0] sm:$0xff]
        %v691 = vld [vmem:[%s229 + $0xbe8] sm:$0xff]
        %v692 = vld [vmem:[%s229 + $0xbf0] sm:$0xff]
        %v693 = vld [vmem:[%s229 + $0xbf8] sm:$0xff]
        %v694 = vld [vmem:[%s229 + $0xc00] sm:$0xff]
        %v695 = vld [vmem:[%s229 + $0xc08] sm:$0xff]
        %v696 = vld [vmem:[%s229 + $0xc10] sm:$0xff]
        %v697 = vld [vmem:[%s229 + $0xc18] sm:$0xff]
        %v698 = vld [vmem:[%s229 + $0xc20] sm:$0xff]
        %v699 = vld [vmem:[%s229 + $0xc28] sm:$0xff]
        %v700 = vld [vmem:[%s229 + $0xc30] sm:$0xff]
        %v701 = vld [vmem:[%s229 + $0xc38] sm:$0xff]
        %v702 = vld [vmem:[%s229 + $0xc40] sm:$0xff]
        %v703 = vld [vmem:[%s229 + $0xc48] sm:$0xff]
        %v704 = vld [vmem:[%s229 + $0xc50] sm:$0xff]
        %v705 = vld [vmem:[%s229 + $0xc58] sm:$0xff]
        %v706 = vld [vmem:[%s229 + $0xc60] sm:$0xff]
        %v707 = vld [vmem:[%s229 + $0xc68] sm:$0xff]
        %v708 = vld [vmem:[%s229 + $0xc70] sm:$0xff]
        %v709 = vld [vmem:[%s229 + $0xc78] sm:$0xff]
        %v710 = vld [vmem:[%s229 + $0xc80] sm:$0xff]
        %v711 = vld [vmem:[%s229 + $0xc88] sm:$0xff]
        %v712 = vld [vmem:[%s229 + $0xc90] sm:$0xff]
        %v713 = vld [vmem:[%s229 + $0xc98] sm:$0xff]
        %v714 = vld [vmem:[%s229 + $0xca0] sm:$0xff]
        %v715 = vld [vmem:[%s229 + $0xca8] sm:$0xff]
        %v716 = vld [vmem:[%s229 + $0xcb0] sm:$0xff]
        %v717 = vld [vmem:[%s229 + $0xcb8] sm:$0xff]
        %v718 = vld [vmem:[%s229 + $0xcc0] sm:$0xff]
        %v719 = vld [vmem:[%s229 + $0xcc8] sm:$0xff]
        %v720 = vld [vmem:[%s229 + $0xcd0] sm:$0xff]
        %v721 = vld [vmem:[%s229 + $0xcd8] sm:$0xff]
        %v722 = vld [vmem:[%s229 + $0xce0] sm:$0xff]
        %v723 = vld [vmem:[%s229 + $0xce8] sm:$0xff]
        %v724 = vld [vmem:[%s229 + $0xcf0] sm:$0xff]
        %v725 = vld [vmem:[%s229 + $0xcf8] sm:$0xff]
        %v726 = vld [vmem:[%s229 + $0xd00] sm:$0xff]
        %v727 = vld [vmem:[%s229 + $0xd08] sm:$0xff]
        %v728 = vld [vmem:[%s229 + $0xd10] sm:$0xff]
        %v729 = vld [vmem:[%s229 + $0xd18] sm:$0xff]
        %v730 = vld [vmem:[%s229 + $0xd20] sm:$0xff]
        %v731 = vld [vmem:[%s229 + $0xd28] sm:$0xff]
        %v732 = vld [vmem:[%s229 + $0xd30] sm:$0xff]
        %v733 = vld [vmem:[%s229 + $0xd38] sm:$0xff]
        %v734 = vld [vmem:[%s229 + $0xd40] sm:$0xff]
        %v735 = vld [vmem:[%s229 + $0xd48] sm:$0xff]
        %v736 = vld [vmem:[%s229 + $0xd50] sm:$0xff]
        %v737 = vld [vmem:[%s229 + $0xd58] sm:$0xff]
        %v738 = vld [vmem:[%s229 + $0xd60] sm:$0xff]
        %v739 = vld [vmem:[%s229 + $0xd68] sm:$0xff]
        %v740 = vld [vmem:[%s229 + $0xd70] sm:$0xff]
        %v741 = vld [vmem:[%s229 + $0xd78] sm:$0xff]
        %v742 = vld [vmem:[%s229 + $0xd80] sm:$0xff]
        %v743 = vld [vmem:[%s229 + $0xd88] sm:$0xff]
        %v744 = vld [vmem:[%s229 + $0xd90] sm:$0xff]
        %v745 = vld [vmem:[%s229 + $0xd98] sm:$0xff]
        %v746 = vld [vmem:[%s229 + $0xda0] sm:$0xff]
        %v747 = vld [vmem:[%s229 + $0xda8] sm:$0xff]
        %v748 = vld [vmem:[%s229 + $0xdb0] sm:$0xff]
        %v749 = vld [vmem:[%s229 + $0xdb8] sm:$0xff]
        %v750 = vld [vmem:[%s229 + $0xdc0] sm:$0xff]
        %v751 = vld [vmem:[%s229 + $0xdc8] sm:$0xff]
        %v752 = vld [vmem:[%s229 + $0xdd0] sm:$0xff]
        %v753 = vld [vmem:[%s229 + $0xdd8] sm:$0xff]
        %v754 = vld [vmem:[%s229 + $0xde0] sm:$0xff]
        %v755 = vld [vmem:[%s229 + $0xde8] sm:$0xff]
        %v756 = vld [vmem:[%s229 + $0xdf0] sm:$0xff]
        %v757 = vld [vmem:[%s229 + $0xdf8] sm:$0xff]
        %v758 = vld [vmem:[%s229 + $0xe00] sm:$0xff]
        %v759 = vld [vmem:[%s229 + $0xe08] sm:$0xff]
        %v760 = vld [vmem:[%s229 + $0xe10] sm:$0xff]
        %v761 = vld [vmem:[%s229 + $0xe18] sm:$0xff]
        %v762 = vld [vmem:[%s229 + $0xe20] sm:$0xff]
        %v763 = vld [vmem:[%s229 + $0xe28] sm:$0xff]
        %v764 = vld [vmem:[%s229 + $0xe30] sm:$0xff]
        %v765 = vld [vmem:[%s229 + $0xe38] sm:$0xff]
        %v766 = vld [vmem:[%s229 + $0xe40] sm:$0xff]
        %v767 = vld [vmem:[%s229 + $0xe48] sm:$0xff]
        %v768 = vld [vmem:[%s229 + $0xe50] sm:$0xff]
        %v769 = vld [vmem:[%s229 + $0xe58] sm:$0xff]
        %v770 = vld [vmem:[%s229 + $0xe60] sm:$0xff]
        %v771 = vld [vmem:[%s229 + $0xe68] sm:$0xff]
        %v772 = vld [vmem:[%s229 + $0xe70] sm:$0xff]
        %v773 = vld [vmem:[%s229 + $0xe78] sm:$0xff]
        %v774 = vld [vmem:[%s229 + $0xe80] sm:$0xff]
        %v775 = vld [vmem:[%s229 + $0xe88] sm:$0xff]
        %v776 = vld [vmem:[%s229 + $0xe90] sm:$0xff]
        %v777 = vld [vmem:[%s229 + $0xe98] sm:$0xff]
        %v778 = vld [vmem:[%s229 + $0xea0] sm:$0xff]
        %v779 = vld [vmem:[%s229 + $0xea8] sm:$0xff]
        %v780 = vld [vmem:[%s229 + $0xeb0] sm:$0xff]
        %v781 = vld [vmem:[%s229 + $0xeb8] sm:$0xff]
        %v782 = vld [vmem:[%s229 + $0xec0] sm:$0xff]
        %v783 = vld [vmem:[%s229 + $0xec8] sm:$0xff]
        %v784 = vld [vmem:[%s229 + $0xed0] sm:$0xff]
        %v785 = vld [vmem:[%s229 + $0xed8] sm:$0xff]
        %v786 = vld [vmem:[%s229 + $0xee0] sm:$0xff]
        %v787 = vld [vmem:[%s229 + $0xee8] sm:$0xff]
        %v788 = vld [vmem:[%s229 + $0xef0] sm:$0xff]
        %v789 = vld [vmem:[%s229 + $0xef8] sm:$0xff]
        %v790 = vld [vmem:[%s229 + $0xf00] sm:$0xff]
        %v791 = vld [vmem:[%s229 + $0xf08] sm:$0xff]
        %v792 = vld [vmem:[%s229 + $0xf10] sm:$0xff]
        %v793 = vld [vmem:[%s229 + $0xf18] sm:$0xff]
        %v794 = vld [vmem:[%s229 + $0xf20] sm:$0xff]
        %v795 = vld [vmem:[%s229 + $0xf28] sm:$0xff]
        %v796 = vld [vmem:[%s229 + $0xf30] sm:$0xff]
        %v797 = vld [vmem:[%s229 + $0xf38] sm:$0xff]
        %v798 = vld [vmem:[%s229 + $0xf40] sm:$0xff]
        %v799 = vld [vmem:[%s229 + $0xf48] sm:$0xff]
        %v800 = vld [vmem:[%s229 + $0xf50] sm:$0xff]
        %v801 = vld [vmem:[%s229 + $0xf58] sm:$0xff]
        %v802 = vld [vmem:[%s229 + $0xf60] sm:$0xff]
        %v803 = vld [vmem:[%s229 + $0xf68] sm:$0xff]
        %v804 = vld [vmem:[%s229 + $0xf70] sm:$0xff]
        %v805 = vld [vmem:[%s229 + $0xf78] sm:$0xff]
        %v806 = vld [vmem:[%s229 + $0xf80] sm:$0xff]
        %v807 = vld [vmem:[%s229 + $0xf88] sm:$0xff]
        %v808 = vld [vmem:[%s229 + $0xf90] sm:$0xff]
        %v809 = vld [vmem:[%s229 + $0xf98] sm:$0xff]
        %v810 = vld [vmem:[%s229 + $0xfa0] sm:$0xff]
        %v811 = vld [vmem:[%s229 + $0xfa8] sm:$0xff]
        %v812 = vld [vmem:[%s229 + $0xfb0] sm:$0xff]
        %v813 = vld [vmem:[%s229 + $0xfb8] sm:$0xff]
        %v814 = vld [vmem:[%s229 + $0xfc0] sm:$0xff]
        %v815 = vld [vmem:[%s229 + $0xfc8] sm:$0xff]
        %v816 = vld [vmem:[%s229 + $0xfd0] sm:$0xff]
        %v817 = vld [vmem:[%s229 + $0xfd8] sm:$0xff]
        %v818 = vld [vmem:[%s229 + $0xfe0] sm:$0xff]
        %v819 = vld [vmem:[%s229 + $0xfe8] sm:$0xff]
        %v820 = vld [vmem:[%s229 + $0xff0] sm:$0xff]
        %v821 = vld [vmem:[%s229 + $0xff8] sm:$0xff]
        %v822 = vld [vmem:[%s229 + $0x1000] sm:$0xff]
        %v823 = vld [vmem:[%s229 + $0x1008] sm:$0xff]
        %v824 = vld [vmem:[%s229 + $0x1010] sm:$0xff]
        %v825 = vld [vmem:[%s229 + $0x1018] sm:$0xff]
        %v826 = vld [vmem:[%s229 + $0x1020] sm:$0xff]
        %v827 = vld [vmem:[%s229 + $0x1028] sm:$0xff]
        %v828 = vld [vmem:[%s229 + $0x1030] sm:$0xff]
        %v829 = vld [vmem:[%s229 + $0x1038] sm:$0xff]
        %v830 = vld [vmem:[%s229 + $0x1040] sm:$0xff]
        %v831 = vld [vmem:[%s229 + $0x1048] sm:$0xff]
        %v832 = vld [vmem:[%s229 + $0x1050] sm:$0xff]
        %v833 = vld [vmem:[%s229 + $0x1058] sm:$0xff]
        %v834 = vld [vmem:[%s229 + $0x1060] sm:$0xff]
        %v835 = vld [vmem:[%s229 + $0x1068] sm:$0xff]
        %v836 = vld [vmem:[%s229 + $0x1070] sm:$0xff]
        %v837 = vld [vmem:[%s229 + $0x1078] sm:$0xff]
        %v838 = vld [vmem:[%s229 + $0x1080] sm:$0xff]
        %v839 = vld [vmem:[%s229 + $0x1088] sm:$0xff]
        %v840 = vld [vmem:[%s229 + $0x1090] sm:$0xff]
        %v841 = vld [vmem:[%s229 + $0x1098] sm:$0xff]
        %v842 = vld [vmem:[%s229 + $0x10a0] sm:$0xff]
        %v843 = vld [vmem:[%s229 + $0x10a8] sm:$0xff]
        %v844 = vld [vmem:[%s229 + $0x10b0] sm:$0xff]
        %v845 = vld [vmem:[%s229 + $0x10b8] sm:$0xff]
        %v846 = vld [vmem:[%s229 + $0x10c0] sm:$0xff]
        %v847 = vld [vmem:[%s229 + $0x10c8] sm:$0xff]
        %v848 = vld [vmem:[%s229 + $0x10d0] sm:$0xff]
        %v849 = vld [vmem:[%s229 + $0x10d8] sm:$0xff]
        %v850 = vld [vmem:[%s229 + $0x10e0] sm:$0xff]
        %v851 = vld [vmem:[%s229 + $0x10e8] sm:$0xff]
        %v852 = vld [vmem:[%s229 + $0x10f0] sm:$0xff]
        %v853 = vld [vmem:[%s229 + $0x10f8] sm:$0xff]
        %v854 = vld [vmem:[%s229 + $0x1100] sm:$0xff]
        %v855 = vld [vmem:[%s229 + $0x1108] sm:$0xff]
        %v856 = vld [vmem:[%s229 + $0x1110] sm:$0xff]
        %v857 = vld [vmem:[%s229 + $0x1118] sm:$0xff]
        %v858 = vld [vmem:[%s229 + $0x1120] sm:$0xff]
        %v859 = vld [vmem:[%s229 + $0x1128] sm:$0xff]
        %v860 = vld [vmem:[%s229 + $0x1130] sm:$0xff]
        %v861 = vld [vmem:[%s229 + $0x1138] sm:$0xff]
        %v862 = vld [vmem:[%s229 + $0x1140] sm:$0xff]
        %v863 = vld [vmem:[%s229 + $0x1148] sm:$0xff]
        %v864 = vld [vmem:[%s229 + $0x1150] sm:$0xff]
        %v865 = vld [vmem:[%s229 + $0x1158] sm:$0xff]
        %v866 = vld [vmem:[%s229 + $0x1160] sm:$0xff]
        %v867 = vld [vmem:[%s229 + $0x1168] sm:$0xff]
        %v868 = vld [vmem:[%s229 + $0x1170] sm:$0xff]
        %v869 = vld [vmem:[%s229 + $0x1178] sm:$0xff]
        %v870 = vld [vmem:[%s229 + $0x1180] sm:$0xff]
        %v871 = vld [vmem:[%s229 + $0x1188] sm:$0xff]
        %v872 = vld [vmem:[%s229 + $0x1190] sm:$0xff]
        %v873 = vld [vmem:[%s229 + $0x1198] sm:$0xff]
        %v874 = vld [vmem:[%s229 + $0x11a0] sm:$0xff]
        %v875 = vld [vmem:[%s229 + $0x11a8] sm:$0xff]
        %v876 = vld [vmem:[%s229 + $0x11b0] sm:$0xff]
        %v877 = vld [vmem:[%s229 + $0x11b8] sm:$0xff]
        %v878 = vld [vmem:[%s229 + $0x11c0] sm:$0xff]
        %v879 = vld [vmem:[%s229 + $0x11c8] sm:$0xff]
        %v880 = vld [vmem:[%s229 + $0x11d0] sm:$0xff]
        %v881 = vld [vmem:[%s229 + $0x11d8] sm:$0xff]
        %v882 = vld [vmem:[%s229 + $0x11e0] sm:$0xff]
        %v883 = vld [vmem:[%s229 + $0x11e8] sm:$0xff]
        %v884 = vld [vmem:[%s229 + $0x11f0] sm:$0xff]
        %v885 = vld [vmem:[%s229 + $0x11f8] sm:$0xff]
        %v886 = vld [vmem:[%s229 + $0x1200] sm:$0xff]
        %v887 = vld [vmem:[%s229 + $0x1208] sm:$0xff]
        %v888 = vld [vmem:[%s229 + $0x1210] sm:$0xff]
        %v889 = vld [vmem:[%s229 + $0x1218] sm:$0xff]
        %v890 = vld [vmem:[%s229 + $0x1220] sm:$0xff]
        %v891 = vld [vmem:[%s229 + $0x1228] sm:$0xff]
        %v892 = vld [vmem:[%s229 + $0x1230] sm:$0xff]
        %v893 = vld [vmem:[%s229 + $0x1238] sm:$0xff]
        %v894 = vld [vmem:[%s229 + $0x1240] sm:$0xff]
        %v895 = vld [vmem:[%s229 + $0x1248] sm:$0xff]
        %v896 = vld [vmem:[%s229 + $0x1250] sm:$0xff]
        %v897 = vld [vmem:[%s229 + $0x1258] sm:$0xff]
        %v898 = vld [vmem:[%s229 + $0x1260] sm:$0xff]
        %v899 = vld [vmem:[%s229 + $0x1268] sm:$0xff]
        %v900 = vld [vmem:[%s229 + $0x1270] sm:$0xff]
        %v901 = vld [vmem:[%s229 + $0x1278] sm:$0xff]
        %v902 = vld [vmem:[%s229 + $0x1280] sm:$0xff]
        %v903 = vld [vmem:[%s229 + $0x1288] sm:$0xff]
        %v904 = vld [vmem:[%s229 + $0x1290] sm:$0xff]
        %v905 = vld [vmem:[%s229 + $0x1298] sm:$0xff]
        %v906 = vld [vmem:[%s229 + $0x12a0] sm:$0xff]
        %v907 = vld [vmem:[%s229 + $0x12a8] sm:$0xff]
        %v908 = vld [vmem:[%s229 + $0x12b0] sm:$0xff]
        %v909 = vld [vmem:[%s229 + $0x12b8] sm:$0xff]
        %v910 = vld [vmem:[%s229 + $0x12c0] sm:$0xff]
        %v911 = vld [vmem:[%s229 + $0x12c8] sm:$0xff]
        %v912 = vld [vmem:[%s229 + $0x12d0] sm:$0xff]
        %v913 = vld [vmem:[%s229 + $0x12d8] sm:$0xff]
        %v914 = vld [vmem:[%s229 + $0x12e0] sm:$0xff]
        %v915 = vld [vmem:[%s229 + $0x12e8] sm:$0xff]
        %v916 = vld [vmem:[%s229 + $0x12f0] sm:$0xff]
        %v917 = vld [vmem:[%s229 + $0x12f8] sm:$0xff]
        %v918 = vld [vmem:[%s229 + $0x1300] sm:$0xff]
        %v919 = vld [vmem:[%s229 + $0x1308] sm:$0xff]
        %v920 = vld [vmem:[%s229 + $0x1310] sm:$0xff]
        %v921 = vld [vmem:[%s229 + $0x1318] sm:$0xff]
        %v922 = vld [vmem:[%s229 + $0x1320] sm:$0xff]
        %v923 = vld [vmem:[%s229 + $0x1328] sm:$0xff]
        %v924 = vld [vmem:[%s229 + $0x1330] sm:$0xff]
        %v925 = vld [vmem:[%s229 + $0x1338] sm:$0xff]
        %v926 = vld [vmem:[%s229 + $0x1340] sm:$0xff]
        %v927 = vld [vmem:[%s229 + $0x1348] sm:$0xff]
        %v928 = vld [vmem:[%s229 + $0x1350] sm:$0xff]
        %v929 = vld [vmem:[%s229 + $0x1358] sm:$0xff]
        %v930 = vld [vmem:[%s229 + $0x1360] sm:$0xff]
        %v931 = vld [vmem:[%s229 + $0x1368] sm:$0xff]
        %v932 = vld [vmem:[%s229 + $0x1370] sm:$0xff]
        %v933 = vld [vmem:[%s229 + $0x1378] sm:$0xff]
        %v934 = vld [vmem:[%s229 + $0x1380] sm:$0xff]
        %v935 = vld [vmem:[%s229 + $0x1388] sm:$0xff]
        %v936 = vld [vmem:[%s229 + $0x1390] sm:$0xff]
        %v937 = vld [vmem:[%s229 + $0x1398] sm:$0xff]
        %v938 = vld [vmem:[%s229 + $0x13a0] sm:$0xff]
        %v939 = vld [vmem:[%s229 + $0x13a8] sm:$0xff]
        %v940 = vld [vmem:[%s229 + $0x13b0] sm:$0xff]
        %v941 = vld [vmem:[%s229 + $0x13b8] sm:$0xff]
        %v942 = vld [vmem:[%s229 + $0x13c0] sm:$0xff]
        %v943 = vld [vmem:[%s229 + $0x13c8] sm:$0xff]
        %v944 = vld [vmem:[%s229 + $0x13d0] sm:$0xff]
        %v945 = vld [vmem:[%s229 + $0x13d8] sm:$0xff]
        %v946 = vld [vmem:[%s229 + $0x13e0] sm:$0xff]
        %v947 = vld [vmem:[%s229 + $0x13e8] sm:$0xff]
        %v948 = vld [vmem:[%s229 + $0x13f0] sm:$0xff]
        %v949 = vld [vmem:[%s229 + $0x13f8] sm:$0xff]
        %v950 = vld [vmem:[%s229 + $0x1400] sm:$0xff]
        %v951 = vld [vmem:[%s229 + $0x1408] sm:$0xff]
        %v952 = vld [vmem:[%s229 + $0x1410] sm:$0xff]
        %v953 = vld [vmem:[%s229 + $0x1418] sm:$0xff]
        %v954 = vld [vmem:[%s229 + $0x1420] sm:$0xff]
        %v955 = vld [vmem:[%s229 + $0x1428] sm:$0xff]
        %v956 = vld [vmem:[%s229 + $0x1430] sm:$0xff]
        %v957 = vld [vmem:[%s229 + $0x1438] sm:$0xff]
        %v958 = vld [vmem:[%s229 + $0x1440] sm:$0xff]
        %v959 = vld [vmem:[%s229 + $0x1448] sm:$0xff]
        %v960 = vld [vmem:[%s229 + $0x1450] sm:$0xff]
        %v961 = vld [vmem:[%s229 + $0x1458] sm:$0xff]
        %v962 = vld [vmem:[%s229 + $0x1460] sm:$0xff]
        %v963 = vld [vmem:[%s229 + $0x1468] sm:$0xff]
        %v964 = vld [vmem:[%s229 + $0x1470] sm:$0xff]
        %v965 = vld [vmem:[%s229 + $0x1478] sm:$0xff]
        %v966 = vld [vmem:[%s229 + $0x1480] sm:$0xff]
        %v967 = vld [vmem:[%s229 + $0x1488] sm:$0xff]
        %v968 = vld [vmem:[%s229 + $0x1490] sm:$0xff]
        %v969 = vld [vmem:[%s229 + $0x1498] sm:$0xff]
        %v970 = vld [vmem:[%s229 + $0x14a0] sm:$0xff]
        %v971 = vld [vmem:[%s229 + $0x14a8] sm:$0xff]
        %v972 = vld [vmem:[%s229 + $0x14b0] sm:$0xff]
        %v973 = vld [vmem:[%s229 + $0x14b8] sm:$0xff]
        %v974 = vld [vmem:[%s229 + $0x14c0] sm:$0xff]
        %v975 = vld [vmem:[%s229 + $0x14c8] sm:$0xff]
        %v976 = vld [vmem:[%s229 + $0x14d0] sm:$0xff]
        %v977 = vld [vmem:[%s229 + $0x14d8] sm:$0xff]
        %v978 = vld [vmem:[%s229 + $0x14e0] sm:$0xff]
        %v979 = vld [vmem:[%s229 + $0x14e8] sm:$0xff]
        %v980 = vld [vmem:[%s229 + $0x14f0] sm:$0xff]
        %v981 = vld [vmem:[%s229 + $0x14f8] sm:$0xff]
        %v982 = vld [vmem:[%s229 + $0x1500] sm:$0xff]
        %v983 = vld [vmem:[%s229 + $0x1508] sm:$0xff]
        %v984 = vld [vmem:[%s229 + $0x1510] sm:$0xff]
        %v985 = vld [vmem:[%s229 + $0x1518] sm:$0xff]
        %v986 = vld [vmem:[%s229 + $0x1520] sm:$0xff]
        %v987 = vld [vmem:[%s229 + $0x1528] sm:$0xff]
        %v988 = vld [vmem:[%s229 + $0x1530] sm:$0xff]
        %v989 = vld [vmem:[%s229 + $0x1538] sm:$0xff]
        %v990 = vld [vmem:[%s229 + $0x1540] sm:$0xff]
        %v991 = vld [vmem:[%s229 + $0x1548] sm:$0xff]
        %v992 = vld [vmem:[%s229 + $0x1550] sm:$0xff]
        %v993 = vld [vmem:[%s229 + $0x1558] sm:$0xff]
        %v994 = vld [vmem:[%s229 + $0x1560] sm:$0xff]
        %v995 = vld [vmem:[%s229 + $0x1568] sm:$0xff]
        %v996 = vld [vmem:[%s229 + $0x1570] sm:$0xff]
        %v997 = vld [vmem:[%s229 + $0x1578] sm:$0xff]
        %v998 = vld [vmem:[%s229 + $0x1580] sm:$0xff]
        %v999 = vld [vmem:[%s229 + $0x1588] sm:$0xff]
        %v1000 = vld [vmem:[%s229 + $0x1590] sm:$0xff]
        %v1001 = vld [vmem:[%s229 + $0x1598] sm:$0xff]
        %v1002 = vld [vmem:[%s229 + $0x15a0] sm:$0xff]
        %v1003 = vld [vmem:[%s229 + $0x15a8] sm:$0xff]
        %v1004 = vld [vmem:[%s229 + $0x15b0] sm:$0xff]
        %v1005 = vld [vmem:[%s229 + $0x15b8] sm:$0xff]
        %v1006 = vld [vmem:[%s229 + $0x15c0] sm:$0xff]
        %v1007 = vld [vmem:[%s229 + $0x15c8] sm:$0xff]
        %v1008 = vld [vmem:[%s229 + $0x15d0] sm:$0xff]
        %v1009 = vld [vmem:[%s229 + $0x15d8] sm:$0xff]
        %v1010 = vld [vmem:[%s229 + $0x15e0] sm:$0xff]
        %v1011 = vld [vmem:[%s229 + $0x15e8] sm:$0xff]
        %v1012 = vld [vmem:[%s229 + $0x15f0] sm:$0xff]
        %v1013 = vld [vmem:[%s229 + $0x15f8] sm:$0xff]
        %v1014 = vld [vmem:[%s229 + $0x1600] sm:$0xff]
        %v1015 = vld [vmem:[%s229 + $0x1608] sm:$0xff]
        %v1016 = vld [vmem:[%s229 + $0x1610] sm:$0xff]
        %v1017 = vld [vmem:[%s229 + $0x1618] sm:$0xff]
        %v1018 = vld [vmem:[%s229 + $0x1620] sm:$0xff]
        %v1019 = vld [vmem:[%s229 + $0x1628] sm:$0xff]
        %v1020 = vld [vmem:[%s229 + $0x1630] sm:$0xff]
        %v1021 = vld [vmem:[%s229 + $0x1638] sm:$0xff]
        %v1022 = vld [vmem:[%s229 + $0x1640] sm:$0xff]
        %v1023 = vld [vmem:[%s229 + $0x1648] sm:$0xff]
        %v1024 = vld [vmem:[%s229 + $0x1650] sm:$0xff]
        %v1025 = vld [vmem:[%s229 + $0x1658] sm:$0xff]
        %v1026 = vld [vmem:[%s229 + $0x1660] sm:$0xff]
        %v1027 = vld [vmem:[%s229 + $0x1668] sm:$0xff]
        %v1028 = vld [vmem:[%s229 + $0x1670] sm:$0xff]
        %v1029 = vld [vmem:[%s229 + $0x1678] sm:$0xff]
        %v1030 = vld [vmem:[%s229 + $0x1680] sm:$0xff]
        %v1031 = vld [vmem:[%s229 + $0x1688] sm:$0xff]
        %v1032 = vld [vmem:[%s229 + $0x1690] sm:$0xff]
        %v1033 = vld [vmem:[%s229 + $0x1698] sm:$0xff]
        %v1034 = vld [vmem:[%s229 + $0x16a0] sm:$0xff]
        %v1035 = vld [vmem:[%s229 + $0x16a8] sm:$0xff]
        %v1036 = vld [vmem:[%s229 + $0x16b0] sm:$0xff]
        %v1037 = vld [vmem:[%s229 + $0x16b8] sm:$0xff]
        %v1038 = vld [vmem:[%s229 + $0x16c0] sm:$0xff]
        %v1039 = vld [vmem:[%s229 + $0x16c8] sm:$0xff]
        %v1040 = vld [vmem:[%s229 + $0x16d0] sm:$0xff]
        %v1041 = vld [vmem:[%s229 + $0x16d8] sm:$0xff]
        %v1042 = vld [vmem:[%s229 + $0x16e0] sm:$0xff]
        %v1043 = vld [vmem:[%s229 + $0x16e8] sm:$0xff]
        %v1044 = vld [vmem:[%s229 + $0x16f0] sm:$0xff]
        %v1045 = vld [vmem:[%s229 + $0x16f8] sm:$0xff]
        %v1046 = vld [vmem:[%s229 + $0x1700] sm:$0xff]
        %v1047 = vld [vmem:[%s229 + $0x1708] sm:$0xff]
        %v1048 = vld [vmem:[%s229 + $0x1710] sm:$0xff]
        %v1049 = vld [vmem:[%s229 + $0x1718] sm:$0xff]
        %v1050 = vld [vmem:[%s229 + $0x1720] sm:$0xff]
        %v1051 = vld [vmem:[%s229 + $0x1728] sm:$0xff]
        %v1052 = vld [vmem:[%s229 + $0x1730] sm:$0xff]
        %v1053 = vld [vmem:[%s229 + $0x1738] sm:$0xff]
        %v1054 = vld [vmem:[%s229 + $0x1740] sm:$0xff]
        %v1055 = vld [vmem:[%s229 + $0x1748] sm:$0xff]
        %v1056 = vld [vmem:[%s229 + $0x1750] sm:$0xff]
        %v1057 = vld [vmem:[%s229 + $0x1758] sm:$0xff]
        %v1058 = vld [vmem:[%s229 + $0x1760] sm:$0xff]
        %v1059 = vld [vmem:[%s229 + $0x1768] sm:$0xff]
        %v1060 = vld [vmem:[%s229 + $0x1770] sm:$0xff]
        %v1061 = vld [vmem:[%s229 + $0x1778] sm:$0xff]
        %v1062 = vld [vmem:[%s229 + $0x1780] sm:$0xff]
        %v1063 = vld [vmem:[%s229 + $0x1788] sm:$0xff]
        %v1064 = vld [vmem:[%s229 + $0x1790] sm:$0xff]
        %v1065 = vld [vmem:[%s229 + $0x1798] sm:$0xff]
        %v1066 = vld [vmem:[%s229 + $0x17a0] sm:$0xff]
        %v1067 = vld [vmem:[%s229 + $0x17a8] sm:$0xff]
        %v1068 = vld [vmem:[%s229 + $0x17b0] sm:$0xff]
        %v1069 = vld [vmem:[%s229 + $0x17b8] sm:$0xff]
        %v1070 = vld [vmem:[%s229 + $0x17c0] sm:$0xff]
        %v1071 = vld [vmem:[%s229 + $0x17c8] sm:$0xff]
        %v1072 = vld [vmem:[%s229 + $0x17d0] sm:$0xff]
        %v1073 = vld [vmem:[%s229 + $0x17d8] sm:$0xff]
        %v1074 = vld [vmem:[%s229 + $0x17e0] sm:$0xff]
        %v1075 = vld [vmem:[%s229 + $0x17e8] sm:$0xff]
        %v1076 = vld [vmem:[%s229 + $0x17f0] sm:$0xff]
        %v1077 = vld [vmem:[%s229 + $0x17f8] sm:$0xff]
        %v1078 = vld [vmem:[%s229 + $0x1800] sm:$0xff]
        %v1079 = vld [vmem:[%s229 + $0x1808] sm:$0xff]
        %v1080 = vld [vmem:[%s229 + $0x1810] sm:$0xff]
        %v1081 = vld [vmem:[%s229 + $0x1818] sm:$0xff]
        %v1082 = vld [vmem:[%s229 + $0x1820] sm:$0xff]
        %v1083 = vld [vmem:[%s229 + $0x1828] sm:$0xff]
        %v1084 = vld [vmem:[%s229 + $0x1830] sm:$0xff]
        %v1085 = vld [vmem:[%s229 + $0x1838] sm:$0xff]
        %v1086 = vld [vmem:[%s229 + $0x1840] sm:$0xff]
        %v1087 = vld [vmem:[%s229 + $0x1848] sm:$0xff]
        %v1088 = vld [vmem:[%s229 + $0x1850] sm:$0xff]
        %v1089 = vld [vmem:[%s229 + $0x1858] sm:$0xff]
        %v1090 = vld [vmem:[%s229 + $0x1860] sm:$0xff]
        %v1091 = vld [vmem:[%s229 + $0x1868] sm:$0xff]
        %v1092 = vld [vmem:[%s229 + $0x1870] sm:$0xff]
        %v1093 = vld [vmem:[%s229 + $0x1878] sm:$0xff]
        %v1094 = vld [vmem:[%s229 + $0x1880] sm:$0xff]
        %v1095 = vld [vmem:[%s229 + $0x1888] sm:$0xff]
        %v1096 = vld [vmem:[%s229 + $0x1890] sm:$0xff]
        %v1097 = vld [vmem:[%s229 + $0x1898] sm:$0xff]
        %v1098 = vld [vmem:[%s229 + $0x18a0] sm:$0xff]
        %v1099 = vld [vmem:[%s229 + $0x18a8] sm:$0xff]
        %v1100 = vld [vmem:[%s229 + $0x18b0] sm:$0xff]
        %v1101 = vld [vmem:[%s229 + $0x18b8] sm:$0xff]
        %v1102 = vld [vmem:[%s229 + $0x18c0] sm:$0xff]
        %v1103 = vld [vmem:[%s229 + $0x18c8] sm:$0xff]
        %v1104 = vld [vmem:[%s229 + $0x18d0] sm:$0xff]
        %v1105 = vld [vmem:[%s229 + $0x18d8] sm:$0xff]
        %v1106 = vld [vmem:[%s229 + $0x18e0] sm:$0xff]
        %v1107 = vld [vmem:[%s229 + $0x18e8] sm:$0xff]
        %v1108 = vld [vmem:[%s229 + $0x18f0] sm:$0xff]
        %v1109 = vld [vmem:[%s229 + $0x18f8] sm:$0xff]
        %v1110 = vld [vmem:[%s229 + $0x1900] sm:$0xff]
        %v1111 = vld [vmem:[%s229 + $0x1908] sm:$0xff]
        %v1112 = vld [vmem:[%s229 + $0x1910] sm:$0xff]
        %v1113 = vld [vmem:[%s229 + $0x1918] sm:$0xff]
        %v1114 = vld [vmem:[%s229 + $0x1920] sm:$0xff]
        %v1115 = vld [vmem:[%s229 + $0x1928] sm:$0xff]
        %v1116 = vld [vmem:[%s229 + $0x1930] sm:$0xff]
        %v1117 = vld [vmem:[%s229 + $0x1938] sm:$0xff]
        %v1118 = vld [vmem:[%s229 + $0x1940] sm:$0xff]
        %v1119 = vld [vmem:[%s229 + $0x1948] sm:$0xff]
        %v1120 = vld [vmem:[%s229 + $0x1950] sm:$0xff]
        %v1121 = vld [vmem:[%s229 + $0x1958] sm:$0xff]
        %v1122 = vld [vmem:[%s229 + $0x1960] sm:$0xff]
        %v1123 = vld [vmem:[%s229 + $0x1968] sm:$0xff]
        %v1124 = vld [vmem:[%s229 + $0x1970] sm:$0xff]
        %v1125 = vld [vmem:[%s229 + $0x1978] sm:$0xff]
        %v1126 = vld [vmem:[%s229 + $0x1980] sm:$0xff]
        %v1127 = vld [vmem:[%s229 + $0x1988] sm:$0xff]
        %v1128 = vld [vmem:[%s229 + $0x1990] sm:$0xff]
        %v1129 = vld [vmem:[%s229 + $0x1998] sm:$0xff]
        %v1130 = vld [vmem:[%s229 + $0x19a0] sm:$0xff]
        %v1131 = vld [vmem:[%s229 + $0x19a8] sm:$0xff]
        %v1132 = vld [vmem:[%s229 + $0x19b0] sm:$0xff]
        %v1133 = vld [vmem:[%s229 + $0x19b8] sm:$0xff]
        %v1134 = vld [vmem:[%s229 + $0x19c0] sm:$0xff]
        %v1135 = vld [vmem:[%s229 + $0x19c8] sm:$0xff]
        %v1136 = vld [vmem:[%s229 + $0x19d0] sm:$0xff]
        %v1137 = vld [vmem:[%s229 + $0x19d8] sm:$0xff]
        %v1138 = vld [vmem:[%s229 + $0x19e0] sm:$0xff]
        %v1139 = vld [vmem:[%s229 + $0x19e8] sm:$0xff]
        %v1140 = vld [vmem:[%s229 + $0x19f0] sm:$0xff]
        %v1141 = vld [vmem:[%s229 + $0x19f8] sm:$0xff]
        %v1142 = vld [vmem:[%s229 + $0x1a00] sm:$0xff]
        %v1143 = vld [vmem:[%s229 + $0x1a08] sm:$0xff]
        %v1144 = vld [vmem:[%s229 + $0x1a10] sm:$0xff]
        %v1145 = vld [vmem:[%s229 + $0x1a18] sm:$0xff]
        %v1146 = vld [vmem:[%s229 + $0x1a20] sm:$0xff]
        %v1147 = vld [vmem:[%s229 + $0x1a28] sm:$0xff]
        %v1148 = vld [vmem:[%s229 + $0x1a30] sm:$0xff]
        %v1149 = vld [vmem:[%s229 + $0x1a38] sm:$0xff]
        %v1150 = vld [vmem:[%s229 + $0x1a40] sm:$0xff]
        %v1151 = vld [vmem:[%s229 + $0x1a48] sm:$0xff]
        %v1152 = vld [vmem:[%s229 + $0x1a50] sm:$0xff]
        %v1153 = vld [vmem:[%s229 + $0x1a58] sm:$0xff]
        %v1154 = vld [vmem:[%s229 + $0x1a60] sm:$0xff]
        %v1155 = vld [vmem:[%s229 + $0x1a68] sm:$0xff]
        %v1156 = vld [vmem:[%s229 + $0x1a70] sm:$0xff]
        %v1157 = vld [vmem:[%s229 + $0x1a78] sm:$0xff]
        %v1158 = vld [vmem:[%s229 + $0x1a80] sm:$0xff]
        %v1159 = vld [vmem:[%s229 + $0x1a88] sm:$0xff]
        %v1160 = vld [vmem:[%s229 + $0x1a90] sm:$0xff]
        %v1161 = vld [vmem:[%s229 + $0x1a98] sm:$0xff]
        %v1162 = vld [vmem:[%s229 + $0x1aa0] sm:$0xff]
        %v1163 = vld [vmem:[%s229 + $0x1aa8] sm:$0xff]
        %v1164 = vld [vmem:[%s229 + $0x1ab0] sm:$0xff]
        %v1165 = vld [vmem:[%s229 + $0x1ab8] sm:$0xff]
        %v1166 = vld [vmem:[%s229 + $0x1ac0] sm:$0xff]
        %v1167 = vld [vmem:[%s229 + $0x1ac8] sm:$0xff]
        %v1168 = vld [vmem:[%s229 + $0x1ad0] sm:$0xff]
        %v1169 = vld [vmem:[%s229 + $0x1ad8] sm:$0xff]
        %v1170 = vld [vmem:[%s229 + $0x1ae0] sm:$0xff]
        %v1171 = vld [vmem:[%s229 + $0x1ae8] sm:$0xff]
        %v1172 = vld [vmem:[%s229 + $0x1af0] sm:$0xff]
        %v1173 = vld [vmem:[%s229 + $0x1af8] sm:$0xff]
        %v1174 = vld [vmem:[%s229 + $0x1b00] sm:$0xff]
        %v1175 = vld [vmem:[%s229 + $0x1b08] sm:$0xff]
        %v1176 = vld [vmem:[%s229 + $0x1b10] sm:$0xff]
        %v1177 = vld [vmem:[%s229 + $0x1b18] sm:$0xff]
        %v1178 = vld [vmem:[%s229 + $0x1b20] sm:$0xff]
        %v1179 = vld [vmem:[%s229 + $0x1b28] sm:$0xff]
        %v1180 = vld [vmem:[%s229 + $0x1b30] sm:$0xff]
        %v1181 = vld [vmem:[%s229 + $0x1b38] sm:$0xff]
        %v1182 = vld [vmem:[%s229 + $0x1b40] sm:$0xff]
        %v1183 = vld [vmem:[%s229 + $0x1b48] sm:$0xff]
        %v1184 = vld [vmem:[%s229 + $0x1b50] sm:$0xff]
        %v1185 = vld [vmem:[%s229 + $0x1b58] sm:$0xff]
        %v1186 = vld [vmem:[%s229 + $0x1b60] sm:$0xff]
        %v1187 = vld [vmem:[%s229 + $0x1b68] sm:$0xff]
        %v1188 = vld [vmem:[%s229 + $0x1b70] sm:$0xff]
        %v1189 = vld [vmem:[%s229 + $0x1b78] sm:$0xff]
        %v1190 = vld [vmem:[%s229 + $0x1b80] sm:$0xff]
        %v1191 = vld [vmem:[%s229 + $0x1b88] sm:$0xff]
        %v1192 = vld [vmem:[%s229 + $0x1b90] sm:$0xff]
        %v1193 = vld [vmem:[%s229 + $0x1b98] sm:$0xff]
        %v1194 = vld [vmem:[%s229 + $0x1ba0] sm:$0xff]
        %v1195 = vld [vmem:[%s229 + $0x1ba8] sm:$0xff]
        %v1196 = vld [vmem:[%s229 + $0x1bb0] sm:$0xff]
        %v1197 = vld [vmem:[%s229 + $0x1bb8] sm:$0xff]
        %v1198 = vld [vmem:[%s229 + $0x1bc0] sm:$0xff]
        %v1199 = vld [vmem:[%s229 + $0x1bc8] sm:$0xff]
        %v1200 = vld [vmem:[%s229 + $0x1bd0] sm:$0xff]
        %v1201 = vld [vmem:[%s229 + $0x1bd8] sm:$0xff]
        %v1202 = vld [vmem:[%s229 + $0x1be0] sm:$0xff]
        %v1203 = vld [vmem:[%s229 + $0x1be8] sm:$0xff]
        %v1204 = vld [vmem:[%s229 + $0x1bf0] sm:$0xff]
        %v1205 = vld [vmem:[%s229 + $0x1bf8] sm:$0xff]
        %v1210 = vcombine.high %v306, %v306
        %v1212 = vunpack.c.l.s4 1966171168
        %v1213 = vunpack.c.0.s8 %v1212
        %v1214 = vlaneseq
        %v1215 = vshrl.u32 %v1214, 7
        %v1216 = vsub.s32 %v1213, %v1215
        %v1217 = vrot.slane %v306, %v1216
        %v1219 = vunpack.c.l.s4 1966171168
        %v1220 = vunpack.c.0.s8 %v1219
        %v1221 = vlaneseq
        %v1222 = vshrl.u32 %v1221, 7
        %v1223 = vsub.s32 %v1220, %v1222
        %v1224 = vrot.slane %v1210, %v1223
        %v1225 = vcombine.high %v1217, %v1217
        %v1226 = vcombine.high %v1224, %v1224
        %v1228 = vunpack.c.l.s4 1966171168
        %v1229 = vunpack.c.0.s8 %v1228
        %v1230 = vlaneseq
        %v1231 = vshrl.u32 %v1230, 7
        %v1232 = vsub.s32 %v1229, %v1231
        %v1233 = vrot.slane %v1217, %v1232
        %v1235 = vunpack.c.l.s4 1966171168
        %v1236 = vunpack.c.0.s8 %v1235
        %v1237 = vlaneseq
        %v1238 = vshrl.u32 %v1237, 7
        %v1239 = vsub.s32 %v1236, %v1238
        %v1240 = vrot.slane %v1224, %v1239
        %v1242 = vunpack.c.l.s4 1966171168
        %v1243 = vunpack.c.0.s8 %v1242
        %v1244 = vlaneseq
        %v1245 = vshrl.u32 %v1244, 7
        %v1246 = vsub.s32 %v1243, %v1245
        %v1247 = vrot.slane %v1225, %v1246
        %v1249 = vunpack.c.l.s4 1966171168
        %v1250 = vunpack.c.0.s8 %v1249
        %v1251 = vlaneseq
        %v1252 = vshrl.u32 %v1251, 7
        %v1253 = vsub.s32 %v1250, %v1252
        %v1254 = vrot.slane %v1226, %v1253
        %v1255 = vcombine.high %v1233, %v1233
        %v1256 = vcombine.high %v1240, %v1240
        %v1257 = vcombine.high %v1247, %v1247
        %v1258 = vcombine.high %v1254, %v1254
        %v1259 = vcombine.high %v307, %v307
        %v1261 = vunpack.c.l.s4 1966171168
        %v1262 = vunpack.c.0.s8 %v1261
        %v1263 = vlaneseq
        %v1264 = vshrl.u32 %v1263, 7
        %v1265 = vsub.s32 %v1262, %v1264
        %v1266 = vrot.slane %v307, %v1265
        %v1268 = vunpack.c.l.s4 1966171168
        %v1269 = vunpack.c.0.s8 %v1268
        %v1270 = vlaneseq
        %v1271 = vshrl.u32 %v1270, 7
        %v1272 = vsub.s32 %v1269, %v1271
        %v1273 = vrot.slane %v1259, %v1272
        %v1274 = vcombine.high %v1266, %v1266
        %v1275 = vcombine.high %v1273, %v1273
        %v1277 = vunpack.c.l.s4 1966171168
        %v1278 = vunpack.c.0.s8 %v1277
        %v1279 = vlaneseq
        %v1280 = vshrl.u32 %v1279, 7
        %v1281 = vsub.s32 %v1278, %v1280
        %v1282 = vrot.slane %v1266, %v1281
        %v1284 = vunpack.c.l.s4 1966171168
        %v1285 = vunpack.c.0.s8 %v1284
        %v1286 = vlaneseq
        %v1287 = vshrl.u32 %v1286, 7
        %v1288 = vsub.s32 %v1285, %v1287
        %v1289 = vrot.slane %v1273, %v1288
        %v1291 = vunpack.c.l.s4 1966171168
        %v1292 = vunpack.c.0.s8 %v1291
        %v1293 = vlaneseq
        %v1294 = vshrl.u32 %v1293, 7
        %v1295 = vsub.s32 %v1292, %v1294
        %v1296 = vrot.slane %v1274, %v1295
        %v1298 = vunpack.c.l.s4 1966171168
        %v1299 = vunpack.c.0.s8 %v1298
        %v1300 = vlaneseq
        %v1301 = vshrl.u32 %v1300, 7
        %v1302 = vsub.s32 %v1299, %v1301
        %v1303 = vrot.slane %v1275, %v1302
        %v1304 = vcombine.high %v1282, %v1282
        %v1305 = vcombine.high %v1289, %v1289
        %v1306 = vcombine.high %v1296, %v1296
        %v1307 = vcombine.high %v1303, %v1303
        %v1308 = vcombine.high %v308, %v308
        %v1310 = vunpack.c.l.s4 1966171168
        %v1311 = vunpack.c.0.s8 %v1310
        %v1312 = vlaneseq
        %v1313 = vshrl.u32 %v1312, 7
        %v1314 = vsub.s32 %v1311, %v1313
        %v1315 = vrot.slane %v308, %v1314
        %v1317 = vunpack.c.l.s4 1966171168
        %v1318 = vunpack.c.0.s8 %v1317
        %v1319 = vlaneseq
        %v1320 = vshrl.u32 %v1319, 7
        %v1321 = vsub.s32 %v1318, %v1320
        %v1322 = vrot.slane %v1308, %v1321
        %v1323 = vcombine.high %v1315, %v1315
        %v1324 = vcombine.high %v1322, %v1322
        %v1326 = vunpack.c.l.s4 1966171168
        %v1327 = vunpack.c.0.s8 %v1326
        %v1328 = vlaneseq
        %v1329 = vshrl.u32 %v1328, 7
        %v1330 = vsub.s32 %v1327, %v1329
        %v1331 = vrot.slane %v1315, %v1330
        %v1333 = vunpack.c.l.s4 1966171168
        %v1334 = vunpack.c.0.s8 %v1333
        %v1335 = vlaneseq
        %v1336 = vshrl.u32 %v1335, 7
        %v1337 = vsub.s32 %v1334, %v1336
        %v1338 = vrot.slane %v1322, %v1337
        %v1340 = vunpack.c.l.s4 1966171168
        %v1341 = vunpack.c.0.s8 %v1340
        %v1342 = vlaneseq
        %v1343 = vshrl.u32 %v1342, 7
        %v1344 = vsub.s32 %v1341, %v1343
        %v1345 = vrot.slane %v1323, %v1344
        %v1347 = vunpack.c.l.s4 1966171168
        %v1348 = vunpack.c.0.s8 %v1347
        %v1349 = vlaneseq
        %v1350 = vshrl.u32 %v1349, 7
        %v1351 = vsub.s32 %v1348, %v1350
        %v1352 = vrot.slane %v1324, %v1351
        %v1353 = vcombine.high %v1331, %v1331
        %v1354 = vcombine.high %v1338, %v1338
        %v1355 = vcombine.high %v1345, %v1345
        %v1356 = vcombine.high %v1352, %v1352
        %v1358 = vunpack.c.l.s4 1966171168
        %v1359 = vunpack.c.0.s8 %v1358
        %v1360 = vlaneseq
        %v1361 = vshrl.u32 %v1360, 7
        %v1362 = vsub.s32 %v1359, %v1361
        %v1363 = vrot.slane %v309, %v1362
        %v1364 = vcombine.high %v1363, %v1363
        %v1366 = vunpack.c.l.s4 1966171168
        %v1367 = vunpack.c.0.s8 %v1366
        %v1368 = vlaneseq
        %v1369 = vshrl.u32 %v1368, 7
        %v1370 = vsub.s32 %v1367, %v1369
        %v1371 = vrot.slane %v1363, %v1370
        %v1373 = vunpack.c.l.s4 1966171168
        %v1374 = vunpack.c.0.s8 %v1373
        %v1375 = vlaneseq
        %v1376 = vshrl.u32 %v1375, 7
        %v1377 = vsub.s32 %v1374, %v1376
        %v1378 = vrot.slane %v1364, %v1377
        %v1379 = vcombine.high %v1371, %v1371
        %v1380 = vcombine.high %v1378, %v1378
        %v2305 = vunpack.c.l.b16 %v310
        %v2306 = vunpack.c.h.b16 %v310
        %v2307 = vunpack.c.l.b16 %v311
        %v2308 = vunpack.c.h.b16 %v311
        %v2309 = vunpack.c.l.b16 %v312
        %v2310 = vunpack.c.h.b16 %v312
        %v2311 = vunpack.c.l.b16 %v313
        %v2312 = vunpack.c.h.b16 %v313
        %v2313 = vunpack.c.l.b16 %v314
        %v2314 = vunpack.c.h.b16 %v314
        %v2315 = vunpack.c.l.b16 %v315
        %v2316 = vunpack.c.h.b16 %v315
        %v2317 = vunpack.c.l.b16 %v316
        %v2318 = vunpack.c.h.b16 %v316
        %v2319 = vunpack.c.l.b16 %v317
        %v2320 = vunpack.c.h.b16 %v317
        %v2321 = vunpack.c.l.b16 %v318
        %v2322 = vunpack.c.h.b16 %v318
        %v2323 = vunpack.c.l.b16 %v319
        %v2324 = vunpack.c.h.b16 %v319
        %v2325 = vunpack.c.l.b16 %v320
        %v2326 = vunpack.c.h.b16 %v320
        %v2327 = vunpack.c.l.b16 %v321
        %v2328 = vunpack.c.h.b16 %v321
        %v2329 = vunpack.c.l.b16 %v322
        %v2330 = vunpack.c.h.b16 %v322
        %v2331 = vunpack.c.l.b16 %v323
        %v2332 = vunpack.c.h.b16 %v323
        %v2333 = vunpack.c.l.b16 %v324
        %v2334 = vunpack.c.h.b16 %v324
        %v2335 = vunpack.c.l.b16 %v325
        %v2336 = vunpack.c.h.b16 %v325
        %v2337 = vunpack.c.l.b16 %v326
        %v2338 = vunpack.c.h.b16 %v326
        %v2339 = vunpack.c.l.b16 %v327
        %v2340 = vunpack.c.h.b16 %v327
        %v2341 = vunpack.c.l.b16 %v328
        %v2342 = vunpack.c.h.b16 %v328
        %v2343 = vunpack.c.l.b16 %v329
        %v2344 = vunpack.c.h.b16 %v329
        %v2345 = vunpack.c.l.b16 %v330
        %v2346 = vunpack.c.h.b16 %v330
        %v2347 = vunpack.c.l.b16 %v331
        %v2348 = vunpack.c.h.b16 %v331
        %v2349 = vunpack.c.l.b16 %v332
        %v2350 = vunpack.c.h.b16 %v332
        %v2351 = vunpack.c.l.b16 %v333
        %v2352 = vunpack.c.h.b16 %v333
        %v2353 = vunpack.c.l.b16 %v334
        %v2354 = vunpack.c.h.b16 %v334
        %v2355 = vunpack.c.l.b16 %v335
        %v2356 = vunpack.c.h.b16 %v335
        %v2357 = vunpack.c.l.b16 %v336
        %v2358 = vunpack.c.h.b16 %v336
        %v2359 = vunpack.c.l.b16 %v337
        %v2360 = vunpack.c.h.b16 %v337
        %v2361 = vunpack.c.l.b16 %v338
        %v2362 = vunpack.c.h.b16 %v338
        %v2363 = vunpack.c.l.b16 %v339
        %v2364 = vunpack.c.h.b16 %v339
        %v2365 = vunpack.c.l.b16 %v340
        %v2366 = vunpack.c.h.b16 %v340
        %v2367 = vunpack.c.l.b16 %v341
        %v2368 = vunpack.c.h.b16 %v341
        %v2369 = vunpack.c.l.b16 %v342
        %v2370 = vunpack.c.h.b16 %v342
        %v2371 = vunpack.c.l.b16 %v343
        %v2372 = vunpack.c.h.b16 %v343
        %v2373 = vunpack.c.l.b16 %v344
        %v2374 = vunpack.c.h.b16 %v344
        %v2375 = vunpack.c.l.b16 %v345
        %v2376 = vunpack.c.h.b16 %v345
        %v2377 = vunpack.c.l.b16 %v346
        %v2378 = vunpack.c.h.b16 %v346
        %v2379 = vunpack.c.l.b16 %v347
        %v2380 = vunpack.c.h.b16 %v347
        %v2381 = vunpack.c.l.b16 %v348
        %v2382 = vunpack.c.h.b16 %v348
        %v2383 = vunpack.c.l.b16 %v349
        %v2384 = vunpack.c.h.b16 %v349
        %v2385 = vunpack.c.l.b16 %v350
        %v2386 = vunpack.c.h.b16 %v350
        %v2387 = vunpack.c.l.b16 %v351
        %v2388 = vunpack.c.h.b16 %v351
        %v2389 = vunpack.c.l.b16 %v352
        %v2390 = vunpack.c.h.b16 %v352
        %v2391 = vunpack.c.l.b16 %v353
        %v2392 = vunpack.c.h.b16 %v353
        %v2393 = vunpack.c.l.b16 %v354
        %v2394 = vunpack.c.h.b16 %v354
        %v2395 = vunpack.c.l.b16 %v355
        %v2396 = vunpack.c.h.b16 %v355
        %v2397 = vunpack.c.l.b16 %v356
        %v2398 = vunpack.c.h.b16 %v356
        %v2399 = vunpack.c.l.b16 %v357
        %v2400 = vunpack.c.h.b16 %v357
        %v2401 = vunpack.c.l.b16 %v358
        %v2402 = vunpack.c.h.b16 %v358
        %v2403 = vunpack.c.l.b16 %v359
        %v2404 = vunpack.c.h.b16 %v359
        %v2405 = vunpack.c.l.b16 %v360
        %v2406 = vunpack.c.h.b16 %v360
        %v2407 = vunpack.c.l.b16 %v361
        %v2408 = vunpack.c.h.b16 %v361
        %v2409 = vunpack.c.l.b16 %v362
        %v2410 = vunpack.c.h.b16 %v362
        %v2411 = vunpack.c.l.b16 %v363
        %v2412 = vunpack.c.h.b16 %v363
        %v2413 = vunpack.c.l.b16 %v364
        %v2414 = vunpack.c.h.b16 %v364
        %v2415 = vunpack.c.l.b16 %v365
        %v2416 = vunpack.c.h.b16 %v365
        %v2417 = vunpack.c.l.b16 %v366
        %v2418 = vunpack.c.h.b16 %v366
        %v2419 = vunpack.c.l.b16 %v367
        %v2420 = vunpack.c.h.b16 %v367
        %v2421 = vunpack.c.l.b16 %v368
        %v2422 = vunpack.c.h.b16 %v368
        %v2423 = vunpack.c.l.b16 %v369
        %v2424 = vunpack.c.h.b16 %v369
        %v2425 = vunpack.c.l.b16 %v370
        %v2426 = vunpack.c.h.b16 %v370
        %v2427 = vunpack.c.l.b16 %v371
        %v2428 = vunpack.c.h.b16 %v371
        %v2429 = vunpack.c.l.b16 %v372
        %v2430 = vunpack.c.h.b16 %v372
        %v2431 = vunpack.c.l.b16 %v373
        %v2432 = vunpack.c.h.b16 %v373
        %v2433 = vunpack.c.l.b16 %v374
        %v2434 = vunpack.c.h.b16 %v374
        %v2435 = vunpack.c.l.b16 %v375
        %v2436 = vunpack.c.h.b16 %v375
        %v2437 = vunpack.c.l.b16 %v376
        %v2438 = vunpack.c.h.b16 %v376
        %v2439 = vunpack.c.l.b16 %v377
        %v2440 = vunpack.c.h.b16 %v377
        %v2441 = vunpack.c.l.b16 %v378
        %v2442 = vunpack.c.h.b16 %v378
        %v2443 = vunpack.c.l.b16 %v379
        %v2444 = vunpack.c.h.b16 %v379
        %v2445 = vunpack.c.l.b16 %v380
        %v2446 = vunpack.c.h.b16 %v380
        %v2447 = vunpack.c.l.b16 %v381
        %v2448 = vunpack.c.h.b16 %v381
        %v2449 = vunpack.c.l.b16 %v382
        %v2450 = vunpack.c.h.b16 %v382
        %v2451 = vunpack.c.l.b16 %v383
        %v2452 = vunpack.c.h.b16 %v383
        %v2453 = vunpack.c.l.b16 %v384
        %v2454 = vunpack.c.h.b16 %v384
        %v2455 = vunpack.c.l.b16 %v385
        %v2456 = vunpack.c.h.b16 %v385
        %v2457 = vunpack.c.l.b16 %v386
        %v2458 = vunpack.c.h.b16 %v386
        %v2459 = vunpack.c.l.b16 %v387
        %v2460 = vunpack.c.h.b16 %v387
        %v2461 = vunpack.c.l.b16 %v388
        %v2462 = vunpack.c.h.b16 %v388
        %v2463 = vunpack.c.l.b16 %v389
        %v2464 = vunpack.c.h.b16 %v389
        %v2465 = vunpack.c.l.b16 %v390
        %v2466 = vunpack.c.h.b16 %v390
        %v2467 = vunpack.c.l.b16 %v391
        %v2468 = vunpack.c.h.b16 %v391
        %v2469 = vunpack.c.l.b16 %v392
        %v2470 = vunpack.c.h.b16 %v392
        %v2471 = vunpack.c.l.b16 %v393
        %v2472 = vunpack.c.h.b16 %v393
        %v2473 = vunpack.c.l.b16 %v394
        %v2474 = vunpack.c.h.b16 %v394
        %v2475 = vunpack.c.l.b16 %v395
        %v2476 = vunpack.c.h.b16 %v395
        %v2477 = vunpack.c.l.b16 %v396
        %v2478 = vunpack.c.h.b16 %v396
        %v2479 = vunpack.c.l.b16 %v397
        %v2480 = vunpack.c.h.b16 %v397
        %v2481 = vunpack.c.l.b16 %v398
        %v2482 = vunpack.c.h.b16 %v398
        %v2483 = vunpack.c.l.b16 %v399
        %v2484 = vunpack.c.h.b16 %v399
        %v2485 = vunpack.c.l.b16 %v400
        %v2486 = vunpack.c.h.b16 %v400
        %v2487 = vunpack.c.l.b16 %v401
        %v2488 = vunpack.c.h.b16 %v401
        %v2489 = vunpack.c.l.b16 %v402
        %v2490 = vunpack.c.h.b16 %v402
        %v2491 = vunpack.c.l.b16 %v403
        %v2492 = vunpack.c.h.b16 %v403
        %v2493 = vunpack.c.l.b16 %v404
        %v2494 = vunpack.c.h.b16 %v404
        %v2495 = vunpack.c.l.b16 %v405
        %v2496 = vunpack.c.h.b16 %v405
        %v2497 = vunpack.c.l.b16 %v406
        %v2498 = vunpack.c.h.b16 %v406
        %v2499 = vunpack.c.l.b16 %v407
        %v2500 = vunpack.c.h.b16 %v407
        %v2501 = vunpack.c.l.b16 %v408
        %v2502 = vunpack.c.h.b16 %v408
        %v2503 = vunpack.c.l.b16 %v409
        %v2504 = vunpack.c.h.b16 %v409
        %v2505 = vunpack.c.l.b16 %v410
        %v2506 = vunpack.c.h.b16 %v410
        %v2507 = vunpack.c.l.b16 %v411
        %v2508 = vunpack.c.h.b16 %v411
        %v2509 = vunpack.c.l.b16 %v412
        %v2510 = vunpack.c.h.b16 %v412
        %v2511 = vunpack.c.l.b16 %v413
        %v2512 = vunpack.c.h.b16 %v413
        %v2513 = vunpack.c.l.b16 %v414
        %v2514 = vunpack.c.h.b16 %v414
        %v2515 = vunpack.c.l.b16 %v415
        %v2516 = vunpack.c.h.b16 %v415
        %v2517 = vunpack.c.l.b16 %v416
        %v2518 = vunpack.c.h.b16 %v416
        %v2519 = vunpack.c.l.b16 %v417
        %v2520 = vunpack.c.h.b16 %v417
        %v2521 = vunpack.c.l.b16 %v418
        %v2522 = vunpack.c.h.b16 %v418
        %v2523 = vunpack.c.l.b16 %v419
        %v2524 = vunpack.c.h.b16 %v419
        %v2525 = vunpack.c.l.b16 %v420
        %v2526 = vunpack.c.h.b16 %v420
        %v2527 = vunpack.c.l.b16 %v421
        %v2528 = vunpack.c.h.b16 %v421
        %v2529 = vunpack.c.l.b16 %v422
        %v2530 = vunpack.c.h.b16 %v422
        %v2531 = vunpack.c.l.b16 %v423
        %v2532 = vunpack.c.h.b16 %v423
        %v2533 = vunpack.c.l.b16 %v424
        %v2534 = vunpack.c.h.b16 %v424
        %v2535 = vunpack.c.l.b16 %v425
        %v2536 = vunpack.c.h.b16 %v425
        %v2537 = vunpack.c.l.b16 %v426
        %v2538 = vunpack.c.h.b16 %v426
        %v2539 = vunpack.c.l.b16 %v427
        %v2540 = vunpack.c.h.b16 %v427
        %v2541 = vunpack.c.l.b16 %v428
        %v2542 = vunpack.c.h.b16 %v428
        %v2543 = vunpack.c.l.b16 %v429
        %v2544 = vunpack.c.h.b16 %v429
        %v2545 = vunpack.c.l.b16 %v430
        %v2546 = vunpack.c.h.b16 %v430
        %v2547 = vunpack.c.l.b16 %v431
        %v2548 = vunpack.c.h.b16 %v431
        %v2549 = vunpack.c.l.b16 %v432
        %v2550 = vunpack.c.h.b16 %v432
        %v2551 = vunpack.c.l.b16 %v433
        %v2552 = vunpack.c.h.b16 %v433
        %v2553 = vunpack.c.l.b16 %v434
        %v2554 = vunpack.c.h.b16 %v434
        %v2555 = vunpack.c.l.b16 %v435
        %v2556 = vunpack.c.h.b16 %v435
        %v2557 = vunpack.c.l.b16 %v436
        %v2558 = vunpack.c.h.b16 %v436
        %v2559 = vunpack.c.l.b16 %v437
        %v2560 = vunpack.c.h.b16 %v437
        %v2561 = vunpack.c.l.b16 %v438
        %v2562 = vunpack.c.h.b16 %v438
        %v2563 = vunpack.c.l.b16 %v439
        %v2564 = vunpack.c.h.b16 %v439
        %v2565 = vunpack.c.l.b16 %v440
        %v2566 = vunpack.c.h.b16 %v440
        %v2567 = vunpack.c.l.b16 %v441
        %v2568 = vunpack.c.h.b16 %v441
        %v2569 = vunpack.c.l.b16 %v442
        %v2570 = vunpack.c.h.b16 %v442
        %v2571 = vunpack.c.l.b16 %v443
        %v2572 = vunpack.c.h.b16 %v443
        %v2573 = vunpack.c.l.b16 %v444
        %v2574 = vunpack.c.h.b16 %v444
        %v2575 = vunpack.c.l.b16 %v445
        %v2576 = vunpack.c.h.b16 %v445
        %v2577 = vunpack.c.l.b16 %v446
        %v2578 = vunpack.c.h.b16 %v446
        %v2579 = vunpack.c.l.b16 %v447
        %v2580 = vunpack.c.h.b16 %v447
        %v2581 = vunpack.c.l.b16 %v448
        %v2582 = vunpack.c.h.b16 %v448
        %v2583 = vunpack.c.l.b16 %v449
        %v2584 = vunpack.c.h.b16 %v449
        %v2585 = vunpack.c.l.b16 %v450
        %v2586 = vunpack.c.h.b16 %v450
        %v2587 = vunpack.c.l.b16 %v451
        %v2588 = vunpack.c.h.b16 %v451
        %v2589 = vunpack.c.l.b16 %v452
        %v2590 = vunpack.c.h.b16 %v452
        %v2591 = vunpack.c.l.b16 %v453
        %v2592 = vunpack.c.h.b16 %v453
        %v2593 = vunpack.c.l.b16 %v454
        %v2594 = vunpack.c.h.b16 %v454
        %v2595 = vunpack.c.l.b16 %v455
        %v2596 = vunpack.c.h.b16 %v455
        %v2597 = vunpack.c.l.b16 %v456
        %v2598 = vunpack.c.h.b16 %v456
        %v2599 = vunpack.c.l.b16 %v457
        %v2600 = vunpack.c.h.b16 %v457
        %v2601 = vunpack.c.l.b16 %v458
        %v2602 = vunpack.c.h.b16 %v458
        %v2603 = vunpack.c.l.b16 %v459
        %v2604 = vunpack.c.h.b16 %v459
        %v2605 = vunpack.c.l.b16 %v460
        %v2606 = vunpack.c.h.b16 %v460
        %v2607 = vunpack.c.l.b16 %v461
        %v2608 = vunpack.c.h.b16 %v461
        %v2609 = vunpack.c.l.b16 %v462
        %v2610 = vunpack.c.h.b16 %v462
        %v2611 = vunpack.c.l.b16 %v463
        %v2612 = vunpack.c.h.b16 %v463
        %v2613 = vunpack.c.l.b16 %v464
        %v2614 = vunpack.c.h.b16 %v464
        %v2615 = vunpack.c.l.b16 %v465
        %v2616 = vunpack.c.h.b16 %v465
        %v2617 = vunpack.c.l.b16 %v466
        %v2618 = vunpack.c.h.b16 %v466
        %v2619 = vunpack.c.l.b16 %v467
        %v2620 = vunpack.c.h.b16 %v467
        %v2621 = vunpack.c.l.b16 %v468
        %v2622 = vunpack.c.h.b16 %v468
        %v2623 = vunpack.c.l.b16 %v469
        %v2624 = vunpack.c.h.b16 %v469
        %v2625 = vunpack.c.l.b16 %v470
        %v2626 = vunpack.c.h.b16 %v470
        %v2627 = vunpack.c.l.b16 %v471
        %v2628 = vunpack.c.h.b16 %v471
        %v2629 = vunpack.c.l.b16 %v472
        %v2630 = vunpack.c.h.b16 %v472
        %v2631 = vunpack.c.l.b16 %v473
        %v2632 = vunpack.c.h.b16 %v473
        %v2633 = vunpack.c.l.b16 %v474
        %v2634 = vunpack.c.h.b16 %v474
        %v2635 = vunpack.c.l.b16 %v475
        %v2636 = vunpack.c.h.b16 %v475
        %v2637 = vunpack.c.l.b16 %v476
        %v2638 = vunpack.c.h.b16 %v476
        %v2639 = vunpack.c.l.b16 %v477
        %v2640 = vunpack.c.h.b16 %v477
        %v2641 = vunpack.c.l.b16 %v478
        %v2642 = vunpack.c.h.b16 %v478
        %v2643 = vunpack.c.l.b16 %v479
        %v2644 = vunpack.c.h.b16 %v479
        %v2645 = vunpack.c.l.b16 %v480
        %v2646 = vunpack.c.h.b16 %v480
        %v2647 = vunpack.c.l.b16 %v481
        %v2648 = vunpack.c.h.b16 %v481
        %v2649 = vunpack.c.l.b16 %v482
        %v2650 = vunpack.c.h.b16 %v482
        %v2651 = vunpack.c.l.b16 %v483
        %v2652 = vunpack.c.h.b16 %v483
        %v2653 = vunpack.c.l.b16 %v484
        %v2654 = vunpack.c.h.b16 %v484
        %v2655 = vunpack.c.l.b16 %v485
        %v2656 = vunpack.c.h.b16 %v485
        %v2657 = vunpack.c.l.b16 %v486
        %v2658 = vunpack.c.h.b16 %v486
        %v2659 = vunpack.c.l.b16 %v487
        %v2660 = vunpack.c.h.b16 %v487
        %v2661 = vunpack.c.l.b16 %v488
        %v2662 = vunpack.c.h.b16 %v488
        %v2663 = vunpack.c.l.b16 %v489
        %v2664 = vunpack.c.h.b16 %v489
        %v2665 = vunpack.c.l.b16 %v490
        %v2666 = vunpack.c.h.b16 %v490
        %v2667 = vunpack.c.l.b16 %v491
        %v2668 = vunpack.c.h.b16 %v491
        %v2669 = vunpack.c.l.b16 %v492
        %v2670 = vunpack.c.h.b16 %v492
        %v2671 = vunpack.c.l.b16 %v493
        %v2672 = vunpack.c.h.b16 %v493
        %v2673 = vunpack.c.l.b16 %v494
        %v2674 = vunpack.c.h.b16 %v494
        %v2675 = vunpack.c.l.b16 %v495
        %v2676 = vunpack.c.h.b16 %v495
        %v2677 = vunpack.c.l.b16 %v496
        %v2678 = vunpack.c.h.b16 %v496
        %v2679 = vunpack.c.l.b16 %v497
        %v2680 = vunpack.c.h.b16 %v497
        %v2681 = vunpack.c.l.b16 %v498
        %v2682 = vunpack.c.h.b16 %v498
        %v2683 = vunpack.c.l.b16 %v499
        %v2684 = vunpack.c.h.b16 %v499
        %v2685 = vunpack.c.l.b16 %v500
        %v2686 = vunpack.c.h.b16 %v500
        %v2687 = vunpack.c.l.b16 %v501
        %v2688 = vunpack.c.h.b16 %v501
        %v2689 = vunpack.c.l.b16 %v502
        %v2690 = vunpack.c.h.b16 %v502
        %v2691 = vunpack.c.l.b16 %v503
        %v2692 = vunpack.c.h.b16 %v503
        %v2693 = vunpack.c.l.b16 %v504
        %v2694 = vunpack.c.h.b16 %v504
        %v2695 = vunpack.c.l.b16 %v505
        %v2696 = vunpack.c.h.b16 %v505
        %v2697 = vunpack.c.l.b16 %v506
        %v2698 = vunpack.c.h.b16 %v506
        %v2699 = vunpack.c.l.b16 %v507
        %v2700 = vunpack.c.h.b16 %v507
        %v2701 = vunpack.c.l.b16 %v508
        %v2702 = vunpack.c.h.b16 %v508
        %v2703 = vunpack.c.l.b16 %v509
        %v2704 = vunpack.c.h.b16 %v509
        %v2705 = vunpack.c.l.b16 %v510
        %v2706 = vunpack.c.h.b16 %v510
        %v2707 = vunpack.c.l.b16 %v511
        %v2708 = vunpack.c.h.b16 %v511
        %v2709 = vunpack.c.l.b16 %v512
        %v2710 = vunpack.c.h.b16 %v512
        %v2711 = vunpack.c.l.b16 %v513
        %v2712 = vunpack.c.h.b16 %v513
        %v2713 = vunpack.c.l.b16 %v514
        %v2714 = vunpack.c.h.b16 %v514
        %v2715 = vunpack.c.l.b16 %v515
        %v2716 = vunpack.c.h.b16 %v515
        %v2717 = vunpack.c.l.b16 %v516
        %v2718 = vunpack.c.h.b16 %v516
        %v2719 = vunpack.c.l.b16 %v517
        %v2720 = vunpack.c.h.b16 %v517
        %v2721 = vunpack.c.l.b16 %v518
        %v2722 = vunpack.c.h.b16 %v518
        %v2723 = vunpack.c.l.b16 %v519
        %v2724 = vunpack.c.h.b16 %v519
        %v2725 = vunpack.c.l.b16 %v520
        %v2726 = vunpack.c.h.b16 %v520
        %v2727 = vunpack.c.l.b16 %v521
        %v2728 = vunpack.c.h.b16 %v521
        %v2729 = vunpack.c.l.b16 %v522
        %v2730 = vunpack.c.h.b16 %v522
        %v2731 = vunpack.c.l.b16 %v523
        %v2732 = vunpack.c.h.b16 %v523
        %v2733 = vunpack.c.l.b16 %v524
        %v2734 = vunpack.c.h.b16 %v524
        %v2735 = vunpack.c.l.b16 %v525
        %v2736 = vunpack.c.h.b16 %v525
        %v2737 = vunpack.c.l.b16 %v526
        %v2738 = vunpack.c.h.b16 %v526
        %v2739 = vunpack.c.l.b16 %v527
        %v2740 = vunpack.c.h.b16 %v527
        %v2741 = vunpack.c.l.b16 %v528
        %v2742 = vunpack.c.h.b16 %v528
        %v2743 = vunpack.c.l.b16 %v529
        %v2744 = vunpack.c.h.b16 %v529
        %v2745 = vunpack.c.l.b16 %v530
        %v2746 = vunpack.c.h.b16 %v530
        %v2747 = vunpack.c.l.b16 %v531
        %v2748 = vunpack.c.h.b16 %v531
        %v2749 = vunpack.c.l.b16 %v532
        %v2750 = vunpack.c.h.b16 %v532
        %v2751 = vunpack.c.l.b16 %v533
        %v2752 = vunpack.c.h.b16 %v533
        %v2753 = vunpack.c.l.b16 %v534
        %v2754 = vunpack.c.h.b16 %v534
        %v2755 = vunpack.c.l.b16 %v535
        %v2756 = vunpack.c.h.b16 %v535
        %v2757 = vunpack.c.l.b16 %v536
        %v2758 = vunpack.c.h.b16 %v536
        %v2759 = vunpack.c.l.b16 %v537
        %v2760 = vunpack.c.h.b16 %v537
        %v2761 = vunpack.c.l.b16 %v538
        %v2762 = vunpack.c.h.b16 %v538
        %v2763 = vunpack.c.l.b16 %v539
        %v2764 = vunpack.c.h.b16 %v539
        %v2765 = vunpack.c.l.b16 %v540
        %v2766 = vunpack.c.h.b16 %v540
        %v2767 = vunpack.c.l.b16 %v541
        %v2768 = vunpack.c.h.b16 %v541
        %v2769 = vunpack.c.l.b16 %v542
        %v2770 = vunpack.c.h.b16 %v542
        %v2771 = vunpack.c.l.b16 %v543
        %v2772 = vunpack.c.h.b16 %v543
        %v2773 = vunpack.c.l.b16 %v544
        %v2774 = vunpack.c.h.b16 %v544
        %v2775 = vunpack.c.l.b16 %v545
        %v2776 = vunpack.c.h.b16 %v545
        %v2777 = vunpack.c.l.b16 %v546
        %v2778 = vunpack.c.h.b16 %v546
        %v2779 = vunpack.c.l.b16 %v547
        %v2780 = vunpack.c.h.b16 %v547
        %v2781 = vunpack.c.l.b16 %v548
        %v2782 = vunpack.c.h.b16 %v548
        %v2783 = vunpack.c.l.b16 %v549
        %v2784 = vunpack.c.h.b16 %v549
        %v2785 = vunpack.c.l.b16 %v550
        %v2786 = vunpack.c.h.b16 %v550
        %v2787 = vunpack.c.l.b16 %v551
        %v2788 = vunpack.c.h.b16 %v551
        %v2789 = vunpack.c.l.b16 %v552
        %v2790 = vunpack.c.h.b16 %v552
        %v2791 = vunpack.c.l.b16 %v553
        %v2792 = vunpack.c.h.b16 %v553
        %v2793 = vunpack.c.l.b16 %v554
        %v2794 = vunpack.c.h.b16 %v554
        %v2795 = vunpack.c.l.b16 %v555
        %v2796 = vunpack.c.h.b16 %v555
        %v2797 = vunpack.c.l.b16 %v556
        %v2798 = vunpack.c.h.b16 %v556
        %v2799 = vunpack.c.l.b16 %v557
        %v2800 = vunpack.c.h.b16 %v557
        %v2801 = vunpack.c.l.b16 %v558
        %v2802 = vunpack.c.h.b16 %v558
        %v2803 = vunpack.c.l.b16 %v559
        %v2804 = vunpack.c.h.b16 %v559
        %v2805 = vunpack.c.l.b16 %v560
        %v2806 = vunpack.c.h.b16 %v560
        %v2807 = vunpack.c.l.b16 %v561
        %v2808 = vunpack.c.h.b16 %v561
        %v2809 = vunpack.c.l.b16 %v562
        %v2810 = vunpack.c.h.b16 %v562
        %v2811 = vunpack.c.l.b16 %v563
        %v2812 = vunpack.c.h.b16 %v563
        %v2813 = vunpack.c.l.b16 %v564
        %v2814 = vunpack.c.h.b16 %v564
        %v2815 = vunpack.c.l.b16 %v565
        %v2816 = vunpack.c.h.b16 %v565
        %v2817 = vunpack.c.l.b16 %v566
        %v2818 = vunpack.c.h.b16 %v566
        %v2819 = vunpack.c.l.b16 %v567
        %v2820 = vunpack.c.h.b16 %v567
        %v2821 = vunpack.c.l.b16 %v568
        %v2822 = vunpack.c.h.b16 %v568
        %v2823 = vunpack.c.l.b16 %v569
        %v2824 = vunpack.c.h.b16 %v569
        %v2825 = vunpack.c.l.b16 %v570
        %v2826 = vunpack.c.h.b16 %v570
        %v2827 = vunpack.c.l.b16 %v571
        %v2828 = vunpack.c.h.b16 %v571
        %v2829 = vunpack.c.l.b16 %v572
        %v2830 = vunpack.c.h.b16 %v572
        %v2831 = vunpack.c.l.b16 %v573
        %v2832 = vunpack.c.h.b16 %v573
        %v2833 = vunpack.c.l.b16 %v574
        %v2834 = vunpack.c.h.b16 %v574
        %v2835 = vunpack.c.l.b16 %v575
        %v2836 = vunpack.c.h.b16 %v575
        %v2837 = vunpack.c.l.b16 %v576
        %v2838 = vunpack.c.h.b16 %v576
        %v2839 = vunpack.c.l.b16 %v577
        %v2840 = vunpack.c.h.b16 %v577
        %v2841 = vunpack.c.l.b16 %v578
        %v2842 = vunpack.c.h.b16 %v578
        %v2843 = vunpack.c.l.b16 %v579
        %v2844 = vunpack.c.h.b16 %v579
        %v2845 = vunpack.c.l.b16 %v580
        %v2846 = vunpack.c.h.b16 %v580
        %v2847 = vunpack.c.l.b16 %v581
        %v2848 = vunpack.c.h.b16 %v581
        %v2849 = vunpack.c.l.b16 %v582
        %v2850 = vunpack.c.h.b16 %v582
        %v2851 = vunpack.c.l.b16 %v583
        %v2852 = vunpack.c.h.b16 %v583
        %v2853 = vunpack.c.l.b16 %v584
        %v2854 = vunpack.c.h.b16 %v584
        %v2855 = vunpack.c.l.b16 %v585
        %v2856 = vunpack.c.h.b16 %v585
        %v2857 = vunpack.c.l.b16 %v586
        %v2858 = vunpack.c.h.b16 %v586
        %v2859 = vunpack.c.l.b16 %v587
        %v2860 = vunpack.c.h.b16 %v587
        %v2861 = vunpack.c.l.b16 %v588
        %v2862 = vunpack.c.h.b16 %v588
        %v2863 = vunpack.c.l.b16 %v589
        %v2864 = vunpack.c.h.b16 %v589
        %v2865 = vunpack.c.l.b16 %v590
        %v2866 = vunpack.c.h.b16 %v590
        %v2867 = vunpack.c.l.b16 %v591
        %v2868 = vunpack.c.h.b16 %v591
        %v2869 = vunpack.c.l.b16 %v592
        %v2870 = vunpack.c.h.b16 %v592
        %v2871 = vunpack.c.l.b16 %v593
        %v2872 = vunpack.c.h.b16 %v593
        %v2873 = vunpack.c.l.b16 %v594
        %v2874 = vunpack.c.h.b16 %v594
        %v2875 = vunpack.c.l.b16 %v595
        %v2876 = vunpack.c.h.b16 %v595
        %v2877 = vunpack.c.l.b16 %v596
        %v2878 = vunpack.c.h.b16 %v596
        %v2879 = vunpack.c.l.b16 %v597
        %v2880 = vunpack.c.h.b16 %v597
        %v2881 = vunpack.c.l.b16 %v598
        %v2882 = vunpack.c.h.b16 %v598
        %v2883 = vunpack.c.l.b16 %v599
        %v2884 = vunpack.c.h.b16 %v599
        %v2885 = vunpack.c.l.b16 %v600
        %v2886 = vunpack.c.h.b16 %v600
        %v2887 = vunpack.c.l.b16 %v601
        %v2888 = vunpack.c.h.b16 %v601
        %v2889 = vunpack.c.l.b16 %v602
        %v2890 = vunpack.c.h.b16 %v602
        %v2891 = vunpack.c.l.b16 %v603
        %v2892 = vunpack.c.h.b16 %v603
        %v2893 = vunpack.c.l.b16 %v604
        %v2894 = vunpack.c.h.b16 %v604
        %v2895 = vunpack.c.l.b16 %v605
        %v2896 = vunpack.c.h.b16 %v605
        %v2897 = vunpack.c.l.b16 %v606
        %v2898 = vunpack.c.h.b16 %v606
        %v2899 = vunpack.c.l.b16 %v607
        %v2900 = vunpack.c.h.b16 %v607
        %v2901 = vunpack.c.l.b16 %v608
        %v2902 = vunpack.c.h.b16 %v608
        %v2903 = vunpack.c.l.b16 %v609
        %v2904 = vunpack.c.h.b16 %v609
        %v2905 = vunpack.c.l.b16 %v610
        %v2906 = vunpack.c.h.b16 %v610
        %v2907 = vunpack.c.l.b16 %v611
        %v2908 = vunpack.c.h.b16 %v611
        %v2909 = vunpack.c.l.b16 %v612
        %v2910 = vunpack.c.h.b16 %v612
        %v2911 = vunpack.c.l.b16 %v613
        %v2912 = vunpack.c.h.b16 %v613
        %v2913 = vunpack.c.l.b16 %v614
        %v2914 = vunpack.c.h.b16 %v614
        %v2915 = vunpack.c.l.b16 %v615
        %v2916 = vunpack.c.h.b16 %v615
        %v2917 = vunpack.c.l.b16 %v616
        %v2918 = vunpack.c.h.b16 %v616
        %v2919 = vunpack.c.l.b16 %v617
        %v2920 = vunpack.c.h.b16 %v617
        %v2921 = vunpack.c.l.b16 %v618
        %v2922 = vunpack.c.h.b16 %v618
        %v2923 = vunpack.c.l.b16 %v619
        %v2924 = vunpack.c.h.b16 %v619
        %v2925 = vunpack.c.l.b16 %v620
        %v2926 = vunpack.c.h.b16 %v620
        %v2927 = vunpack.c.l.b16 %v621
        %v2928 = vunpack.c.h.b16 %v621
        %v2929 = vunpack.c.l.b16 %v622
        %v2930 = vunpack.c.h.b16 %v622
        %v2931 = vunpack.c.l.b16 %v623
        %v2932 = vunpack.c.h.b16 %v623
        %v2933 = vunpack.c.l.b16 %v624
        %v2934 = vunpack.c.h.b16 %v624
        %v2935 = vunpack.c.l.b16 %v625
        %v2936 = vunpack.c.h.b16 %v625
        %v2937 = vunpack.c.l.b16 %v626
        %v2938 = vunpack.c.h.b16 %v626
        %v2939 = vunpack.c.l.b16 %v627
        %v2940 = vunpack.c.h.b16 %v627
        %v2941 = vunpack.c.l.b16 %v628
        %v2942 = vunpack.c.h.b16 %v628
        %v2943 = vunpack.c.l.b16 %v629
        %v2944 = vunpack.c.h.b16 %v629
        %v2945 = vunpack.c.l.b16 %v630
        %v2946 = vunpack.c.h.b16 %v630
        %v2947 = vunpack.c.l.b16 %v631
        %v2948 = vunpack.c.h.b16 %v631
        %v2949 = vunpack.c.l.b16 %v632
        %v2950 = vunpack.c.h.b16 %v632
        %v2951 = vunpack.c.l.b16 %v633
        %v2952 = vunpack.c.h.b16 %v633
        %v2953 = vunpack.c.l.b16 %v634
        %v2954 = vunpack.c.h.b16 %v634
        %v2955 = vunpack.c.l.b16 %v635
        %v2956 = vunpack.c.h.b16 %v635
        %v2957 = vunpack.c.l.b16 %v636
        %v2958 = vunpack.c.h.b16 %v636
        %v2959 = vunpack.c.l.b16 %v637
        %v2960 = vunpack.c.h.b16 %v637
        %v2961 = vunpack.c.l.b16 %v638
        %v2962 = vunpack.c.h.b16 %v638
        %v2963 = vunpack.c.l.b16 %v639
        %v2964 = vunpack.c.h.b16 %v639
        %v2965 = vunpack.c.l.b16 %v640
        %v2966 = vunpack.c.h.b16 %v640
        %v2967 = vunpack.c.l.b16 %v641
        %v2968 = vunpack.c.h.b16 %v641
        %v2969 = vunpack.c.l.b16 %v642
        %v2970 = vunpack.c.h.b16 %v642
        %v2971 = vunpack.c.l.b16 %v643
        %v2972 = vunpack.c.h.b16 %v643
        %v2973 = vunpack.c.l.b16 %v644
        %v2974 = vunpack.c.h.b16 %v644
        %v2975 = vunpack.c.l.b16 %v645
        %v2976 = vunpack.c.h.b16 %v645
        %v2977 = vunpack.c.l.b16 %v646
        %v2978 = vunpack.c.h.b16 %v646
        %v2979 = vunpack.c.l.b16 %v647
        %v2980 = vunpack.c.h.b16 %v647
        %v2981 = vunpack.c.l.b16 %v648
        %v2982 = vunpack.c.h.b16 %v648
        %v2983 = vunpack.c.l.b16 %v649
        %v2984 = vunpack.c.h.b16 %v649
        %v2985 = vunpack.c.l.b16 %v650
        %v2986 = vunpack.c.h.b16 %v650
        %v2987 = vunpack.c.l.b16 %v651
        %v2988 = vunpack.c.h.b16 %v651
        %v2989 = vunpack.c.l.b16 %v652
        %v2990 = vunpack.c.h.b16 %v652
        %v2991 = vunpack.c.l.b16 %v653
        %v2992 = vunpack.c.h.b16 %v653
        %v2993 = vunpack.c.l.b16 %v654
        %v2994 = vunpack.c.h.b16 %v654
        %v2995 = vunpack.c.l.b16 %v655
        %v2996 = vunpack.c.h.b16 %v655
        %v2997 = vunpack.c.l.b16 %v656
        %v2998 = vunpack.c.h.b16 %v656
        %v2999 = vunpack.c.l.b16 %v657
        %v3000 = vunpack.c.h.b16 %v657
        %v3001 = vunpack.c.l.b16 %v658
        %v3002 = vunpack.c.h.b16 %v658
        %v3003 = vunpack.c.l.b16 %v659
        %v3004 = vunpack.c.h.b16 %v659
        %v3005 = vunpack.c.l.b16 %v660
        %v3006 = vunpack.c.h.b16 %v660
        %v3007 = vunpack.c.l.b16 %v661
        %v3008 = vunpack.c.h.b16 %v661
        %v3009 = vunpack.c.l.b16 %v662
        %v3010 = vunpack.c.h.b16 %v662
        %v3011 = vunpack.c.l.b16 %v663
        %v3012 = vunpack.c.h.b16 %v663
        %v3013 = vunpack.c.l.b16 %v664
        %v3014 = vunpack.c.h.b16 %v664
        %v3015 = vunpack.c.l.b16 %v665
        %v3016 = vunpack.c.h.b16 %v665
        %v3017 = vunpack.c.l.b16 %v666
        %v3018 = vunpack.c.h.b16 %v666
        %v3019 = vunpack.c.l.b16 %v667
        %v3020 = vunpack.c.h.b16 %v667
        %v3021 = vunpack.c.l.b16 %v668
        %v3022 = vunpack.c.h.b16 %v668
        %v3023 = vunpack.c.l.b16 %v669
        %v3024 = vunpack.c.h.b16 %v669
        %v3025 = vunpack.c.l.b16 %v670
        %v3026 = vunpack.c.h.b16 %v670
        %v3027 = vunpack.c.l.b16 %v671
        %v3028 = vunpack.c.h.b16 %v671
        %v3029 = vunpack.c.l.b16 %v672
        %v3030 = vunpack.c.h.b16 %v672
        %v3031 = vunpack.c.l.b16 %v673
        %v3032 = vunpack.c.h.b16 %v673
        %v3033 = vunpack.c.l.b16 %v674
        %v3034 = vunpack.c.h.b16 %v674
        %v3035 = vunpack.c.l.b16 %v675
        %v3036 = vunpack.c.h.b16 %v675
        %v3037 = vunpack.c.l.b16 %v676
        %v3038 = vunpack.c.h.b16 %v676
        %v3039 = vunpack.c.l.b16 %v677
        %v3040 = vunpack.c.h.b16 %v677
        %v3041 = vunpack.c.l.b16 %v678
        %v3042 = vunpack.c.h.b16 %v678
        %v3043 = vunpack.c.l.b16 %v679
        %v3044 = vunpack.c.h.b16 %v679
        %v3045 = vunpack.c.l.b16 %v680
        %v3046 = vunpack.c.h.b16 %v680
        %v3047 = vunpack.c.l.b16 %v681
        %v3048 = vunpack.c.h.b16 %v681
        %v3049 = vunpack.c.l.b16 %v682
        %v3050 = vunpack.c.h.b16 %v682
        %v3051 = vunpack.c.l.b16 %v683
        %v3052 = vunpack.c.h.b16 %v683
        %v3053 = vunpack.c.l.b16 %v684
        %v3054 = vunpack.c.h.b16 %v684
        %v3055 = vunpack.c.l.b16 %v685
        %v3056 = vunpack.c.h.b16 %v685
        %v3057 = vunpack.c.l.b16 %v686
        %v3058 = vunpack.c.h.b16 %v686
        %v3059 = vunpack.c.l.b16 %v687
        %v3060 = vunpack.c.h.b16 %v687
        %v3061 = vunpack.c.l.b16 %v688
        %v3062 = vunpack.c.h.b16 %v688
        %v3063 = vunpack.c.l.b16 %v689
        %v3064 = vunpack.c.h.b16 %v689
        %v3065 = vunpack.c.l.b16 %v690
        %v3066 = vunpack.c.h.b16 %v690
        %v3067 = vunpack.c.l.b16 %v691
        %v3068 = vunpack.c.h.b16 %v691
        %v3069 = vunpack.c.l.b16 %v692
        %v3070 = vunpack.c.h.b16 %v692
        %v3071 = vunpack.c.l.b16 %v693
        %v3072 = vunpack.c.h.b16 %v693
        %v3073 = vunpack.c.l.b16 %v694
        %v3074 = vunpack.c.h.b16 %v694
        %v3075 = vunpack.c.l.b16 %v695
        %v3076 = vunpack.c.h.b16 %v695
        %v3077 = vunpack.c.l.b16 %v696
        %v3078 = vunpack.c.h.b16 %v696
        %v3079 = vunpack.c.l.b16 %v697
        %v3080 = vunpack.c.h.b16 %v697
        %v3081 = vunpack.c.l.b16 %v698
        %v3082 = vunpack.c.h.b16 %v698
        %v3083 = vunpack.c.l.b16 %v699
        %v3084 = vunpack.c.h.b16 %v699
        %v3085 = vunpack.c.l.b16 %v700
        %v3086 = vunpack.c.h.b16 %v700
        %v3087 = vunpack.c.l.b16 %v701
        %v3088 = vunpack.c.h.b16 %v701
        %v3089 = vunpack.c.l.b16 %v702
        %v3090 = vunpack.c.h.b16 %v702
        %v3091 = vunpack.c.l.b16 %v703
        %v3092 = vunpack.c.h.b16 %v703
        %v3093 = vunpack.c.l.b16 %v704
        %v3094 = vunpack.c.h.b16 %v704
        %v3095 = vunpack.c.l.b16 %v705
        %v3096 = vunpack.c.h.b16 %v705
        %v3097 = vunpack.c.l.b16 %v706
        %v3098 = vunpack.c.h.b16 %v706
        %v3099 = vunpack.c.l.b16 %v707
        %v3100 = vunpack.c.h.b16 %v707
        %v3101 = vunpack.c.l.b16 %v708
        %v3102 = vunpack.c.h.b16 %v708
        %v3103 = vunpack.c.l.b16 %v709
        %v3104 = vunpack.c.h.b16 %v709
        %v3105 = vunpack.c.l.b16 %v710
        %v3106 = vunpack.c.h.b16 %v710
        %v3107 = vunpack.c.l.b16 %v711
        %v3108 = vunpack.c.h.b16 %v711
        %v3109 = vunpack.c.l.b16 %v712
        %v3110 = vunpack.c.h.b16 %v712
        %v3111 = vunpack.c.l.b16 %v713
        %v3112 = vunpack.c.h.b16 %v713
        %v3113 = vunpack.c.l.b16 %v714
        %v3114 = vunpack.c.h.b16 %v714
        %v3115 = vunpack.c.l.b16 %v715
        %v3116 = vunpack.c.h.b16 %v715
        %v3117 = vunpack.c.l.b16 %v716
        %v3118 = vunpack.c.h.b16 %v716
        %v3119 = vunpack.c.l.b16 %v717
        %v3120 = vunpack.c.h.b16 %v717
        %v3121 = vunpack.c.l.b16 %v718
        %v3122 = vunpack.c.h.b16 %v718
        %v3123 = vunpack.c.l.b16 %v719
        %v3124 = vunpack.c.h.b16 %v719
        %v3125 = vunpack.c.l.b16 %v720
        %v3126 = vunpack.c.h.b16 %v720
        %v3127 = vunpack.c.l.b16 %v721
        %v3128 = vunpack.c.h.b16 %v721
        %v3129 = vunpack.c.l.b16 %v722
        %v3130 = vunpack.c.h.b16 %v722
        %v3131 = vunpack.c.l.b16 %v723
        %v3132 = vunpack.c.h.b16 %v723
        %v3133 = vunpack.c.l.b16 %v724
        %v3134 = vunpack.c.h.b16 %v724
        %v3135 = vunpack.c.l.b16 %v725
        %v3136 = vunpack.c.h.b16 %v725
        %v3137 = vunpack.c.l.b16 %v726
        %v3138 = vunpack.c.h.b16 %v726
        %v3139 = vunpack.c.l.b16 %v727
        %v3140 = vunpack.c.h.b16 %v727
        %v3141 = vunpack.c.l.b16 %v728
        %v3142 = vunpack.c.h.b16 %v728
        %v3143 = vunpack.c.l.b16 %v729
        %v3144 = vunpack.c.h.b16 %v729
        %v3145 = vunpack.c.l.b16 %v730
        %v3146 = vunpack.c.h.b16 %v730
        %v3147 = vunpack.c.l.b16 %v731
        %v3148 = vunpack.c.h.b16 %v731
        %v3149 = vunpack.c.l.b16 %v732
        %v3150 = vunpack.c.h.b16 %v732
        %v3151 = vunpack.c.l.b16 %v733
        %v3152 = vunpack.c.h.b16 %v733
        %v3153 = vunpack.c.l.b16 %v734
        %v3154 = vunpack.c.h.b16 %v734
        %v3155 = vunpack.c.l.b16 %v735
        %v3156 = vunpack.c.h.b16 %v735
        %v3157 = vunpack.c.l.b16 %v736
        %v3158 = vunpack.c.h.b16 %v736
        %v3159 = vunpack.c.l.b16 %v737
        %v3160 = vunpack.c.h.b16 %v737
        %v3161 = vunpack.c.l.b16 %v738
        %v3162 = vunpack.c.h.b16 %v738
        %v3163 = vunpack.c.l.b16 %v739
        %v3164 = vunpack.c.h.b16 %v739
        %v3165 = vunpack.c.l.b16 %v740
        %v3166 = vunpack.c.h.b16 %v740
        %v3167 = vunpack.c.l.b16 %v741
        %v3168 = vunpack.c.h.b16 %v741
        %v3169 = vunpack.c.l.b16 %v742
        %v3170 = vunpack.c.h.b16 %v742
        %v3171 = vunpack.c.l.b16 %v743
        %v3172 = vunpack.c.h.b16 %v743
        %v3173 = vunpack.c.l.b16 %v744
        %v3174 = vunpack.c.h.b16 %v744
        %v3175 = vunpack.c.l.b16 %v745
        %v3176 = vunpack.c.h.b16 %v745
        %v3177 = vunpack.c.l.b16 %v746
        %v3178 = vunpack.c.h.b16 %v746
        %v3179 = vunpack.c.l.b16 %v747
        %v3180 = vunpack.c.h.b16 %v747
        %v3181 = vunpack.c.l.b16 %v748
        %v3182 = vunpack.c.h.b16 %v748
        %v3183 = vunpack.c.l.b16 %v749
        %v3184 = vunpack.c.h.b16 %v749
        %v3185 = vunpack.c.l.b16 %v750
        %v3186 = vunpack.c.h.b16 %v750
        %v3187 = vunpack.c.l.b16 %v751
        %v3188 = vunpack.c.h.b16 %v751
        %v3189 = vunpack.c.l.b16 %v752
        %v3190 = vunpack.c.h.b16 %v752
        %v3191 = vunpack.c.l.b16 %v753
        %v3192 = vunpack.c.h.b16 %v753
        %v3193 = vunpack.c.l.b16 %v754
        %v3194 = vunpack.c.h.b16 %v754
        %v3195 = vunpack.c.l.b16 %v755
        %v3196 = vunpack.c.h.b16 %v755
        %v3197 = vunpack.c.l.b16 %v756
        %v3198 = vunpack.c.h.b16 %v756
        %v3199 = vunpack.c.l.b16 %v757
        %v3200 = vunpack.c.h.b16 %v757
        %v3201 = vunpack.c.l.b16 %v758
        %v3202 = vunpack.c.h.b16 %v758
        %v3203 = vunpack.c.l.b16 %v759
        %v3204 = vunpack.c.h.b16 %v759
        %v3205 = vunpack.c.l.b16 %v760
        %v3206 = vunpack.c.h.b16 %v760
        %v3207 = vunpack.c.l.b16 %v761
        %v3208 = vunpack.c.h.b16 %v761
        %v3209 = vunpack.c.l.b16 %v762
        %v3210 = vunpack.c.h.b16 %v762
        %v3211 = vunpack.c.l.b16 %v763
        %v3212 = vunpack.c.h.b16 %v763
        %v3213 = vunpack.c.l.b16 %v764
        %v3214 = vunpack.c.h.b16 %v764
        %v3215 = vunpack.c.l.b16 %v765
        %v3216 = vunpack.c.h.b16 %v765
        %v3217 = vunpack.c.l.b16 %v766
        %v3218 = vunpack.c.h.b16 %v766
        %v3219 = vunpack.c.l.b16 %v767
        %v3220 = vunpack.c.h.b16 %v767
        %v3221 = vunpack.c.l.b16 %v768
        %v3222 = vunpack.c.h.b16 %v768
        %v3223 = vunpack.c.l.b16 %v769
        %v3224 = vunpack.c.h.b16 %v769
        %v3225 = vunpack.c.l.b16 %v770
        %v3226 = vunpack.c.h.b16 %v770
        %v3227 = vunpack.c.l.b16 %v771
        %v3228 = vunpack.c.h.b16 %v771
        %v3229 = vunpack.c.l.b16 %v772
        %v3230 = vunpack.c.h.b16 %v772
        %v3231 = vunpack.c.l.b16 %v773
        %v3232 = vunpack.c.h.b16 %v773
        %v3233 = vunpack.c.l.b16 %v774
        %v3234 = vunpack.c.h.b16 %v774
        %v3235 = vunpack.c.l.b16 %v775
        %v3236 = vunpack.c.h.b16 %v775
        %v3237 = vunpack.c.l.b16 %v776
        %v3238 = vunpack.c.h.b16 %v776
        %v3239 = vunpack.c.l.b16 %v777
        %v3240 = vunpack.c.h.b16 %v777
        %v3241 = vunpack.c.l.b16 %v778
        %v3242 = vunpack.c.h.b16 %v778
        %v3243 = vunpack.c.l.b16 %v779
        %v3244 = vunpack.c.h.b16 %v779
        %v3245 = vunpack.c.l.b16 %v780
        %v3246 = vunpack.c.h.b16 %v780
        %v3247 = vunpack.c.l.b16 %v781
        %v3248 = vunpack.c.h.b16 %v781
        %v3249 = vunpack.c.l.b16 %v782
        %v3250 = vunpack.c.h.b16 %v782
        %v3251 = vunpack.c.l.b16 %v783
        %v3252 = vunpack.c.h.b16 %v783
        %v3253 = vunpack.c.l.b16 %v784
        %v3254 = vunpack.c.h.b16 %v784
        %v3255 = vunpack.c.l.b16 %v785
        %v3256 = vunpack.c.h.b16 %v785
        %v3257 = vunpack.c.l.b16 %v786
        %v3258 = vunpack.c.h.b16 %v786
        %v3259 = vunpack.c.l.b16 %v787
        %v3260 = vunpack.c.h.b16 %v787
        %v3261 = vunpack.c.l.b16 %v788
        %v3262 = vunpack.c.h.b16 %v788
        %v3263 = vunpack.c.l.b16 %v789
        %v3264 = vunpack.c.h.b16 %v789
        %v3265 = vunpack.c.l.b16 %v790
        %v3266 = vunpack.c.h.b16 %v790
        %v3267 = vunpack.c.l.b16 %v791
        %v3268 = vunpack.c.h.b16 %v791
        %v3269 = vunpack.c.l.b16 %v792
        %v3270 = vunpack.c.h.b16 %v792
        %v3271 = vunpack.c.l.b16 %v793
        %v3272 = vunpack.c.h.b16 %v793
        %v3273 = vunpack.c.l.b16 %v794
        %v3274 = vunpack.c.h.b16 %v794
        %v3275 = vunpack.c.l.b16 %v795
        %v3276 = vunpack.c.h.b16 %v795
        %v3277 = vunpack.c.l.b16 %v796
        %v3278 = vunpack.c.h.b16 %v796
        %v3279 = vunpack.c.l.b16 %v797
        %v3280 = vunpack.c.h.b16 %v797
        %v3281 = vunpack.c.l.b16 %v798
        %v3282 = vunpack.c.h.b16 %v798
        %v3283 = vunpack.c.l.b16 %v799
        %v3284 = vunpack.c.h.b16 %v799
        %v3285 = vunpack.c.l.b16 %v800
        %v3286 = vunpack.c.h.b16 %v800
        %v3287 = vunpack.c.l.b16 %v801
        %v3288 = vunpack.c.h.b16 %v801
        %v3289 = vunpack.c.l.b16 %v802
        %v3290 = vunpack.c.h.b16 %v802
        %v3291 = vunpack.c.l.b16 %v803
        %v3292 = vunpack.c.h.b16 %v803
        %v3293 = vunpack.c.l.b16 %v804
        %v3294 = vunpack.c.h.b16 %v804
        %v3295 = vunpack.c.l.b16 %v805
        %v3296 = vunpack.c.h.b16 %v805
        %v3297 = vunpack.c.l.b16 %v806
        %v3298 = vunpack.c.h.b16 %v806
        %v3299 = vunpack.c.l.b16 %v807
        %v3300 = vunpack.c.h.b16 %v807
        %v3301 = vunpack.c.l.b16 %v808
        %v3302 = vunpack.c.h.b16 %v808
        %v3303 = vunpack.c.l.b16 %v809
        %v3304 = vunpack.c.h.b16 %v809
        %v3305 = vunpack.c.l.b16 %v810
        %v3306 = vunpack.c.h.b16 %v810
        %v3307 = vunpack.c.l.b16 %v811
        %v3308 = vunpack.c.h.b16 %v811
        %v3309 = vunpack.c.l.b16 %v812
        %v3310 = vunpack.c.h.b16 %v812
        %v3311 = vunpack.c.l.b16 %v813
        %v3312 = vunpack.c.h.b16 %v813
        %v3313 = vunpack.c.l.b16 %v814
        %v3314 = vunpack.c.h.b16 %v814
        %v3315 = vunpack.c.l.b16 %v815
        %v3316 = vunpack.c.h.b16 %v815
        %v3317 = vunpack.c.l.b16 %v816
        %v3318 = vunpack.c.h.b16 %v816
        %v3319 = vunpack.c.l.b16 %v817
        %v3320 = vunpack.c.h.b16 %v817
        %v3321 = vunpack.c.l.b16 %v818
        %v3322 = vunpack.c.h.b16 %v818
        %v3323 = vunpack.c.l.b16 %v819
        %v3324 = vunpack.c.h.b16 %v819
        %v3325 = vunpack.c.l.b16 %v820
        %v3326 = vunpack.c.h.b16 %v820
        %v3327 = vunpack.c.l.b16 %v821
        %v3328 = vunpack.c.h.b16 %v821
        %v3329 = vunpack.c.l.b16 %v822
        %v3330 = vunpack.c.h.b16 %v822
        %v3331 = vunpack.c.l.b16 %v823
        %v3332 = vunpack.c.h.b16 %v823
        %v3333 = vunpack.c.l.b16 %v824
        %v3334 = vunpack.c.h.b16 %v824
        %v3335 = vunpack.c.l.b16 %v825
        %v3336 = vunpack.c.h.b16 %v825
        %v3337 = vunpack.c.l.b16 %v826
        %v3338 = vunpack.c.h.b16 %v826
        %v3339 = vunpack.c.l.b16 %v827
        %v3340 = vunpack.c.h.b16 %v827
        %v3341 = vunpack.c.l.b16 %v828
        %v3342 = vunpack.c.h.b16 %v828
        %v3343 = vunpack.c.l.b16 %v829
        %v3344 = vunpack.c.h.b16 %v829
        %v3345 = vunpack.c.l.b16 %v830
        %v3346 = vunpack.c.h.b16 %v830
        %v3347 = vunpack.c.l.b16 %v831
        %v3348 = vunpack.c.h.b16 %v831
        %v3349 = vunpack.c.l.b16 %v832
        %v3350 = vunpack.c.h.b16 %v832
        %v3351 = vunpack.c.l.b16 %v833
        %v3352 = vunpack.c.h.b16 %v833
        %v3353 = vunpack.c.l.b16 %v834
        %v3354 = vunpack.c.h.b16 %v834
        %v3355 = vunpack.c.l.b16 %v835
        %v3356 = vunpack.c.h.b16 %v835
        %v3357 = vunpack.c.l.b16 %v836
        %v3358 = vunpack.c.h.b16 %v836
        %v3359 = vunpack.c.l.b16 %v837
        %v3360 = vunpack.c.h.b16 %v837
        %v3361 = vunpack.c.l.b16 %v838
        %v3362 = vunpack.c.h.b16 %v838
        %v3363 = vunpack.c.l.b16 %v839
        %v3364 = vunpack.c.h.b16 %v839
        %v3365 = vunpack.c.l.b16 %v840
        %v3366 = vunpack.c.h.b16 %v840
        %v3367 = vunpack.c.l.b16 %v841
        %v3368 = vunpack.c.h.b16 %v841
        %v3369 = vunpack.c.l.b16 %v842
        %v3370 = vunpack.c.h.b16 %v842
        %v3371 = vunpack.c.l.b16 %v843
        %v3372 = vunpack.c.h.b16 %v843
        %v3373 = vunpack.c.l.b16 %v844
        %v3374 = vunpack.c.h.b16 %v844
        %v3375 = vunpack.c.l.b16 %v845
        %v3376 = vunpack.c.h.b16 %v845
        %v3377 = vunpack.c.l.b16 %v846
        %v3378 = vunpack.c.h.b16 %v846
        %v3379 = vunpack.c.l.b16 %v847
        %v3380 = vunpack.c.h.b16 %v847
        %v3381 = vunpack.c.l.b16 %v848
        %v3382 = vunpack.c.h.b16 %v848
        %v3383 = vunpack.c.l.b16 %v849
        %v3384 = vunpack.c.h.b16 %v849
        %v3385 = vunpack.c.l.b16 %v850
        %v3386 = vunpack.c.h.b16 %v850
        %v3387 = vunpack.c.l.b16 %v851
        %v3388 = vunpack.c.h.b16 %v851
        %v3389 = vunpack.c.l.b16 %v852
        %v3390 = vunpack.c.h.b16 %v852
        %v3391 = vunpack.c.l.b16 %v853
        %v3392 = vunpack.c.h.b16 %v853
        %v3393 = vunpack.c.l.b16 %v854
        %v3394 = vunpack.c.h.b16 %v854
        %v3395 = vunpack.c.l.b16 %v855
        %v3396 = vunpack.c.h.b16 %v855
        %v3397 = vunpack.c.l.b16 %v856
        %v3398 = vunpack.c.h.b16 %v856
        %v3399 = vunpack.c.l.b16 %v857
        %v3400 = vunpack.c.h.b16 %v857
        %v3401 = vunpack.c.l.b16 %v858
        %v3402 = vunpack.c.h.b16 %v858
        %v3403 = vunpack.c.l.b16 %v859
        %v3404 = vunpack.c.h.b16 %v859
        %v3405 = vunpack.c.l.b16 %v860
        %v3406 = vunpack.c.h.b16 %v860
        %v3407 = vunpack.c.l.b16 %v861
        %v3408 = vunpack.c.h.b16 %v861
        %v3409 = vunpack.c.l.b16 %v862
        %v3410 = vunpack.c.h.b16 %v862
        %v3411 = vunpack.c.l.b16 %v863
        %v3412 = vunpack.c.h.b16 %v863
        %v3413 = vunpack.c.l.b16 %v864
        %v3414 = vunpack.c.h.b16 %v864
        %v3415 = vunpack.c.l.b16 %v865
        %v3416 = vunpack.c.h.b16 %v865
        %v3417 = vunpack.c.l.b16 %v866
        %v3418 = vunpack.c.h.b16 %v866
        %v3419 = vunpack.c.l.b16 %v867
        %v3420 = vunpack.c.h.b16 %v867
        %v3421 = vunpack.c.l.b16 %v868
        %v3422 = vunpack.c.h.b16 %v868
        %v3423 = vunpack.c.l.b16 %v869
        %v3424 = vunpack.c.h.b16 %v869
        %v3425 = vunpack.c.l.b16 %v870
        %v3426 = vunpack.c.h.b16 %v870
        %v3427 = vunpack.c.l.b16 %v871
        %v3428 = vunpack.c.h.b16 %v871
        %v3429 = vunpack.c.l.b16 %v872
        %v3430 = vunpack.c.h.b16 %v872
        %v3431 = vunpack.c.l.b16 %v873
        %v3432 = vunpack.c.h.b16 %v873
        %v3433 = vunpack.c.l.b16 %v874
        %v3434 = vunpack.c.h.b16 %v874
        %v3435 = vunpack.c.l.b16 %v875
        %v3436 = vunpack.c.h.b16 %v875
        %v3437 = vunpack.c.l.b16 %v876
        %v3438 = vunpack.c.h.b16 %v876
        %v3439 = vunpack.c.l.b16 %v877
        %v3440 = vunpack.c.h.b16 %v877
        %v3441 = vunpack.c.l.b16 %v878
        %v3442 = vunpack.c.h.b16 %v878
        %v3443 = vunpack.c.l.b16 %v879
        %v3444 = vunpack.c.h.b16 %v879
        %v3445 = vunpack.c.l.b16 %v880
        %v3446 = vunpack.c.h.b16 %v880
        %v3447 = vunpack.c.l.b16 %v881
        %v3448 = vunpack.c.h.b16 %v881
        %v3449 = vunpack.c.l.b16 %v882
        %v3450 = vunpack.c.h.b16 %v882
        %v3451 = vunpack.c.l.b16 %v883
        %v3452 = vunpack.c.h.b16 %v883
        %v3453 = vunpack.c.l.b16 %v884
        %v3454 = vunpack.c.h.b16 %v884
        %v3455 = vunpack.c.l.b16 %v885
        %v3456 = vunpack.c.h.b16 %v885
        %v3457 = vunpack.c.l.b16 %v886
        %v3458 = vunpack.c.h.b16 %v886
        %v3459 = vunpack.c.l.b16 %v887
        %v3460 = vunpack.c.h.b16 %v887
        %v3461 = vunpack.c.l.b16 %v888
        %v3462 = vunpack.c.h.b16 %v888
        %v3463 = vunpack.c.l.b16 %v889
        %v3464 = vunpack.c.h.b16 %v889
        %v3465 = vunpack.c.l.b16 %v890
        %v3466 = vunpack.c.h.b16 %v890
        %v3467 = vunpack.c.l.b16 %v891
        %v3468 = vunpack.c.h.b16 %v891
        %v3469 = vunpack.c.l.b16 %v892
        %v3470 = vunpack.c.h.b16 %v892
        %v3471 = vunpack.c.l.b16 %v893
        %v3472 = vunpack.c.h.b16 %v893
        %v3473 = vunpack.c.l.b16 %v894
        %v3474 = vunpack.c.h.b16 %v894
        %v3475 = vunpack.c.l.b16 %v895
        %v3476 = vunpack.c.h.b16 %v895
        %v3477 = vunpack.c.l.b16 %v896
        %v3478 = vunpack.c.h.b16 %v896
        %v3479 = vunpack.c.l.b16 %v897
        %v3480 = vunpack.c.h.b16 %v897
        %v3481 = vunpack.c.l.b16 %v898
        %v3482 = vunpack.c.h.b16 %v898
        %v3483 = vunpack.c.l.b16 %v899
        %v3484 = vunpack.c.h.b16 %v899
        %v3485 = vunpack.c.l.b16 %v900
        %v3486 = vunpack.c.h.b16 %v900
        %v3487 = vunpack.c.l.b16 %v901
        %v3488 = vunpack.c.h.b16 %v901
        %v3489 = vunpack.c.l.b16 %v902
        %v3490 = vunpack.c.h.b16 %v902
        %v3491 = vunpack.c.l.b16 %v903
        %v3492 = vunpack.c.h.b16 %v903
        %v3493 = vunpack.c.l.b16 %v904
        %v3494 = vunpack.c.h.b16 %v904
        %v3495 = vunpack.c.l.b16 %v905
        %v3496 = vunpack.c.h.b16 %v905
        %v3497 = vunpack.c.l.b16 %v906
        %v3498 = vunpack.c.h.b16 %v906
        %v3499 = vunpack.c.l.b16 %v907
        %v3500 = vunpack.c.h.b16 %v907
        %v3501 = vunpack.c.l.b16 %v908
        %v3502 = vunpack.c.h.b16 %v908
        %v3503 = vunpack.c.l.b16 %v909
        %v3504 = vunpack.c.h.b16 %v909
        %v3505 = vunpack.c.l.b16 %v910
        %v3506 = vunpack.c.h.b16 %v910
        %v3507 = vunpack.c.l.b16 %v911
        %v3508 = vunpack.c.h.b16 %v911
        %v3509 = vunpack.c.l.b16 %v912
        %v3510 = vunpack.c.h.b16 %v912
        %v3511 = vunpack.c.l.b16 %v913
        %v3512 = vunpack.c.h.b16 %v913
        %v3513 = vunpack.c.l.b16 %v914
        %v3514 = vunpack.c.h.b16 %v914
        %v3515 = vunpack.c.l.b16 %v915
        %v3516 = vunpack.c.h.b16 %v915
        %v3517 = vunpack.c.l.b16 %v916
        %v3518 = vunpack.c.h.b16 %v916
        %v3519 = vunpack.c.l.b16 %v917
        %v3520 = vunpack.c.h.b16 %v917
        %v3521 = vunpack.c.l.b16 %v918
        %v3522 = vunpack.c.h.b16 %v918
        %v3523 = vunpack.c.l.b16 %v919
        %v3524 = vunpack.c.h.b16 %v919
        %v3525 = vunpack.c.l.b16 %v920
        %v3526 = vunpack.c.h.b16 %v920
        %v3527 = vunpack.c.l.b16 %v921
        %v3528 = vunpack.c.h.b16 %v921
        %v3529 = vunpack.c.l.b16 %v922
        %v3530 = vunpack.c.h.b16 %v922
        %v3531 = vunpack.c.l.b16 %v923
        %v3532 = vunpack.c.h.b16 %v923
        %v3533 = vunpack.c.l.b16 %v924
        %v3534 = vunpack.c.h.b16 %v924
        %v3535 = vunpack.c.l.b16 %v925
        %v3536 = vunpack.c.h.b16 %v925
        %v3537 = vunpack.c.l.b16 %v926
        %v3538 = vunpack.c.h.b16 %v926
        %v3539 = vunpack.c.l.b16 %v927
        %v3540 = vunpack.c.h.b16 %v927
        %v3541 = vunpack.c.l.b16 %v928
        %v3542 = vunpack.c.h.b16 %v928
        %v3543 = vunpack.c.l.b16 %v929
        %v3544 = vunpack.c.h.b16 %v929
        %v3545 = vunpack.c.l.b16 %v930
        %v3546 = vunpack.c.h.b16 %v930
        %v3547 = vunpack.c.l.b16 %v931
        %v3548 = vunpack.c.h.b16 %v931
        %v3549 = vunpack.c.l.b16 %v932
        %v3550 = vunpack.c.h.b16 %v932
        %v3551 = vunpack.c.l.b16 %v933
        %v3552 = vunpack.c.h.b16 %v933
        %v3553 = vunpack.c.l.b16 %v934
        %v3554 = vunpack.c.h.b16 %v934
        %v3555 = vunpack.c.l.b16 %v935
        %v3556 = vunpack.c.h.b16 %v935
        %v3557 = vunpack.c.l.b16 %v936
        %v3558 = vunpack.c.h.b16 %v936
        %v3559 = vunpack.c.l.b16 %v937
        %v3560 = vunpack.c.h.b16 %v937
        %v3561 = vunpack.c.l.b16 %v938
        %v3562 = vunpack.c.h.b16 %v938
        %v3563 = vunpack.c.l.b16 %v939
        %v3564 = vunpack.c.h.b16 %v939
        %v3565 = vunpack.c.l.b16 %v940
        %v3566 = vunpack.c.h.b16 %v940
        %v3567 = vunpack.c.l.b16 %v941
        %v3568 = vunpack.c.h.b16 %v941
        %v3569 = vunpack.c.l.b16 %v942
        %v3570 = vunpack.c.h.b16 %v942
        %v3571 = vunpack.c.l.b16 %v943
        %v3572 = vunpack.c.h.b16 %v943
        %v3573 = vunpack.c.l.b16 %v944
        %v3574 = vunpack.c.h.b16 %v944
        %v3575 = vunpack.c.l.b16 %v945
        %v3576 = vunpack.c.h.b16 %v945
        %v3577 = vunpack.c.l.b16 %v946
        %v3578 = vunpack.c.h.b16 %v946
        %v3579 = vunpack.c.l.b16 %v947
        %v3580 = vunpack.c.h.b16 %v947
        %v3581 = vunpack.c.l.b16 %v948
        %v3582 = vunpack.c.h.b16 %v948
        %v3583 = vunpack.c.l.b16 %v949
        %v3584 = vunpack.c.h.b16 %v949
        %v3585 = vunpack.c.l.b16 %v950
        %v3586 = vunpack.c.h.b16 %v950
        %v3587 = vunpack.c.l.b16 %v951
        %v3588 = vunpack.c.h.b16 %v951
        %v3589 = vunpack.c.l.b16 %v952
        %v3590 = vunpack.c.h.b16 %v952
        %v3591 = vunpack.c.l.b16 %v953
        %v3592 = vunpack.c.h.b16 %v953
        %v3593 = vunpack.c.l.b16 %v954
        %v3594 = vunpack.c.h.b16 %v954
        %v3595 = vunpack.c.l.b16 %v955
        %v3596 = vunpack.c.h.b16 %v955
        %v3597 = vunpack.c.l.b16 %v956
        %v3598 = vunpack.c.h.b16 %v956
        %v3599 = vunpack.c.l.b16 %v957
        %v3600 = vunpack.c.h.b16 %v957
        %v3601 = vunpack.c.l.b16 %v958
        %v3602 = vunpack.c.h.b16 %v958
        %v3603 = vunpack.c.l.b16 %v959
        %v3604 = vunpack.c.h.b16 %v959
        %v3605 = vunpack.c.l.b16 %v960
        %v3606 = vunpack.c.h.b16 %v960
        %v3607 = vunpack.c.l.b16 %v961
        %v3608 = vunpack.c.h.b16 %v961
        %v3609 = vunpack.c.l.b16 %v962
        %v3610 = vunpack.c.h.b16 %v962
        %v3611 = vunpack.c.l.b16 %v963
        %v3612 = vunpack.c.h.b16 %v963
        %v3613 = vunpack.c.l.b16 %v964
        %v3614 = vunpack.c.h.b16 %v964
        %v3615 = vunpack.c.l.b16 %v965
        %v3616 = vunpack.c.h.b16 %v965
        %v3617 = vunpack.c.l.b16 %v966
        %v3618 = vunpack.c.h.b16 %v966
        %v3619 = vunpack.c.l.b16 %v967
        %v3620 = vunpack.c.h.b16 %v967
        %v3621 = vunpack.c.l.b16 %v968
        %v3622 = vunpack.c.h.b16 %v968
        %v3623 = vunpack.c.l.b16 %v969
        %v3624 = vunpack.c.h.b16 %v969
        %v3625 = vunpack.c.l.b16 %v970
        %v3626 = vunpack.c.h.b16 %v970
        %v3627 = vunpack.c.l.b16 %v971
        %v3628 = vunpack.c.h.b16 %v971
        %v3629 = vunpack.c.l.b16 %v972
        %v3630 = vunpack.c.h.b16 %v972
        %v3631 = vunpack.c.l.b16 %v973
        %v3632 = vunpack.c.h.b16 %v973
        %v3633 = vunpack.c.l.b16 %v974
        %v3634 = vunpack.c.h.b16 %v974
        %v3635 = vunpack.c.l.b16 %v975
        %v3636 = vunpack.c.h.b16 %v975
        %v3637 = vunpack.c.l.b16 %v976
        %v3638 = vunpack.c.h.b16 %v976
        %v3639 = vunpack.c.l.b16 %v977
        %v3640 = vunpack.c.h.b16 %v977
        %v3641 = vunpack.c.l.b16 %v978
        %v3642 = vunpack.c.h.b16 %v978
        %v3643 = vunpack.c.l.b16 %v979
        %v3644 = vunpack.c.h.b16 %v979
        %v3645 = vunpack.c.l.b16 %v980
        %v3646 = vunpack.c.h.b16 %v980
        %v3647 = vunpack.c.l.b16 %v981
        %v3648 = vunpack.c.h.b16 %v981
        %v3649 = vunpack.c.l.b16 %v982
        %v3650 = vunpack.c.h.b16 %v982
        %v3651 = vunpack.c.l.b16 %v983
        %v3652 = vunpack.c.h.b16 %v983
        %v3653 = vunpack.c.l.b16 %v984
        %v3654 = vunpack.c.h.b16 %v984
        %v3655 = vunpack.c.l.b16 %v985
        %v3656 = vunpack.c.h.b16 %v985
        %v3657 = vunpack.c.l.b16 %v986
        %v3658 = vunpack.c.h.b16 %v986
        %v3659 = vunpack.c.l.b16 %v987
        %v3660 = vunpack.c.h.b16 %v987
        %v3661 = vunpack.c.l.b16 %v988
        %v3662 = vunpack.c.h.b16 %v988
        %v3663 = vunpack.c.l.b16 %v989
        %v3664 = vunpack.c.h.b16 %v989
        %v3665 = vunpack.c.l.b16 %v990
        %v3666 = vunpack.c.h.b16 %v990
        %v3667 = vunpack.c.l.b16 %v991
        %v3668 = vunpack.c.h.b16 %v991
        %v3669 = vunpack.c.l.b16 %v992
        %v3670 = vunpack.c.h.b16 %v992
        %v3671 = vunpack.c.l.b16 %v993
        %v3672 = vunpack.c.h.b16 %v993
        %v3673 = vunpack.c.l.b16 %v994
        %v3674 = vunpack.c.h.b16 %v994
        %v3675 = vunpack.c.l.b16 %v995
        %v3676 = vunpack.c.h.b16 %v995
        %v3677 = vunpack.c.l.b16 %v996
        %v3678 = vunpack.c.h.b16 %v996
        %v3679 = vunpack.c.l.b16 %v997
        %v3680 = vunpack.c.h.b16 %v997
        %v3681 = vunpack.c.l.b16 %v998
        %v3682 = vunpack.c.h.b16 %v998
        %v3683 = vunpack.c.l.b16 %v999
        %v3684 = vunpack.c.h.b16 %v999
        %v3685 = vunpack.c.l.b16 %v1000
        %v3686 = vunpack.c.h.b16 %v1000
        %v3687 = vunpack.c.l.b16 %v1001
        %v3688 = vunpack.c.h.b16 %v1001
        %v3689 = vunpack.c.l.b16 %v1002
        %v3690 = vunpack.c.h.b16 %v1002
        %v3691 = vunpack.c.l.b16 %v1003
        %v3692 = vunpack.c.h.b16 %v1003
        %v3693 = vunpack.c.l.b16 %v1004
        %v3694 = vunpack.c.h.b16 %v1004
        %v3695 = vunpack.c.l.b16 %v1005
        %v3696 = vunpack.c.h.b16 %v1005
        %v3697 = vunpack.c.l.b16 %v1006
        %v3698 = vunpack.c.h.b16 %v1006
        %v3699 = vunpack.c.l.b16 %v1007
        %v3700 = vunpack.c.h.b16 %v1007
        %v3701 = vunpack.c.l.b16 %v1008
        %v3702 = vunpack.c.h.b16 %v1008
        %v3703 = vunpack.c.l.b16 %v1009
        %v3704 = vunpack.c.h.b16 %v1009
        %v3705 = vunpack.c.l.b16 %v1010
        %v3706 = vunpack.c.h.b16 %v1010
        %v3707 = vunpack.c.l.b16 %v1011
        %v3708 = vunpack.c.h.b16 %v1011
        %v3709 = vunpack.c.l.b16 %v1012
        %v3710 = vunpack.c.h.b16 %v1012
        %v3711 = vunpack.c.l.b16 %v1013
        %v3712 = vunpack.c.h.b16 %v1013
        %v3713 = vunpack.c.l.b16 %v1014
        %v3714 = vunpack.c.h.b16 %v1014
        %v3715 = vunpack.c.l.b16 %v1015
        %v3716 = vunpack.c.h.b16 %v1015
        %v3717 = vunpack.c.l.b16 %v1016
        %v3718 = vunpack.c.h.b16 %v1016
        %v3719 = vunpack.c.l.b16 %v1017
        %v3720 = vunpack.c.h.b16 %v1017
        %v3721 = vunpack.c.l.b16 %v1018
        %v3722 = vunpack.c.h.b16 %v1018
        %v3723 = vunpack.c.l.b16 %v1019
        %v3724 = vunpack.c.h.b16 %v1019
        %v3725 = vunpack.c.l.b16 %v1020
        %v3726 = vunpack.c.h.b16 %v1020
        %v3727 = vunpack.c.l.b16 %v1021
        %v3728 = vunpack.c.h.b16 %v1021
        %v3729 = vunpack.c.l.b16 %v1022
        %v3730 = vunpack.c.h.b16 %v1022
        %v3731 = vunpack.c.l.b16 %v1023
        %v3732 = vunpack.c.h.b16 %v1023
        %v3733 = vunpack.c.l.b16 %v1024
        %v3734 = vunpack.c.h.b16 %v1024
        %v3735 = vunpack.c.l.b16 %v1025
        %v3736 = vunpack.c.h.b16 %v1025
        %v3737 = vunpack.c.l.b16 %v1026
        %v3738 = vunpack.c.h.b16 %v1026
        %v3739 = vunpack.c.l.b16 %v1027
        %v3740 = vunpack.c.h.b16 %v1027
        %v3741 = vunpack.c.l.b16 %v1028
        %v3742 = vunpack.c.h.b16 %v1028
        %v3743 = vunpack.c.l.b16 %v1029
        %v3744 = vunpack.c.h.b16 %v1029
        %v3745 = vunpack.c.l.b16 %v1030
        %v3746 = vunpack.c.h.b16 %v1030
        %v3747 = vunpack.c.l.b16 %v1031
        %v3748 = vunpack.c.h.b16 %v1031
        %v3749 = vunpack.c.l.b16 %v1032
        %v3750 = vunpack.c.h.b16 %v1032
        %v3751 = vunpack.c.l.b16 %v1033
        %v3752 = vunpack.c.h.b16 %v1033
        %v3753 = vunpack.c.l.b16 %v1034
        %v3754 = vunpack.c.h.b16 %v1034
        %v3755 = vunpack.c.l.b16 %v1035
        %v3756 = vunpack.c.h.b16 %v1035
        %v3757 = vunpack.c.l.b16 %v1036
        %v3758 = vunpack.c.h.b16 %v1036
        %v3759 = vunpack.c.l.b16 %v1037
        %v3760 = vunpack.c.h.b16 %v1037
        %v3761 = vunpack.c.l.b16 %v1038
        %v3762 = vunpack.c.h.b16 %v1038
        %v3763 = vunpack.c.l.b16 %v1039
        %v3764 = vunpack.c.h.b16 %v1039
        %v3765 = vunpack.c.l.b16 %v1040
        %v3766 = vunpack.c.h.b16 %v1040
        %v3767 = vunpack.c.l.b16 %v1041
        %v3768 = vunpack.c.h.b16 %v1041
        %v3769 = vunpack.c.l.b16 %v1042
        %v3770 = vunpack.c.h.b16 %v1042
        %v3771 = vunpack.c.l.b16 %v1043
        %v3772 = vunpack.c.h.b16 %v1043
        %v3773 = vunpack.c.l.b16 %v1044
        %v3774 = vunpack.c.h.b16 %v1044
        %v3775 = vunpack.c.l.b16 %v1045
        %v3776 = vunpack.c.h.b16 %v1045
        %v3777 = vunpack.c.l.b16 %v1046
        %v3778 = vunpack.c.h.b16 %v1046
        %v3779 = vunpack.c.l.b16 %v1047
        %v3780 = vunpack.c.h.b16 %v1047
        %v3781 = vunpack.c.l.b16 %v1048
        %v3782 = vunpack.c.h.b16 %v1048
        %v3783 = vunpack.c.l.b16 %v1049
        %v3784 = vunpack.c.h.b16 %v1049
        %v3785 = vunpack.c.l.b16 %v1050
        %v3786 = vunpack.c.h.b16 %v1050
        %v3787 = vunpack.c.l.b16 %v1051
        %v3788 = vunpack.c.h.b16 %v1051
        %v3789 = vunpack.c.l.b16 %v1052
        %v3790 = vunpack.c.h.b16 %v1052
        %v3791 = vunpack.c.l.b16 %v1053
        %v3792 = vunpack.c.h.b16 %v1053
        %v3793 = vunpack.c.l.b16 %v1054
        %v3794 = vunpack.c.h.b16 %v1054
        %v3795 = vunpack.c.l.b16 %v1055
        %v3796 = vunpack.c.h.b16 %v1055
        %v3797 = vunpack.c.l.b16 %v1056
        %v3798 = vunpack.c.h.b16 %v1056
        %v3799 = vunpack.c.l.b16 %v1057
        %v3800 = vunpack.c.h.b16 %v1057
        %v3801 = vunpack.c.l.b16 %v1058
        %v3802 = vunpack.c.h.b16 %v1058
        %v3803 = vunpack.c.l.b16 %v1059
        %v3804 = vunpack.c.h.b16 %v1059
        %v3805 = vunpack.c.l.b16 %v1060
        %v3806 = vunpack.c.h.b16 %v1060
        %v3807 = vunpack.c.l.b16 %v1061
        %v3808 = vunpack.c.h.b16 %v1061
        %v3809 = vunpack.c.l.b16 %v1062
        %v3810 = vunpack.c.h.b16 %v1062
        %v3811 = vunpack.c.l.b16 %v1063
        %v3812 = vunpack.c.h.b16 %v1063
        %v3813 = vunpack.c.l.b16 %v1064
        %v3814 = vunpack.c.h.b16 %v1064
        %v3815 = vunpack.c.l.b16 %v1065
        %v3816 = vunpack.c.h.b16 %v1065
        %v3817 = vunpack.c.l.b16 %v1066
        %v3818 = vunpack.c.h.b16 %v1066
        %v3819 = vunpack.c.l.b16 %v1067
        %v3820 = vunpack.c.h.b16 %v1067
        %v3821 = vunpack.c.l.b16 %v1068
        %v3822 = vunpack.c.h.b16 %v1068
        %v3823 = vunpack.c.l.b16 %v1069
        %v3824 = vunpack.c.h.b16 %v1069
        %v3825 = vunpack.c.l.b16 %v1070
        %v3826 = vunpack.c.h.b16 %v1070
        %v3827 = vunpack.c.l.b16 %v1071
        %v3828 = vunpack.c.h.b16 %v1071
        %v3829 = vunpack.c.l.b16 %v1072
        %v3830 = vunpack.c.h.b16 %v1072
        %v3831 = vunpack.c.l.b16 %v1073
        %v3832 = vunpack.c.h.b16 %v1073
        %v3833 = vunpack.c.l.b16 %v1074
        %v3834 = vunpack.c.h.b16 %v1074
        %v3835 = vunpack.c.l.b16 %v1075
        %v3836 = vunpack.c.h.b16 %v1075
        %v3837 = vunpack.c.l.b16 %v1076
        %v3838 = vunpack.c.h.b16 %v1076
        %v3839 = vunpack.c.l.b16 %v1077
        %v3840 = vunpack.c.h.b16 %v1077
        %v3841 = vunpack.c.l.b16 %v1078
        %v3842 = vunpack.c.h.b16 %v1078
        %v3843 = vunpack.c.l.b16 %v1079
        %v3844 = vunpack.c.h.b16 %v1079
        %v3845 = vunpack.c.l.b16 %v1080
        %v3846 = vunpack.c.h.b16 %v1080
        %v3847 = vunpack.c.l.b16 %v1081
        %v3848 = vunpack.c.h.b16 %v1081
        %v3849 = vunpack.c.l.b16 %v1082
        %v3850 = vunpack.c.h.b16 %v1082
        %v3851 = vunpack.c.l.b16 %v1083
        %v3852 = vunpack.c.h.b16 %v1083
        %v3853 = vunpack.c.l.b16 %v1084
        %v3854 = vunpack.c.h.b16 %v1084
        %v3855 = vunpack.c.l.b16 %v1085
        %v3856 = vunpack.c.h.b16 %v1085
        %v3857 = vunpack.c.l.b16 %v1086
        %v3858 = vunpack.c.h.b16 %v1086
        %v3859 = vunpack.c.l.b16 %v1087
        %v3860 = vunpack.c.h.b16 %v1087
        %v3861 = vunpack.c.l.b16 %v1088
        %v3862 = vunpack.c.h.b16 %v1088
        %v3863 = vunpack.c.l.b16 %v1089
        %v3864 = vunpack.c.h.b16 %v1089
        %v3865 = vunpack.c.l.b16 %v1090
        %v3866 = vunpack.c.h.b16 %v1090
        %v3867 = vunpack.c.l.b16 %v1091
        %v3868 = vunpack.c.h.b16 %v1091
        %v3869 = vunpack.c.l.b16 %v1092
        %v3870 = vunpack.c.h.b16 %v1092
        %v3871 = vunpack.c.l.b16 %v1093
        %v3872 = vunpack.c.h.b16 %v1093
        %v3873 = vunpack.c.l.b16 %v1094
        %v3874 = vunpack.c.h.b16 %v1094
        %v3875 = vunpack.c.l.b16 %v1095
        %v3876 = vunpack.c.h.b16 %v1095
        %v3877 = vunpack.c.l.b16 %v1096
        %v3878 = vunpack.c.h.b16 %v1096
        %v3879 = vunpack.c.l.b16 %v1097
        %v3880 = vunpack.c.h.b16 %v1097
        %v3881 = vunpack.c.l.b16 %v1098
        %v3882 = vunpack.c.h.b16 %v1098
        %v3883 = vunpack.c.l.b16 %v1099
        %v3884 = vunpack.c.h.b16 %v1099
        %v3885 = vunpack.c.l.b16 %v1100
        %v3886 = vunpack.c.h.b16 %v1100
        %v3887 = vunpack.c.l.b16 %v1101
        %v3888 = vunpack.c.h.b16 %v1101
        %v3889 = vunpack.c.l.b16 %v1102
        %v3890 = vunpack.c.h.b16 %v1102
        %v3891 = vunpack.c.l.b16 %v1103
        %v3892 = vunpack.c.h.b16 %v1103
        %v3893 = vunpack.c.l.b16 %v1104
        %v3894 = vunpack.c.h.b16 %v1104
        %v3895 = vunpack.c.l.b16 %v1105
        %v3896 = vunpack.c.h.b16 %v1105
        %v3897 = vunpack.c.l.b16 %v1106
        %v3898 = vunpack.c.h.b16 %v1106
        %v3899 = vunpack.c.l.b16 %v1107
        %v3900 = vunpack.c.h.b16 %v1107
        %v3901 = vunpack.c.l.b16 %v1108
        %v3902 = vunpack.c.h.b16 %v1108
        %v3903 = vunpack.c.l.b16 %v1109
        %v3904 = vunpack.c.h.b16 %v1109
        %v3905 = vunpack.c.l.b16 %v1110
        %v3906 = vunpack.c.h.b16 %v1110
        %v3907 = vunpack.c.l.b16 %v1111
        %v3908 = vunpack.c.h.b16 %v1111
        %v3909 = vunpack.c.l.b16 %v1112
        %v3910 = vunpack.c.h.b16 %v1112
        %v3911 = vunpack.c.l.b16 %v1113
        %v3912 = vunpack.c.h.b16 %v1113
        %v3913 = vunpack.c.l.b16 %v1114
        %v3914 = vunpack.c.h.b16 %v1114
        %v3915 = vunpack.c.l.b16 %v1115
        %v3916 = vunpack.c.h.b16 %v1115
        %v3917 = vunpack.c.l.b16 %v1116
        %v3918 = vunpack.c.h.b16 %v1116
        %v3919 = vunpack.c.l.b16 %v1117
        %v3920 = vunpack.c.h.b16 %v1117
        %v3921 = vunpack.c.l.b16 %v1118
        %v3922 = vunpack.c.h.b16 %v1118
        %v3923 = vunpack.c.l.b16 %v1119
        %v3924 = vunpack.c.h.b16 %v1119
        %v3925 = vunpack.c.l.b16 %v1120
        %v3926 = vunpack.c.h.b16 %v1120
        %v3927 = vunpack.c.l.b16 %v1121
        %v3928 = vunpack.c.h.b16 %v1121
        %v3929 = vunpack.c.l.b16 %v1122
        %v3930 = vunpack.c.h.b16 %v1122
        %v3931 = vunpack.c.l.b16 %v1123
        %v3932 = vunpack.c.h.b16 %v1123
        %v3933 = vunpack.c.l.b16 %v1124
        %v3934 = vunpack.c.h.b16 %v1124
        %v3935 = vunpack.c.l.b16 %v1125
        %v3936 = vunpack.c.h.b16 %v1125
        %v3937 = vunpack.c.l.b16 %v1126
        %v3938 = vunpack.c.h.b16 %v1126
        %v3939 = vunpack.c.l.b16 %v1127
        %v3940 = vunpack.c.h.b16 %v1127
        %v3941 = vunpack.c.l.b16 %v1128
        %v3942 = vunpack.c.h.b16 %v1128
        %v3943 = vunpack.c.l.b16 %v1129
        %v3944 = vunpack.c.h.b16 %v1129
        %v3945 = vunpack.c.l.b16 %v1130
        %v3946 = vunpack.c.h.b16 %v1130
        %v3947 = vunpack.c.l.b16 %v1131
        %v3948 = vunpack.c.h.b16 %v1131
        %v3949 = vunpack.c.l.b16 %v1132
        %v3950 = vunpack.c.h.b16 %v1132
        %v3951 = vunpack.c.l.b16 %v1133
        %v3952 = vunpack.c.h.b16 %v1133
        %v3953 = vunpack.c.l.b16 %v1134
        %v3954 = vunpack.c.h.b16 %v1134
        %v3955 = vunpack.c.l.b16 %v1135
        %v3956 = vunpack.c.h.b16 %v1135
        %v3957 = vunpack.c.l.b16 %v1136
        %v3958 = vunpack.c.h.b16 %v1136
        %v3959 = vunpack.c.l.b16 %v1137
        %v3960 = vunpack.c.h.b16 %v1137
        %v3961 = vunpack.c.l.b16 %v1138
        %v3962 = vunpack.c.h.b16 %v1138
        %v3963 = vunpack.c.l.b16 %v1139
        %v3964 = vunpack.c.h.b16 %v1139
        %v3965 = vunpack.c.l.b16 %v1140
        %v3966 = vunpack.c.h.b16 %v1140
        %v3967 = vunpack.c.l.b16 %v1141
        %v3968 = vunpack.c.h.b16 %v1141
        %v3969 = vunpack.c.l.b16 %v1142
        %v3970 = vunpack.c.h.b16 %v1142
        %v3971 = vunpack.c.l.b16 %v1143
        %v3972 = vunpack.c.h.b16 %v1143
        %v3973 = vunpack.c.l.b16 %v1144
        %v3974 = vunpack.c.h.b16 %v1144
        %v3975 = vunpack.c.l.b16 %v1145
        %v3976 = vunpack.c.h.b16 %v1145
        %v3977 = vunpack.c.l.b16 %v1146
        %v3978 = vunpack.c.h.b16 %v1146
        %v3979 = vunpack.c.l.b16 %v1147
        %v3980 = vunpack.c.h.b16 %v1147
        %v3981 = vunpack.c.l.b16 %v1148
        %v3982 = vunpack.c.h.b16 %v1148
        %v3983 = vunpack.c.l.b16 %v1149
        %v3984 = vunpack.c.h.b16 %v1149
        %v3985 = vunpack.c.l.b16 %v1150
        %v3986 = vunpack.c.h.b16 %v1150
        %v3987 = vunpack.c.l.b16 %v1151
        %v3988 = vunpack.c.h.b16 %v1151
        %v3989 = vunpack.c.l.b16 %v1152
        %v3990 = vunpack.c.h.b16 %v1152
        %v3991 = vunpack.c.l.b16 %v1153
        %v3992 = vunpack.c.h.b16 %v1153
        %v3993 = vunpack.c.l.b16 %v1154
        %v3994 = vunpack.c.h.b16 %v1154
        %v3995 = vunpack.c.l.b16 %v1155
        %v3996 = vunpack.c.h.b16 %v1155
        %v3997 = vunpack.c.l.b16 %v1156
        %v3998 = vunpack.c.h.b16 %v1156
        %v3999 = vunpack.c.l.b16 %v1157
        %v4000 = vunpack.c.h.b16 %v1157
        %v4001 = vunpack.c.l.b16 %v1158
        %v4002 = vunpack.c.h.b16 %v1158
        %v4003 = vunpack.c.l.b16 %v1159
        %v4004 = vunpack.c.h.b16 %v1159
        %v4005 = vunpack.c.l.b16 %v1160
        %v4006 = vunpack.c.h.b16 %v1160
        %v4007 = vunpack.c.l.b16 %v1161
        %v4008 = vunpack.c.h.b16 %v1161
        %v4009 = vunpack.c.l.b16 %v1162
        %v4010 = vunpack.c.h.b16 %v1162
        %v4011 = vunpack.c.l.b16 %v1163
        %v4012 = vunpack.c.h.b16 %v1163
        %v4013 = vunpack.c.l.b16 %v1164
        %v4014 = vunpack.c.h.b16 %v1164
        %v4015 = vunpack.c.l.b16 %v1165
        %v4016 = vunpack.c.h.b16 %v1165
        %v4017 = vunpack.c.l.b16 %v1166
        %v4018 = vunpack.c.h.b16 %v1166
        %v4019 = vunpack.c.l.b16 %v1167
        %v4020 = vunpack.c.h.b16 %v1167
        %v4021 = vunpack.c.l.b16 %v1168
        %v4022 = vunpack.c.h.b16 %v1168
        %v4023 = vunpack.c.l.b16 %v1169
        %v4024 = vunpack.c.h.b16 %v1169
        %v4025 = vunpack.c.l.b16 %v1170
        %v4026 = vunpack.c.h.b16 %v1170
        %v4027 = vunpack.c.l.b16 %v1171
        %v4028 = vunpack.c.h.b16 %v1171
        %v4029 = vunpack.c.l.b16 %v1172
        %v4030 = vunpack.c.h.b16 %v1172
        %v4031 = vunpack.c.l.b16 %v1173
        %v4032 = vunpack.c.h.b16 %v1173
        %v4033 = vunpack.c.l.b16 %v1174
        %v4034 = vunpack.c.h.b16 %v1174
        %v4035 = vunpack.c.l.b16 %v1175
        %v4036 = vunpack.c.h.b16 %v1175
        %v4037 = vunpack.c.l.b16 %v1176
        %v4038 = vunpack.c.h.b16 %v1176
        %v4039 = vunpack.c.l.b16 %v1177
        %v4040 = vunpack.c.h.b16 %v1177
        %v4041 = vunpack.c.l.b16 %v1178
        %v4042 = vunpack.c.h.b16 %v1178
        %v4043 = vunpack.c.l.b16 %v1179
        %v4044 = vunpack.c.h.b16 %v1179
        %v4045 = vunpack.c.l.b16 %v1180
        %v4046 = vunpack.c.h.b16 %v1180
        %v4047 = vunpack.c.l.b16 %v1181
        %v4048 = vunpack.c.h.b16 %v1181
        %v4049 = vunpack.c.l.b16 %v1182
        %v4050 = vunpack.c.h.b16 %v1182
        %v4051 = vunpack.c.l.b16 %v1183
        %v4052 = vunpack.c.h.b16 %v1183
        %v4053 = vunpack.c.l.b16 %v1184
        %v4054 = vunpack.c.h.b16 %v1184
        %v4055 = vunpack.c.l.b16 %v1185
        %v4056 = vunpack.c.h.b16 %v1185
        %v4057 = vunpack.c.l.b16 %v1186
        %v4058 = vunpack.c.h.b16 %v1186
        %v4059 = vunpack.c.l.b16 %v1187
        %v4060 = vunpack.c.h.b16 %v1187
        %v4061 = vunpack.c.l.b16 %v1188
        %v4062 = vunpack.c.h.b16 %v1188
        %v4063 = vunpack.c.l.b16 %v1189
        %v4064 = vunpack.c.h.b16 %v1189
        %v4065 = vunpack.c.l.b16 %v1190
        %v4066 = vunpack.c.h.b16 %v1190
        %v4067 = vunpack.c.l.b16 %v1191
        %v4068 = vunpack.c.h.b16 %v1191
        %v4069 = vunpack.c.l.b16 %v1192
        %v4070 = vunpack.c.h.b16 %v1192
        %v4071 = vunpack.c.l.b16 %v1193
        %v4072 = vunpack.c.h.b16 %v1193
        %v4073 = vunpack.c.l.b16 %v1194
        %v4074 = vunpack.c.h.b16 %v1194
        %v4075 = vunpack.c.l.b16 %v1195
        %v4076 = vunpack.c.h.b16 %v1195
        %v4077 = vunpack.c.l.b16 %v1196
        %v4078 = vunpack.c.h.b16 %v1196
        %v4079 = vunpack.c.l.b16 %v1197
        %v4080 = vunpack.c.h.b16 %v1197
        %v4081 = vunpack.c.l.b16 %v1198
        %v4082 = vunpack.c.h.b16 %v1198
        %v4083 = vunpack.c.l.b16 %v1199
        %v4084 = vunpack.c.h.b16 %v1199
        %v4085 = vunpack.c.l.b16 %v1200
        %v4086 = vunpack.c.h.b16 %v1200
        %v4087 = vunpack.c.l.b16 %v1201
        %v4088 = vunpack.c.h.b16 %v1201
        %v4089 = vunpack.c.l.b16 %v1202
        %v4090 = vunpack.c.h.b16 %v1202
        %v4091 = vunpack.c.l.b16 %v1203
        %v4092 = vunpack.c.h.b16 %v1203
        %v4093 = vunpack.c.l.b16 %v1204
        %v4094 = vunpack.c.h.b16 %v1204
        %v4095 = vunpack.c.l.b16 %v1205
        %v4096 = vunpack.c.h.b16 %v1205
        %v4097 = vpack.c.b16 %v2309, %v2305
        %v4098 = vpack.c.b16 %v2310, %v2306
        %v4099 = vpack.c.b16 %v2311, %v2307
        %v4100 = vpack.c.b16 %v2312, %v2308
        %v4101 = vpack.c.b16 %v2317, %v2313
        %v4102 = vpack.c.b16 %v2318, %v2314
        %v4103 = vpack.c.b16 %v2319, %v2315
        %v4104 = vpack.c.b16 %v2320, %v2316
        %v4105 = vpack.c.b16 %v2325, %v2321
        %v4106 = vpack.c.b16 %v2326, %v2322
        %v4107 = vpack.c.b16 %v2327, %v2323
        %v4108 = vpack.c.b16 %v2328, %v2324
        %v4109 = vpack.c.b16 %v2333, %v2329
        %v4110 = vpack.c.b16 %v2334, %v2330
        %v4111 = vpack.c.b16 %v2335, %v2331
        %v4112 = vpack.c.b16 %v2336, %v2332
        %v4113 = vpack.c.b16 %v2341, %v2337
        %v4114 = vpack.c.b16 %v2342, %v2338
        %v4115 = vpack.c.b16 %v2343, %v2339
        %v4116 = vpack.c.b16 %v2344, %v2340
        %v4117 = vpack.c.b16 %v2349, %v2345
        %v4118 = vpack.c.b16 %v2350, %v2346
        %v4119 = vpack.c.b16 %v2351, %v2347
        %v4120 = vpack.c.b16 %v2352, %v2348
        %v4121 = vpack.c.b16 %v2357, %v2353
        %v4122 = vpack.c.b16 %v2358, %v2354
        %v4123 = vpack.c.b16 %v2359, %v2355
        %v4124 = vpack.c.b16 %v2360, %v2356
        %v4125 = vpack.c.b16 %v2365, %v2361
        %v4126 = vpack.c.b16 %v2366, %v2362
        %v4127 = vpack.c.b16 %v2367, %v2363
        %v4128 = vpack.c.b16 %v2368, %v2364
        %v4129 = vpack.c.b16 %v2373, %v2369
        %v4130 = vpack.c.b16 %v2374, %v2370
        %v4131 = vpack.c.b16 %v2375, %v2371
        %v4132 = vpack.c.b16 %v2376, %v2372
        %v4133 = vpack.c.b16 %v2381, %v2377
        %v4134 = vpack.c.b16 %v2382, %v2378
        %v4135 = vpack.c.b16 %v2383, %v2379
        %v4136 = vpack.c.b16 %v2384, %v2380
        %v4137 = vpack.c.b16 %v2389, %v2385
        %v4138 = vpack.c.b16 %v2390, %v2386
        %v4139 = vpack.c.b16 %v2391, %v2387
        %v4140 = vpack.c.b16 %v2392, %v2388
        %v4141 = vpack.c.b16 %v2397, %v2393
        %v4142 = vpack.c.b16 %v2398, %v2394
        %v4143 = vpack.c.b16 %v2399, %v2395
        %v4144 = vpack.c.b16 %v2400, %v2396
        %v4145 = vpack.c.b16 %v2405, %v2401
        %v4146 = vpack.c.b16 %v2406, %v2402
        %v4147 = vpack.c.b16 %v2407, %v2403
        %v4148 = vpack.c.b16 %v2408, %v2404
        %v4149 = vpack.c.b16 %v2413, %v2409
        %v4150 = vpack.c.b16 %v2414, %v2410
        %v4151 = vpack.c.b16 %v2415, %v2411
        %v4152 = vpack.c.b16 %v2416, %v2412
        %v4153 = vpack.c.b16 %v2421, %v2417
        %v4154 = vpack.c.b16 %v2422, %v2418
        %v4155 = vpack.c.b16 %v2423, %v2419
        %v4156 = vpack.c.b16 %v2424, %v2420
        %v4157 = vpack.c.b16 %v2429, %v2425
        %v4158 = vpack.c.b16 %v2430, %v2426
        %v4159 = vpack.c.b16 %v2431, %v2427
        %v4160 = vpack.c.b16 %v2432, %v2428
        %v4161 = vpack.c.b16 %v2437, %v2433
        %v4162 = vpack.c.b16 %v2438, %v2434
        %v4163 = vpack.c.b16 %v2439, %v2435
        %v4164 = vpack.c.b16 %v2440, %v2436
        %v4165 = vpack.c.b16 %v2445, %v2441
        %v4166 = vpack.c.b16 %v2446, %v2442
        %v4167 = vpack.c.b16 %v2447, %v2443
        %v4168 = vpack.c.b16 %v2448, %v2444
        %v4169 = vpack.c.b16 %v2453, %v2449
        %v4170 = vpack.c.b16 %v2454, %v2450
        %v4171 = vpack.c.b16 %v2455, %v2451
        %v4172 = vpack.c.b16 %v2456, %v2452
        %v4173 = vpack.c.b16 %v2461, %v2457
        %v4174 = vpack.c.b16 %v2462, %v2458
        %v4175 = vpack.c.b16 %v2463, %v2459
        %v4176 = vpack.c.b16 %v2464, %v2460
        %v4177 = vpack.c.b16 %v2469, %v2465
        %v4178 = vpack.c.b16 %v2470, %v2466
        %v4179 = vpack.c.b16 %v2471, %v2467
        %v4180 = vpack.c.b16 %v2472, %v2468
        %v4181 = vpack.c.b16 %v2477, %v2473
        %v4182 = vpack.c.b16 %v2478, %v2474
        %v4183 = vpack.c.b16 %v2479, %v2475
        %v4184 = vpack.c.b16 %v2480, %v2476
        %v4185 = vpack.c.b16 %v2485, %v2481
        %v4186 = vpack.c.b16 %v2486, %v2482
        %v4187 = vpack.c.b16 %v2487, %v2483
        %v4188 = vpack.c.b16 %v2488, %v2484
        %v4189 = vpack.c.b16 %v2493, %v2489
        %v4190 = vpack.c.b16 %v2494, %v2490
        %v4191 = vpack.c.b16 %v2495, %v2491
        %v4192 = vpack.c.b16 %v2496, %v2492
        %v4193 = vpack.c.b16 %v2501, %v2497
        %v4194 = vpack.c.b16 %v2502, %v2498
        %v4195 = vpack.c.b16 %v2503, %v2499
        %v4196 = vpack.c.b16 %v2504, %v2500
        %v4197 = vpack.c.b16 %v2509, %v2505
        %v4198 = vpack.c.b16 %v2510, %v2506
        %v4199 = vpack.c.b16 %v2511, %v2507
        %v4200 = vpack.c.b16 %v2512, %v2508
        %v4201 = vpack.c.b16 %v2517, %v2513
        %v4202 = vpack.c.b16 %v2518, %v2514
        %v4203 = vpack.c.b16 %v2519, %v2515
        %v4204 = vpack.c.b16 %v2520, %v2516
        %v4205 = vpack.c.b16 %v2525, %v2521
        %v4206 = vpack.c.b16 %v2526, %v2522
        %v4207 = vpack.c.b16 %v2527, %v2523
        %v4208 = vpack.c.b16 %v2528, %v2524
        %v4209 = vpack.c.b16 %v2533, %v2529
        %v4210 = vpack.c.b16 %v2534, %v2530
        %v4211 = vpack.c.b16 %v2535, %v2531
        %v4212 = vpack.c.b16 %v2536, %v2532
        %v4213 = vpack.c.b16 %v2541, %v2537
        %v4214 = vpack.c.b16 %v2542, %v2538
        %v4215 = vpack.c.b16 %v2543, %v2539
        %v4216 = vpack.c.b16 %v2544, %v2540
        %v4217 = vpack.c.b16 %v2549, %v2545
        %v4218 = vpack.c.b16 %v2550, %v2546
        %v4219 = vpack.c.b16 %v2551, %v2547
        %v4220 = vpack.c.b16 %v2552, %v2548
        %v4221 = vpack.c.b16 %v2557, %v2553
        %v4222 = vpack.c.b16 %v2558, %v2554
        %v4223 = vpack.c.b16 %v2559, %v2555
        %v4224 = vpack.c.b16 %v2560, %v2556
        %v4225 = vpack.c.b16 %v2565, %v2561
        %v4226 = vpack.c.b16 %v2566, %v2562
        %v4227 = vpack.c.b16 %v2567, %v2563
        %v4228 = vpack.c.b16 %v2568, %v2564
        %v4229 = vpack.c.b16 %v2573, %v2569
        %v4230 = vpack.c.b16 %v2574, %v2570
        %v4231 = vpack.c.b16 %v2575, %v2571
        %v4232 = vpack.c.b16 %v2576, %v2572
        %v4233 = vpack.c.b16 %v2581, %v2577
        %v4234 = vpack.c.b16 %v2582, %v2578
        %v4235 = vpack.c.b16 %v2583, %v2579
        %v4236 = vpack.c.b16 %v2584, %v2580
        %v4237 = vpack.c.b16 %v2589, %v2585
        %v4238 = vpack.c.b16 %v2590, %v2586
        %v4239 = vpack.c.b16 %v2591, %v2587
        %v4240 = vpack.c.b16 %v2592, %v2588
        %v4241 = vpack.c.b16 %v2597, %v2593
        %v4242 = vpack.c.b16 %v2598, %v2594
        %v4243 = vpack.c.b16 %v2599, %v2595
        %v4244 = vpack.c.b16 %v2600, %v2596
        %v4245 = vpack.c.b16 %v2605, %v2601
        %v4246 = vpack.c.b16 %v2606, %v2602
        %v4247 = vpack.c.b16 %v2607, %v2603
        %v4248 = vpack.c.b16 %v2608, %v2604
        %v4249 = vpack.c.b16 %v2613, %v2609
        %v4250 = vpack.c.b16 %v2614, %v2610
        %v4251 = vpack.c.b16 %v2615, %v2611
        %v4252 = vpack.c.b16 %v2616, %v2612
        %v4253 = vpack.c.b16 %v2621, %v2617
        %v4254 = vpack.c.b16 %v2622, %v2618
        %v4255 = vpack.c.b16 %v2623, %v2619
        %v4256 = vpack.c.b16 %v2624, %v2620
        %v4257 = vpack.c.b16 %v2629, %v2625
        %v4258 = vpack.c.b16 %v2630, %v2626
        %v4259 = vpack.c.b16 %v2631, %v2627
        %v4260 = vpack.c.b16 %v2632, %v2628
        %v4261 = vpack.c.b16 %v2637, %v2633
        %v4262 = vpack.c.b16 %v2638, %v2634
        %v4263 = vpack.c.b16 %v2639, %v2635
        %v4264 = vpack.c.b16 %v2640, %v2636
        %v4265 = vpack.c.b16 %v2645, %v2641
        %v4266 = vpack.c.b16 %v2646, %v2642
        %v4267 = vpack.c.b16 %v2647, %v2643
        %v4268 = vpack.c.b16 %v2648, %v2644
        %v4269 = vpack.c.b16 %v2653, %v2649
        %v4270 = vpack.c.b16 %v2654, %v2650
        %v4271 = vpack.c.b16 %v2655, %v2651
        %v4272 = vpack.c.b16 %v2656, %v2652
        %v4273 = vpack.c.b16 %v2661, %v2657
        %v4274 = vpack.c.b16 %v2662, %v2658
        %v4275 = vpack.c.b16 %v2663, %v2659
        %v4276 = vpack.c.b16 %v2664, %v2660
        %v4277 = vpack.c.b16 %v2669, %v2665
        %v4278 = vpack.c.b16 %v2670, %v2666
        %v4279 = vpack.c.b16 %v2671, %v2667
        %v4280 = vpack.c.b16 %v2672, %v2668
        %v4281 = vpack.c.b16 %v2677, %v2673
        %v4282 = vpack.c.b16 %v2678, %v2674
        %v4283 = vpack.c.b16 %v2679, %v2675
        %v4284 = vpack.c.b16 %v2680, %v2676
        %v4285 = vpack.c.b16 %v2685, %v2681
        %v4286 = vpack.c.b16 %v2686, %v2682
        %v4287 = vpack.c.b16 %v2687, %v2683
        %v4288 = vpack.c.b16 %v2688, %v2684
        %v4289 = vpack.c.b16 %v2693, %v2689
        %v4290 = vpack.c.b16 %v2694, %v2690
        %v4291 = vpack.c.b16 %v2695, %v2691
        %v4292 = vpack.c.b16 %v2696, %v2692
        %v4293 = vpack.c.b16 %v2701, %v2697
        %v4294 = vpack.c.b16 %v2702, %v2698
        %v4295 = vpack.c.b16 %v2703, %v2699
        %v4296 = vpack.c.b16 %v2704, %v2700
        %v4297 = vpack.c.b16 %v2709, %v2705
        %v4298 = vpack.c.b16 %v2710, %v2706
        %v4299 = vpack.c.b16 %v2711, %v2707
        %v4300 = vpack.c.b16 %v2712, %v2708
        %v4301 = vpack.c.b16 %v2717, %v2713
        %v4302 = vpack.c.b16 %v2718, %v2714
        %v4303 = vpack.c.b16 %v2719, %v2715
        %v4304 = vpack.c.b16 %v2720, %v2716
        %v4305 = vpack.c.b16 %v2725, %v2721
        %v4306 = vpack.c.b16 %v2726, %v2722
        %v4307 = vpack.c.b16 %v2727, %v2723
        %v4308 = vpack.c.b16 %v2728, %v2724
        %v4309 = vpack.c.b16 %v2733, %v2729
        %v4310 = vpack.c.b16 %v2734, %v2730
        %v4311 = vpack.c.b16 %v2735, %v2731
        %v4312 = vpack.c.b16 %v2736, %v2732
        %v4313 = vpack.c.b16 %v2741, %v2737
        %v4314 = vpack.c.b16 %v2742, %v2738
        %v4315 = vpack.c.b16 %v2743, %v2739
        %v4316 = vpack.c.b16 %v2744, %v2740
        %v4317 = vpack.c.b16 %v2749, %v2745
        %v4318 = vpack.c.b16 %v2750, %v2746
        %v4319 = vpack.c.b16 %v2751, %v2747
        %v4320 = vpack.c.b16 %v2752, %v2748
        %v4321 = vpack.c.b16 %v2757, %v2753
        %v4322 = vpack.c.b16 %v2758, %v2754
        %v4323 = vpack.c.b16 %v2759, %v2755
        %v4324 = vpack.c.b16 %v2760, %v2756
        %v4325 = vpack.c.b16 %v2765, %v2761
        %v4326 = vpack.c.b16 %v2766, %v2762
        %v4327 = vpack.c.b16 %v2767, %v2763
        %v4328 = vpack.c.b16 %v2768, %v2764
        %v4329 = vpack.c.b16 %v2773, %v2769
        %v4330 = vpack.c.b16 %v2774, %v2770
        %v4331 = vpack.c.b16 %v2775, %v2771
        %v4332 = vpack.c.b16 %v2776, %v2772
        %v4333 = vpack.c.b16 %v2781, %v2777
        %v4334 = vpack.c.b16 %v2782, %v2778
        %v4335 = vpack.c.b16 %v2783, %v2779
        %v4336 = vpack.c.b16 %v2784, %v2780
        %v4337 = vpack.c.b16 %v2789, %v2785
        %v4338 = vpack.c.b16 %v2790, %v2786
        %v4339 = vpack.c.b16 %v2791, %v2787
        %v4340 = vpack.c.b16 %v2792, %v2788
        %v4341 = vpack.c.b16 %v2797, %v2793
        %v4342 = vpack.c.b16 %v2798, %v2794
        %v4343 = vpack.c.b16 %v2799, %v2795
        %v4344 = vpack.c.b16 %v2800, %v2796
        %v4345 = vpack.c.b16 %v2805, %v2801
        %v4346 = vpack.c.b16 %v2806, %v2802
        %v4347 = vpack.c.b16 %v2807, %v2803
        %v4348 = vpack.c.b16 %v2808, %v2804
        %v4349 = vpack.c.b16 %v2813, %v2809
        %v4350 = vpack.c.b16 %v2814, %v2810
        %v4351 = vpack.c.b16 %v2815, %v2811
        %v4352 = vpack.c.b16 %v2816, %v2812
        %v4353 = vpack.c.b16 %v2821, %v2817
        %v4354 = vpack.c.b16 %v2822, %v2818
        %v4355 = vpack.c.b16 %v2823, %v2819
        %v4356 = vpack.c.b16 %v2824, %v2820
        %v4357 = vpack.c.b16 %v2829, %v2825
        %v4358 = vpack.c.b16 %v2830, %v2826
        %v4359 = vpack.c.b16 %v2831, %v2827
        %v4360 = vpack.c.b16 %v2832, %v2828
        %v4361 = vpack.c.b16 %v2837, %v2833
        %v4362 = vpack.c.b16 %v2838, %v2834
        %v4363 = vpack.c.b16 %v2839, %v2835
        %v4364 = vpack.c.b16 %v2840, %v2836
        %v4365 = vpack.c.b16 %v2845, %v2841
        %v4366 = vpack.c.b16 %v2846, %v2842
        %v4367 = vpack.c.b16 %v2847, %v2843
        %v4368 = vpack.c.b16 %v2848, %v2844
        %v4369 = vpack.c.b16 %v2853, %v2849
        %v4370 = vpack.c.b16 %v2854, %v2850
        %v4371 = vpack.c.b16 %v2855, %v2851
        %v4372 = vpack.c.b16 %v2856, %v2852
        %v4373 = vpack.c.b16 %v2861, %v2857
        %v4374 = vpack.c.b16 %v2862, %v2858
        %v4375 = vpack.c.b16 %v2863, %v2859
        %v4376 = vpack.c.b16 %v2864, %v2860
        %v4377 = vpack.c.b16 %v2869, %v2865
        %v4378 = vpack.c.b16 %v2870, %v2866
        %v4379 = vpack.c.b16 %v2871, %v2867
        %v4380 = vpack.c.b16 %v2872, %v2868
        %v4381 = vpack.c.b16 %v2877, %v2873
        %v4382 = vpack.c.b16 %v2878, %v2874
        %v4383 = vpack.c.b16 %v2879, %v2875
        %v4384 = vpack.c.b16 %v2880, %v2876
        %v4385 = vpack.c.b16 %v2885, %v2881
        %v4386 = vpack.c.b16 %v2886, %v2882
        %v4387 = vpack.c.b16 %v2887, %v2883
        %v4388 = vpack.c.b16 %v2888, %v2884
        %v4389 = vpack.c.b16 %v2893, %v2889
        %v4390 = vpack.c.b16 %v2894, %v2890
        %v4391 = vpack.c.b16 %v2895, %v2891
        %v4392 = vpack.c.b16 %v2896, %v2892
        %v4393 = vpack.c.b16 %v2901, %v2897
        %v4394 = vpack.c.b16 %v2902, %v2898
        %v4395 = vpack.c.b16 %v2903, %v2899
        %v4396 = vpack.c.b16 %v2904, %v2900
        %v4397 = vpack.c.b16 %v2909, %v2905
        %v4398 = vpack.c.b16 %v2910, %v2906
        %v4399 = vpack.c.b16 %v2911, %v2907
        %v4400 = vpack.c.b16 %v2912, %v2908
        %v4401 = vpack.c.b16 %v2917, %v2913
        %v4402 = vpack.c.b16 %v2918, %v2914
        %v4403 = vpack.c.b16 %v2919, %v2915
        %v4404 = vpack.c.b16 %v2920, %v2916
        %v4405 = vpack.c.b16 %v2925, %v2921
        %v4406 = vpack.c.b16 %v2926, %v2922
        %v4407 = vpack.c.b16 %v2927, %v2923
        %v4408 = vpack.c.b16 %v2928, %v2924
        %v4409 = vpack.c.b16 %v2933, %v2929
        %v4410 = vpack.c.b16 %v2934, %v2930
        %v4411 = vpack.c.b16 %v2935, %v2931
        %v4412 = vpack.c.b16 %v2936, %v2932
        %v4413 = vpack.c.b16 %v2941, %v2937
        %v4414 = vpack.c.b16 %v2942, %v2938
        %v4415 = vpack.c.b16 %v2943, %v2939
        %v4416 = vpack.c.b16 %v2944, %v2940
        %v4417 = vpack.c.b16 %v2949, %v2945
        %v4418 = vpack.c.b16 %v2950, %v2946
        %v4419 = vpack.c.b16 %v2951, %v2947
        %v4420 = vpack.c.b16 %v2952, %v2948
        %v4421 = vpack.c.b16 %v2957, %v2953
        %v4422 = vpack.c.b16 %v2958, %v2954
        %v4423 = vpack.c.b16 %v2959, %v2955
        %v4424 = vpack.c.b16 %v2960, %v2956
        %v4425 = vpack.c.b16 %v2965, %v2961
        %v4426 = vpack.c.b16 %v2966, %v2962
        %v4427 = vpack.c.b16 %v2967, %v2963
        %v4428 = vpack.c.b16 %v2968, %v2964
        %v4429 = vpack.c.b16 %v2973, %v2969
        %v4430 = vpack.c.b16 %v2974, %v2970
        %v4431 = vpack.c.b16 %v2975, %v2971
        %v4432 = vpack.c.b16 %v2976, %v2972
        %v4433 = vpack.c.b16 %v2981, %v2977
        %v4434 = vpack.c.b16 %v2982, %v2978
        %v4435 = vpack.c.b16 %v2983, %v2979
        %v4436 = vpack.c.b16 %v2984, %v2980
        %v4437 = vpack.c.b16 %v2989, %v2985
        %v4438 = vpack.c.b16 %v2990, %v2986
        %v4439 = vpack.c.b16 %v2991, %v2987
        %v4440 = vpack.c.b16 %v2992, %v2988
        %v4441 = vpack.c.b16 %v2997, %v2993
        %v4442 = vpack.c.b16 %v2998, %v2994
        %v4443 = vpack.c.b16 %v2999, %v2995
        %v4444 = vpack.c.b16 %v3000, %v2996
        %v4445 = vpack.c.b16 %v3005, %v3001
        %v4446 = vpack.c.b16 %v3006, %v3002
        %v4447 = vpack.c.b16 %v3007, %v3003
        %v4448 = vpack.c.b16 %v3008, %v3004
        %v4449 = vpack.c.b16 %v3013, %v3009
        %v4450 = vpack.c.b16 %v3014, %v3010
        %v4451 = vpack.c.b16 %v3015, %v3011
        %v4452 = vpack.c.b16 %v3016, %v3012
        %v4453 = vpack.c.b16 %v3021, %v3017
        %v4454 = vpack.c.b16 %v3022, %v3018
        %v4455 = vpack.c.b16 %v3023, %v3019
        %v4456 = vpack.c.b16 %v3024, %v3020
        %v4457 = vpack.c.b16 %v3029, %v3025
        %v4458 = vpack.c.b16 %v3030, %v3026
        %v4459 = vpack.c.b16 %v3031, %v3027
        %v4460 = vpack.c.b16 %v3032, %v3028
        %v4461 = vpack.c.b16 %v3037, %v3033
        %v4462 = vpack.c.b16 %v3038, %v3034
        %v4463 = vpack.c.b16 %v3039, %v3035
        %v4464 = vpack.c.b16 %v3040, %v3036
        %v4465 = vpack.c.b16 %v3045, %v3041
        %v4466 = vpack.c.b16 %v3046, %v3042
        %v4467 = vpack.c.b16 %v3047, %v3043
        %v4468 = vpack.c.b16 %v3048, %v3044
        %v4469 = vpack.c.b16 %v3053, %v3049
        %v4470 = vpack.c.b16 %v3054, %v3050
        %v4471 = vpack.c.b16 %v3055, %v3051
        %v4472 = vpack.c.b16 %v3056, %v3052
        %v4473 = vpack.c.b16 %v3061, %v3057
        %v4474 = vpack.c.b16 %v3062, %v3058
        %v4475 = vpack.c.b16 %v3063, %v3059
        %v4476 = vpack.c.b16 %v3064, %v3060
        %v4477 = vpack.c.b16 %v3069, %v3065
        %v4478 = vpack.c.b16 %v3070, %v3066
        %v4479 = vpack.c.b16 %v3071, %v3067
        %v4480 = vpack.c.b16 %v3072, %v3068
        %v4481 = vpack.c.b16 %v3077, %v3073
        %v4482 = vpack.c.b16 %v3078, %v3074
        %v4483 = vpack.c.b16 %v3079, %v3075
        %v4484 = vpack.c.b16 %v3080, %v3076
        %v4485 = vpack.c.b16 %v3085, %v3081
        %v4486 = vpack.c.b16 %v3086, %v3082
        %v4487 = vpack.c.b16 %v3087, %v3083
        %v4488 = vpack.c.b16 %v3088, %v3084
        %v4489 = vpack.c.b16 %v3093, %v3089
        %v4490 = vpack.c.b16 %v3094, %v3090
        %v4491 = vpack.c.b16 %v3095, %v3091
        %v4492 = vpack.c.b16 %v3096, %v3092
        %v4493 = vpack.c.b16 %v3101, %v3097
        %v4494 = vpack.c.b16 %v3102, %v3098
        %v4495 = vpack.c.b16 %v3103, %v3099
        %v4496 = vpack.c.b16 %v3104, %v3100
        %v4497 = vpack.c.b16 %v3109, %v3105
        %v4498 = vpack.c.b16 %v3110, %v3106
        %v4499 = vpack.c.b16 %v3111, %v3107
        %v4500 = vpack.c.b16 %v3112, %v3108
        %v4501 = vpack.c.b16 %v3117, %v3113
        %v4502 = vpack.c.b16 %v3118, %v3114
        %v4503 = vpack.c.b16 %v3119, %v3115
        %v4504 = vpack.c.b16 %v3120, %v3116
        %v4505 = vpack.c.b16 %v3125, %v3121
        %v4506 = vpack.c.b16 %v3126, %v3122
        %v4507 = vpack.c.b16 %v3127, %v3123
        %v4508 = vpack.c.b16 %v3128, %v3124
        %v4509 = vpack.c.b16 %v3133, %v3129
        %v4510 = vpack.c.b16 %v3134, %v3130
        %v4511 = vpack.c.b16 %v3135, %v3131
        %v4512 = vpack.c.b16 %v3136, %v3132
        %v4513 = vpack.c.b16 %v3141, %v3137
        %v4514 = vpack.c.b16 %v3142, %v3138
        %v4515 = vpack.c.b16 %v3143, %v3139
        %v4516 = vpack.c.b16 %v3144, %v3140
        %v4517 = vpack.c.b16 %v3149, %v3145
        %v4518 = vpack.c.b16 %v3150, %v3146
        %v4519 = vpack.c.b16 %v3151, %v3147
        %v4520 = vpack.c.b16 %v3152, %v3148
        %v4521 = vpack.c.b16 %v3157, %v3153
        %v4522 = vpack.c.b16 %v3158, %v3154
        %v4523 = vpack.c.b16 %v3159, %v3155
        %v4524 = vpack.c.b16 %v3160, %v3156
        %v4525 = vpack.c.b16 %v3165, %v3161
        %v4526 = vpack.c.b16 %v3166, %v3162
        %v4527 = vpack.c.b16 %v3167, %v3163
        %v4528 = vpack.c.b16 %v3168, %v3164
        %v4529 = vpack.c.b16 %v3173, %v3169
        %v4530 = vpack.c.b16 %v3174, %v3170
        %v4531 = vpack.c.b16 %v3175, %v3171
        %v4532 = vpack.c.b16 %v3176, %v3172
        %v4533 = vpack.c.b16 %v3181, %v3177
        %v4534 = vpack.c.b16 %v3182, %v3178
        %v4535 = vpack.c.b16 %v3183, %v3179
        %v4536 = vpack.c.b16 %v3184, %v3180
        %v4537 = vpack.c.b16 %v3189, %v3185
        %v4538 = vpack.c.b16 %v3190, %v3186
        %v4539 = vpack.c.b16 %v3191, %v3187
        %v4540 = vpack.c.b16 %v3192, %v3188
        %v4541 = vpack.c.b16 %v3197, %v3193
        %v4542 = vpack.c.b16 %v3198, %v3194
        %v4543 = vpack.c.b16 %v3199, %v3195
        %v4544 = vpack.c.b16 %v3200, %v3196
        %v4545 = vpack.c.b16 %v3205, %v3201
        %v4546 = vpack.c.b16 %v3206, %v3202
        %v4547 = vpack.c.b16 %v3207, %v3203
        %v4548 = vpack.c.b16 %v3208, %v3204
        %v4549 = vpack.c.b16 %v3213, %v3209
        %v4550 = vpack.c.b16 %v3214, %v3210
        %v4551 = vpack.c.b16 %v3215, %v3211
        %v4552 = vpack.c.b16 %v3216, %v3212
        %v4553 = vpack.c.b16 %v3221, %v3217
        %v4554 = vpack.c.b16 %v3222, %v3218
        %v4555 = vpack.c.b16 %v3223, %v3219
        %v4556 = vpack.c.b16 %v3224, %v3220
        %v4557 = vpack.c.b16 %v3229, %v3225
        %v4558 = vpack.c.b16 %v3230, %v3226
        %v4559 = vpack.c.b16 %v3231, %v3227
        %v4560 = vpack.c.b16 %v3232, %v3228
        %v4561 = vpack.c.b16 %v3237, %v3233
        %v4562 = vpack.c.b16 %v3238, %v3234
        %v4563 = vpack.c.b16 %v3239, %v3235
        %v4564 = vpack.c.b16 %v3240, %v3236
        %v4565 = vpack.c.b16 %v3245, %v3241
        %v4566 = vpack.c.b16 %v3246, %v3242
        %v4567 = vpack.c.b16 %v3247, %v3243
        %v4568 = vpack.c.b16 %v3248, %v3244
        %v4569 = vpack.c.b16 %v3253, %v3249
        %v4570 = vpack.c.b16 %v3254, %v3250
        %v4571 = vpack.c.b16 %v3255, %v3251
        %v4572 = vpack.c.b16 %v3256, %v3252
        %v4573 = vpack.c.b16 %v3261, %v3257
        %v4574 = vpack.c.b16 %v3262, %v3258
        %v4575 = vpack.c.b16 %v3263, %v3259
        %v4576 = vpack.c.b16 %v3264, %v3260
        %v4577 = vpack.c.b16 %v3269, %v3265
        %v4578 = vpack.c.b16 %v3270, %v3266
        %v4579 = vpack.c.b16 %v3271, %v3267
        %v4580 = vpack.c.b16 %v3272, %v3268
        %v4581 = vpack.c.b16 %v3277, %v3273
        %v4582 = vpack.c.b16 %v3278, %v3274
        %v4583 = vpack.c.b16 %v3279, %v3275
        %v4584 = vpack.c.b16 %v3280, %v3276
        %v4585 = vpack.c.b16 %v3285, %v3281
        %v4586 = vpack.c.b16 %v3286, %v3282
        %v4587 = vpack.c.b16 %v3287, %v3283
        %v4588 = vpack.c.b16 %v3288, %v3284
        %v4589 = vpack.c.b16 %v3293, %v3289
        %v4590 = vpack.c.b16 %v3294, %v3290
        %v4591 = vpack.c.b16 %v3295, %v3291
        %v4592 = vpack.c.b16 %v3296, %v3292
        %v4593 = vpack.c.b16 %v3301, %v3297
        %v4594 = vpack.c.b16 %v3302, %v3298
        %v4595 = vpack.c.b16 %v3303, %v3299
        %v4596 = vpack.c.b16 %v3304, %v3300
        %v4597 = vpack.c.b16 %v3309, %v3305
        %v4598 = vpack.c.b16 %v3310, %v3306
        %v4599 = vpack.c.b16 %v3311, %v3307
        %v4600 = vpack.c.b16 %v3312, %v3308
        %v4601 = vpack.c.b16 %v3317, %v3313
        %v4602 = vpack.c.b16 %v3318, %v3314
        %v4603 = vpack.c.b16 %v3319, %v3315
        %v4604 = vpack.c.b16 %v3320, %v3316
        %v4605 = vpack.c.b16 %v3325, %v3321
        %v4606 = vpack.c.b16 %v3326, %v3322
        %v4607 = vpack.c.b16 %v3327, %v3323
        %v4608 = vpack.c.b16 %v3328, %v3324
        %v4609 = vpack.c.b16 %v3333, %v3329
        %v4610 = vpack.c.b16 %v3334, %v3330
        %v4611 = vpack.c.b16 %v3335, %v3331
        %v4612 = vpack.c.b16 %v3336, %v3332
        %v4613 = vpack.c.b16 %v3341, %v3337
        %v4614 = vpack.c.b16 %v3342, %v3338
        %v4615 = vpack.c.b16 %v3343, %v3339
        %v4616 = vpack.c.b16 %v3344, %v3340
        %v4617 = vpack.c.b16 %v3349, %v3345
        %v4618 = vpack.c.b16 %v3350, %v3346
        %v4619 = vpack.c.b16 %v3351, %v3347
        %v4620 = vpack.c.b16 %v3352, %v3348
        %v4621 = vpack.c.b16 %v3357, %v3353
        %v4622 = vpack.c.b16 %v3358, %v3354
        %v4623 = vpack.c.b16 %v3359, %v3355
        %v4624 = vpack.c.b16 %v3360, %v3356
        %v4625 = vpack.c.b16 %v3365, %v3361
        %v4626 = vpack.c.b16 %v3366, %v3362
        %v4627 = vpack.c.b16 %v3367, %v3363
        %v4628 = vpack.c.b16 %v3368, %v3364
        %v4629 = vpack.c.b16 %v3373, %v3369
        %v4630 = vpack.c.b16 %v3374, %v3370
        %v4631 = vpack.c.b16 %v3375, %v3371
        %v4632 = vpack.c.b16 %v3376, %v3372
        %v4633 = vpack.c.b16 %v3381, %v3377
        %v4634 = vpack.c.b16 %v3382, %v3378
        %v4635 = vpack.c.b16 %v3383, %v3379
        %v4636 = vpack.c.b16 %v3384, %v3380
        %v4637 = vpack.c.b16 %v3389, %v3385
        %v4638 = vpack.c.b16 %v3390, %v3386
        %v4639 = vpack.c.b16 %v3391, %v3387
        %v4640 = vpack.c.b16 %v3392, %v3388
        %v4641 = vpack.c.b16 %v3397, %v3393
        %v4642 = vpack.c.b16 %v3398, %v3394
        %v4643 = vpack.c.b16 %v3399, %v3395
        %v4644 = vpack.c.b16 %v3400, %v3396
        %v4645 = vpack.c.b16 %v3405, %v3401
        %v4646 = vpack.c.b16 %v3406, %v3402
        %v4647 = vpack.c.b16 %v3407, %v3403
        %v4648 = vpack.c.b16 %v3408, %v3404
        %v4649 = vpack.c.b16 %v3413, %v3409
        %v4650 = vpack.c.b16 %v3414, %v3410
        %v4651 = vpack.c.b16 %v3415, %v3411
        %v4652 = vpack.c.b16 %v3416, %v3412
        %v4653 = vpack.c.b16 %v3421, %v3417
        %v4654 = vpack.c.b16 %v3422, %v3418
        %v4655 = vpack.c.b16 %v3423, %v3419
        %v4656 = vpack.c.b16 %v3424, %v3420
        %v4657 = vpack.c.b16 %v3429, %v3425
        %v4658 = vpack.c.b16 %v3430, %v3426
        %v4659 = vpack.c.b16 %v3431, %v3427
        %v4660 = vpack.c.b16 %v3432, %v3428
        %v4661 = vpack.c.b16 %v3437, %v3433
        %v4662 = vpack.c.b16 %v3438, %v3434
        %v4663 = vpack.c.b16 %v3439, %v3435
        %v4664 = vpack.c.b16 %v3440, %v3436
        %v4665 = vpack.c.b16 %v3445, %v3441
        %v4666 = vpack.c.b16 %v3446, %v3442
        %v4667 = vpack.c.b16 %v3447, %v3443
        %v4668 = vpack.c.b16 %v3448, %v3444
        %v4669 = vpack.c.b16 %v3453, %v3449
        %v4670 = vpack.c.b16 %v3454, %v3450
        %v4671 = vpack.c.b16 %v3455, %v3451
        %v4672 = vpack.c.b16 %v3456, %v3452
        %v4673 = vpack.c.b16 %v3461, %v3457
        %v4674 = vpack.c.b16 %v3462, %v3458
        %v4675 = vpack.c.b16 %v3463, %v3459
        %v4676 = vpack.c.b16 %v3464, %v3460
        %v4677 = vpack.c.b16 %v3469, %v3465
        %v4678 = vpack.c.b16 %v3470, %v3466
        %v4679 = vpack.c.b16 %v3471, %v3467
        %v4680 = vpack.c.b16 %v3472, %v3468
        %v4681 = vpack.c.b16 %v3477, %v3473
        %v4682 = vpack.c.b16 %v3478, %v3474
        %v4683 = vpack.c.b16 %v3479, %v3475
        %v4684 = vpack.c.b16 %v3480, %v3476
        %v4685 = vpack.c.b16 %v3485, %v3481
        %v4686 = vpack.c.b16 %v3486, %v3482
        %v4687 = vpack.c.b16 %v3487, %v3483
        %v4688 = vpack.c.b16 %v3488, %v3484
        %v4689 = vpack.c.b16 %v3493, %v3489
        %v4690 = vpack.c.b16 %v3494, %v3490
        %v4691 = vpack.c.b16 %v3495, %v3491
        %v4692 = vpack.c.b16 %v3496, %v3492
        %v4693 = vpack.c.b16 %v3501, %v3497
        %v4694 = vpack.c.b16 %v3502, %v3498
        %v4695 = vpack.c.b16 %v3503, %v3499
        %v4696 = vpack.c.b16 %v3504, %v3500
        %v4697 = vpack.c.b16 %v3509, %v3505
        %v4698 = vpack.c.b16 %v3510, %v3506
        %v4699 = vpack.c.b16 %v3511, %v3507
        %v4700 = vpack.c.b16 %v3512, %v3508
        %v4701 = vpack.c.b16 %v3517, %v3513
        %v4702 = vpack.c.b16 %v3518, %v3514
        %v4703 = vpack.c.b16 %v3519, %v3515
        %v4704 = vpack.c.b16 %v3520, %v3516
        %v4705 = vpack.c.b16 %v3525, %v3521
        %v4706 = vpack.c.b16 %v3526, %v3522
        %v4707 = vpack.c.b16 %v3527, %v3523
        %v4708 = vpack.c.b16 %v3528, %v3524
        %v4709 = vpack.c.b16 %v3533, %v3529
        %v4710 = vpack.c.b16 %v3534, %v3530
        %v4711 = vpack.c.b16 %v3535, %v3531
        %v4712 = vpack.c.b16 %v3536, %v3532
        %v4713 = vpack.c.b16 %v3541, %v3537
        %v4714 = vpack.c.b16 %v3542, %v3538
        %v4715 = vpack.c.b16 %v3543, %v3539
        %v4716 = vpack.c.b16 %v3544, %v3540
        %v4717 = vpack.c.b16 %v3549, %v3545
        %v4718 = vpack.c.b16 %v3550, %v3546
        %v4719 = vpack.c.b16 %v3551, %v3547
        %v4720 = vpack.c.b16 %v3552, %v3548
        %v4721 = vpack.c.b16 %v3557, %v3553
        %v4722 = vpack.c.b16 %v3558, %v3554
        %v4723 = vpack.c.b16 %v3559, %v3555
        %v4724 = vpack.c.b16 %v3560, %v3556
        %v4725 = vpack.c.b16 %v3565, %v3561
        %v4726 = vpack.c.b16 %v3566, %v3562
        %v4727 = vpack.c.b16 %v3567, %v3563
        %v4728 = vpack.c.b16 %v3568, %v3564
        %v4729 = vpack.c.b16 %v3573, %v3569
        %v4730 = vpack.c.b16 %v3574, %v3570
        %v4731 = vpack.c.b16 %v3575, %v3571
        %v4732 = vpack.c.b16 %v3576, %v3572
        %v4733 = vpack.c.b16 %v3581, %v3577
        %v4734 = vpack.c.b16 %v3582, %v3578
        %v4735 = vpack.c.b16 %v3583, %v3579
        %v4736 = vpack.c.b16 %v3584, %v3580
        %v4737 = vpack.c.b16 %v3589, %v3585
        %v4738 = vpack.c.b16 %v3590, %v3586
        %v4739 = vpack.c.b16 %v3591, %v3587
        %v4740 = vpack.c.b16 %v3592, %v3588
        %v4741 = vpack.c.b16 %v3597, %v3593
        %v4742 = vpack.c.b16 %v3598, %v3594
        %v4743 = vpack.c.b16 %v3599, %v3595
        %v4744 = vpack.c.b16 %v3600, %v3596
        %v4745 = vpack.c.b16 %v3605, %v3601
        %v4746 = vpack.c.b16 %v3606, %v3602
        %v4747 = vpack.c.b16 %v3607, %v3603
        %v4748 = vpack.c.b16 %v3608, %v3604
        %v4749 = vpack.c.b16 %v3613, %v3609
        %v4750 = vpack.c.b16 %v3614, %v3610
        %v4751 = vpack.c.b16 %v3615, %v3611
        %v4752 = vpack.c.b16 %v3616, %v3612
        %v4753 = vpack.c.b16 %v3621, %v3617
        %v4754 = vpack.c.b16 %v3622, %v3618
        %v4755 = vpack.c.b16 %v3623, %v3619
        %v4756 = vpack.c.b16 %v3624, %v3620
        %v4757 = vpack.c.b16 %v3629, %v3625
        %v4758 = vpack.c.b16 %v3630, %v3626
        %v4759 = vpack.c.b16 %v3631, %v3627
        %v4760 = vpack.c.b16 %v3632, %v3628
        %v4761 = vpack.c.b16 %v3637, %v3633
        %v4762 = vpack.c.b16 %v3638, %v3634
        %v4763 = vpack.c.b16 %v3639, %v3635
        %v4764 = vpack.c.b16 %v3640, %v3636
        %v4765 = vpack.c.b16 %v3645, %v3641
        %v4766 = vpack.c.b16 %v3646, %v3642
        %v4767 = vpack.c.b16 %v3647, %v3643
        %v4768 = vpack.c.b16 %v3648, %v3644
        %v4769 = vpack.c.b16 %v3653, %v3649
        %v4770 = vpack.c.b16 %v3654, %v3650
        %v4771 = vpack.c.b16 %v3655, %v3651
        %v4772 = vpack.c.b16 %v3656, %v3652
        %v4773 = vpack.c.b16 %v3661, %v3657
        %v4774 = vpack.c.b16 %v3662, %v3658
        %v4775 = vpack.c.b16 %v3663, %v3659
        %v4776 = vpack.c.b16 %v3664, %v3660
        %v4777 = vpack.c.b16 %v3669, %v3665
        %v4778 = vpack.c.b16 %v3670, %v3666
        %v4779 = vpack.c.b16 %v3671, %v3667
        %v4780 = vpack.c.b16 %v3672, %v3668
        %v4781 = vpack.c.b16 %v3677, %v3673
        %v4782 = vpack.c.b16 %v3678, %v3674
        %v4783 = vpack.c.b16 %v3679, %v3675
        %v4784 = vpack.c.b16 %v3680, %v3676
        %v4785 = vpack.c.b16 %v3685, %v3681
        %v4786 = vpack.c.b16 %v3686, %v3682
        %v4787 = vpack.c.b16 %v3687, %v3683
        %v4788 = vpack.c.b16 %v3688, %v3684
        %v4789 = vpack.c.b16 %v3693, %v3689
        %v4790 = vpack.c.b16 %v3694, %v3690
        %v4791 = vpack.c.b16 %v3695, %v3691
        %v4792 = vpack.c.b16 %v3696, %v3692
        %v4793 = vpack.c.b16 %v3701, %v3697
        %v4794 = vpack.c.b16 %v3702, %v3698
        %v4795 = vpack.c.b16 %v3703, %v3699
        %v4796 = vpack.c.b16 %v3704, %v3700
        %v4797 = vpack.c.b16 %v3709, %v3705
        %v4798 = vpack.c.b16 %v3710, %v3706
        %v4799 = vpack.c.b16 %v3711, %v3707
        %v4800 = vpack.c.b16 %v3712, %v3708
        %v4801 = vpack.c.b16 %v3717, %v3713
        %v4802 = vpack.c.b16 %v3718, %v3714
        %v4803 = vpack.c.b16 %v3719, %v3715
        %v4804 = vpack.c.b16 %v3720, %v3716
        %v4805 = vpack.c.b16 %v3725, %v3721
        %v4806 = vpack.c.b16 %v3726, %v3722
        %v4807 = vpack.c.b16 %v3727, %v3723
        %v4808 = vpack.c.b16 %v3728, %v3724
        %v4809 = vpack.c.b16 %v3733, %v3729
        %v4810 = vpack.c.b16 %v3734, %v3730
        %v4811 = vpack.c.b16 %v3735, %v3731
        %v4812 = vpack.c.b16 %v3736, %v3732
        %v4813 = vpack.c.b16 %v3741, %v3737
        %v4814 = vpack.c.b16 %v3742, %v3738
        %v4815 = vpack.c.b16 %v3743, %v3739
        %v4816 = vpack.c.b16 %v3744, %v3740
        %v4817 = vpack.c.b16 %v3749, %v3745
        %v4818 = vpack.c.b16 %v3750, %v3746
        %v4819 = vpack.c.b16 %v3751, %v3747
        %v4820 = vpack.c.b16 %v3752, %v3748
        %v4821 = vpack.c.b16 %v3757, %v3753
        %v4822 = vpack.c.b16 %v3758, %v3754
        %v4823 = vpack.c.b16 %v3759, %v3755
        %v4824 = vpack.c.b16 %v3760, %v3756
        %v4825 = vpack.c.b16 %v3765, %v3761
        %v4826 = vpack.c.b16 %v3766, %v3762
        %v4827 = vpack.c.b16 %v3767, %v3763
        %v4828 = vpack.c.b16 %v3768, %v3764
        %v4829 = vpack.c.b16 %v3773, %v3769
        %v4830 = vpack.c.b16 %v3774, %v3770
        %v4831 = vpack.c.b16 %v3775, %v3771
        %v4832 = vpack.c.b16 %v3776, %v3772
        %v4833 = vpack.c.b16 %v3781, %v3777
        %v4834 = vpack.c.b16 %v3782, %v3778
        %v4835 = vpack.c.b16 %v3783, %v3779
        %v4836 = vpack.c.b16 %v3784, %v3780
        %v4837 = vpack.c.b16 %v3789, %v3785
        %v4838 = vpack.c.b16 %v3790, %v3786
        %v4839 = vpack.c.b16 %v3791, %v3787
        %v4840 = vpack.c.b16 %v3792, %v3788
        %v4841 = vpack.c.b16 %v3797, %v3793
        %v4842 = vpack.c.b16 %v3798, %v3794
        %v4843 = vpack.c.b16 %v3799, %v3795
        %v4844 = vpack.c.b16 %v3800, %v3796
        %v4845 = vpack.c.b16 %v3805, %v3801
        %v4846 = vpack.c.b16 %v3806, %v3802
        %v4847 = vpack.c.b16 %v3807, %v3803
        %v4848 = vpack.c.b16 %v3808, %v3804
        %v4849 = vpack.c.b16 %v3813, %v3809
        %v4850 = vpack.c.b16 %v3814, %v3810
        %v4851 = vpack.c.b16 %v3815, %v3811
        %v4852 = vpack.c.b16 %v3816, %v3812
        %v4853 = vpack.c.b16 %v3821, %v3817
        %v4854 = vpack.c.b16 %v3822, %v3818
        %v4855 = vpack.c.b16 %v3823, %v3819
        %v4856 = vpack.c.b16 %v3824, %v3820
        %v4857 = vpack.c.b16 %v3829, %v3825
        %v4858 = vpack.c.b16 %v3830, %v3826
        %v4859 = vpack.c.b16 %v3831, %v3827
        %v4860 = vpack.c.b16 %v3832, %v3828
        %v4861 = vpack.c.b16 %v3837, %v3833
        %v4862 = vpack.c.b16 %v3838, %v3834
        %v4863 = vpack.c.b16 %v3839, %v3835
        %v4864 = vpack.c.b16 %v3840, %v3836
        %v4865 = vpack.c.b16 %v3845, %v3841
        %v4866 = vpack.c.b16 %v3846, %v3842
        %v4867 = vpack.c.b16 %v3847, %v3843
        %v4868 = vpack.c.b16 %v3848, %v3844
        %v4869 = vpack.c.b16 %v3853, %v3849
        %v4870 = vpack.c.b16 %v3854, %v3850
        %v4871 = vpack.c.b16 %v3855, %v3851
        %v4872 = vpack.c.b16 %v3856, %v3852
        %v4873 = vpack.c.b16 %v3861, %v3857
        %v4874 = vpack.c.b16 %v3862, %v3858
        %v4875 = vpack.c.b16 %v3863, %v3859
        %v4876 = vpack.c.b16 %v3864, %v3860
        %v4877 = vpack.c.b16 %v3869, %v3865
        %v4878 = vpack.c.b16 %v3870, %v3866
        %v4879 = vpack.c.b16 %v3871, %v3867
        %v4880 = vpack.c.b16 %v3872, %v3868
        %v4881 = vpack.c.b16 %v3877, %v3873
        %v4882 = vpack.c.b16 %v3878, %v3874
        %v4883 = vpack.c.b16 %v3879, %v3875
        %v4884 = vpack.c.b16 %v3880, %v3876
        %v4885 = vpack.c.b16 %v3885, %v3881
        %v4886 = vpack.c.b16 %v3886, %v3882
        %v4887 = vpack.c.b16 %v3887, %v3883
        %v4888 = vpack.c.b16 %v3888, %v3884
        %v4889 = vpack.c.b16 %v3893, %v3889
        %v4890 = vpack.c.b16 %v3894, %v3890
        %v4891 = vpack.c.b16 %v3895, %v3891
        %v4892 = vpack.c.b16 %v3896, %v3892
        %v4893 = vpack.c.b16 %v3901, %v3897
        %v4894 = vpack.c.b16 %v3902, %v3898
        %v4895 = vpack.c.b16 %v3903, %v3899
        %v4896 = vpack.c.b16 %v3904, %v3900
        %v4897 = vpack.c.b16 %v3909, %v3905
        %v4898 = vpack.c.b16 %v3910, %v3906
        %v4899 = vpack.c.b16 %v3911, %v3907
        %v4900 = vpack.c.b16 %v3912, %v3908
        %v4901 = vpack.c.b16 %v3917, %v3913
        %v4902 = vpack.c.b16 %v3918, %v3914
        %v4903 = vpack.c.b16 %v3919, %v3915
        %v4904 = vpack.c.b16 %v3920, %v3916
        %v4905 = vpack.c.b16 %v3925, %v3921
        %v4906 = vpack.c.b16 %v3926, %v3922
        %v4907 = vpack.c.b16 %v3927, %v3923
        %v4908 = vpack.c.b16 %v3928, %v3924
        %v4909 = vpack.c.b16 %v3933, %v3929
        %v4910 = vpack.c.b16 %v3934, %v3930
        %v4911 = vpack.c.b16 %v3935, %v3931
        %v4912 = vpack.c.b16 %v3936, %v3932
        %v4913 = vpack.c.b16 %v3941, %v3937
        %v4914 = vpack.c.b16 %v3942, %v3938
        %v4915 = vpack.c.b16 %v3943, %v3939
        %v4916 = vpack.c.b16 %v3944, %v3940
        %v4917 = vpack.c.b16 %v3949, %v3945
        %v4918 = vpack.c.b16 %v3950, %v3946
        %v4919 = vpack.c.b16 %v3951, %v3947
        %v4920 = vpack.c.b16 %v3952, %v3948
        %v4921 = vpack.c.b16 %v3957, %v3953
        %v4922 = vpack.c.b16 %v3958, %v3954
        %v4923 = vpack.c.b16 %v3959, %v3955
        %v4924 = vpack.c.b16 %v3960, %v3956
        %v4925 = vpack.c.b16 %v3965, %v3961
        %v4926 = vpack.c.b16 %v3966, %v3962
        %v4927 = vpack.c.b16 %v3967, %v3963
        %v4928 = vpack.c.b16 %v3968, %v3964
        %v4929 = vpack.c.b16 %v3973, %v3969
        %v4930 = vpack.c.b16 %v3974, %v3970
        %v4931 = vpack.c.b16 %v3975, %v3971
        %v4932 = vpack.c.b16 %v3976, %v3972
        %v4933 = vpack.c.b16 %v3981, %v3977
        %v4934 = vpack.c.b16 %v3982, %v3978
        %v4935 = vpack.c.b16 %v3983, %v3979
        %v4936 = vpack.c.b16 %v3984, %v3980
        %v4937 = vpack.c.b16 %v3989, %v3985
        %v4938 = vpack.c.b16 %v3990, %v3986
        %v4939 = vpack.c.b16 %v3991, %v3987
        %v4940 = vpack.c.b16 %v3992, %v3988
        %v4941 = vpack.c.b16 %v3997, %v3993
        %v4942 = vpack.c.b16 %v3998, %v3994
        %v4943 = vpack.c.b16 %v3999, %v3995
        %v4944 = vpack.c.b16 %v4000, %v3996
        %v4945 = vpack.c.b16 %v4005, %v4001
        %v4946 = vpack.c.b16 %v4006, %v4002
        %v4947 = vpack.c.b16 %v4007, %v4003
        %v4948 = vpack.c.b16 %v4008, %v4004
        %v4949 = vpack.c.b16 %v4013, %v4009
        %v4950 = vpack.c.b16 %v4014, %v4010
        %v4951 = vpack.c.b16 %v4015, %v4011
        %v4952 = vpack.c.b16 %v4016, %v4012
        %v4953 = vpack.c.b16 %v4021, %v4017
        %v4954 = vpack.c.b16 %v4022, %v4018
        %v4955 = vpack.c.b16 %v4023, %v4019
        %v4956 = vpack.c.b16 %v4024, %v4020
        %v4957 = vpack.c.b16 %v4029, %v4025
        %v4958 = vpack.c.b16 %v4030, %v4026
        %v4959 = vpack.c.b16 %v4031, %v4027
        %v4960 = vpack.c.b16 %v4032, %v4028
        %v4961 = vpack.c.b16 %v4037, %v4033
        %v4962 = vpack.c.b16 %v4038, %v4034
        %v4963 = vpack.c.b16 %v4039, %v4035
        %v4964 = vpack.c.b16 %v4040, %v4036
        %v4965 = vpack.c.b16 %v4045, %v4041
        %v4966 = vpack.c.b16 %v4046, %v4042
        %v4967 = vpack.c.b16 %v4047, %v4043
        %v4968 = vpack.c.b16 %v4048, %v4044
        %v4969 = vpack.c.b16 %v4053, %v4049
        %v4970 = vpack.c.b16 %v4054, %v4050
        %v4971 = vpack.c.b16 %v4055, %v4051
        %v4972 = vpack.c.b16 %v4056, %v4052
        %v4973 = vpack.c.b16 %v4061, %v4057
        %v4974 = vpack.c.b16 %v4062, %v4058
        %v4975 = vpack.c.b16 %v4063, %v4059
        %v4976 = vpack.c.b16 %v4064, %v4060
        %v4977 = vpack.c.b16 %v4069, %v4065
        %v4978 = vpack.c.b16 %v4070, %v4066
        %v4979 = vpack.c.b16 %v4071, %v4067
        %v4980 = vpack.c.b16 %v4072, %v4068
        %v4981 = vpack.c.b16 %v4077, %v4073
        %v4982 = vpack.c.b16 %v4078, %v4074
        %v4983 = vpack.c.b16 %v4079, %v4075
        %v4984 = vpack.c.b16 %v4080, %v4076
        %v4985 = vpack.c.b16 %v4085, %v4081
        %v4986 = vpack.c.b16 %v4086, %v4082
        %v4987 = vpack.c.b16 %v4087, %v4083
        %v4988 = vpack.c.b16 %v4088, %v4084
        %v4989 = vpack.c.b16 %v4093, %v4089
        %v4990 = vpack.c.b16 %v4094, %v4090
        %v4991 = vpack.c.b16 %v4095, %v4091
        %v4992 = vpack.c.b16 %v4096, %v4092
        %5889 = vmatprep.subr.bf16.mxu0 %v4126
        %5890 = vmatpush1.bf16.msra.mxu0 %v4125
        %5891 = vmatprep.subr.bf16.mxu0 %v4122
        %5892 = vmatpush1.bf16.msra.mxu0 %v4121
        %5893 = vmatprep.subr.bf16.mxu0 %v4118
        %5894 = vmatpush1.bf16.msra.mxu0 %v4117
        %5895 = vmatprep.subr.bf16.mxu0 %v4114
        %5896 = vmatpush1.bf16.msra.mxu0 %v4113
        %5897 = vmatprep.subr.bf16.mxu0 %v4110
        %5898 = vmatpush1.bf16.msra.mxu0 %v4109
        %5899 = vmatprep.subr.bf16.mxu0 %v4106
        %5900 = vmatpush1.bf16.msra.mxu0 %v4105
        %5901 = vmatprep.subr.bf16.mxu0 %v4102
        %5902 = vmatpush1.bf16.msra.mxu0 %v4101
        %5903 = vmatprep.subr.bf16.mxu0 %v4098
        %5904 = vmatpush1.bf16.msra.mxu0 %v4097
        %5905 = vmatprep.subr.bf16.mxu0 %v4158
        %5906 = vmatpush2.bf16.msra.mxu0 %v4157
        %5907 = vmatprep.subr.bf16.mxu0 %v4154
        %5908 = vmatpush2.bf16.msra.mxu0 %v4153
        %5909 = vmatprep.subr.bf16.mxu0 %v4150
        %5910 = vmatpush2.bf16.msra.mxu0 %v4149
        %5911 = vmatprep.subr.bf16.mxu0 %v4146
        %5912 = vmatpush2.bf16.msra.mxu0 %v4145
        %5913 = vmatprep.subr.bf16.mxu0 %v4142
        %5914 = vmatpush2.bf16.msra.mxu0 %v4141
        %5915 = vmatprep.subr.bf16.mxu0 %v4138
        %5916 = vmatpush2.bf16.msra.mxu0 %v4137
        %5917 = vmatprep.subr.bf16.mxu0 %v4134
        %5918 = vmatpush2.bf16.msra.mxu0 %v4133
        %5919 = vmatprep.subr.bf16.mxu0 %v4130
        %5920 = vmatpush2.bf16.msra.mxu0 %v4129
        %5921 = vmatprep.mubr.bf16.mxu0 %v1247
        %5922 = vmatmul.mubr.bf16.gmra.mxu0 %v1233
        %v5923 = vpop.f32.mrf.mxu0
        %v5924 = vadd.f32 0.0, %v5923
        %v5925 = vpop.f32.mrf.mxu0
        %v5926 = vadd.f32 0.0, %v5925
        %v5927 = vpop.f32.mrf.mxu0
        %v5928 = vpop.f32.mrf.mxu0
        %5929 = vdwg.mxu0
        %5930 = vmatprep.subr.bf16.mxu0 %v4190
        %5931 = vmatpush1.bf16.msra.mxu0 %v4189
        %5932 = vmatprep.subr.bf16.mxu0 %v4186
        %5933 = vmatpush1.bf16.msra.mxu0 %v4185
        %5934 = vmatprep.subr.bf16.mxu0 %v4182
        %5935 = vmatpush1.bf16.msra.mxu0 %v4181
        %5936 = vmatprep.subr.bf16.mxu0 %v4178
        %5937 = vmatpush1.bf16.msra.mxu0 %v4177
        %5938 = vmatprep.subr.bf16.mxu0 %v4174
        %5939 = vmatpush1.bf16.msra.mxu0 %v4173
        %5940 = vmatprep.subr.bf16.mxu0 %v4170
        %5941 = vmatpush1.bf16.msra.mxu0 %v4169
        %5942 = vmatprep.subr.bf16.mxu0 %v4166
        %5943 = vmatpush1.bf16.msra.mxu0 %v4165
        %5944 = vmatprep.subr.bf16.mxu0 %v4162
        %5945 = vmatpush1.bf16.msra.mxu0 %v4161
        %5946 = vmatprep.subr.bf16.mxu0 %v4222
        %5947 = vmatpush2.bf16.msra.mxu0 %v4221
        %5948 = vmatprep.subr.bf16.mxu0 %v4218
        %5949 = vmatpush2.bf16.msra.mxu0 %v4217
        %5950 = vmatprep.subr.bf16.mxu0 %v4214
        %5951 = vmatpush2.bf16.msra.mxu0 %v4213
        %5952 = vmatprep.subr.bf16.mxu0 %v4210
        %5953 = vmatpush2.bf16.msra.mxu0 %v4209
        %5954 = vmatprep.subr.bf16.mxu0 %v4206
        %5955 = vmatpush2.bf16.msra.mxu0 %v4205
        %5956 = vmatprep.subr.bf16.mxu0 %v4202
        %5957 = vmatpush2.bf16.msra.mxu0 %v4201
        %5958 = vmatprep.subr.bf16.mxu0 %v4198
        %5959 = vmatpush2.bf16.msra.mxu0 %v4197
        %5960 = vmatprep.subr.bf16.mxu0 %v4194
        %5961 = vmatpush2.bf16.msra.mxu0 %v4193
        %5962 = vmatprep.mubr.bf16.mxu0 %v1257
        %5963 = vmatmul.mubr.bf16.gmra.mxu0 %v1255
        %v5964 = vpop.f32.mrf.mxu0
        %v5965 = vadd.f32 %v5924, %v5964
        %v5966 = vpop.f32.mrf.mxu0
        %v5967 = vadd.f32 %v5926, %v5966
        %v5968 = vpop.f32.mrf.mxu0
        %v5969 = vpop.f32.mrf.mxu0
        %5970 = vdwg.mxu0
        %5971 = vmatprep.subr.bf16.mxu0 %v4254
        %5972 = vmatpush1.bf16.msra.mxu0 %v4253
        %5973 = vmatprep.subr.bf16.mxu0 %v4250
        %5974 = vmatpush1.bf16.msra.mxu0 %v4249
        %5975 = vmatprep.subr.bf16.mxu0 %v4246
        %5976 = vmatpush1.bf16.msra.mxu0 %v4245
        %5977 = vmatprep.subr.bf16.mxu0 %v4242
        %5978 = vmatpush1.bf16.msra.mxu0 %v4241
        %5979 = vmatprep.subr.bf16.mxu0 %v4238
        %5980 = vmatpush1.bf16.msra.mxu0 %v4237
        %5981 = vmatprep.subr.bf16.mxu0 %v4234
        %5982 = vmatpush1.bf16.msra.mxu0 %v4233
        %5983 = vmatprep.subr.bf16.mxu0 %v4230
        %5984 = vmatpush1.bf16.msra.mxu0 %v4229
        %5985 = vmatprep.subr.bf16.mxu0 %v4226
        %5986 = vmatpush1.bf16.msra.mxu0 %v4225
        %5987 = vmatprep.subr.bf16.mxu0 %v4286
        %5988 = vmatpush2.bf16.msra.mxu0 %v4285
        %5989 = vmatprep.subr.bf16.mxu0 %v4282
        %5990 = vmatpush2.bf16.msra.mxu0 %v4281
        %5991 = vmatprep.subr.bf16.mxu0 %v4278
        %5992 = vmatpush2.bf16.msra.mxu0 %v4277
        %5993 = vmatprep.subr.bf16.mxu0 %v4274
        %5994 = vmatpush2.bf16.msra.mxu0 %v4273
        %5995 = vmatprep.subr.bf16.mxu0 %v4270
        %5996 = vmatpush2.bf16.msra.mxu0 %v4269
        %5997 = vmatprep.subr.bf16.mxu0 %v4266
        %5998 = vmatpush2.bf16.msra.mxu0 %v4265
        %5999 = vmatprep.subr.bf16.mxu0 %v4262
        %6000 = vmatpush2.bf16.msra.mxu0 %v4261
        %6001 = vmatprep.subr.bf16.mxu0 %v4258
        %6002 = vmatpush2.bf16.msra.mxu0 %v4257
        %6003 = vmatprep.mubr.bf16.mxu0 %v1254
        %6004 = vmatmul.mubr.bf16.gmra.mxu0 %v1240
        %v6005 = vpop.f32.mrf.mxu0
        %v6006 = vadd.f32 %v5965, %v6005
        %v6007 = vpop.f32.mrf.mxu0
        %v6008 = vadd.f32 %v5967, %v6007
        %v6009 = vpop.f32.mrf.mxu0
        %v6010 = vpop.f32.mrf.mxu0
        %6011 = vdwg.mxu0
        %6012 = vmatprep.subr.bf16.mxu0 %v4318
        %6013 = vmatpush1.bf16.msra.mxu0 %v4317
        %6014 = vmatprep.subr.bf16.mxu0 %v4314
        %6015 = vmatpush1.bf16.msra.mxu0 %v4313
        %6016 = vmatprep.subr.bf16.mxu0 %v4310
        %6017 = vmatpush1.bf16.msra.mxu0 %v4309
        %6018 = vmatprep.subr.bf16.mxu0 %v4306
        %6019 = vmatpush1.bf16.msra.mxu0 %v4305
        %6020 = vmatprep.subr.bf16.mxu0 %v4302
        %6021 = vmatpush1.bf16.msra.mxu0 %v4301
        %6022 = vmatprep.subr.bf16.mxu0 %v4298
        %6023 = vmatpush1.bf16.msra.mxu0 %v4297
        %6024 = vmatprep.subr.bf16.mxu0 %v4294
        %6025 = vmatpush1.bf16.msra.mxu0 %v4293
        %6026 = vmatprep.subr.bf16.mxu0 %v4290
        %6027 = vmatpush1.bf16.msra.mxu0 %v4289
        %6028 = vmatprep.subr.bf16.mxu0 %v4350
        %6029 = vmatpush2.bf16.msra.mxu0 %v4349
        %6030 = vmatprep.subr.bf16.mxu0 %v4346
        %6031 = vmatpush2.bf16.msra.mxu0 %v4345
        %6032 = vmatprep.subr.bf16.mxu0 %v4342
        %6033 = vmatpush2.bf16.msra.mxu0 %v4341
        %6034 = vmatprep.subr.bf16.mxu0 %v4338
        %6035 = vmatpush2.bf16.msra.mxu0 %v4337
        %6036 = vmatprep.subr.bf16.mxu0 %v4334
        %6037 = vmatpush2.bf16.msra.mxu0 %v4333
        %6038 = vmatprep.subr.bf16.mxu0 %v4330
        %6039 = vmatpush2.bf16.msra.mxu0 %v4329
        %6040 = vmatprep.subr.bf16.mxu0 %v4326
        %6041 = vmatpush2.bf16.msra.mxu0 %v4325
        %6042 = vmatprep.subr.bf16.mxu0 %v4322
        %6043 = vmatpush2.bf16.msra.mxu0 %v4321
        %6044 = vmatprep.mubr.bf16.mxu0 %v1258
        %6045 = vmatmul.mubr.bf16.gmra.mxu0 %v1256
        %v6046 = vpop.f32.mrf.mxu0
        %v6047 = vadd.f32 %v6006, %v6046
        %v6048 = vpop.f32.mrf.mxu0
        %v6049 = vadd.f32 %v6008, %v6048
        %v6050 = vpop.f32.mrf.mxu0
        %v6051 = vpop.f32.mrf.mxu0
        %6052 = vdwg.mxu0
        %6053 = vmatprep.subr.bf16.mxu0 %v4382
        %6054 = vmatpush1.bf16.msra.mxu0 %v4381
        %6055 = vmatprep.subr.bf16.mxu0 %v4378
        %6056 = vmatpush1.bf16.msra.mxu0 %v4377
        %6057 = vmatprep.subr.bf16.mxu0 %v4374
        %6058 = vmatpush1.bf16.msra.mxu0 %v4373
        %6059 = vmatprep.subr.bf16.mxu0 %v4370
        %6060 = vmatpush1.bf16.msra.mxu0 %v4369
        %6061 = vmatprep.subr.bf16.mxu0 %v4366
        %6062 = vmatpush1.bf16.msra.mxu0 %v4365
        %6063 = vmatprep.subr.bf16.mxu0 %v4362
        %6064 = vmatpush1.bf16.msra.mxu0 %v4361
        %6065 = vmatprep.subr.bf16.mxu0 %v4358
        %6066 = vmatpush1.bf16.msra.mxu0 %v4357
        %6067 = vmatprep.subr.bf16.mxu0 %v4354
        %6068 = vmatpush1.bf16.msra.mxu0 %v4353
        %6069 = vmatprep.subr.bf16.mxu0 %v4414
        %6070 = vmatpush2.bf16.msra.mxu0 %v4413
        %6071 = vmatprep.subr.bf16.mxu0 %v4410
        %6072 = vmatpush2.bf16.msra.mxu0 %v4409
        %6073 = vmatprep.subr.bf16.mxu0 %v4406
        %6074 = vmatpush2.bf16.msra.mxu0 %v4405
        %6075 = vmatprep.subr.bf16.mxu0 %v4402
        %6076 = vmatpush2.bf16.msra.mxu0 %v4401
        %6077 = vmatprep.subr.bf16.mxu0 %v4398
        %6078 = vmatpush2.bf16.msra.mxu0 %v4397
        %6079 = vmatprep.subr.bf16.mxu0 %v4394
        %6080 = vmatpush2.bf16.msra.mxu0 %v4393
        %6081 = vmatprep.subr.bf16.mxu0 %v4390
        %6082 = vmatpush2.bf16.msra.mxu0 %v4389
        %6083 = vmatprep.subr.bf16.mxu0 %v4386
        %6084 = vmatpush2.bf16.msra.mxu0 %v4385
        %6085 = vmatprep.mubr.bf16.mxu0 %v1296
        %6086 = vmatmul.mubr.bf16.gmra.mxu0 %v1282
        %v6087 = vpop.f32.mrf.mxu0
        %v6088 = vadd.f32 %v6047, %v6087
        %v6089 = vpop.f32.mrf.mxu0
        %v6090 = vadd.f32 %v6049, %v6089
        %v6091 = vpop.f32.mrf.mxu0
        %v6092 = vpop.f32.mrf.mxu0
        %6093 = vdwg.mxu0
        %6094 = vmatprep.subr.bf16.mxu0 %v4446
        %6095 = vmatpush1.bf16.msra.mxu0 %v4445
        %6096 = vmatprep.subr.bf16.mxu0 %v4442
        %6097 = vmatpush1.bf16.msra.mxu0 %v4441
        %6098 = vmatprep.subr.bf16.mxu0 %v4438
        %6099 = vmatpush1.bf16.msra.mxu0 %v4437
        %6100 = vmatprep.subr.bf16.mxu0 %v4434
        %6101 = vmatpush1.bf16.msra.mxu0 %v4433
        %6102 = vmatprep.subr.bf16.mxu0 %v4430
        %6103 = vmatpush1.bf16.msra.mxu0 %v4429
        %6104 = vmatprep.subr.bf16.mxu0 %v4426
        %6105 = vmatpush1.bf16.msra.mxu0 %v4425
        %6106 = vmatprep.subr.bf16.mxu0 %v4422
        %6107 = vmatpush1.bf16.msra.mxu0 %v4421
        %6108 = vmatprep.subr.bf16.mxu0 %v4418
        %6109 = vmatpush1.bf16.msra.mxu0 %v4417
        %6110 = vmatprep.subr.bf16.mxu0 %v4478
        %6111 = vmatpush2.bf16.msra.mxu0 %v4477
        %6112 = vmatprep.subr.bf16.mxu0 %v4474
        %6113 = vmatpush2.bf16.msra.mxu0 %v4473
        %6114 = vmatprep.subr.bf16.mxu0 %v4470
        %6115 = vmatpush2.bf16.msra.mxu0 %v4469
        %6116 = vmatprep.subr.bf16.mxu0 %v4466
        %6117 = vmatpush2.bf16.msra.mxu0 %v4465
        %6118 = vmatprep.subr.bf16.mxu0 %v4462
        %6119 = vmatpush2.bf16.msra.mxu0 %v4461
        %6120 = vmatprep.subr.bf16.mxu0 %v4458
        %6121 = vmatpush2.bf16.msra.mxu0 %v4457
        %6122 = vmatprep.subr.bf16.mxu0 %v4454
        %6123 = vmatpush2.bf16.msra.mxu0 %v4453
        %6124 = vmatprep.subr.bf16.mxu0 %v4450
        %6125 = vmatpush2.bf16.msra.mxu0 %v4449
        %6126 = vmatprep.mubr.bf16.mxu0 %v1306
        %6127 = vmatmul.mubr.bf16.gmra.mxu0 %v1304
        %v6128 = vpop.f32.mrf.mxu0
        %v6129 = vadd.f32 %v6088, %v6128
        %v6130 = vpop.f32.mrf.mxu0
        %v6131 = vadd.f32 %v6090, %v6130
        %v6132 = vpop.f32.mrf.mxu0
        %v6133 = vpop.f32.mrf.mxu0
        %6134 = vdwg.mxu0
        %6135 = vmatprep.subr.bf16.mxu0 %v4510
        %6136 = vmatpush1.bf16.msra.mxu0 %v4509
        %6137 = vmatprep.subr.bf16.mxu0 %v4506
        %6138 = vmatpush1.bf16.msra.mxu0 %v4505
        %6139 = vmatprep.subr.bf16.mxu0 %v4502
        %6140 = vmatpush1.bf16.msra.mxu0 %v4501
        %6141 = vmatprep.subr.bf16.mxu0 %v4498
        %6142 = vmatpush1.bf16.msra.mxu0 %v4497
        %6143 = vmatprep.subr.bf16.mxu0 %v4494
        %6144 = vmatpush1.bf16.msra.mxu0 %v4493
        %6145 = vmatprep.subr.bf16.mxu0 %v4490
        %6146 = vmatpush1.bf16.msra.mxu0 %v4489
        %6147 = vmatprep.subr.bf16.mxu0 %v4486
        %6148 = vmatpush1.bf16.msra.mxu0 %v4485
        %6149 = vmatprep.subr.bf16.mxu0 %v4482
        %6150 = vmatpush1.bf16.msra.mxu0 %v4481
        %6151 = vmatprep.subr.bf16.mxu0 %v4542
        %6152 = vmatpush2.bf16.msra.mxu0 %v4541
        %6153 = vmatprep.subr.bf16.mxu0 %v4538
        %6154 = vmatpush2.bf16.msra.mxu0 %v4537
        %6155 = vmatprep.subr.bf16.mxu0 %v4534
        %6156 = vmatpush2.bf16.msra.mxu0 %v4533
        %6157 = vmatprep.subr.bf16.mxu0 %v4530
        %6158 = vmatpush2.bf16.msra.mxu0 %v4529
        %6159 = vmatprep.subr.bf16.mxu0 %v4526
        %6160 = vmatpush2.bf16.msra.mxu0 %v4525
        %6161 = vmatprep.subr.bf16.mxu0 %v4522
        %6162 = vmatpush2.bf16.msra.mxu0 %v4521
        %6163 = vmatprep.subr.bf16.mxu0 %v4518
        %6164 = vmatpush2.bf16.msra.mxu0 %v4517
        %6165 = vmatprep.subr.bf16.mxu0 %v4514
        %6166 = vmatpush2.bf16.msra.mxu0 %v4513
        %6167 = vmatprep.mubr.bf16.mxu0 %v1303
        %6168 = vmatmul.mubr.bf16.gmra.mxu0 %v1289
        %v6169 = vpop.f32.mrf.mxu0
        %v6170 = vadd.f32 %v6129, %v6169
        %v6171 = vpop.f32.mrf.mxu0
        %v6172 = vadd.f32 %v6131, %v6171
        %v6173 = vpop.f32.mrf.mxu0
        %v6174 = vpop.f32.mrf.mxu0
        %6175 = vdwg.mxu0
        %6176 = vmatprep.subr.bf16.mxu0 %v4574
        %6177 = vmatpush1.bf16.msra.mxu0 %v4573
        %6178 = vmatprep.subr.bf16.mxu0 %v4570
        %6179 = vmatpush1.bf16.msra.mxu0 %v4569
        %6180 = vmatprep.subr.bf16.mxu0 %v4566
        %6181 = vmatpush1.bf16.msra.mxu0 %v4565
        %6182 = vmatprep.subr.bf16.mxu0 %v4562
        %6183 = vmatpush1.bf16.msra.mxu0 %v4561
        %6184 = vmatprep.subr.bf16.mxu0 %v4558
        %6185 = vmatpush1.bf16.msra.mxu0 %v4557
        %6186 = vmatprep.subr.bf16.mxu0 %v4554
        %6187 = vmatpush1.bf16.msra.mxu0 %v4553
        %6188 = vmatprep.subr.bf16.mxu0 %v4550
        %6189 = vmatpush1.bf16.msra.mxu0 %v4549
        %6190 = vmatprep.subr.bf16.mxu0 %v4546
        %6191 = vmatpush1.bf16.msra.mxu0 %v4545
        %6192 = vmatprep.subr.bf16.mxu0 %v4606
        %6193 = vmatpush2.bf16.msra.mxu0 %v4605
        %6194 = vmatprep.subr.bf16.mxu0 %v4602
        %6195 = vmatpush2.bf16.msra.mxu0 %v4601
        %6196 = vmatprep.subr.bf16.mxu0 %v4598
        %6197 = vmatpush2.bf16.msra.mxu0 %v4597
        %6198 = vmatprep.subr.bf16.mxu0 %v4594
        %6199 = vmatpush2.bf16.msra.mxu0 %v4593
        %6200 = vmatprep.subr.bf16.mxu0 %v4590
        %6201 = vmatpush2.bf16.msra.mxu0 %v4589
        %6202 = vmatprep.subr.bf16.mxu0 %v4586
        %6203 = vmatpush2.bf16.msra.mxu0 %v4585
        %6204 = vmatprep.subr.bf16.mxu0 %v4582
        %6205 = vmatpush2.bf16.msra.mxu0 %v4581
        %6206 = vmatprep.subr.bf16.mxu0 %v4578
        %6207 = vmatpush2.bf16.msra.mxu0 %v4577
        %6208 = vmatprep.mubr.bf16.mxu0 %v1307
        %6209 = vmatmul.mubr.bf16.gmra.mxu0 %v1305
        %v6210 = vpop.f32.mrf.mxu0
        %v6211 = vadd.f32 %v6170, %v6210
        %v6212 = vpop.f32.mrf.mxu0
        %v6213 = vadd.f32 %v6172, %v6212
        %v6214 = vpop.f32.mrf.mxu0
        %v6215 = vpop.f32.mrf.mxu0
        %6216 = vdwg.mxu0
        %6217 = vmatprep.subr.bf16.mxu0 %v4638
        %6218 = vmatpush1.bf16.msra.mxu0 %v4637
        %6219 = vmatprep.subr.bf16.mxu0 %v4634
        %6220 = vmatpush1.bf16.msra.mxu0 %v4633
        %6221 = vmatprep.subr.bf16.mxu0 %v4630
        %6222 = vmatpush1.bf16.msra.mxu0 %v4629
        %6223 = vmatprep.subr.bf16.mxu0 %v4626
        %6224 = vmatpush1.bf16.msra.mxu0 %v4625
        %6225 = vmatprep.subr.bf16.mxu0 %v4622
        %6226 = vmatpush1.bf16.msra.mxu0 %v4621
        %6227 = vmatprep.subr.bf16.mxu0 %v4618
        %6228 = vmatpush1.bf16.msra.mxu0 %v4617
        %6229 = vmatprep.subr.bf16.mxu0 %v4614
        %6230 = vmatpush1.bf16.msra.mxu0 %v4613
        %6231 = vmatprep.subr.bf16.mxu0 %v4610
        %6232 = vmatpush1.bf16.msra.mxu0 %v4609
        %6233 = vmatprep.subr.bf16.mxu0 %v4670
        %6234 = vmatpush2.bf16.msra.mxu0 %v4669
        %6235 = vmatprep.subr.bf16.mxu0 %v4666
        %6236 = vmatpush2.bf16.msra.mxu0 %v4665
        %6237 = vmatprep.subr.bf16.mxu0 %v4662
        %6238 = vmatpush2.bf16.msra.mxu0 %v4661
        %6239 = vmatprep.subr.bf16.mxu0 %v4658
        %6240 = vmatpush2.bf16.msra.mxu0 %v4657
        %6241 = vmatprep.subr.bf16.mxu0 %v4654
        %6242 = vmatpush2.bf16.msra.mxu0 %v4653
        %6243 = vmatprep.subr.bf16.mxu0 %v4650
        %6244 = vmatpush2.bf16.msra.mxu0 %v4649
        %6245 = vmatprep.subr.bf16.mxu0 %v4646
        %6246 = vmatpush2.bf16.msra.mxu0 %v4645
        %6247 = vmatprep.subr.bf16.mxu0 %v4642
        %6248 = vmatpush2.bf16.msra.mxu0 %v4641
        %6249 = vmatprep.mubr.bf16.mxu0 %v1345
        %6250 = vmatmul.mubr.bf16.gmra.mxu0 %v1331
        %v6251 = vpop.f32.mrf.mxu0
        %v6252 = vadd.f32 %v6211, %v6251
        %v6253 = vpop.f32.mrf.mxu0
        %v6254 = vadd.f32 %v6213, %v6253
        %v6255 = vpop.f32.mrf.mxu0
        %v6256 = vpop.f32.mrf.mxu0
        %6257 = vdwg.mxu0
        %6258 = vmatprep.subr.bf16.mxu0 %v4702
        %6259 = vmatpush1.bf16.msra.mxu0 %v4701
        %6260 = vmatprep.subr.bf16.mxu0 %v4698
        %6261 = vmatpush1.bf16.msra.mxu0 %v4697
        %6262 = vmatprep.subr.bf16.mxu0 %v4694
        %6263 = vmatpush1.bf16.msra.mxu0 %v4693
        %6264 = vmatprep.subr.bf16.mxu0 %v4690
        %6265 = vmatpush1.bf16.msra.mxu0 %v4689
        %6266 = vmatprep.subr.bf16.mxu0 %v4686
        %6267 = vmatpush1.bf16.msra.mxu0 %v4685
        %6268 = vmatprep.subr.bf16.mxu0 %v4682
        %6269 = vmatpush1.bf16.msra.mxu0 %v4681
        %6270 = vmatprep.subr.bf16.mxu0 %v4678
        %6271 = vmatpush1.bf16.msra.mxu0 %v4677
        %6272 = vmatprep.subr.bf16.mxu0 %v4674
        %6273 = vmatpush1.bf16.msra.mxu0 %v4673
        %6274 = vmatprep.subr.bf16.mxu0 %v4734
        %6275 = vmatpush2.bf16.msra.mxu0 %v4733
        %6276 = vmatprep.subr.bf16.mxu0 %v4730
        %6277 = vmatpush2.bf16.msra.mxu0 %v4729
        %6278 = vmatprep.subr.bf16.mxu0 %v4726
        %6279 = vmatpush2.bf16.msra.mxu0 %v4725
        %6280 = vmatprep.subr.bf16.mxu0 %v4722
        %6281 = vmatpush2.bf16.msra.mxu0 %v4721
        %6282 = vmatprep.subr.bf16.mxu0 %v4718
        %6283 = vmatpush2.bf16.msra.mxu0 %v4717
        %6284 = vmatprep.subr.bf16.mxu0 %v4714
        %6285 = vmatpush2.bf16.msra.mxu0 %v4713
        %6286 = vmatprep.subr.bf16.mxu0 %v4710
        %6287 = vmatpush2.bf16.msra.mxu0 %v4709
        %6288 = vmatprep.subr.bf16.mxu0 %v4706
        %6289 = vmatpush2.bf16.msra.mxu0 %v4705
        %6290 = vmatprep.mubr.bf16.mxu0 %v1355
        %6291 = vmatmul.mubr.bf16.gmra.mxu0 %v1353
        %v6292 = vpop.f32.mrf.mxu0
        %v6293 = vadd.f32 %v6252, %v6292
        %v6294 = vpop.f32.mrf.mxu0
        %v6295 = vadd.f32 %v6254, %v6294
        %v6296 = vpop.f32.mrf.mxu0
        %v6297 = vpop.f32.mrf.mxu0
        %6298 = vdwg.mxu0
        %6299 = vmatprep.subr.bf16.mxu0 %v4766
        %6300 = vmatpush1.bf16.msra.mxu0 %v4765
        %6301 = vmatprep.subr.bf16.mxu0 %v4762
        %6302 = vmatpush1.bf16.msra.mxu0 %v4761
        %6303 = vmatprep.subr.bf16.mxu0 %v4758
        %6304 = vmatpush1.bf16.msra.mxu0 %v4757
        %6305 = vmatprep.subr.bf16.mxu0 %v4754
        %6306 = vmatpush1.bf16.msra.mxu0 %v4753
        %6307 = vmatprep.subr.bf16.mxu0 %v4750
        %6308 = vmatpush1.bf16.msra.mxu0 %v4749
        %6309 = vmatprep.subr.bf16.mxu0 %v4746
        %6310 = vmatpush1.bf16.msra.mxu0 %v4745
        %6311 = vmatprep.subr.bf16.mxu0 %v4742
        %6312 = vmatpush1.bf16.msra.mxu0 %v4741
        %6313 = vmatprep.subr.bf16.mxu0 %v4738
        %6314 = vmatpush1.bf16.msra.mxu0 %v4737
        %6315 = vmatprep.subr.bf16.mxu0 %v4798
        %6316 = vmatpush2.bf16.msra.mxu0 %v4797
        %6317 = vmatprep.subr.bf16.mxu0 %v4794
        %6318 = vmatpush2.bf16.msra.mxu0 %v4793
        %6319 = vmatprep.subr.bf16.mxu0 %v4790
        %6320 = vmatpush2.bf16.msra.mxu0 %v4789
        %6321 = vmatprep.subr.bf16.mxu0 %v4786
        %6322 = vmatpush2.bf16.msra.mxu0 %v4785
        %6323 = vmatprep.subr.bf16.mxu0 %v4782
        %6324 = vmatpush2.bf16.msra.mxu0 %v4781
        %6325 = vmatprep.subr.bf16.mxu0 %v4778
        %6326 = vmatpush2.bf16.msra.mxu0 %v4777
        %6327 = vmatprep.subr.bf16.mxu0 %v4774
        %6328 = vmatpush2.bf16.msra.mxu0 %v4773
        %6329 = vmatprep.subr.bf16.mxu0 %v4770
        %6330 = vmatpush2.bf16.msra.mxu0 %v4769
        %6331 = vmatprep.mubr.bf16.mxu0 %v1352
        %6332 = vmatmul.mubr.bf16.gmra.mxu0 %v1338
        %v6333 = vpop.f32.mrf.mxu0
        %v6334 = vadd.f32 %v6293, %v6333
        %v6335 = vpop.f32.mrf.mxu0
        %v6336 = vadd.f32 %v6295, %v6335
        %v6337 = vpop.f32.mrf.mxu0
        %v6338 = vpop.f32.mrf.mxu0
        %6339 = vdwg.mxu0
        %6340 = vmatprep.subr.bf16.mxu0 %v4830
        %6341 = vmatpush1.bf16.msra.mxu0 %v4829
        %6342 = vmatprep.subr.bf16.mxu0 %v4826
        %6343 = vmatpush1.bf16.msra.mxu0 %v4825
        %6344 = vmatprep.subr.bf16.mxu0 %v4822
        %6345 = vmatpush1.bf16.msra.mxu0 %v4821
        %6346 = vmatprep.subr.bf16.mxu0 %v4818
        %6347 = vmatpush1.bf16.msra.mxu0 %v4817
        %6348 = vmatprep.subr.bf16.mxu0 %v4814
        %6349 = vmatpush1.bf16.msra.mxu0 %v4813
        %6350 = vmatprep.subr.bf16.mxu0 %v4810
        %6351 = vmatpush1.bf16.msra.mxu0 %v4809
        %6352 = vmatprep.subr.bf16.mxu0 %v4806
        %6353 = vmatpush1.bf16.msra.mxu0 %v4805
        %6354 = vmatprep.subr.bf16.mxu0 %v4802
        %6355 = vmatpush1.bf16.msra.mxu0 %v4801
        %6356 = vmatprep.subr.bf16.mxu0 %v4862
        %6357 = vmatpush2.bf16.msra.mxu0 %v4861
        %6358 = vmatprep.subr.bf16.mxu0 %v4858
        %6359 = vmatpush2.bf16.msra.mxu0 %v4857
        %6360 = vmatprep.subr.bf16.mxu0 %v4854
        %6361 = vmatpush2.bf16.msra.mxu0 %v4853
        %6362 = vmatprep.subr.bf16.mxu0 %v4850
        %6363 = vmatpush2.bf16.msra.mxu0 %v4849
        %6364 = vmatprep.subr.bf16.mxu0 %v4846
        %6365 = vmatpush2.bf16.msra.mxu0 %v4845
        %6366 = vmatprep.subr.bf16.mxu0 %v4842
        %6367 = vmatpush2.bf16.msra.mxu0 %v4841
        %6368 = vmatprep.subr.bf16.mxu0 %v4838
        %6369 = vmatpush2.bf16.msra.mxu0 %v4837
        %6370 = vmatprep.subr.bf16.mxu0 %v4834
        %6371 = vmatpush2.bf16.msra.mxu0 %v4833
        %6372 = vmatprep.mubr.bf16.mxu0 %v1356
        %6373 = vmatmul.mubr.bf16.gmra.mxu0 %v1354
        %v6374 = vpop.f32.mrf.mxu0
        %v6375 = vadd.f32 %v6334, %v6374
        %v6376 = vpop.f32.mrf.mxu0
        %v6377 = vadd.f32 %v6336, %v6376
        %v6378 = vpop.f32.mrf.mxu0
        %v6379 = vpop.f32.mrf.mxu0
        %6380 = vdwg.mxu0
        %6381 = vmatprep.subr.bf16.mxu0 %v4894
        %6382 = vmatpush1.bf16.msra.mxu0 %v4893
        %6383 = vmatprep.subr.bf16.mxu0 %v4890
        %6384 = vmatpush1.bf16.msra.mxu0 %v4889
        %6385 = vmatprep.subr.bf16.mxu0 %v4886
        %6386 = vmatpush1.bf16.msra.mxu0 %v4885
        %6387 = vmatprep.subr.bf16.mxu0 %v4882
        %6388 = vmatpush1.bf16.msra.mxu0 %v4881
        %6389 = vmatprep.subr.bf16.mxu0 %v4878
        %6390 = vmatpush1.bf16.msra.mxu0 %v4877
        %6391 = vmatprep.subr.bf16.mxu0 %v4874
        %6392 = vmatpush1.bf16.msra.mxu0 %v4873
        %6393 = vmatprep.subr.bf16.mxu0 %v4870
        %6394 = vmatpush1.bf16.msra.mxu0 %v4869
        %6395 = vmatprep.subr.bf16.mxu0 %v4866
        %6396 = vmatpush1.bf16.msra.mxu0 %v4865
        %6397 = vmatprep.subr.bf16.mxu0 %v4926
        %6398 = vmatpush2.bf16.msra.mxu0 %v4925
        %6399 = vmatprep.subr.bf16.mxu0 %v4922
        %6400 = vmatpush2.bf16.msra.mxu0 %v4921
        %6401 = vmatprep.subr.bf16.mxu0 %v4918
        %6402 = vmatpush2.bf16.msra.mxu0 %v4917
        %6403 = vmatprep.subr.bf16.mxu0 %v4914
        %6404 = vmatpush2.bf16.msra.mxu0 %v4913
        %6405 = vmatprep.subr.bf16.mxu0 %v4910
        %6406 = vmatpush2.bf16.msra.mxu0 %v4909
        %6407 = vmatprep.subr.bf16.mxu0 %v4906
        %6408 = vmatpush2.bf16.msra.mxu0 %v4905
        %6409 = vmatprep.subr.bf16.mxu0 %v4902
        %6410 = vmatpush2.bf16.msra.mxu0 %v4901
        %6411 = vmatprep.subr.bf16.mxu0 %v4898
        %6412 = vmatpush2.bf16.msra.mxu0 %v4897
        %6413 = vmatprep.mubr.bf16.mxu0 %v1378
        %6414 = vmatmul.mubr.bf16.gmra.mxu0 %v1371
        %v6415 = vpop.f32.mrf.mxu0
        %v6416 = vadd.f32 %v6375, %v6415
        %v6417 = vpop.f32.mrf.mxu0
        %v6418 = vadd.f32 %v6377, %v6417
        %v6419 = vpop.f32.mrf.mxu0
        %v6420 = vpop.f32.mrf.mxu0
        %6421 = vdwg.mxu0
        %6422 = vmatprep.subr.bf16.mxu0 %v4958
        %6423 = vmatpush1.bf16.msra.mxu0 %v4957
        %6424 = vmatprep.subr.bf16.mxu0 %v4954
        %6425 = vmatpush1.bf16.msra.mxu0 %v4953
        %6426 = vmatprep.subr.bf16.mxu0 %v4950
        %6427 = vmatpush1.bf16.msra.mxu0 %v4949
        %6428 = vmatprep.subr.bf16.mxu0 %v4946
        %6429 = vmatpush1.bf16.msra.mxu0 %v4945
        %6430 = vmatprep.subr.bf16.mxu0 %v4942
        %6431 = vmatpush1.bf16.msra.mxu0 %v4941
        %6432 = vmatprep.subr.bf16.mxu0 %v4938
        %6433 = vmatpush1.bf16.msra.mxu0 %v4937
        %6434 = vmatprep.subr.bf16.mxu0 %v4934
        %6435 = vmatpush1.bf16.msra.mxu0 %v4933
        %6436 = vmatprep.subr.bf16.mxu0 %v4930
        %6437 = vmatpush1.bf16.msra.mxu0 %v4929
        %6438 = vmatprep.subr.bf16.mxu0 %v4990
        %6439 = vmatpush2.bf16.msra.mxu0 %v4989
        %6440 = vmatprep.subr.bf16.mxu0 %v4986
        %6441 = vmatpush2.bf16.msra.mxu0 %v4985
        %6442 = vmatprep.subr.bf16.mxu0 %v4982
        %6443 = vmatpush2.bf16.msra.mxu0 %v4981
        %6444 = vmatprep.subr.bf16.mxu0 %v4978
        %6445 = vmatpush2.bf16.msra.mxu0 %v4977
        %6446 = vmatprep.subr.bf16.mxu0 %v4974
        %6447 = vmatpush2.bf16.msra.mxu0 %v4973
        %6448 = vmatprep.subr.bf16.mxu0 %v4970
        %6449 = vmatpush2.bf16.msra.mxu0 %v4969
        %6450 = vmatprep.subr.bf16.mxu0 %v4966
        %6451 = vmatpush2.bf16.msra.mxu0 %v4965
        %6452 = vmatprep.subr.bf16.mxu0 %v4962
        %6453 = vmatpush2.bf16.msra.mxu0 %v4961
        %6454 = vmatprep.mubr.bf16.mxu0 %v1380
        %6455 = vmatmul.mubr.bf16.gmra.mxu0 %v1379
        %v6456 = vpop.f32.mrf.mxu0
        %v6457 = vadd.f32 %v6416, %v6456
        %v6458 = vpop.f32.mrf.mxu0
        %v6459 = vadd.f32 %v6418, %v6458
        %v6460 = vpop.f32.mrf.mxu0
        %v6461 = vpop.f32.mrf.mxu0
        %6462 = vdwg.mxu0
        %6463 = vmatprep.subr.bf16.mxu0 %v4128
        %6464 = vmatpush1.bf16.msra.mxu0 %v4127
        %6465 = vmatprep.subr.bf16.mxu0 %v4124
        %6466 = vmatpush1.bf16.msra.mxu0 %v4123
        %6467 = vmatprep.subr.bf16.mxu0 %v4120
        %6468 = vmatpush1.bf16.msra.mxu0 %v4119
        %6469 = vmatprep.subr.bf16.mxu0 %v4116
        %6470 = vmatpush1.bf16.msra.mxu0 %v4115
        %6471 = vmatprep.subr.bf16.mxu0 %v4112
        %6472 = vmatpush1.bf16.msra.mxu0 %v4111
        %6473 = vmatprep.subr.bf16.mxu0 %v4108
        %6474 = vmatpush1.bf16.msra.mxu0 %v4107
        %6475 = vmatprep.subr.bf16.mxu0 %v4104
        %6476 = vmatpush1.bf16.msra.mxu0 %v4103
        %6477 = vmatprep.subr.bf16.mxu0 %v4100
        %6478 = vmatpush1.bf16.msra.mxu0 %v4099
        %6479 = vmatprep.subr.bf16.mxu0 %v4160
        %6480 = vmatpush2.bf16.msra.mxu0 %v4159
        %6481 = vmatprep.subr.bf16.mxu0 %v4156
        %6482 = vmatpush2.bf16.msra.mxu0 %v4155
        %6483 = vmatprep.subr.bf16.mxu0 %v4152
        %6484 = vmatpush2.bf16.msra.mxu0 %v4151
        %6485 = vmatprep.subr.bf16.mxu0 %v4148
        %6486 = vmatpush2.bf16.msra.mxu0 %v4147
        %6487 = vmatprep.subr.bf16.mxu0 %v4144
        %6488 = vmatpush2.bf16.msra.mxu0 %v4143
        %6489 = vmatprep.subr.bf16.mxu0 %v4140
        %6490 = vmatpush2.bf16.msra.mxu0 %v4139
        %6491 = vmatprep.subr.bf16.mxu0 %v4136
        %6492 = vmatpush2.bf16.msra.mxu0 %v4135
        %6493 = vmatprep.subr.bf16.mxu0 %v4132
        %6494 = vmatpush2.bf16.msra.mxu0 %v4131
        %6495 = vmatprep.mubr.bf16.mxu0 %v1247
        %6496 = vmatmul.mubr.bf16.gmra.mxu0 %v1233
        %v6497 = vpop.f32.mrf.mxu0
        %v6498 = vadd.f32 0.0, %v6497
        %v6499 = vpop.f32.mrf.mxu0
        %v6500 = vadd.f32 0.0, %v6499
        %v6501 = vpop.f32.mrf.mxu0
        %v6502 = vpop.f32.mrf.mxu0
        %6503 = vdwg.mxu0
        %6504 = vmatprep.subr.bf16.mxu0 %v4192
        %6505 = vmatpush1.bf16.msra.mxu0 %v4191
        %6506 = vmatprep.subr.bf16.mxu0 %v4188
        %6507 = vmatpush1.bf16.msra.mxu0 %v4187
        %6508 = vmatprep.subr.bf16.mxu0 %v4184
        %6509 = vmatpush1.bf16.msra.mxu0 %v4183
        %6510 = vmatprep.subr.bf16.mxu0 %v4180
        %6511 = vmatpush1.bf16.msra.mxu0 %v4179
        %6512 = vmatprep.subr.bf16.mxu0 %v4176
        %6513 = vmatpush1.bf16.msra.mxu0 %v4175
        %6514 = vmatprep.subr.bf16.mxu0 %v4172
        %6515 = vmatpush1.bf16.msra.mxu0 %v4171
        %6516 = vmatprep.subr.bf16.mxu0 %v4168
        %6517 = vmatpush1.bf16.msra.mxu0 %v4167
        %6518 = vmatprep.subr.bf16.mxu0 %v4164
        %6519 = vmatpush1.bf16.msra.mxu0 %v4163
        %6520 = vmatprep.subr.bf16.mxu0 %v4224
        %6521 = vmatpush2.bf16.msra.mxu0 %v4223
        %6522 = vmatprep.subr.bf16.mxu0 %v4220
        %6523 = vmatpush2.bf16.msra.mxu0 %v4219
        %6524 = vmatprep.subr.bf16.mxu0 %v4216
        %6525 = vmatpush2.bf16.msra.mxu0 %v4215
        %6526 = vmatprep.subr.bf16.mxu0 %v4212
        %6527 = vmatpush2.bf16.msra.mxu0 %v4211
        %6528 = vmatprep.subr.bf16.mxu0 %v4208
        %6529 = vmatpush2.bf16.msra.mxu0 %v4207
        %6530 = vmatprep.subr.bf16.mxu0 %v4204
        %6531 = vmatpush2.bf16.msra.mxu0 %v4203
        %6532 = vmatprep.subr.bf16.mxu0 %v4200
        %6533 = vmatpush2.bf16.msra.mxu0 %v4199
        %6534 = vmatprep.subr.bf16.mxu0 %v4196
        %6535 = vmatpush2.bf16.msra.mxu0 %v4195
        %6536 = vmatprep.mubr.bf16.mxu0 %v1257
        %6537 = vmatmul.mubr.bf16.gmra.mxu0 %v1255
        %v6538 = vpop.f32.mrf.mxu0
        %v6539 = vadd.f32 %v6498, %v6538
        %v6540 = vpop.f32.mrf.mxu0
        %v6541 = vadd.f32 %v6500, %v6540
        %v6542 = vpop.f32.mrf.mxu0
        %v6543 = vpop.f32.mrf.mxu0
        %6544 = vdwg.mxu0
        %6545 = vmatprep.subr.bf16.mxu0 %v4256
        %6546 = vmatpush1.bf16.msra.mxu0 %v4255
        %6547 = vmatprep.subr.bf16.mxu0 %v4252
        %6548 = vmatpush1.bf16.msra.mxu0 %v4251
        %6549 = vmatprep.subr.bf16.mxu0 %v4248
        %6550 = vmatpush1.bf16.msra.mxu0 %v4247
        %6551 = vmatprep.subr.bf16.mxu0 %v4244
        %6552 = vmatpush1.bf16.msra.mxu0 %v4243
        %6553 = vmatprep.subr.bf16.mxu0 %v4240
        %6554 = vmatpush1.bf16.msra.mxu0 %v4239
        %6555 = vmatprep.subr.bf16.mxu0 %v4236
        %6556 = vmatpush1.bf16.msra.mxu0 %v4235
        %6557 = vmatprep.subr.bf16.mxu0 %v4232
        %6558 = vmatpush1.bf16.msra.mxu0 %v4231
        %6559 = vmatprep.subr.bf16.mxu0 %v4228
        %6560 = vmatpush1.bf16.msra.mxu0 %v4227
        %6561 = vmatprep.subr.bf16.mxu0 %v4288
        %6562 = vmatpush2.bf16.msra.mxu0 %v4287
        %6563 = vmatprep.subr.bf16.mxu0 %v4284
        %6564 = vmatpush2.bf16.msra.mxu0 %v4283
        %6565 = vmatprep.subr.bf16.mxu0 %v4280
        %6566 = vmatpush2.bf16.msra.mxu0 %v4279
        %6567 = vmatprep.subr.bf16.mxu0 %v4276
        %6568 = vmatpush2.bf16.msra.mxu0 %v4275
        %6569 = vmatprep.subr.bf16.mxu0 %v4272
        %6570 = vmatpush2.bf16.msra.mxu0 %v4271
        %6571 = vmatprep.subr.bf16.mxu0 %v4268
        %6572 = vmatpush2.bf16.msra.mxu0 %v4267
        %6573 = vmatprep.subr.bf16.mxu0 %v4264
        %6574 = vmatpush2.bf16.msra.mxu0 %v4263
        %6575 = vmatprep.subr.bf16.mxu0 %v4260
        %6576 = vmatpush2.bf16.msra.mxu0 %v4259
        %6577 = vmatprep.mubr.bf16.mxu0 %v1254
        %6578 = vmatmul.mubr.bf16.gmra.mxu0 %v1240
        %v6579 = vpop.f32.mrf.mxu0
        %v6580 = vadd.f32 %v6539, %v6579
        %v6581 = vpop.f32.mrf.mxu0
        %v6582 = vadd.f32 %v6541, %v6581
        %v6583 = vpop.f32.mrf.mxu0
        %v6584 = vpop.f32.mrf.mxu0
        %6585 = vdwg.mxu0
        %6586 = vmatprep.subr.bf16.mxu0 %v4320
        %6587 = vmatpush1.bf16.msra.mxu0 %v4319
        %6588 = vmatprep.subr.bf16.mxu0 %v4316
        %6589 = vmatpush1.bf16.msra.mxu0 %v4315
        %6590 = vmatprep.subr.bf16.mxu0 %v4312
        %6591 = vmatpush1.bf16.msra.mxu0 %v4311
        %6592 = vmatprep.subr.bf16.mxu0 %v4308
        %6593 = vmatpush1.bf16.msra.mxu0 %v4307
        %6594 = vmatprep.subr.bf16.mxu0 %v4304
        %6595 = vmatpush1.bf16.msra.mxu0 %v4303
        %6596 = vmatprep.subr.bf16.mxu0 %v4300
        %6597 = vmatpush1.bf16.msra.mxu0 %v4299
        %6598 = vmatprep.subr.bf16.mxu0 %v4296
        %6599 = vmatpush1.bf16.msra.mxu0 %v4295
        %6600 = vmatprep.subr.bf16.mxu0 %v4292
        %6601 = vmatpush1.bf16.msra.mxu0 %v4291
        %6602 = vmatprep.subr.bf16.mxu0 %v4352
        %6603 = vmatpush2.bf16.msra.mxu0 %v4351
        %6604 = vmatprep.subr.bf16.mxu0 %v4348
        %6605 = vmatpush2.bf16.msra.mxu0 %v4347
        %6606 = vmatprep.subr.bf16.mxu0 %v4344
        %6607 = vmatpush2.bf16.msra.mxu0 %v4343
        %6608 = vmatprep.subr.bf16.mxu0 %v4340
        %6609 = vmatpush2.bf16.msra.mxu0 %v4339
        %6610 = vmatprep.subr.bf16.mxu0 %v4336
        %6611 = vmatpush2.bf16.msra.mxu0 %v4335
        %6612 = vmatprep.subr.bf16.mxu0 %v4332
        %6613 = vmatpush2.bf16.msra.mxu0 %v4331
        %6614 = vmatprep.subr.bf16.mxu0 %v4328
        %6615 = vmatpush2.bf16.msra.mxu0 %v4327
        %6616 = vmatprep.subr.bf16.mxu0 %v4324
        %6617 = vmatpush2.bf16.msra.mxu0 %v4323
        %6618 = vmatprep.mubr.bf16.mxu0 %v1258
        %6619 = vmatmul.mubr.bf16.gmra.mxu0 %v1256
        %v6620 = vpop.f32.mrf.mxu0
        %v6621 = vadd.f32 %v6580, %v6620
        %v6622 = vpop.f32.mrf.mxu0
        %v6623 = vadd.f32 %v6582, %v6622
        %v6624 = vpop.f32.mrf.mxu0
        %v6625 = vpop.f32.mrf.mxu0
        %6626 = vdwg.mxu0
        %6627 = vmatprep.subr.bf16.mxu0 %v4384
        %6628 = vmatpush1.bf16.msra.mxu0 %v4383
        %6629 = vmatprep.subr.bf16.mxu0 %v4380
        %6630 = vmatpush1.bf16.msra.mxu0 %v4379
        %6631 = vmatprep.subr.bf16.mxu0 %v4376
        %6632 = vmatpush1.bf16.msra.mxu0 %v4375
        %6633 = vmatprep.subr.bf16.mxu0 %v4372
        %6634 = vmatpush1.bf16.msra.mxu0 %v4371
        %6635 = vmatprep.subr.bf16.mxu0 %v4368
        %6636 = vmatpush1.bf16.msra.mxu0 %v4367
        %6637 = vmatprep.subr.bf16.mxu0 %v4364
        %6638 = vmatpush1.bf16.msra.mxu0 %v4363
        %6639 = vmatprep.subr.bf16.mxu0 %v4360
        %6640 = vmatpush1.bf16.msra.mxu0 %v4359
        %6641 = vmatprep.subr.bf16.mxu0 %v4356
        %6642 = vmatpush1.bf16.msra.mxu0 %v4355
        %6643 = vmatprep.subr.bf16.mxu0 %v4416
        %6644 = vmatpush2.bf16.msra.mxu0 %v4415
        %6645 = vmatprep.subr.bf16.mxu0 %v4412
        %6646 = vmatpush2.bf16.msra.mxu0 %v4411
        %6647 = vmatprep.subr.bf16.mxu0 %v4408
        %6648 = vmatpush2.bf16.msra.mxu0 %v4407
        %6649 = vmatprep.subr.bf16.mxu0 %v4404
        %6650 = vmatpush2.bf16.msra.mxu0 %v4403
        %6651 = vmatprep.subr.bf16.mxu0 %v4400
        %6652 = vmatpush2.bf16.msra.mxu0 %v4399
        %6653 = vmatprep.subr.bf16.mxu0 %v4396
        %6654 = vmatpush2.bf16.msra.mxu0 %v4395
        %6655 = vmatprep.subr.bf16.mxu0 %v4392
        %6656 = vmatpush2.bf16.msra.mxu0 %v4391
        %6657 = vmatprep.subr.bf16.mxu0 %v4388
        %6658 = vmatpush2.bf16.msra.mxu0 %v4387
        %6659 = vmatprep.mubr.bf16.mxu0 %v1296
        %6660 = vmatmul.mubr.bf16.gmra.mxu0 %v1282
        %v6661 = vpop.f32.mrf.mxu0
        %v6662 = vadd.f32 %v6621, %v6661
        %v6663 = vpop.f32.mrf.mxu0
        %v6664 = vadd.f32 %v6623, %v6663
        %v6665 = vpop.f32.mrf.mxu0
        %v6666 = vpop.f32.mrf.mxu0
        %6667 = vdwg.mxu0
        %6668 = vmatprep.subr.bf16.mxu0 %v4448
        %6669 = vmatpush1.bf16.msra.mxu0 %v4447
        %6670 = vmatprep.subr.bf16.mxu0 %v4444
        %6671 = vmatpush1.bf16.msra.mxu0 %v4443
        %6672 = vmatprep.subr.bf16.mxu0 %v4440
        %6673 = vmatpush1.bf16.msra.mxu0 %v4439
        %6674 = vmatprep.subr.bf16.mxu0 %v4436
        %6675 = vmatpush1.bf16.msra.mxu0 %v4435
        %6676 = vmatprep.subr.bf16.mxu0 %v4432
        %6677 = vmatpush1.bf16.msra.mxu0 %v4431
        %6678 = vmatprep.subr.bf16.mxu0 %v4428
        %6679 = vmatpush1.bf16.msra.mxu0 %v4427
        %6680 = vmatprep.subr.bf16.mxu0 %v4424
        %6681 = vmatpush1.bf16.msra.mxu0 %v4423
        %6682 = vmatprep.subr.bf16.mxu0 %v4420
        %6683 = vmatpush1.bf16.msra.mxu0 %v4419
        %6684 = vmatprep.subr.bf16.mxu0 %v4480
        %6685 = vmatpush2.bf16.msra.mxu0 %v4479
        %6686 = vmatprep.subr.bf16.mxu0 %v4476
        %6687 = vmatpush2.bf16.msra.mxu0 %v4475
        %6688 = vmatprep.subr.bf16.mxu0 %v4472
        %6689 = vmatpush2.bf16.msra.mxu0 %v4471
        %6690 = vmatprep.subr.bf16.mxu0 %v4468
        %6691 = vmatpush2.bf16.msra.mxu0 %v4467
        %6692 = vmatprep.subr.bf16.mxu0 %v4464
        %6693 = vmatpush2.bf16.msra.mxu0 %v4463
        %6694 = vmatprep.subr.bf16.mxu0 %v4460
        %6695 = vmatpush2.bf16.msra.mxu0 %v4459
        %6696 = vmatprep.subr.bf16.mxu0 %v4456
        %6697 = vmatpush2.bf16.msra.mxu0 %v4455
        %6698 = vmatprep.subr.bf16.mxu0 %v4452
        %6699 = vmatpush2.bf16.msra.mxu0 %v4451
        %6700 = vmatprep.mubr.bf16.mxu0 %v1306
        %6701 = vmatmul.mubr.bf16.gmra.mxu0 %v1304
        %v6702 = vpop.f32.mrf.mxu0
        %v6703 = vadd.f32 %v6662, %v6702
        %v6704 = vpop.f32.mrf.mxu0
        %v6705 = vadd.f32 %v6664, %v6704
        %v6706 = vpop.f32.mrf.mxu0
        %v6707 = vpop.f32.mrf.mxu0
        %6708 = vdwg.mxu0
        %6709 = vmatprep.subr.bf16.mxu0 %v4512
        %6710 = vmatpush1.bf16.msra.mxu0 %v4511
        %6711 = vmatprep.subr.bf16.mxu0 %v4508
        %6712 = vmatpush1.bf16.msra.mxu0 %v4507
        %6713 = vmatprep.subr.bf16.mxu0 %v4504
        %6714 = vmatpush1.bf16.msra.mxu0 %v4503
        %6715 = vmatprep.subr.bf16.mxu0 %v4500
        %6716 = vmatpush1.bf16.msra.mxu0 %v4499
        %6717 = vmatprep.subr.bf16.mxu0 %v4496
        %6718 = vmatpush1.bf16.msra.mxu0 %v4495
        %6719 = vmatprep.subr.bf16.mxu0 %v4492
        %6720 = vmatpush1.bf16.msra.mxu0 %v4491
        %6721 = vmatprep.subr.bf16.mxu0 %v4488
        %6722 = vmatpush1.bf16.msra.mxu0 %v4487
        %6723 = vmatprep.subr.bf16.mxu0 %v4484
        %6724 = vmatpush1.bf16.msra.mxu0 %v4483
        %6725 = vmatprep.subr.bf16.mxu0 %v4544
        %6726 = vmatpush2.bf16.msra.mxu0 %v4543
        %6727 = vmatprep.subr.bf16.mxu0 %v4540
        %6728 = vmatpush2.bf16.msra.mxu0 %v4539
        %6729 = vmatprep.subr.bf16.mxu0 %v4536
        %6730 = vmatpush2.bf16.msra.mxu0 %v4535
        %6731 = vmatprep.subr.bf16.mxu0 %v4532
        %6732 = vmatpush2.bf16.msra.mxu0 %v4531
        %6733 = vmatprep.subr.bf16.mxu0 %v4528
        %6734 = vmatpush2.bf16.msra.mxu0 %v4527
        %6735 = vmatprep.subr.bf16.mxu0 %v4524
        %6736 = vmatpush2.bf16.msra.mxu0 %v4523
        %6737 = vmatprep.subr.bf16.mxu0 %v4520
        %6738 = vmatpush2.bf16.msra.mxu0 %v4519
        %6739 = vmatprep.subr.bf16.mxu0 %v4516
        %6740 = vmatpush2.bf16.msra.mxu0 %v4515
        %6741 = vmatprep.mubr.bf16.mxu0 %v1303
        %6742 = vmatmul.mubr.bf16.gmra.mxu0 %v1289
        %v6743 = vpop.f32.mrf.mxu0
        %v6744 = vadd.f32 %v6703, %v6743
        %v6745 = vpop.f32.mrf.mxu0
        %v6746 = vadd.f32 %v6705, %v6745
        %v6747 = vpop.f32.mrf.mxu0
        %v6748 = vpop.f32.mrf.mxu0
        %6749 = vdwg.mxu0
        %6750 = vmatprep.subr.bf16.mxu0 %v4576
        %6751 = vmatpush1.bf16.msra.mxu0 %v4575
        %6752 = vmatprep.subr.bf16.mxu0 %v4572
        %6753 = vmatpush1.bf16.msra.mxu0 %v4571
        %6754 = vmatprep.subr.bf16.mxu0 %v4568
        %6755 = vmatpush1.bf16.msra.mxu0 %v4567
        %6756 = vmatprep.subr.bf16.mxu0 %v4564
        %6757 = vmatpush1.bf16.msra.mxu0 %v4563
        %6758 = vmatprep.subr.bf16.mxu0 %v4560
        %6759 = vmatpush1.bf16.msra.mxu0 %v4559
        %6760 = vmatprep.subr.bf16.mxu0 %v4556
        %6761 = vmatpush1.bf16.msra.mxu0 %v4555
        %6762 = vmatprep.subr.bf16.mxu0 %v4552
        %6763 = vmatpush1.bf16.msra.mxu0 %v4551
        %6764 = vmatprep.subr.bf16.mxu0 %v4548
        %6765 = vmatpush1.bf16.msra.mxu0 %v4547
        %6766 = vmatprep.subr.bf16.mxu0 %v4608
        %6767 = vmatpush2.bf16.msra.mxu0 %v4607
        %6768 = vmatprep.subr.bf16.mxu0 %v4604
        %6769 = vmatpush2.bf16.msra.mxu0 %v4603
        %6770 = vmatprep.subr.bf16.mxu0 %v4600
        %6771 = vmatpush2.bf16.msra.mxu0 %v4599
        %6772 = vmatprep.subr.bf16.mxu0 %v4596
        %6773 = vmatpush2.bf16.msra.mxu0 %v4595
        %6774 = vmatprep.subr.bf16.mxu0 %v4592
        %6775 = vmatpush2.bf16.msra.mxu0 %v4591
        %6776 = vmatprep.subr.bf16.mxu0 %v4588
        %6777 = vmatpush2.bf16.msra.mxu0 %v4587
        %6778 = vmatprep.subr.bf16.mxu0 %v4584
        %6779 = vmatpush2.bf16.msra.mxu0 %v4583
        %6780 = vmatprep.subr.bf16.mxu0 %v4580
        %6781 = vmatpush2.bf16.msra.mxu0 %v4579
        %6782 = vmatprep.mubr.bf16.mxu0 %v1307
        %6783 = vmatmul.mubr.bf16.gmra.mxu0 %v1305
        %v6784 = vpop.f32.mrf.mxu0
        %v6785 = vadd.f32 %v6744, %v6784
        %v6786 = vpop.f32.mrf.mxu0
        %v6787 = vadd.f32 %v6746, %v6786
        %v6788 = vpop.f32.mrf.mxu0
        %v6789 = vpop.f32.mrf.mxu0
        %6790 = vdwg.mxu0
        %6791 = vmatprep.subr.bf16.mxu0 %v4640
        %6792 = vmatpush1.bf16.msra.mxu0 %v4639
        %6793 = vmatprep.subr.bf16.mxu0 %v4636
        %6794 = vmatpush1.bf16.msra.mxu0 %v4635
        %6795 = vmatprep.subr.bf16.mxu0 %v4632
        %6796 = vmatpush1.bf16.msra.mxu0 %v4631
        %6797 = vmatprep.subr.bf16.mxu0 %v4628
        %6798 = vmatpush1.bf16.msra.mxu0 %v4627
        %6799 = vmatprep.subr.bf16.mxu0 %v4624
        %6800 = vmatpush1.bf16.msra.mxu0 %v4623
        %6801 = vmatprep.subr.bf16.mxu0 %v4620
        %6802 = vmatpush1.bf16.msra.mxu0 %v4619
        %6803 = vmatprep.subr.bf16.mxu0 %v4616
        %6804 = vmatpush1.bf16.msra.mxu0 %v4615
        %6805 = vmatprep.subr.bf16.mxu0 %v4612
        %6806 = vmatpush1.bf16.msra.mxu0 %v4611
        %6807 = vmatprep.subr.bf16.mxu0 %v4672
        %6808 = vmatpush2.bf16.msra.mxu0 %v4671
        %6809 = vmatprep.subr.bf16.mxu0 %v4668
        %6810 = vmatpush2.bf16.msra.mxu0 %v4667
        %6811 = vmatprep.subr.bf16.mxu0 %v4664
        %6812 = vmatpush2.bf16.msra.mxu0 %v4663
        %6813 = vmatprep.subr.bf16.mxu0 %v4660
        %6814 = vmatpush2.bf16.msra.mxu0 %v4659
        %6815 = vmatprep.subr.bf16.mxu0 %v4656
        %6816 = vmatpush2.bf16.msra.mxu0 %v4655
        %6817 = vmatprep.subr.bf16.mxu0 %v4652
        %6818 = vmatpush2.bf16.msra.mxu0 %v4651
        %6819 = vmatprep.subr.bf16.mxu0 %v4648
        %6820 = vmatpush2.bf16.msra.mxu0 %v4647
        %6821 = vmatprep.subr.bf16.mxu0 %v4644
        %6822 = vmatpush2.bf16.msra.mxu0 %v4643
        %6823 = vmatprep.mubr.bf16.mxu0 %v1345
        %6824 = vmatmul.mubr.bf16.gmra.mxu0 %v1331
        %v6825 = vpop.f32.mrf.mxu0
        %v6826 = vadd.f32 %v6785, %v6825
        %v6827 = vpop.f32.mrf.mxu0
        %v6828 = vadd.f32 %v6787, %v6827
        %v6829 = vpop.f32.mrf.mxu0
        %v6830 = vpop.f32.mrf.mxu0
        %6831 = vdwg.mxu0
        %6832 = vmatprep.subr.bf16.mxu0 %v4704
        %6833 = vmatpush1.bf16.msra.mxu0 %v4703
        %6834 = vmatprep.subr.bf16.mxu0 %v4700
        %6835 = vmatpush1.bf16.msra.mxu0 %v4699
        %6836 = vmatprep.subr.bf16.mxu0 %v4696
        %6837 = vmatpush1.bf16.msra.mxu0 %v4695
        %6838 = vmatprep.subr.bf16.mxu0 %v4692
        %6839 = vmatpush1.bf16.msra.mxu0 %v4691
        %6840 = vmatprep.subr.bf16.mxu0 %v4688
        %6841 = vmatpush1.bf16.msra.mxu0 %v4687
        %6842 = vmatprep.subr.bf16.mxu0 %v4684
        %6843 = vmatpush1.bf16.msra.mxu0 %v4683
        %6844 = vmatprep.subr.bf16.mxu0 %v4680
        %6845 = vmatpush1.bf16.msra.mxu0 %v4679
        %6846 = vmatprep.subr.bf16.mxu0 %v4676
        %6847 = vmatpush1.bf16.msra.mxu0 %v4675
        %6848 = vmatprep.subr.bf16.mxu0 %v4736
        %6849 = vmatpush2.bf16.msra.mxu0 %v4735
        %6850 = vmatprep.subr.bf16.mxu0 %v4732
        %6851 = vmatpush2.bf16.msra.mxu0 %v4731
        %6852 = vmatprep.subr.bf16.mxu0 %v4728
        %6853 = vmatpush2.bf16.msra.mxu0 %v4727
        %6854 = vmatprep.subr.bf16.mxu0 %v4724
        %6855 = vmatpush2.bf16.msra.mxu0 %v4723
        %6856 = vmatprep.subr.bf16.mxu0 %v4720
        %6857 = vmatpush2.bf16.msra.mxu0 %v4719
        %6858 = vmatprep.subr.bf16.mxu0 %v4716
        %6859 = vmatpush2.bf16.msra.mxu0 %v4715
        %6860 = vmatprep.subr.bf16.mxu0 %v4712
        %6861 = vmatpush2.bf16.msra.mxu0 %v4711
        %6862 = vmatprep.subr.bf16.mxu0 %v4708
        %6863 = vmatpush2.bf16.msra.mxu0 %v4707
        %6864 = vmatprep.mubr.bf16.mxu0 %v1355
        %6865 = vmatmul.mubr.bf16.gmra.mxu0 %v1353
        %v6866 = vpop.f32.mrf.mxu0
        %v6867 = vadd.f32 %v6826, %v6866
        %v6868 = vpop.f32.mrf.mxu0
        %v6869 = vadd.f32 %v6828, %v6868
        %v6870 = vpop.f32.mrf.mxu0
        %v6871 = vpop.f32.mrf.mxu0
        %6872 = vdwg.mxu0
        %6873 = vmatprep.subr.bf16.mxu0 %v4768
        %6874 = vmatpush1.bf16.msra.mxu0 %v4767
        %6875 = vmatprep.subr.bf16.mxu0 %v4764
        %6876 = vmatpush1.bf16.msra.mxu0 %v4763
        %6877 = vmatprep.subr.bf16.mxu0 %v4760
        %6878 = vmatpush1.bf16.msra.mxu0 %v4759
        %6879 = vmatprep.subr.bf16.mxu0 %v4756
        %6880 = vmatpush1.bf16.msra.mxu0 %v4755
        %6881 = vmatprep.subr.bf16.mxu0 %v4752
        %6882 = vmatpush1.bf16.msra.mxu0 %v4751
        %6883 = vmatprep.subr.bf16.mxu0 %v4748
        %6884 = vmatpush1.bf16.msra.mxu0 %v4747
        %6885 = vmatprep.subr.bf16.mxu0 %v4744
        %6886 = vmatpush1.bf16.msra.mxu0 %v4743
        %6887 = vmatprep.subr.bf16.mxu0 %v4740
        %6888 = vmatpush1.bf16.msra.mxu0 %v4739
        %6889 = vmatprep.subr.bf16.mxu0 %v4800
        %6890 = vmatpush2.bf16.msra.mxu0 %v4799
        %6891 = vmatprep.subr.bf16.mxu0 %v4796
        %6892 = vmatpush2.bf16.msra.mxu0 %v4795
        %6893 = vmatprep.subr.bf16.mxu0 %v4792
        %6894 = vmatpush2.bf16.msra.mxu0 %v4791
        %6895 = vmatprep.subr.bf16.mxu0 %v4788
        %6896 = vmatpush2.bf16.msra.mxu0 %v4787
        %6897 = vmatprep.subr.bf16.mxu0 %v4784
        %6898 = vmatpush2.bf16.msra.mxu0 %v4783
        %6899 = vmatprep.subr.bf16.mxu0 %v4780
        %6900 = vmatpush2.bf16.msra.mxu0 %v4779
        %6901 = vmatprep.subr.bf16.mxu0 %v4776
        %6902 = vmatpush2.bf16.msra.mxu0 %v4775
        %6903 = vmatprep.subr.bf16.mxu0 %v4772
        %6904 = vmatpush2.bf16.msra.mxu0 %v4771
        %6905 = vmatprep.mubr.bf16.mxu0 %v1352
        %6906 = vmatmul.mubr.bf16.gmra.mxu0 %v1338
        %v6907 = vpop.f32.mrf.mxu0
        %v6908 = vadd.f32 %v6867, %v6907
        %v6909 = vpop.f32.mrf.mxu0
        %v6910 = vadd.f32 %v6869, %v6909
        %v6911 = vpop.f32.mrf.mxu0
        %v6912 = vpop.f32.mrf.mxu0
        %6913 = vdwg.mxu0
        %6914 = vmatprep.subr.bf16.mxu0 %v4832
        %6915 = vmatpush1.bf16.msra.mxu0 %v4831
        %6916 = vmatprep.subr.bf16.mxu0 %v4828
        %6917 = vmatpush1.bf16.msra.mxu0 %v4827
        %6918 = vmatprep.subr.bf16.mxu0 %v4824
        %6919 = vmatpush1.bf16.msra.mxu0 %v4823
        %6920 = vmatprep.subr.bf16.mxu0 %v4820
        %6921 = vmatpush1.bf16.msra.mxu0 %v4819
        %6922 = vmatprep.subr.bf16.mxu0 %v4816
        %6923 = vmatpush1.bf16.msra.mxu0 %v4815
        %6924 = vmatprep.subr.bf16.mxu0 %v4812
        %6925 = vmatpush1.bf16.msra.mxu0 %v4811
        %6926 = vmatprep.subr.bf16.mxu0 %v4808
        %6927 = vmatpush1.bf16.msra.mxu0 %v4807
        %6928 = vmatprep.subr.bf16.mxu0 %v4804
        %6929 = vmatpush1.bf16.msra.mxu0 %v4803
        %6930 = vmatprep.subr.bf16.mxu0 %v4864
        %6931 = vmatpush2.bf16.msra.mxu0 %v4863
        %6932 = vmatprep.subr.bf16.mxu0 %v4860
        %6933 = vmatpush2.bf16.msra.mxu0 %v4859
        %6934 = vmatprep.subr.bf16.mxu0 %v4856
        %6935 = vmatpush2.bf16.msra.mxu0 %v4855
        %6936 = vmatprep.subr.bf16.mxu0 %v4852
        %6937 = vmatpush2.bf16.msra.mxu0 %v4851
        %6938 = vmatprep.subr.bf16.mxu0 %v4848
        %6939 = vmatpush2.bf16.msra.mxu0 %v4847
        %6940 = vmatprep.subr.bf16.mxu0 %v4844
        %6941 = vmatpush2.bf16.msra.mxu0 %v4843
        %6942 = vmatprep.subr.bf16.mxu0 %v4840
        %6943 = vmatpush2.bf16.msra.mxu0 %v4839
        %6944 = vmatprep.subr.bf16.mxu0 %v4836
        %6945 = vmatpush2.bf16.msra.mxu0 %v4835
        %6946 = vmatprep.mubr.bf16.mxu0 %v1356
        %6947 = vmatmul.mubr.bf16.gmra.mxu0 %v1354
        %v6948 = vpop.f32.mrf.mxu0
        %v6949 = vadd.f32 %v6908, %v6948
        %v6950 = vpop.f32.mrf.mxu0
        %v6951 = vadd.f32 %v6910, %v6950
        %v6952 = vpop.f32.mrf.mxu0
        %v6953 = vpop.f32.mrf.mxu0
        %6954 = vdwg.mxu0
        %6955 = vmatprep.subr.bf16.mxu0 %v4896
        %6956 = vmatpush1.bf16.msra.mxu0 %v4895
        %6957 = vmatprep.subr.bf16.mxu0 %v4892
        %6958 = vmatpush1.bf16.msra.mxu0 %v4891
        %6959 = vmatprep.subr.bf16.mxu0 %v4888
        %6960 = vmatpush1.bf16.msra.mxu0 %v4887
        %6961 = vmatprep.subr.bf16.mxu0 %v4884
        %6962 = vmatpush1.bf16.msra.mxu0 %v4883
        %6963 = vmatprep.subr.bf16.mxu0 %v4880
        %6964 = vmatpush1.bf16.msra.mxu0 %v4879
        %6965 = vmatprep.subr.bf16.mxu0 %v4876
        %6966 = vmatpush1.bf16.msra.mxu0 %v4875
        %6967 = vmatprep.subr.bf16.mxu0 %v4872
        %6968 = vmatpush1.bf16.msra.mxu0 %v4871
        %6969 = vmatprep.subr.bf16.mxu0 %v4868
        %6970 = vmatpush1.bf16.msra.mxu0 %v4867
        %6971 = vmatprep.subr.bf16.mxu0 %v4928
        %6972 = vmatpush2.bf16.msra.mxu0 %v4927
        %6973 = vmatprep.subr.bf16.mxu0 %v4924
        %6974 = vmatpush2.bf16.msra.mxu0 %v4923
        %6975 = vmatprep.subr.bf16.mxu0 %v4920
        %6976 = vmatpush2.bf16.msra.mxu0 %v4919
        %6977 = vmatprep.subr.bf16.mxu0 %v4916
        %6978 = vmatpush2.bf16.msra.mxu0 %v4915
        %6979 = vmatprep.subr.bf16.mxu0 %v4912
        %6980 = vmatpush2.bf16.msra.mxu0 %v4911
        %6981 = vmatprep.subr.bf16.mxu0 %v4908
        %6982 = vmatpush2.bf16.msra.mxu0 %v4907
        %6983 = vmatprep.subr.bf16.mxu0 %v4904
        %6984 = vmatpush2.bf16.msra.mxu0 %v4903
        %6985 = vmatprep.subr.bf16.mxu0 %v4900
        %6986 = vmatpush2.bf16.msra.mxu0 %v4899
        %6987 = vmatprep.mubr.bf16.mxu0 %v1378
        %6988 = vmatmul.mubr.bf16.gmra.mxu0 %v1371
        %v6989 = vpop.f32.mrf.mxu0
        %v6990 = vadd.f32 %v6949, %v6989
        %v6991 = vpop.f32.mrf.mxu0
        %v6992 = vadd.f32 %v6951, %v6991
        %v6993 = vpop.f32.mrf.mxu0
        %v6994 = vpop.f32.mrf.mxu0
        %6995 = vdwg.mxu0
        %6996 = vmatprep.subr.bf16.mxu0 %v4960
        %6997 = vmatpush1.bf16.msra.mxu0 %v4959
        %6998 = vmatprep.subr.bf16.mxu0 %v4956
        %6999 = vmatpush1.bf16.msra.mxu0 %v4955
        %7000 = vmatprep.subr.bf16.mxu0 %v4952
        %7001 = vmatpush1.bf16.msra.mxu0 %v4951
        %7002 = vmatprep.subr.bf16.mxu0 %v4948
        %7003 = vmatpush1.bf16.msra.mxu0 %v4947
        %7004 = vmatprep.subr.bf16.mxu0 %v4944
        %7005 = vmatpush1.bf16.msra.mxu0 %v4943
        %7006 = vmatprep.subr.bf16.mxu0 %v4940
        %7007 = vmatpush1.bf16.msra.mxu0 %v4939
        %7008 = vmatprep.subr.bf16.mxu0 %v4936
        %7009 = vmatpush1.bf16.msra.mxu0 %v4935
        %7010 = vmatprep.subr.bf16.mxu0 %v4932
        %7011 = vmatpush1.bf16.msra.mxu0 %v4931
        %7012 = vmatprep.subr.bf16.mxu0 %v4992
        %7013 = vmatpush2.bf16.msra.mxu0 %v4991
        %7014 = vmatprep.subr.bf16.mxu0 %v4988
        %7015 = vmatpush2.bf16.msra.mxu0 %v4987
        %7016 = vmatprep.subr.bf16.mxu0 %v4984
        %7017 = vmatpush2.bf16.msra.mxu0 %v4983
        %7018 = vmatprep.subr.bf16.mxu0 %v4980
        %7019 = vmatpush2.bf16.msra.mxu0 %v4979
        %7020 = vmatprep.subr.bf16.mxu0 %v4976
        %7021 = vmatpush2.bf16.msra.mxu0 %v4975
        %7022 = vmatprep.subr.bf16.mxu0 %v4972
        %7023 = vmatpush2.bf16.msra.mxu0 %v4971
        %7024 = vmatprep.subr.bf16.mxu0 %v4968
        %7025 = vmatpush2.bf16.msra.mxu0 %v4967
        %7026 = vmatprep.subr.bf16.mxu0 %v4964
        %7027 = vmatpush2.bf16.msra.mxu0 %v4963
        %7028 = vmatprep.mubr.bf16.mxu0 %v1380
        %7029 = vmatmul.mubr.bf16.gmra.mxu0 %v1379
        %v7030 = vpop.f32.mrf.mxu0
        %v7031 = vadd.f32 %v6990, %v7030
        %v7032 = vpop.f32.mrf.mxu0
        %v7033 = vadd.f32 %v6992, %v7032
        %v7034 = vpop.f32.mrf.mxu0
        %v7035 = vpop.f32.mrf.mxu0
        %7036 = vdwg.mxu0
        %v7041 = vcombine.low %v6457, %v6459
        %v7042 = vcombine.low %v7031, %v7033
        %v7044 = vunpack.c.l.s4 1983009808
        %v7045 = vunpack.c.0.s8 %v7044
        %v7046 = vlaneseq
        %v7047 = vshrl.u32 %v7046, 7
        %v7048 = vsub.s32 %v7045, %v7047
        %v7049 = vrot.slane %v7041, %v7048
        %v7051 = vunpack.c.l.s4 1983009808
        %v7052 = vunpack.c.0.s8 %v7051
        %v7053 = vlaneseq
        %v7054 = vshrl.u32 %v7053, 7
        %v7055 = vsub.s32 %v7052, %v7054
        %v7056 = vrot.slane %v7042, %v7055
        %v7057 = vcombine.low %v7049, %v7056
        %v7059 = vadd.f32 %v305, %v7057
        %7060 = vst [vmem:[#allocation2] sm:$0xff] %v7059
        %p7061 = scmp.eq.s32.totalorder %s27, 6
        // Predicated region
        $region45: #{model_forward.8} parent=31 // pred_check
          %p7062 = pneg %p7061
        $region46: #{model_forward.8} parent=31 // pred_check_branch
          %7064 = sbr.rel (%p7062) target = $region48
        $region47: #{model_forward.8} parent=31 // pred_region
          %v7065 = vld [vmem:[#allocation2] sm:$0xff]
          %v7066 = vld [vmem:[%s238] sm:$0xf]
          %v7068 = vlaneseq
          %v7069 = vshrl.u32 %v7068, 7
          %v7070 = vsub.s32 0, %v7069
          %v7071 = vrot.slane %v7066, %v7070
          %v7072 = vlaneseq
          %v7073 = vshrl.u32 %v7072, 7
          %v7074 = vsub.s32 1, %v7073
          %v7075 = vrot.slane %v7066, %v7074
          %v7076 = vlaneseq
          %v7077 = vshrl.u32 %v7076, 7
          %v7078 = vsub.s32 2, %v7077
          %v7079 = vrot.slane %v7066, %v7078
          %v7080 = vlaneseq
          %v7081 = vshrl.u32 %v7080, 7
          %v7082 = vsub.s32 3, %v7081
          %v7083 = vrot.slane %v7066, %v7082
          %v7084 = vcombine.low %v7071, %v7075
          %v7085 = vcombine.low %v7079, %v7083
          %v7087 = vunpack.c.l.s4 1983009808
          %v7088 = vunpack.c.0.s8 %v7087
          %v7089 = vlaneseq
          %v7090 = vshrl.u32 %v7089, 7
          %v7091 = vsub.s32 %v7088, %v7090
          %v7092 = vrot.slane %v7084, %v7091
          %v7094 = vunpack.c.l.s4 1983009808
          %v7095 = vunpack.c.0.s8 %v7094
          %v7096 = vlaneseq
          %v7097 = vshrl.u32 %v7096, 7
          %v7098 = vsub.s32 %v7095, %v7097
          %v7099 = vrot.slane %v7085, %v7098
          %v7100 = vcombine.low %v7092, %v7099
          %v7102 = vadd.f32 %v7065, %v7100
          %v7103 = vmax.f32 %v7102, 0.0
          %7104 = vst [vmem:[%s298] sm:$0xff] %v7103
        $region48: #{model_forward.8} parent=31 // pred_fallthru
          _
        %s7105 = smul.u32 4, %s26
        %p7106 = scmp.lt.s32.totalorder %s25, 0
        %s7107 = scalar_select %p7106, %s25, 0
        %p7108 = scmp.lt.s32.totalorder %s7105, 7
        %s7109 = scalar_select %p7108, %s7105, 7
        %s7110 = smul.addr %s7107, 8
        %s7111 = sadd.s32 %s7109, %s7110
        %s7112 = smul.addr %s7111, 2
        %s7113 = scalar_lea.vmem %s3, %s7112
        // Predicated region
        $region49: #{model_forward.8} parent=31 // pred_check
          %p7114 = pneg %p141
        $region50: #{model_forward.8} parent=31 // pred_check_branch
          %7116 = sbr.rel (%p7114) target = $region52
        $region51: #{model_forward.8} parent=31 // pred_region
          %s7117 = smul.u32 4, %s26
        $region52: #{model_forward.8} parent=31 // pred_fallthru
          _
      $region32: #{model_forward.8} parent=5 // pred_fallthru
        _
      %p7118 = scmp.le.s32.totalorder 2, %s15
      // Predicated region
      $region53: #{model_forward.8} parent=5 // pred_check
        %p7119 = pneg %p7118
      $region54: #{model_forward.8} parent=5 // pred_check_branch
        %7121 = sbr.rel (%p7119) target = $region56
      $region55: #{model_forward.8} parent=5 // pred_region
        %s7122 = ssub.s32 %s15, 2
        // Predicated region
        $region57: #{model_forward.8} parent=55 // pred_check
          %p7123 = pneg %p147
        $region58: #{model_forward.8} parent=55 // pred_check_branch
          %7125 = sbr.rel (%p7123) target = $region60
        $region59: #{model_forward.8} parent=55 // pred_region
          %s7126 = smul.u32 4, %s29
          %p7127 = scmp.lt.s32.totalorder %s28, 0
          %s7128 = scalar_select %p7127, %s28, 0
          %p7129 = scmp.lt.s32.totalorder %s7126, 7
          %s7130 = scalar_select %p7129, %s7126, 7
          %s7131 = smul.addr %s7128, 8
          %s7132 = sadd.s32 %s7130, %s7131
          %s7133 = smul.addr %s7132, 2
          %s7134 = scalar_lea.vmem %s3, %s7133
        $region60: #{model_forward.8} parent=55 // pred_fallthru
          _
      $region56: #{model_forward.8} parent=5 // pred_fallthru
        _
    $region6: #{model_forward.8} parent=1 // loop_footer
      %s19 = sadd.s32 1, %s15
    $region7: #{model_forward.8} parent=1 // loop_footer_branch
      %14 = sbr.rel target = $region3
    $region8: #{model_forward.8} parent=1 // loop_exit
      _
    %7135 = vsyncpa [#allocation4], 1
    %s7136 = scalar_lea.sflag [#allocation4], 1
    %7137 = vsyncpa %s7136, 1
    %7138 = vsyncpa [#allocation6], 1
    %s7139 = scalar_lea.sflag [#allocation6], 1
    %7140 = vsyncpa %s7139, 1

</llo_original>
